<compile_context>
chip_gen: v6e
topology: v6e:2x2x1
jax: 0.10.0
libtpu: 0.0.40
codegen_flags: <defaults>
</compile_context>

<pallas_src>
import functools

import jax
import jax.numpy as jnp
from jax.experimental import pallas as pl
from jax.experimental.pallas import tpu as pltpu

EPS = 1e-5  # nn.InstanceNorm2d default eps


def rup(x, m):
    return (x + m - 1) // m * m


def _pick_tk(Kp, cap=768):
    """Largest 128-multiple divisor of Kp that is <= cap (Kp is a 128 multiple)."""
    units = Kp // 128
    best = 1
    for d in range(1, units + 1):
        if units % d == 0 and d * 128 <= cap:
            best = d
    return best * 128


# ---------------------------------------------------------------------------
# Kernel 1: fused [InstanceNorm+ReLU prologue] -> bf16 MXU matmul ->
#           [bf16 raw output + per-sample per-channel sum / sum-of-squares].
# ---------------------------------------------------------------------------
def _conv_mm_kernel(*refs, fused):
    if fused:
        s_ref, b_ref, a_ref, w_ref, y_ref, st_ref, acc_ref = refs
    else:
        a_ref, w_ref, y_ref, st_ref, acc_ref = refs
    m = pl.program_id(2)
    k = pl.program_id(3)

    @pl.when(k == 0)
    def _zero_acc():
        acc_ref[...] = jnp.zeros_like(acc_ref)

    @pl.when((m == 0) & (k == 0))
    def _zero_stats():
        st_ref[...] = jnp.zeros_like(st_ref)

    a = a_ref[...]
    if fused:
        # previous layer's InstanceNorm + ReLU fused into this matmul's prologue
        a = jnp.maximum(a.astype(jnp.float32) * s_ref[...] + b_ref[...], 0.0)
        a = a.astype(jnp.bfloat16)
    acc_ref[...] += jnp.dot(a, w_ref[...], preferred_element_type=jnp.float32)

    @pl.when(k == pl.num_programs(3) - 1)
    def _store():
        y = acc_ref[...]
        y_ref[...] = y.astype(y_ref.dtype)
        st_ref[0:1, :] += jnp.sum(y, axis=0, keepdims=True)
        st_ref[1:2, :] += jnp.sum(y * y, axis=0, keepdims=True)


def conv_matmul(patches, w_mat, in_scale=None, in_bias=None):
    """patches: (B, M, K), w_mat: (K, N) f32.
    in_scale / in_bias: per-sample per-K-column affine (B, K) applied with ReLU to
    the patches inside the kernel (fused previous-layer InstanceNorm+ReLU), or None.
    Returns raw output (B, M, Np) bf16 and stats (B, 2, Np) f32 = per-sample
    per-channel [sum, sum of squares] over the M rows (Np = rup(N, 128))."""
    B, M, K = patches.shape
    N = w_mat.shape[1]
    Np = rup(N, 128)
    Kp = rup(K, 128)
    tk = _pick_tk(Kp)
    tn = 256 if Np % 256 == 0 else 128
    assert M % 8 == 0
    tm = min(1024, M)
    while M % tm:          # keep tm a multiple of 8 that divides M (no M padding)
        tm -= 8

    fused = in_scale is not None
    a = jnp.pad(patches.astype(jnp.bfloat16), ((0, 0), (0, 0), (0, Kp - K)))
    w = jnp.pad(w_mat, ((0, Kp - K), (0, Np - N))).astype(jnp.bfloat16)

    args, in_specs = [], []
    if fused:
        s = jnp.pad(in_scale, ((0, 0), (0, Kp - K))).reshape(B, 1, Kp)
        bv = jnp.pad(in_bias, ((0, 0), (0, Kp - K))).reshape(B, 1, Kp)
        args += [s, bv]
        in_specs += [pl.BlockSpec((None, 1, tk), lambda b, n, m, k: (b, 0, k)),
                     pl.BlockSpec((None, 1, tk), lambda b, n, m, k: (b, 0, k))]
    args += [a, w]
    in_specs += [pl.BlockSpec((None, tm, tk), lambda b, n, m, k: (b, m, k)),
                 pl.BlockSpec((tk, tn), lambda b, n, m, k: (k, n))]

    y, stats = pl.pallas_call(
        functools.partial(_conv_mm_kernel, fused=fused),
        out_shape=(jax.ShapeDtypeStruct((B, M, Np), jnp.bfloat16),
                   jax.ShapeDtypeStruct((B, 2, Np), jnp.float32)),
        grid=(B, Np // tn, M // tm, Kp // tk),
        in_specs=in_specs,
        out_specs=[
            pl.BlockSpec((None, tm, tn), lambda b, n, m, k: (b, m, n)),  # raw conv out
            pl.BlockSpec((None, 2, tn), lambda b, n, m, k: (b, 0, n)),   # [sum, sumsq]
        ],
        scratch_shapes=[pltpu.VMEM((tm, tn), jnp.float32)],
        compiler_params=pltpu.CompilerParams(
            dimension_semantics=("parallel", "parallel", "arbitrary", "arbitrary")),
    )(*args)
    return y, stats


# ---------------------------------------------------------------------------
# Kernel 1b: plain matmul for the tiny late layers with the batch folded into M
# (weights stream once, MXU rows stay occupied).  Input patches are already
# normalized + ReLU'd in XLA; output stays f32 (it is tiny).
# ---------------------------------------------------------------------------
def _mm_kernel(a_ref, w_ref, y_ref, acc_ref):
    k = pl.program_id(2)

    @pl.when(k == 0)
    def _zero():
        acc_ref[...] = jnp.zeros_like(acc_ref)

    acc_ref[...] += jnp.dot(a_ref[...], w_ref[...], preferred_element_type=jnp.float32)

    @pl.when(k == pl.num_programs(2) - 1)
    def _store():
        y_ref[...] = acc_ref[...].astype(y_ref.dtype)


def conv_matmul_folded(patches2d, w_mat):
    """patches2d: (B*M, K) normalized patches, w_mat: (K, N).  Returns (B*M, Np) f32."""
    BM, K = patches2d.shape
    N = w_mat.shape[1]
    Np = rup(N, 128)
    Kp = rup(K, 128)
    tk = _pick_tk(Kp)
    tn = 256 if Np % 256 == 0 else 128
    BMp = rup(BM, 8)
    tm = min(512, BMp)
    while BMp % tm:
        tm -= 8
    a = jnp.pad(patches2d.astype(jnp.bfloat16), ((0, BMp - BM), (0, Kp - K)))
    w = jnp.pad(w_mat, ((0, Kp - K), (0, Np - N))).astype(jnp.bfloat16)

    y = pl.pallas_call(
        _mm_kernel,
        out_shape=jax.ShapeDtypeStruct((BMp, Np), jnp.float32),
        grid=(Np // tn, BMp // tm, Kp // tk),
        in_specs=[pl.BlockSpec((tm, tk), lambda n, m, k: (m, k)),
                  pl.BlockSpec((tk, tn), lambda n, m, k: (k, n))],
        out_specs=pl.BlockSpec((tm, tn), lambda n, m, k: (m, n)),
        scratch_shapes=[pltpu.VMEM((tm, tn), jnp.float32)],
        compiler_params=pltpu.CompilerParams(
            dimension_semantics=("parallel", "parallel", "arbitrary")),
    )(a, w)
    return y[:BM]


# ---------------------------------------------------------------------------
# Kernel 2: fused Self_Attn + mask conv + spatial softmax + attention pooling.
# ---------------------------------------------------------------------------
def _atten_pool_kernel(sc_ref, s_ref, b_ref, x_ref, wq_ref, bq_ref, wk_ref, bk_ref,
                       wv_ref, bv_ref, wm_ref, o_ref):
    # InstanceNorm + ReLU of the raw encoder features, computed in VMEM.
    x = jnp.maximum(x_ref[...].astype(jnp.float32) * s_ref[...] + b_ref[...], 0.0)
    xb = x.astype(jnp.bfloat16)                                          # (HW, Cp)

    # Self_Attn: 1x1-conv projections (bias fused), energy, softmax, attn @ v.
    q = jnp.dot(xb, wq_ref[...], preferred_element_type=jnp.float32) + bq_ref[...]
    k = jnp.dot(xb, wk_ref[...], preferred_element_type=jnp.float32) + bk_ref[...]
    v = jnp.dot(xb, wv_ref[...], preferred_element_type=jnp.float32) + bv_ref[...]
    energy = jax.lax.dot_general(q.astype(jnp.bfloat16), k.astype(jnp.bfloat16),
                                 (((1,), (1,)), ((), ())),
                                 preferred_element_type=jnp.float32)     # (HW, HW)
    energy = energy - jnp.max(energy, axis=-1, keepdims=True)
    pe = jnp.exp(energy)
    attn = pe * pl.reciprocal(jnp.sum(pe, axis=-1, keepdims=True), approx=True)
    o = jnp.dot(attn.astype(jnp.bfloat16), v.astype(jnp.bfloat16),
                preferred_element_type=jnp.float32)                      # (HW, Cp)
    h = sc_ref[0] * o + x                                                # gamma*out + x

    # mask: 1x1 conv (C -> 1, with bias) + tanh, then softmax over the HW positions.
    logit = jnp.tanh(jnp.sum(h * wm_ref[...], axis=-1, keepdims=True) + sc_ref[1])
    logit = logit - jnp.max(logit, axis=0, keepdims=True)
    el = jnp.exp(logit)
    amap = el * pl.reciprocal(jnp.sum(el, axis=0, keepdims=True), approx=True)

    # attention-weighted spatial pooling of the normalized features; the reference's
    # division by sum(attention_map) is dropped (amap is a softmax, it sums to 1).
    o_ref[...] = jnp.sum(x * amap, axis=0, keepdims=True)


def atten_pool(y, mean, var, C, p):
    """y: (B, HW, Cp) raw last-conv output; mean/var: (B, Cp) its per-sample channel
    statistics.  Returns the pooled feature vector (B, C)."""
    B, HW, Cp = y.shape
    assert HW % 8 == 0
    inv_std = jax.lax.rsqrt(var + EPS)
    s = inv_std.reshape(B, 1, Cp)
    bb = (-mean * inv_std).reshape(B, 1, Cp)
    Dq = rup(max(C // 8, 1), 128)          # slim q/k output padding (not Cp x Cp)

    def to_mat(w_pt, rows, cols):          # 1x1 conv weight (Cout, Cin, 1, 1) -> matrix
        m = jnp.transpose(w_pt[:, :, 0, 0], (1, 0))
        return jnp.pad(m, ((0, rows - m.shape[0]),
                           (0, cols - m.shape[1]))).astype(jnp.bfloat16)

    def pad_b(b, cols):
        return jnp.pad(b, (0, cols - b.shape[0])).reshape(1, cols).astype(jnp.float32)

    wq, bq = to_mat(p["q_w"], Cp, Dq), pad_b(p["q_b"], Dq)
    wk, bk = to_mat(p["k_w"], Cp, Dq), pad_b(p["k_b"], Dq)
    wv, bv = to_mat(p["v_w"], Cp, Cp), pad_b(p["v_b"], Cp)
    wm = pad_b(p["mask_w"].reshape(-1), Cp)
    sc = jnp.concatenate([p["gamma"].reshape(1),
                          p["mask_b"].reshape(1)]).astype(jnp.float32)

    pooled = pl.pallas_call(
        _atten_pool_kernel,
        out_shape=jax.ShapeDtypeStruct((B, 1, Cp), jnp.float32),
        grid=(B,),
        in_specs=[
            pl.BlockSpec(memory_space=pltpu.MemorySpace.SMEM),      # [gamma, mask bias]
            pl.BlockSpec((None, 1, Cp), lambda b: (b, 0, 0)),       # inv_std
            pl.BlockSpec((None, 1, Cp), lambda b: (b, 0, 0)),       # -mean*inv_std
            pl.BlockSpec((None, HW, Cp), lambda b: (b, 0, 0)),      # raw features (bf16)
            pl.BlockSpec((Cp, Dq), lambda b: (0, 0)),               # wq (bf16)
            pl.BlockSpec((1, Dq), lambda b: (0, 0)),                # bq
            pl.BlockSpec((Cp, Dq), lambda b: (0, 0)),               # wk (bf16)
            pl.BlockSpec((1, Dq), lambda b: (0, 0)),                # bk
            pl.BlockSpec((Cp, Cp), lambda b: (0, 0)),               # wv (bf16)
            pl.BlockSpec((1, Cp), lambda b: (0, 0)),                # bv
            pl.BlockSpec((1, Cp), lambda b: (0, 0)),                # mask weight row
        ],
        out_specs=pl.BlockSpec((None, 1, Cp), lambda b: (b, 0, 0)),
        compiler_params=pltpu.CompilerParams(dimension_semantics=("parallel",)),
    )(sc, s, bb, y, wq, bq, wk, bk, wv, bv, wm)
    return pooled[:, 0, :C]


# ---------------------------------------------------------------------------
# Glue: weight reshaping, im2col, mean-padding (pure data movement, fused by XLA
# into the Pallas operand materialization).
# ---------------------------------------------------------------------------
def _w_to_mat(w_pt):
    """PyTorch conv weight (Cout, Cin, kh, kw) -> im2col matrix (kh*kw*Cin, Cout)."""
    co, ci, kh, kw = w_pt.shape
    return jnp.transpose(w_pt, (2, 3, 1, 0)).reshape(kh * kw * ci, co)


def _im2col(x, kh, kw, stride):
    """x: (B, H, W, C) -> patches (B, OH*OW, kh*kw*C), tap-major / channel-minor."""
    B, H, W, C = x.shape
    oh = (H - kh) // stride + 1
    ow = (W - kw) // stride + 1
    taps = []
    for i in range(kh):
        for j in range(kw):
            taps.append(x[:, i:i + stride * (oh - 1) + 1:stride,
                          j:j + stride * (ow - 1) + 1:stride, :])
    p = jnp.stack(taps, axis=3).reshape(B, oh * ow, kh * kw * C)
    return p, oh, ow


def _pad_with_mean(x, mean):
    """Spatially pad (B, H, W, C) by 1 with the per-(sample, channel) mean so the
    fused (x - mean) * inv_std prologue maps the border to exactly the zero padding
    the PyTorch conv sees after InstanceNorm + ReLU."""
    B, H, W, C = x.shape
    out = jnp.broadcast_to(mean[:, None, None, :].astype(x.dtype), (B, H + 2, W + 2, C))
    return out.at[:, 1:H + 1, 1:W + 1, :].set(x)


# ---------------------------------------------------------------------------
# Forward pass
# ---------------------------------------------------------------------------
def encoder_forward(inp_nchw, p):
    """encoder1 + encoder2.  Returns the *raw* (pre-InstanceNorm) output of the last
    conv as (B, H*W, Np) plus its per-sample per-channel mean/var; the final
    InstanceNorm + ReLU is fused into the attention kernel's prologue."""
    x = jnp.transpose(inp_nchw, (0, 2, 3, 1))                               # NHWC
    B = x.shape[0]

    # encoder1: ReflectionPad2d(3) + Conv2d(k=7, bias=False)
    xp = jnp.pad(x, ((0, 0), (3, 3), (3, 3), (0, 0)), mode="reflect")
    patches, H, W = _im2col(xp, 7, 7, 1)
    y, stats = conv_matmul(patches, _w_to_mat(p["enc1_w"]))
    C = p["enc1_w"].shape[0]
    HW = H * W
    mean = stats[:, 0, :] / HW
    var = jnp.maximum(stats[:, 1, :] / HW - mean * mean, 0.0)

    # encoder2: 4 x [Conv2d(k=3, s=2, p=1, bias=False) + InstanceNorm + ReLU].
    for w_pt in p["enc2_w"]:
        Cout = w_pt.shape[0]
        M_out = (((H - 1) // 2) + 1) * (((W - 1) // 2) + 1)
        inv_std = jax.lax.rsqrt(var + EPS)
        if M_out >= 256:
            # Big layers: previous layer's InstanceNorm + ReLU fused into this conv's
            # prologue; the conv's zero padding is reproduced by padding the raw bf16
            # map with the bf16-rounded per-(sample,channel) mean.
            mean_r = mean[:, :C].astype(jnp.bfloat16).astype(jnp.float32)
            fmap = y[:, :, :C].reshape(B, H, W, C)
            patches, H, W = _im2col(_pad_with_mean(fmap, mean_r), 3, 3, 2)
            in_scale = jnp.tile(inv_std[:, :C], (1, 9))
            in_bias = jnp.tile(-mean_r * inv_std[:, :C], (1, 9))
            y, stats = conv_matmul(patches, _w_to_mat(w_pt), in_scale, in_bias)
            HW = H * W
            mean = stats[:, 0, :] / HW
            var = jnp.maximum(stats[:, 1, :] / HW - mean * mean, 0.0)
        else:
            # Tiny late layers: normalize the small map in XLA, fold B into M so the
            # weight streams once and the MXU rows stay occupied; stats of the tiny
            # output are computed in XLA.
            fmap = y[:, :, :C].astype(jnp.float32).reshape(B, H, W, C)
            fmap = jnp.maximum(
                (fmap - mean[:, None, None, :C]) * inv_std[:, None, None, :C], 0.0)
            fmap = jnp.pad(fmap, ((0, 0), (1, 1), (1, 1), (0, 0)))
            patches, H, W = _im2col(fmap, 3, 3, 2)
            HW = H * W
            y2 = conv_matmul_folded(patches.reshape(B * HW, patches.shape[-1]),
                                    _w_to_mat(w_pt))
            y = y2.reshape(B, HW, y2.shape[-1])
            mean = jnp.mean(y, axis=1)
            var = jnp.maximum(jnp.mean(y * y, axis=1) - mean * mean, 0.0)
        C = Cout
    return y, mean, var, C


def ftgan_encoder_atten(inp_nchw, params, noise):
    y, mean, var, C = encoder_forward(inp_nchw, params)
    pooled = atten_pool(y, mean, var, C, params)                            # (B, C)
    B = pooled.shape[0]
    # TODO(synk): the module draws fresh torch.randn noise every call; a fixed
    # JAX-generated gaussian sample of the same shape is supplied instead.
    return pooled.reshape(B, C, 1, 1) + noise * 0.02                        # (B, C, 4, 4)


# ---------------------------------------------------------------------------
# Deterministic parameter initialization (shapes from the module's __init__,
# PyTorch weight layouts).
# ---------------------------------------------------------------------------
def init_params(key, input_nc, ngf):
    ks = iter(jax.random.split(key, 16))

    def nrm(shape, std=0.02):
        return jax.random.normal(next(ks), shape, jnp.float32) * std

    C = ngf * 2 ** 4
    return {
        "enc1_w": nrm((ngf, input_nc, 7, 7)),
        "enc2_w": [nrm((ngf * 2 ** i * 2, ngf * 2 ** i, 3, 3)) for i in range(4)],
        "q_w": nrm((C // 8, C, 1, 1)), "q_b": nrm((C // 8,), 0.01),
        "k_w": nrm((C // 8, C, 1, 1)), "k_b": nrm((C // 8,), 0.01),
        "v_w": nrm((C, C, 1, 1)), "v_b": nrm((C,), 0.01),
        "gamma": jnp.zeros((1,), jnp.float32),   # Self_Attn gamma (init to 0)
        "mask_w": nrm((1, C, 1, 1)), "mask_b": nrm((1,), 0.01),
    }


# ---------------------------------------------------------------------------
if __name__ == "__main__":
    # 64x64 input (the module hard-codes the 4x4 noise, i.e. 4 stride-2 halvings
    # of a 64x64 map); small ngf / batch for a fast check.
    B, input_nc, ngf = 2, 1, 4
    C = ngf * 2 ** 4
    key = jax.random.PRNGKey(0)
    k1, k2, k3 = jax.random.split(key, 3)
    inp = jax.random.normal(k1, (B, input_nc, 64, 64), jnp.float32)
    params = init_params(k2, input_nc, ngf)
    noise = jax.random.normal(k3, (B, C, 4, 4), jnp.float32)

    out = jax.block_until_ready(jax.jit(ftgan_encoder_atten)(inp, params, noise))
    assert out.shape == (B, C, 4, 4)
    assert bool(jnp.all(jnp.isfinite(out)))
    print("KERNEL_OK")
</pallas_src>

<mosaic_0001>
module attributes {stable_mosaic.version = 11 : i64} {
  func.func @_conv_mm_kernel(%arg0: i32, %arg1: i32, %arg2: i32, %arg3: i32, %arg4: memref<1x1024x128xbf16, #tpu.memory_space<vmem>>, %arg5: memref<128x128xbf16, #tpu.memory_space<vmem>>, %arg6: memref<1x1024x128xbf16, #tpu.memory_space<vmem>>, %arg7: memref<1x2x128xf32, #tpu.memory_space<vmem>>, %arg8: memref<1024x128xf32, #tpu.memory_space<vmem>>) attributes {dimension_semantics = [#tpu.dimension_semantics<parallel>, #tpu.dimension_semantics<parallel>, #tpu.dimension_semantics<arbitrary>, #tpu.dimension_semantics<arbitrary>], iteration_bounds = array<i64: 2, 1, 4, 1>, scalar_prefetch = 0 : i64, scratch_operands = 1 : i64, tpu.core_type = #tpu.core_type<tc>, window_params = [{transform_indices = @transform_0, window_bounds = array<i64: 1, 1024, 128>}, {transform_indices = @transform_1, window_bounds = array<i64: 128, 128>}, {transform_indices = @transform_2, window_bounds = array<i64: 1, 1024, 128>}, {transform_indices = @transform_3, window_bounds = array<i64: 1, 2, 128>}]} {
    %c0_i32 = arith.constant 0 : i32
    %0 = arith.cmpi eq, %arg3, %c0_i32 : i32
    %1 = arith.extui %0 : i1 to i32
    %c0_i32_0 = arith.constant 0 : i32
    %2 = arith.cmpi ne, %1, %c0_i32_0 : i32
    scf.if %2 {
      %cst_14 = arith.constant 0.000000e+00 : f32
      %18 = vector.broadcast %cst_14 : f32 to vector<1024x128xf32>
      %c0_15 = arith.constant 0 : index
      %c0_16 = arith.constant 0 : index
      %19 = vector.load %arg8[%c0_15, %c0_16] : memref<1024x128xf32, #tpu.memory_space<vmem>>, vector<1024x128xf32>
      tpu.vector_store %arg8[%c0_15, %c0_16], %18 {strides = array<i32>} : memref<1024x128xf32, #tpu.memory_space<vmem>>, vector<1024x128xf32>,
    } else {
    }
    %c0_i32_1 = arith.constant 0 : i32
    %3 = arith.cmpi eq, %arg2, %c0_i32_1 : i32
    %c0_i32_2 = arith.constant 0 : i32
    %4 = arith.cmpi eq, %arg3, %c0_i32_2 : i32
    %5 = arith.andi %3, %4 : i1
    %6 = arith.extui %5 : i1 to i32
    %c0_i32_3 = arith.constant 0 : i32
    %7 = arith.cmpi ne, %6, %c0_i32_3 : i32
    scf.if %7 {
      %cst_14 = arith.constant 0.000000e+00 : f32
      %18 = vector.broadcast %cst_14 : f32 to vector<2x128xf32>
      %c0_15 = arith.constant 0 : index
      %c0_16 = arith.constant 0 : index
      %c0_17 = arith.constant 0 : index
      %19 = vector.load %arg7[%c0_15, %c0_16, %c0_17] : memref<1x2x128xf32, #tpu.memory_space<vmem>>, vector<1x2x128xf32>
      %20 = vector.shape_cast %19 : vector<1x2x128xf32> to vector<2x128xf32>
      %21 = vector.shape_cast %18 : vector<2x128xf32> to vector<1x2x128xf32>
      tpu.vector_store %arg7[%c0_15, %c0_16, %c0_17], %21 {strides = array<i32>} : memref<1x2x128xf32, #tpu.memory_space<vmem>>, vector<1x2x128xf32>,
    } else {
    }
    %c0 = arith.constant 0 : index
    %c0_4 = arith.constant 0 : index
    %c0_5 = arith.constant 0 : index
    %8 = vector.load %arg4[%c0, %c0_4, %c0_5] : memref<1x1024x128xbf16, #tpu.memory_space<vmem>>, vector<1x1024x128xbf16>
    %9 = vector.shape_cast %8 : vector<1x1024x128xbf16> to vector<1024x128xbf16>
    %c0_6 = arith.constant 0 : index
    %c0_7 = arith.constant 0 : index
    %10 = vector.load %arg8[%c0_6, %c0_7] : memref<1024x128xf32, #tpu.memory_space<vmem>>, vector<1024x128xf32>
    %c0_8 = arith.constant 0 : index
    %c0_9 = arith.constant 0 : index
    %11 = vector.load %arg5[%c0_8, %c0_9] : memref<128x128xbf16, #tpu.memory_space<vmem>>, vector<128x128xbf16>
    %cst = arith.constant dense<0.000000e+00> : vector<1024x128xf32>
    %12 = tpu.matmul %9, %11, %cst {dimension_numbers = #tpu.dot_dimension_numbers<[1], [0], [0], [1], [0, 0, 1, 1], [], []>} : vector<1024x128xbf16>, vector<128x128xbf16>, vector<1024x128xf32> -> vector<1024x128xf32>
    %13 = arith.addf %10, %12 : vector<1024x128xf32>
    %c0_10 = arith.constant 0 : index
    %c0_11 = arith.constant 0 : index
    %14 = vector.load %arg8[%c0_10, %c0_11] : memref<1024x128xf32, #tpu.memory_space<vmem>>, vector<1024x128xf32>
    tpu.vector_store %arg8[%c0_10, %c0_11], %13 {strides = array<i32>} : memref<1024x128xf32, #tpu.memory_space<vmem>>, vector<1024x128xf32>,
    %c0_i32_12 = arith.constant 0 : i32
    %15 = arith.cmpi eq, %arg3, %c0_i32_12 : i32
    %16 = arith.extui %15 : i1 to i32
    %c0_i32_13 = arith.constant 0 : i32
    %17 = arith.cmpi ne, %16, %c0_i32_13 : i32
    scf.if %17 {
      %c0_14 = arith.constant 0 : index
      %c0_15 = arith.constant 0 : index
      %18 = vector.load %arg8[%c0_14, %c0_15] : memref<1024x128xf32, #tpu.memory_space<vmem>>, vector<1024x128xf32>
      %19 = arith.truncf %18 : vector<1024x128xf32> to vector<1024x128xbf16>
      %c0_16 = arith.constant 0 : index
      %c0_17 = arith.constant 0 : index
      %c0_18 = arith.constant 0 : index
      %20 = vector.load %arg6[%c0_16, %c0_17, %c0_18] : memref<1x1024x128xbf16, #tpu.memory_space<vmem>>, vector<1x1024x128xbf16>
      %21 = vector.shape_cast %20 : vector<1x1024x128xbf16> to vector<1024x128xbf16>
      %22 = vector.shape_cast %19 : vector<1024x128xbf16> to vector<1x1024x128xbf16>
      tpu.vector_store %arg6[%c0_16, %c0_17, %c0_18], %22 {strides = array<i32>} : memref<1x1024x128xbf16, #tpu.memory_space<vmem>>, vector<1x1024x128xbf16>,
      %c0_19 = arith.constant 0 : index
      %c0_20 = arith.constant 0 : index
      %c0_21 = arith.constant 0 : index
      %23 = vector.load %arg7[%c0_19, %c0_20, %c0_21] : memref<1x2x128xf32, #tpu.memory_space<vmem>>, vector<1x1x128xf32>
      %24 = vector.shape_cast %23 : vector<1x1x128xf32> to vector<1x128xf32>
      %cst_22 = arith.constant dense<0.000000e+00> : vector<128xf32>
      %25 = vector.multi_reduction <add>, %18, %cst_22 [0] : vector<1024x128xf32> to vector<128xf32>
      %26 = vector.shape_cast %25 : vector<128xf32> to vector<1x128xf32>
      %27 = arith.addf %24, %26 : vector<1x128xf32>
      %c0_23 = arith.constant 0 : index
      %c0_24 = arith.constant 0 : index
      %c0_25 = arith.constant 0 : index
      %28 = vector.load %arg7[%c0_23, %c0_24, %c0_25] : memref<1x2x128xf32, #tpu.memory_space<vmem>>, vector<1x1x128xf32>
      %29 = vector.shape_cast %28 : vector<1x1x128xf32> to vector<1x128xf32>
      %30 = vector.shape_cast %27 : vector<1x128xf32> to vector<1x1x128xf32>
      tpu.vector_store %arg7[%c0_23, %c0_24, %c0_25], %30 {strides = array<i32>} : memref<1x2x128xf32, #tpu.memory_space<vmem>>, vector<1x1x128xf32>,
      %c0_26 = arith.constant 0 : index
      %c1 = arith.constant 1 : index
      %c0_27 = arith.constant 0 : index
      %31 = vector.load %arg7[%c0_26, %c1, %c0_27] : memref<1x2x128xf32, #tpu.memory_space<vmem>>, vector<1x1x128xf32>
      %32 = vector.shape_cast %31 : vector<1x1x128xf32> to vector<1x128xf32>
      %33 = arith.mulf %18, %18 : vector<1024x128xf32>
      %cst_28 = arith.constant dense<0.000000e+00> : vector<128xf32>
      %34 = vector.multi_reduction <add>, %33, %cst_28 [0] : vector<1024x128xf32> to vector<128xf32>
      %35 = vector.shape_cast %34 : vector<128xf32> to vector<1x128xf32>
      %36 = arith.addf %32, %35 : vector<1x128xf32>
      %c0_29 = arith.constant 0 : index
      %c1_30 = arith.constant 1 : index
      %c0_31 = arith.constant 0 : index
      %37 = vector.load %arg7[%c0_29, %c1_30, %c0_31] : memref<1x2x128xf32, #tpu.memory_space<vmem>>, vector<1x1x128xf32>
      %38 = vector.shape_cast %37 : vector<1x1x128xf32> to vector<1x128xf32>
      %39 = vector.shape_cast %36 : vector<1x128xf32> to vector<1x1x128xf32>
      tpu.vector_store %arg7[%c0_29, %c1_30, %c0_31], %39 {strides = array<i32>} : memref<1x2x128xf32, #tpu.memory_space<vmem>>, vector<1x1x128xf32>,
    } else {
    }
    return
  }
  func.func @transform_0(%arg0: i32, %arg1: i32, %arg2: i32, %arg3: i32) -> (i32, i32, i32) {
    %c0_i32 = arith.constant 0 : i32
    return %arg0, %arg2, %arg3 : i32, i32, i32
  }
  func.func @transform_1(%arg0: i32, %arg1: i32, %arg2: i32, %arg3: i32) -> (i32, i32) {
    %c0_i32 = arith.constant 0 : i32
    return %arg3, %arg1 : i32, i32
  }
  func.func @transform_2(%arg0: i32, %arg1: i32, %arg2: i32, %arg3: i32) -> (i32, i32, i32) {
    %c0_i32 = arith.constant 0 : i32
    return %arg0, %arg2, %arg1 : i32, i32, i32
  }
  func.func @transform_3(%arg0: i32, %arg1: i32, %arg2: i32, %arg3: i32) -> (i32, i32, i32) {
    %c0_i32 = arith.constant 0 : i32
    %c0_i32_0 = arith.constant 0 : i32
    return %arg0, %c0_i32, %arg1 : i32, i32, i32
  }
}

module attributes {stable_mosaic.version = 11 : i64} {
  func.func @_conv_mm_kernel(%arg0: i32, %arg1: i32, %arg2: i32, %arg3: i32, %arg4: memref<1x1x128xf32, #tpu.memory_space<vmem>>, %arg5: memref<1x1x128xf32, #tpu.memory_space<vmem>>, %arg6: memref<1x1024x128xbf16, #tpu.memory_space<vmem>>, %arg7: memref<128x128xbf16, #tpu.memory_space<vmem>>, %arg8: memref<1x1024x128xbf16, #tpu.memory_space<vmem>>, %arg9: memref<1x2x128xf32, #tpu.memory_space<vmem>>, %arg10: memref<1024x128xf32, #tpu.memory_space<vmem>>) attributes {dimension_semantics = [#tpu.dimension_semantics<parallel>, #tpu.dimension_semantics<parallel>, #tpu.dimension_semantics<arbitrary>, #tpu.dimension_semantics<arbitrary>], iteration_bounds = array<i64: 2, 1, 1, 1>, scalar_prefetch = 0 : i64, scratch_operands = 1 : i64, tpu.core_type = #tpu.core_type<tc>, window_params = [{transform_indices = @transform_0, window_bounds = array<i64: 1, 1, 128>}, {transform_indices = @transform_1, window_bounds = array<i64: 1, 1, 128>}, {transform_indices = @transform_2, window_bounds = array<i64: 1, 1024, 128>}, {transform_indices = @transform_3, window_bounds = array<i64: 128, 128>}, {transform_indices = @transform_4, window_bounds = array<i64: 1, 1024, 128>}, {transform_indices = @transform_5, window_bounds = array<i64: 1, 2, 128>}]} {
    %c0_i32 = arith.constant 0 : i32
    %0 = arith.cmpi eq, %arg3, %c0_i32 : i32
    %1 = arith.extui %0 : i1 to i32
    %c0_i32_0 = arith.constant 0 : i32
    %2 = arith.cmpi ne, %1, %c0_i32_0 : i32
    scf.if %2 {
      %cst_21 = arith.constant 0.000000e+00 : f32
      %30 = vector.broadcast %cst_21 : f32 to vector<1024x128xf32>
      %c0_22 = arith.constant 0 : index
      %c0_23 = arith.constant 0 : index
      %31 = vector.load %arg10[%c0_22, %c0_23] : memref<1024x128xf32, #tpu.memory_space<vmem>>, vector<1024x128xf32>
      tpu.vector_store %arg10[%c0_22, %c0_23], %30 {strides = array<i32>} : memref<1024x128xf32, #tpu.memory_space<vmem>>, vector<1024x128xf32>,
    } else {
    }
    %c0_i32_1 = arith.constant 0 : i32
    %3 = arith.cmpi eq, %arg2, %c0_i32_1 : i32
    %c0_i32_2 = arith.constant 0 : i32
    %4 = arith.cmpi eq, %arg3, %c0_i32_2 : i32
    %5 = arith.andi %3, %4 : i1
    %6 = arith.extui %5 : i1 to i32
    %c0_i32_3 = arith.constant 0 : i32
    %7 = arith.cmpi ne, %6, %c0_i32_3 : i32
    scf.if %7 {
      %cst_21 = arith.constant 0.000000e+00 : f32
      %30 = vector.broadcast %cst_21 : f32 to vector<2x128xf32>
      %c0_22 = arith.constant 0 : index
      %c0_23 = arith.constant 0 : index
      %c0_24 = arith.constant 0 : index
      %31 = vector.load %arg9[%c0_22, %c0_23, %c0_24] : memref<1x2x128xf32, #tpu.memory_space<vmem>>, vector<1x2x128xf32>
      %32 = vector.shape_cast %31 : vector<1x2x128xf32> to vector<2x128xf32>
      %33 = vector.shape_cast %30 : vector<2x128xf32> to vector<1x2x128xf32>
      tpu.vector_store %arg9[%c0_22, %c0_23, %c0_24], %33 {strides = array<i32>} : memref<1x2x128xf32, #tpu.memory_space<vmem>>, vector<1x2x128xf32>,
    } else {
    }
    %c0 = arith.constant 0 : index
    %c0_4 = arith.constant 0 : index
    %c0_5 = arith.constant 0 : index
    %8 = vector.load %arg6[%c0, %c0_4, %c0_5] : memref<1x1024x128xbf16, #tpu.memory_space<vmem>>, vector<1x1024x128xbf16>
    %9 = vector.shape_cast %8 : vector<1x1024x128xbf16> to vector<1024x128xbf16>
    %10 = arith.extf %9 : vector<1024x128xbf16> to vector<1024x128xf32>
    %c0_6 = arith.constant 0 : index
    %c0_7 = arith.constant 0 : index
    %c0_8 = arith.constant 0 : index
    %11 = vector.load %arg4[%c0_6, %c0_7, %c0_8] : memref<1x1x128xf32, #tpu.memory_space<vmem>>, vector<1x1x128xf32>
    %12 = vector.shape_cast %11 : vector<1x1x128xf32> to vector<1x128xf32>
    %13 = vector.broadcast %12 : vector<1x128xf32> to vector<1024x128xf32>
    %14 = arith.mulf %10, %13 : vector<1024x128xf32>
    %c0_9 = arith.constant 0 : index
    %c0_10 = arith.constant 0 : index
    %c0_11 = arith.constant 0 : index
    %15 = vector.load %arg5[%c0_9, %c0_10, %c0_11] : memref<1x1x128xf32, #tpu.memory_space<vmem>>, vector<1x1x128xf32>
    %16 = vector.shape_cast %15 : vector<1x1x128xf32> to vector<1x128xf32>
    %17 = vector.broadcast %16 : vector<1x128xf32> to vector<1024x128xf32>
    %18 = arith.addf %14, %17 : vector<1024x128xf32>
    %cst = arith.constant 0.000000e+00 : f32
    %19 = vector.broadcast %cst : f32 to vector<1024x128xf32>
    %20 = arith.maximumf %18, %19 : vector<1024x128xf32>
    %21 = arith.truncf %20 : vector<1024x128xf32> to vector<1024x128xbf16>
    %c0_12 = arith.constant 0 : index
    %c0_13 = arith.constant 0 : index
    %22 = vector.load %arg10[%c0_12, %c0_13] : memref<1024x128xf32, #tpu.memory_space<vmem>>, vector<1024x128xf32>
    %c0_14 = arith.constant 0 : index
    %c0_15 = arith.constant 0 : index
    %23 = vector.load %arg7[%c0_14, %c0_15] : memref<128x128xbf16, #tpu.memory_space<vmem>>, vector<128x128xbf16>
    %cst_16 = arith.constant dense<0.000000e+00> : vector<1024x128xf32>
    %24 = tpu.matmul %21, %23, %cst_16 {dimension_numbers = #tpu.dot_dimension_numbers<[1], [0], [0], [1], [0, 0, 1, 1], [], []>} : vector<1024x128xbf16>, vector<128x128xbf16>, vector<1024x128xf32> -> vector<1024x128xf32>
    %25 = arith.addf %22, %24 : vector<1024x128xf32>
    %c0_17 = arith.constant 0 : index
    %c0_18 = arith.constant 0 : index
    %26 = vector.load %arg10[%c0_17, %c0_18] : memref<1024x128xf32, #tpu.memory_space<vmem>>, vector<1024x128xf32>
    tpu.vector_store %arg10[%c0_17, %c0_18], %25 {strides = array<i32>} : memref<1024x128xf32, #tpu.memory_space<vmem>>, vector<1024x128xf32>,
    %c0_i32_19 = arith.constant 0 : i32
    %27 = arith.cmpi eq, %arg3, %c0_i32_19 : i32
    %28 = arith.extui %27 : i1 to i32
    %c0_i32_20 = arith.constant 0 : i32
    %29 = arith.cmpi ne, %28, %c0_i32_20 : i32
    scf.if %29 {
      %c0_21 = arith.constant 0 : index
      %c0_22 = arith.constant 0 : index
      %30 = vector.load %arg10[%c0_21, %c0_22] : memref<1024x128xf32, #tpu.memory_space<vmem>>, vector<1024x128xf32>
      %31 = arith.truncf %30 : vector<1024x128xf32> to vector<1024x128xbf16>
      %c0_23 = arith.constant 0 : index
      %c0_24 = arith.constant 0 : index
      %c0_25 = arith.constant 0 : index
      %32 = vector.load %arg8[%c0_23, %c0_24, %c0_25] : memref<1x1024x128xbf16, #tpu.memory_space<vmem>>, vector<1x1024x128xbf16>
      %33 = vector.shape_cast %32 : vector<1x1024x128xbf16> to vector<1024x128xbf16>
      %34 = vector.shape_cast %31 : vector<1024x128xbf16> to vector<1x1024x128xbf16>
      tpu.vector_store %arg8[%c0_23, %c0_24, %c0_25], %34 {strides = array<i32>} : memref<1x1024x128xbf16, #tpu.memory_space<vmem>>, vector<1x1024x128xbf16>,
      %c0_26 = arith.constant 0 : index
      %c0_27 = arith.constant 0 : index
      %c0_28 = arith.constant 0 : index
      %35 = vector.load %arg9[%c0_26, %c0_27, %c0_28] : memref<1x2x128xf32, #tpu.memory_space<vmem>>, vector<1x1x128xf32>
      %36 = vector.shape_cast %35 : vector<1x1x128xf32> to vector<1x128xf32>
      %cst_29 = arith.constant dense<0.000000e+00> : vector<128xf32>
      %37 = vector.multi_reduction <add>, %30, %cst_29 [0] : vector<1024x128xf32> to vector<128xf32>
      %38 = vector.shape_cast %37 : vector<128xf32> to vector<1x128xf32>
      %39 = arith.addf %36, %38 : vector<1x128xf32>
      %c0_30 = arith.constant 0 : index
      %c0_31 = arith.constant 0 : index
      %c0_32 = arith.constant 0 : index
      %40 = vector.load %arg9[%c0_30, %c0_31, %c0_32] : memref<1x2x128xf32, #tpu.memory_space<vmem>>, vector<1x1x128xf32>
      %41 = vector.shape_cast %40 : vector<1x1x128xf32> to vector<1x128xf32>
      %42 = vector.shape_cast %39 : vector<1x128xf32> to vector<1x1x128xf32>
      tpu.vector_store %arg9[%c0_30, %c0_31, %c0_32], %42 {strides = array<i32>} : memref<1x2x128xf32, #tpu.memory_space<vmem>>, vector<1x1x128xf32>,
      %c0_33 = arith.constant 0 : index
      %c1 = arith.constant 1 : index
      %c0_34 = arith.constant 0 : index
      %43 = vector.load %arg9[%c0_33, %c1, %c0_34] : memref<1x2x128xf32, #tpu.memory_space<vmem>>, vector<1x1x128xf32>
      %44 = vector.shape_cast %43 : vector<1x1x128xf32> to vector<1x128xf32>
      %45 = arith.mulf %30, %30 : vector<1024x128xf32>
      %cst_35 = arith.constant dense<0.000000e+00> : vector<128xf32>
      %46 = vector.multi_reduction <add>, %45, %cst_35 [0] : vector<1024x128xf32> to vector<128xf32>
      %47 = vector.shape_cast %46 : vector<128xf32> to vector<1x128xf32>
      %48 = arith.addf %44, %47 : vector<1x128xf32>
      %c0_36 = arith.constant 0 : index
      %c1_37 = arith.constant 1 : index
      %c0_38 = arith.constant 0 : index
      %49 = vector.load %arg9[%c0_36, %c1_37, %c0_38] : memref<1x2x128xf32, #tpu.memory_space<vmem>>, vector<1x1x128xf32>
      %50 = vector.shape_cast %49 : vector<1x1x128xf32> to vector<1x128xf32>
      %51 = vector.shape_cast %48 : vector<1x128xf32> to vector<1x1x128xf32>
      tpu.vector_store %arg9[%c0_36, %c1_37, %c0_38], %51 {strides = array<i32>} : memref<1x2x128xf32, #tpu.memory_space<vmem>>, vector<1x1x128xf32>,
    } else {
    }
    return
  }
  func.func @transform_0(%arg0: i32, %arg1: i32, %arg2: i32, %arg3: i32) -> (i32, i32, i32) {
    %c0_i32 = arith.constant 0 : i32
    %c0_i32_0 = arith.constant 0 : i32
    return %arg0, %c0_i32, %arg3 : i32, i32, i32
  }
  func.func @transform_1(%arg0: i32, %arg1: i32, %arg2: i32, %arg3: i32) -> (i32, i32, i32) {
    %c0_i32 = arith.constant 0 : i32
    %c0_i32_0 = arith.constant 0 : i32
    return %arg0, %c0_i32, %arg3 : i32, i32, i32
  }
  func.func @transform_2(%arg0: i32, %arg1: i32, %arg2: i32, %arg3: i32) -> (i32, i32, i32) {
    %c0_i32 = arith.constant 0 : i32
    return %arg0, %arg2, %arg3 : i32, i32, i32
  }
  func.func @transform_3(%arg0: i32, %arg1: i32, %arg2: i32, %arg3: i32) -> (i32, i32) {
    %c0_i32 = arith.constant 0 : i32
    return %arg3, %arg1 : i32, i32
  }
  func.func @transform_4(%arg0: i32, %arg1: i32, %arg2: i32, %arg3: i32) -> (i32, i32, i32) {
    %c0_i32 = arith.constant 0 : i32
    return %arg0, %arg2, %arg1 : i32, i32, i32
  }
  func.func @transform_5(%arg0: i32, %arg1: i32, %arg2: i32, %arg3: i32) -> (i32, i32, i32) {
    %c0_i32 = arith.constant 0 : i32
    %c0_i32_0 = arith.constant 0 : i32
    return %arg0, %c0_i32, %arg1 : i32, i32, i32
  }
}

module attributes {stable_mosaic.version = 11 : i64} {
  func.func @_conv_mm_kernel(%arg0: i32, %arg1: i32, %arg2: i32, %arg3: i32, %arg4: memref<1x1x128xf32, #tpu.memory_space<vmem>>, %arg5: memref<1x1x128xf32, #tpu.memory_space<vmem>>, %arg6: memref<1x256x128xbf16, #tpu.memory_space<vmem>>, %arg7: memref<128x128xbf16, #tpu.memory_space<vmem>>, %arg8: memref<1x256x128xbf16, #tpu.memory_space<vmem>>, %arg9: memref<1x2x128xf32, #tpu.memory_space<vmem>>, %arg10: memref<256x128xf32, #tpu.memory_space<vmem>>) attributes {dimension_semantics = [#tpu.dimension_semantics<parallel>, #tpu.dimension_semantics<parallel>, #tpu.dimension_semantics<arbitrary>, #tpu.dimension_semantics<arbitrary>], iteration_bounds = array<i64: 2, 1, 1, 1>, scalar_prefetch = 0 : i64, scratch_operands = 1 : i64, tpu.core_type = #tpu.core_type<tc>, window_params = [{transform_indices = @transform_0, window_bounds = array<i64: 1, 1, 128>}, {transform_indices = @transform_1, window_bounds = array<i64: 1, 1, 128>}, {transform_indices = @transform_2, window_bounds = array<i64: 1, 256, 128>}, {transform_indices = @transform_3, window_bounds = array<i64: 128, 128>}, {transform_indices = @transform_4, window_bounds = array<i64: 1, 256, 128>}, {transform_indices = @transform_5, window_bounds = array<i64: 1, 2, 128>}]} {
    %c0_i32 = arith.constant 0 : i32
    %0 = arith.cmpi eq, %arg3, %c0_i32 : i32
    %1 = arith.extui %0 : i1 to i32
    %c0_i32_0 = arith.constant 0 : i32
    %2 = arith.cmpi ne, %1, %c0_i32_0 : i32
    scf.if %2 {
      %cst_21 = arith.constant 0.000000e+00 : f32
      %30 = vector.broadcast %cst_21 : f32 to vector<256x128xf32>
      %c0_22 = arith.constant 0 : index
      %c0_23 = arith.constant 0 : index
      %31 = vector.load %arg10[%c0_22, %c0_23] : memref<256x128xf32, #tpu.memory_space<vmem>>, vector<256x128xf32>
      tpu.vector_store %arg10[%c0_22, %c0_23], %30 {strides = array<i32>} : memref<256x128xf32, #tpu.memory_space<vmem>>, vector<256x128xf32>,
    } else {
    }
    %c0_i32_1 = arith.constant 0 : i32
    %3 = arith.cmpi eq, %arg2, %c0_i32_1 : i32
    %c0_i32_2 = arith.constant 0 : i32
    %4 = arith.cmpi eq, %arg3, %c0_i32_2 : i32
    %5 = arith.andi %3, %4 : i1
    %6 = arith.extui %5 : i1 to i32
    %c0_i32_3 = arith.constant 0 : i32
    %7 = arith.cmpi ne, %6, %c0_i32_3 : i32
    scf.if %7 {
      %cst_21 = arith.constant 0.000000e+00 : f32
      %30 = vector.broadcast %cst_21 : f32 to vector<2x128xf32>
      %c0_22 = arith.constant 0 : index
      %c0_23 = arith.constant 0 : index
      %c0_24 = arith.constant 0 : index
      %31 = vector.load %arg9[%c0_22, %c0_23, %c0_24] : memref<1x2x128xf32, #tpu.memory_space<vmem>>, vector<1x2x128xf32>
      %32 = vector.shape_cast %31 : vector<1x2x128xf32> to vector<2x128xf32>
      %33 = vector.shape_cast %30 : vector<2x128xf32> to vector<1x2x128xf32>
      tpu.vector_store %arg9[%c0_22, %c0_23, %c0_24], %33 {strides = array<i32>} : memref<1x2x128xf32, #tpu.memory_space<vmem>>, vector<1x2x128xf32>,
    } else {
    }
    %c0 = arith.constant 0 : index
    %c0_4 = arith.constant 0 : index
    %c0_5 = arith.constant 0 : index
    %8 = vector.load %arg6[%c0, %c0_4, %c0_5] : memref<1x256x128xbf16, #tpu.memory_space<vmem>>, vector<1x256x128xbf16>
    %9 = vector.shape_cast %8 : vector<1x256x128xbf16> to vector<256x128xbf16>
    %10 = arith.extf %9 : vector<256x128xbf16> to vector<256x128xf32>
    %c0_6 = arith.constant 0 : index
    %c0_7 = arith.constant 0 : index
    %c0_8 = arith.constant 0 : index
    %11 = vector.load %arg4[%c0_6, %c0_7, %c0_8] : memref<1x1x128xf32, #tpu.memory_space<vmem>>, vector<1x1x128xf32>
    %12 = vector.shape_cast %11 : vector<1x1x128xf32> to vector<1x128xf32>
    %13 = vector.broadcast %12 : vector<1x128xf32> to vector<256x128xf32>
    %14 = arith.mulf %10, %13 : vector<256x128xf32>
    %c0_9 = arith.constant 0 : index
    %c0_10 = arith.constant 0 : index
    %c0_11 = arith.constant 0 : index
    %15 = vector.load %arg5[%c0_9, %c0_10, %c0_11] : memref<1x1x128xf32, #tpu.memory_space<vmem>>, vector<1x1x128xf32>
    %16 = vector.shape_cast %15 : vector<1x1x128xf32> to vector<1x128xf32>
    %17 = vector.broadcast %16 : vector<1x128xf32> to vector<256x128xf32>
    %18 = arith.addf %14, %17 : vector<256x128xf32>
    %cst = arith.constant 0.000000e+00 : f32
    %19 = vector.broadcast %cst : f32 to vector<256x128xf32>
    %20 = arith.maximumf %18, %19 : vector<256x128xf32>
    %21 = arith.truncf %20 : vector<256x128xf32> to vector<256x128xbf16>
    %c0_12 = arith.constant 0 : index
    %c0_13 = arith.constant 0 : index
    %22 = vector.load %arg10[%c0_12, %c0_13] : memref<256x128xf32, #tpu.memory_space<vmem>>, vector<256x128xf32>
    %c0_14 = arith.constant 0 : index
    %c0_15 = arith.constant 0 : index
    %23 = vector.load %arg7[%c0_14, %c0_15] : memref<128x128xbf16, #tpu.memory_space<vmem>>, vector<128x128xbf16>
    %cst_16 = arith.constant dense<0.000000e+00> : vector<256x128xf32>
    %24 = tpu.matmul %21, %23, %cst_16 {dimension_numbers = #tpu.dot_dimension_numbers<[1], [0], [0], [1], [0, 0, 1, 1], [], []>} : vector<256x128xbf16>, vector<128x128xbf16>, vector<256x128xf32> -> vector<256x128xf32>
    %25 = arith.addf %22, %24 : vector<256x128xf32>
    %c0_17 = arith.constant 0 : index
    %c0_18 = arith.constant 0 : index
    %26 = vector.load %arg10[%c0_17, %c0_18] : memref<256x128xf32, #tpu.memory_space<vmem>>, vector<256x128xf32>
    tpu.vector_store %arg10[%c0_17, %c0_18], %25 {strides = array<i32>} : memref<256x128xf32, #tpu.memory_space<vmem>>, vector<256x128xf32>,
    %c0_i32_19 = arith.constant 0 : i32
    %27 = arith.cmpi eq, %arg3, %c0_i32_19 : i32
    %28 = arith.extui %27 : i1 to i32
    %c0_i32_20 = arith.constant 0 : i32
    %29 = arith.cmpi ne, %28, %c0_i32_20 : i32
    scf.if %29 {
      %c0_21 = arith.constant 0 : index
      %c0_22 = arith.constant 0 : index
      %30 = vector.load %arg10[%c0_21, %c0_22] : memref<256x128xf32, #tpu.memory_space<vmem>>, vector<256x128xf32>
      %31 = arith.truncf %30 : vector<256x128xf32> to vector<256x128xbf16>
      %c0_23 = arith.constant 0 : index
      %c0_24 = arith.constant 0 : index
      %c0_25 = arith.constant 0 : index
      %32 = vector.load %arg8[%c0_23, %c0_24, %c0_25] : memref<1x256x128xbf16, #tpu.memory_space<vmem>>, vector<1x256x128xbf16>
      %33 = vector.shape_cast %32 : vector<1x256x128xbf16> to vector<256x128xbf16>
      %34 = vector.shape_cast %31 : vector<256x128xbf16> to vector<1x256x128xbf16>
      tpu.vector_store %arg8[%c0_23, %c0_24, %c0_25], %34 {strides = array<i32>} : memref<1x256x128xbf16, #tpu.memory_space<vmem>>, vector<1x256x128xbf16>,
      %c0_26 = arith.constant 0 : index
      %c0_27 = arith.constant 0 : index
      %c0_28 = arith.constant 0 : index
      %35 = vector.load %arg9[%c0_26, %c0_27, %c0_28] : memref<1x2x128xf32, #tpu.memory_space<vmem>>, vector<1x1x128xf32>
      %36 = vector.shape_cast %35 : vector<1x1x128xf32> to vector<1x128xf32>
      %cst_29 = arith.constant dense<0.000000e+00> : vector<128xf32>
      %37 = vector.multi_reduction <add>, %30, %cst_29 [0] : vector<256x128xf32> to vector<128xf32>
      %38 = vector.shape_cast %37 : vector<128xf32> to vector<1x128xf32>
      %39 = arith.addf %36, %38 : vector<1x128xf32>
      %c0_30 = arith.constant 0 : index
      %c0_31 = arith.constant 0 : index
      %c0_32 = arith.constant 0 : index
      %40 = vector.load %arg9[%c0_30, %c0_31, %c0_32] : memref<1x2x128xf32, #tpu.memory_space<vmem>>, vector<1x1x128xf32>
      %41 = vector.shape_cast %40 : vector<1x1x128xf32> to vector<1x128xf32>
      %42 = vector.shape_cast %39 : vector<1x128xf32> to vector<1x1x128xf32>
      tpu.vector_store %arg9[%c0_30, %c0_31, %c0_32], %42 {strides = array<i32>} : memref<1x2x128xf32, #tpu.memory_space<vmem>>, vector<1x1x128xf32>,
      %c0_33 = arith.constant 0 : index
      %c1 = arith.constant 1 : index
      %c0_34 = arith.constant 0 : index
      %43 = vector.load %arg9[%c0_33, %c1, %c0_34] : memref<1x2x128xf32, #tpu.memory_space<vmem>>, vector<1x1x128xf32>
      %44 = vector.shape_cast %43 : vector<1x1x128xf32> to vector<1x128xf32>
      %45 = arith.mulf %30, %30 : vector<256x128xf32>
      %cst_35 = arith.constant dense<0.000000e+00> : vector<128xf32>
      %46 = vector.multi_reduction <add>, %45, %cst_35 [0] : vector<256x128xf32> to vector<128xf32>
      %47 = vector.shape_cast %46 : vector<128xf32> to vector<1x128xf32>
      %48 = arith.addf %44, %47 : vector<1x128xf32>
      %c0_36 = arith.constant 0 : index
      %c1_37 = arith.constant 1 : index
      %c0_38 = arith.constant 0 : index
      %49 = vector.load %arg9[%c0_36, %c1_37, %c0_38] : memref<1x2x128xf32, #tpu.memory_space<vmem>>, vector<1x1x128xf32>
      %50 = vector.shape_cast %49 : vector<1x1x128xf32> to vector<1x128xf32>
      %51 = vector.shape_cast %48 : vector<1x128xf32> to vector<1x1x128xf32>
      tpu.vector_store %arg9[%c0_36, %c1_37, %c0_38], %51 {strides = array<i32>} : memref<1x2x128xf32, #tpu.memory_space<vmem>>, vector<1x1x128xf32>,
    } else {
    }
    return
  }
  func.func @transform_0(%arg0: i32, %arg1: i32, %arg2: i32, %arg3: i32) -> (i32, i32, i32) {
    %c0_i32 = arith.constant 0 : i32
    %c0_i32_0 = arith.constant 0 : i32
    return %arg0, %c0_i32, %arg3 : i32, i32, i32
  }
  func.func @transform_1(%arg0: i32, %arg1: i32, %arg2: i32, %arg3: i32) -> (i32, i32, i32) {
    %c0_i32 = arith.constant 0 : i32
    %c0_i32_0 = arith.constant 0 : i32
    return %arg0, %c0_i32, %arg3 : i32, i32, i32
  }
  func.func @transform_2(%arg0: i32, %arg1: i32, %arg2: i32, %arg3: i32) -> (i32, i32, i32) {
    %c0_i32 = arith.constant 0 : i32
    return %arg0, %arg2, %arg3 : i32, i32, i32
  }
  func.func @transform_3(%arg0: i32, %arg1: i32, %arg2: i32, %arg3: i32) -> (i32, i32) {
    %c0_i32 = arith.constant 0 : i32
    return %arg3, %arg1 : i32, i32
  }
  func.func @transform_4(%arg0: i32, %arg1: i32, %arg2: i32, %arg3: i32) -> (i32, i32, i32) {
    %c0_i32 = arith.constant 0 : i32
    return %arg0, %arg2, %arg1 : i32, i32, i32
  }
  func.func @transform_5(%arg0: i32, %arg1: i32, %arg2: i32, %arg3: i32) -> (i32, i32, i32) {
    %c0_i32 = arith.constant 0 : i32
    %c0_i32_0 = arith.constant 0 : i32
    return %arg0, %c0_i32, %arg1 : i32, i32, i32
  }
}

module attributes {stable_mosaic.version = 11 : i64} {
  func.func @_mm_kernel(%arg0: i32, %arg1: i32, %arg2: i32, %arg3: memref<128x256xbf16, #tpu.memory_space<vmem>>, %arg4: memref<256x128xbf16, #tpu.memory_space<vmem>>, %arg5: memref<128x128xf32, #tpu.memory_space<vmem>>, %arg6: memref<128x128xf32, #tpu.memory_space<vmem>>) attributes {dimension_semantics = [#tpu.dimension_semantics<parallel>, #tpu.dimension_semantics<parallel>, #tpu.dimension_semantics<arbitrary>], iteration_bounds = array<i64: 1, 1, 1>, scalar_prefetch = 0 : i64, scratch_operands = 1 : i64, tpu.core_type = #tpu.core_type<tc>, window_params = [{transform_indices = @transform_0, window_bounds = array<i64: 128, 256>}, {transform_indices = @transform_1, window_bounds = array<i64: 256, 128>}, {transform_indices = @transform_2, window_bounds = array<i64: 128, 128>}]} {
    %c0_i32 = arith.constant 0 : i32
    %0 = arith.cmpi eq, %arg2, %c0_i32 : i32
    %1 = arith.extui %0 : i1 to i32
    %c0_i32_0 = arith.constant 0 : i32
    %2 = arith.cmpi ne, %1, %c0_i32_0 : i32
    scf.if %2 {
      %cst_10 = arith.constant 0.000000e+00 : f32
      %12 = vector.broadcast %cst_10 : f32 to vector<128x128xf32>
      %c0_11 = arith.constant 0 : index
      %c0_12 = arith.constant 0 : index
      %13 = vector.load %arg6[%c0_11, %c0_12] : memref<128x128xf32, #tpu.memory_space<vmem>>, vector<128x128xf32>
      tpu.vector_store %arg6[%c0_11, %c0_12], %12 {strides = array<i32>} : memref<128x128xf32, #tpu.memory_space<vmem>>, vector<128x128xf32>,
    } else {
    }
    %c0 = arith.constant 0 : index
    %c0_1 = arith.constant 0 : index
    %3 = vector.load %arg6[%c0, %c0_1] : memref<128x128xf32, #tpu.memory_space<vmem>>, vector<128x128xf32>
    %c0_2 = arith.constant 0 : index
    %c0_3 = arith.constant 0 : index
    %4 = vector.load %arg3[%c0_2, %c0_3] : memref<128x256xbf16, #tpu.memory_space<vmem>>, vector<128x256xbf16>
    %c0_4 = arith.constant 0 : index
    %c0_5 = arith.constant 0 : index
    %5 = vector.load %arg4[%c0_4, %c0_5] : memref<256x128xbf16, #tpu.memory_space<vmem>>, vector<256x128xbf16>
    %cst = arith.constant dense<0.000000e+00> : vector<128x128xf32>
    %6 = tpu.matmul %4, %5, %cst {dimension_numbers = #tpu.dot_dimension_numbers<[1], [0], [0], [1], [0, 0, 1, 1], [], []>} : vector<128x256xbf16>, vector<256x128xbf16>, vector<128x128xf32> -> vector<128x128xf32>
    %7 = arith.addf %3, %6 : vector<128x128xf32>
    %c0_6 = arith.constant 0 : index
    %c0_7 = arith.constant 0 : index
    %8 = vector.load %arg6[%c0_6, %c0_7] : memref<128x128xf32, #tpu.memory_space<vmem>>, vector<128x128xf32>
    tpu.vector_store %arg6[%c0_6, %c0_7], %7 {strides = array<i32>} : memref<128x128xf32, #tpu.memory_space<vmem>>, vector<128x128xf32>,
    %c0_i32_8 = arith.constant 0 : i32
    %9 = arith.cmpi eq, %arg2, %c0_i32_8 : i32
    %10 = arith.extui %9 : i1 to i32
    %c0_i32_9 = arith.constant 0 : i32
    %11 = arith.cmpi ne, %10, %c0_i32_9 : i32
    scf.if %11 {
      %c0_10 = arith.constant 0 : index
      %c0_11 = arith.constant 0 : index
      %12 = vector.load %arg6[%c0_10, %c0_11] : memref<128x128xf32, #tpu.memory_space<vmem>>, vector<128x128xf32>
      %c0_12 = arith.constant 0 : index
      %c0_13 = arith.constant 0 : index
      %13 = vector.load %arg5[%c0_12, %c0_13] : memref<128x128xf32, #tpu.memory_space<vmem>>, vector<128x128xf32>
      tpu.vector_store %arg5[%c0_12, %c0_13], %12 {strides = array<i32>} : memref<128x128xf32, #tpu.memory_space<vmem>>, vector<128x128xf32>,
    } else {
    }
    return
  }
  func.func @transform_0(%arg0: i32, %arg1: i32, %arg2: i32) -> (i32, i32) {
    %c0_i32 = arith.constant 0 : i32
    return %arg1, %arg2 : i32, i32
  }
  func.func @transform_1(%arg0: i32, %arg1: i32, %arg2: i32) -> (i32, i32) {
    %c0_i32 = arith.constant 0 : i32
    return %arg2, %arg0 : i32, i32
  }
  func.func @transform_2(%arg0: i32, %arg1: i32, %arg2: i32) -> (i32, i32) {
    %c0_i32 = arith.constant 0 : i32
    return %arg1, %arg0 : i32, i32
  }
}

module attributes {stable_mosaic.version = 11 : i64} {
  func.func @_mm_kernel(%arg0: i32, %arg1: i32, %arg2: i32, %arg3: memref<32x384xbf16, #tpu.memory_space<vmem>>, %arg4: memref<384x128xbf16, #tpu.memory_space<vmem>>, %arg5: memref<32x128xf32, #tpu.memory_space<vmem>>, %arg6: memref<32x128xf32, #tpu.memory_space<vmem>>) attributes {dimension_semantics = [#tpu.dimension_semantics<parallel>, #tpu.dimension_semantics<parallel>, #tpu.dimension_semantics<arbitrary>], iteration_bounds = array<i64: 1, 1, 1>, scalar_prefetch = 0 : i64, scratch_operands = 1 : i64, tpu.core_type = #tpu.core_type<tc>, window_params = [{transform_indices = @transform_0, window_bounds = array<i64: 32, 384>}, {transform_indices = @transform_1, window_bounds = array<i64: 384, 128>}, {transform_indices = @transform_2, window_bounds = array<i64: 32, 128>}]} {
    %c0_i32 = arith.constant 0 : i32
    %0 = arith.cmpi eq, %arg2, %c0_i32 : i32
    %1 = arith.extui %0 : i1 to i32
    %c0_i32_0 = arith.constant 0 : i32
    %2 = arith.cmpi ne, %1, %c0_i32_0 : i32
    scf.if %2 {
      %cst_10 = arith.constant 0.000000e+00 : f32
      %12 = vector.broadcast %cst_10 : f32 to vector<32x128xf32>
      %c0_11 = arith.constant 0 : index
      %c0_12 = arith.constant 0 : index
      %13 = vector.load %arg6[%c0_11, %c0_12] : memref<32x128xf32, #tpu.memory_space<vmem>>, vector<32x128xf32>
      tpu.vector_store %arg6[%c0_11, %c0_12], %12 {strides = array<i32>} : memref<32x128xf32, #tpu.memory_space<vmem>>, vector<32x128xf32>,
    } else {
    }
    %c0 = arith.constant 0 : index
    %c0_1 = arith.constant 0 : index
    %3 = vector.load %arg6[%c0, %c0_1] : memref<32x128xf32, #tpu.memory_space<vmem>>, vector<32x128xf32>
    %c0_2 = arith.constant 0 : index
    %c0_3 = arith.constant 0 : index
    %4 = vector.load %arg3[%c0_2, %c0_3] : memref<32x384xbf16, #tpu.memory_space<vmem>>, vector<32x384xbf16>
    %c0_4 = arith.constant 0 : index
    %c0_5 = arith.constant 0 : index
    %5 = vector.load %arg4[%c0_4, %c0_5] : memref<384x128xbf16, #tpu.memory_space<vmem>>, vector<384x128xbf16>
    %cst = arith.constant dense<0.000000e+00> : vector<32x128xf32>
    %6 = tpu.matmul %4, %5, %cst {dimension_numbers = #tpu.dot_dimension_numbers<[1], [0], [0], [1], [0, 0, 1, 1], [], []>} : vector<32x384xbf16>, vector<384x128xbf16>, vector<32x128xf32> -> vector<32x128xf32>
    %7 = arith.addf %3, %6 : vector<32x128xf32>
    %c0_6 = arith.constant 0 : index
    %c0_7 = arith.constant 0 : index
    %8 = vector.load %arg6[%c0_6, %c0_7] : memref<32x128xf32, #tpu.memory_space<vmem>>, vector<32x128xf32>
    tpu.vector_store %arg6[%c0_6, %c0_7], %7 {strides = array<i32>} : memref<32x128xf32, #tpu.memory_space<vmem>>, vector<32x128xf32>,
    %c0_i32_8 = arith.constant 0 : i32
    %9 = arith.cmpi eq, %arg2, %c0_i32_8 : i32
    %10 = arith.extui %9 : i1 to i32
    %c0_i32_9 = arith.constant 0 : i32
    %11 = arith.cmpi ne, %10, %c0_i32_9 : i32
    scf.if %11 {
      %c0_10 = arith.constant 0 : index
      %c0_11 = arith.constant 0 : index
      %12 = vector.load %arg6[%c0_10, %c0_11] : memref<32x128xf32, #tpu.memory_space<vmem>>, vector<32x128xf32>
      %c0_12 = arith.constant 0 : index
      %c0_13 = arith.constant 0 : index
      %13 = vector.load %arg5[%c0_12, %c0_13] : memref<32x128xf32, #tpu.memory_space<vmem>>, vector<32x128xf32>
      tpu.vector_store %arg5[%c0_12, %c0_13], %12 {strides = array<i32>} : memref<32x128xf32, #tpu.memory_space<vmem>>, vector<32x128xf32>,
    } else {
    }
    return
  }
  func.func @transform_0(%arg0: i32, %arg1: i32, %arg2: i32) -> (i32, i32) {
    %c0_i32 = arith.constant 0 : i32
    return %arg1, %arg2 : i32, i32
  }
  func.func @transform_1(%arg0: i32, %arg1: i32, %arg2: i32) -> (i32, i32) {
    %c0_i32 = arith.constant 0 : i32
    return %arg2, %arg0 : i32, i32
  }
  func.func @transform_2(%arg0: i32, %arg1: i32, %arg2: i32) -> (i32, i32) {
    %c0_i32 = arith.constant 0 : i32
    return %arg1, %arg0 : i32, i32
  }
}

module attributes {stable_mosaic.version = 11 : i64} {
  func.func @_atten_pool_kernel(%arg0: i32, %arg1: memref<2xf32, #tpu.memory_space<smem>>, %arg2: memref<1x1x128xf32, #tpu.memory_space<vmem>>, %arg3: memref<1x1x128xf32, #tpu.memory_space<vmem>>, %arg4: memref<1x16x128xf32, #tpu.memory_space<vmem>>, %arg5: memref<128x128xbf16, #tpu.memory_space<vmem>>, %arg6: memref<1x128xf32, #tpu.memory_space<vmem>>, %arg7: memref<128x128xbf16, #tpu.memory_space<vmem>>, %arg8: memref<1x128xf32, #tpu.memory_space<vmem>>, %arg9: memref<128x128xbf16, #tpu.memory_space<vmem>>, %arg10: memref<1x128xf32, #tpu.memory_space<vmem>>, %arg11: memref<1x128xf32, #tpu.memory_space<vmem>>, %arg12: memref<1x1x128xf32, #tpu.memory_space<vmem>>) attributes {dimension_semantics = [#tpu.dimension_semantics<parallel>], iteration_bounds = array<i64: 2>, scalar_prefetch = 0 : i64, scratch_operands = 0 : i64, tpu.core_type = #tpu.core_type<tc>, window_params = [{transform_indices = @transform_0, window_bounds = array<i64: 2>}, {transform_indices = @transform_1, window_bounds = array<i64: 1, 1, 128>}, {transform_indices = @transform_2, window_bounds = array<i64: 1, 1, 128>}, {transform_indices = @transform_3, window_bounds = array<i64: 1, 16, 128>}, {pipeline_mode = #tpu.pipeline_mode<synchronous>, transform_indices = @transform_4, window_bounds = array<i64: 128, 128>}, {pipeline_mode = #tpu.pipeline_mode<synchronous>, transform_indices = @transform_5, window_bounds = array<i64: 1, 128>}, {pipeline_mode = #tpu.pipeline_mode<synchronous>, transform_indices = @transform_6, window_bounds = array<i64: 128, 128>}, {pipeline_mode = #tpu.pipeline_mode<synchronous>, transform_indices = @transform_7, window_bounds = array<i64: 1, 128>}, {pipeline_mode = #tpu.pipeline_mode<synchronous>, transform_indices = @transform_8, window_bounds = array<i64: 128, 128>}, {pipeline_mode = #tpu.pipeline_mode<synchronous>, transform_indices = @transform_9, window_bounds = array<i64: 1, 128>}, {pipeline_mode = #tpu.pipeline_mode<synchronous>, transform_indices = @transform_10, window_bounds = array<i64: 1, 128>}, {transform_indices = @transform_11, window_bounds = array<i64: 1, 1, 128>}]} {
    %c0 = arith.constant 0 : index
    %c0_0 = arith.constant 0 : index
    %c0_1 = arith.constant 0 : index
    %0 = vector.load %arg4[%c0, %c0_0, %c0_1] : memref<1x16x128xf32, #tpu.memory_space<vmem>>, vector<1x16x128xf32>
    %1 = vector.shape_cast %0 : vector<1x16x128xf32> to vector<16x128xf32>
    %c0_2 = arith.constant 0 : index
    %c0_3 = arith.constant 0 : index
    %c0_4 = arith.constant 0 : index
    %2 = vector.load %arg2[%c0_2, %c0_3, %c0_4] : memref<1x1x128xf32, #tpu.memory_space<vmem>>, vector<1x1x128xf32>
    %3 = vector.shape_cast %2 : vector<1x1x128xf32> to vector<1x128xf32>
    %4 = vector.broadcast %3 : vector<1x128xf32> to vector<16x128xf32>
    %5 = arith.mulf %1, %4 : vector<16x128xf32>
    %c0_5 = arith.constant 0 : index
    %c0_6 = arith.constant 0 : index
    %c0_7 = arith.constant 0 : index
    %6 = vector.load %arg3[%c0_5, %c0_6, %c0_7] : memref<1x1x128xf32, #tpu.memory_space<vmem>>, vector<1x1x128xf32>
    %7 = vector.shape_cast %6 : vector<1x1x128xf32> to vector<1x128xf32>
    %8 = vector.broadcast %7 : vector<1x128xf32> to vector<16x128xf32>
    %9 = arith.addf %5, %8 : vector<16x128xf32>
    %cst = arith.constant 0.000000e+00 : f32
    %10 = vector.broadcast %cst : f32 to vector<16x128xf32>
    %11 = arith.maximumf %9, %10 : vector<16x128xf32>
    %12 = arith.truncf %11 : vector<16x128xf32> to vector<16x128xbf16>
    %c0_8 = arith.constant 0 : index
    %c0_9 = arith.constant 0 : index
    %13 = vector.load %arg5[%c0_8, %c0_9] : memref<128x128xbf16, #tpu.memory_space<vmem>>, vector<128x128xbf16>
    %cst_10 = arith.constant dense<0.000000e+00> : vector<16x128xf32>
    %14 = tpu.matmul %12, %13, %cst_10 {dimension_numbers = #tpu.dot_dimension_numbers<[1], [0], [0], [1], [0, 0, 1, 1], [], []>} : vector<16x128xbf16>, vector<128x128xbf16>, vector<16x128xf32> -> vector<16x128xf32>
    %c0_11 = arith.constant 0 : index
    %c0_12 = arith.constant 0 : index
    %15 = vector.load %arg6[%c0_11, %c0_12] : memref<1x128xf32, #tpu.memory_space<vmem>>, vector<1x128xf32>
    %16 = vector.broadcast %15 : vector<1x128xf32> to vector<16x128xf32>
    %17 = arith.addf %14, %16 : vector<16x128xf32>
    %c0_13 = arith.constant 0 : index
    %c0_14 = arith.constant 0 : index
    %18 = vector.load %arg7[%c0_13, %c0_14] : memref<128x128xbf16, #tpu.memory_space<vmem>>, vector<128x128xbf16>
    %cst_15 = arith.constant dense<0.000000e+00> : vector<16x128xf32>
    %19 = tpu.matmul %12, %18, %cst_15 {dimension_numbers = #tpu.dot_dimension_numbers<[1], [0], [0], [1], [0, 0, 1, 1], [], []>} : vector<16x128xbf16>, vector<128x128xbf16>, vector<16x128xf32> -> vector<16x128xf32>
    %c0_16 = arith.constant 0 : index
    %c0_17 = arith.constant 0 : index
    %20 = vector.load %arg8[%c0_16, %c0_17] : memref<1x128xf32, #tpu.memory_space<vmem>>, vector<1x128xf32>
    %21 = vector.broadcast %20 : vector<1x128xf32> to vector<16x128xf32>
    %22 = arith.addf %19, %21 : vector<16x128xf32>
    %c0_18 = arith.constant 0 : index
    %c0_19 = arith.constant 0 : index
    %23 = vector.load %arg9[%c0_18, %c0_19] : memref<128x128xbf16, #tpu.memory_space<vmem>>, vector<128x128xbf16>
    %cst_20 = arith.constant dense<0.000000e+00> : vector<16x128xf32>
    %24 = tpu.matmul %12, %23, %cst_20 {dimension_numbers = #tpu.dot_dimension_numbers<[1], [0], [0], [1], [0, 0, 1, 1], [], []>} : vector<16x128xbf16>, vector<128x128xbf16>, vector<16x128xf32> -> vector<16x128xf32>
    %c0_21 = arith.constant 0 : index
    %c0_22 = arith.constant 0 : index
    %25 = vector.load %arg10[%c0_21, %c0_22] : memref<1x128xf32, #tpu.memory_space<vmem>>, vector<1x128xf32>
    %26 = vector.broadcast %25 : vector<1x128xf32> to vector<16x128xf32>
    %27 = arith.addf %24, %26 : vector<16x128xf32>
    %28 = arith.truncf %17 : vector<16x128xf32> to vector<16x128xbf16>
    %29 = arith.truncf %22 : vector<16x128xf32> to vector<16x128xbf16>
    %cst_23 = arith.constant dense<0.000000e+00> : vector<16x16xf32>
    %30 = tpu.matmul %28, %29, %cst_23 {dimension_numbers = #tpu.dot_dimension_numbers<[1], [1], [0], [0], [0, 0, 1, 0], [], []>} : vector<16x128xbf16>, vector<16x128xbf16>, vector<16x16xf32> -> vector<16x16xf32>
    %cst_24 = arith.constant dense<0xFF800000> : vector<16xf32>
    %31 = vector.multi_reduction <maximumf>, %30, %cst_24 [1] : vector<16x16xf32> to vector<16xf32>
    %32 = vector.shape_cast %31 : vector<16xf32> to vector<16x1xf32>
    %33 = vector.broadcast %32 : vector<16x1xf32> to vector<16x16xf32>
    %34 = arith.subf %30, %33 : vector<16x16xf32>
    %35 = math.exp %34 : vector<16x16xf32>
    %cst_25 = arith.constant dense<0.000000e+00> : vector<16xf32>
    %36 = vector.multi_reduction <add>, %35, %cst_25 [1] : vector<16x16xf32> to vector<16xf32>
    %37 = vector.shape_cast %36 : vector<16xf32> to vector<16x1xf32>
    %38 = tpu.reciprocal %37 {approx = true} : vector<16x1xf32> -> vector<16x1xf32>
    %39 = vector.broadcast %38 : vector<16x1xf32> to vector<16x16xf32>
    %40 = arith.mulf %35, %39 : vector<16x16xf32>
    %41 = arith.truncf %40 : vector<16x16xf32> to vector<16x16xbf16>
    %42 = arith.truncf %27 : vector<16x128xf32> to vector<16x128xbf16>
    %cst_26 = arith.constant dense<0.000000e+00> : vector<16x128xf32>
    %43 = tpu.matmul %41, %42, %cst_26 {dimension_numbers = #tpu.dot_dimension_numbers<[1], [0], [0], [1], [0, 0, 1, 1], [], []>} : vector<16x16xbf16>, vector<16x128xbf16>, vector<16x128xf32> -> vector<16x128xf32>
    %c0_27 = arith.constant 0 : index
    %44 = memref.load %arg1[%c0_27] : memref<2xf32, #tpu.memory_space<smem>>
    %45 = vector.broadcast %44 : f32 to vector<16x128xf32>
    %46 = arith.mulf %45, %43 : vector<16x128xf32>
    %47 = arith.addf %46, %11 : vector<16x128xf32>
    %c0_28 = arith.constant 0 : index
    %c0_29 = arith.constant 0 : index
    %48 = vector.load %arg11[%c0_28, %c0_29] : memref<1x128xf32, #tpu.memory_space<vmem>>, vector<1x128xf32>
    %49 = vector.broadcast %48 : vector<1x128xf32> to vector<16x128xf32>
    %50 = arith.mulf %47, %49 : vector<16x128xf32>
    %cst_30 = arith.constant dense<0.000000e+00> : vector<16xf32>
    %51 = vector.multi_reduction <add>, %50, %cst_30 [1] : vector<16x128xf32> to vector<16xf32>
    %52 = vector.shape_cast %51 : vector<16xf32> to vector<16x1xf32>
    %c1 = arith.constant 1 : index
    %53 = memref.load %arg1[%c1] : memref<2xf32, #tpu.memory_space<smem>>
    %54 = vector.broadcast %53 : f32 to vector<16x1xf32>
    %55 = arith.addf %52, %54 : vector<16x1xf32>
    %56 = math.tanh %55 : vector<16x1xf32>
    %cst_31 = arith.constant dense<0xFF800000> : vector<1xf32>
    %57 = vector.multi_reduction <maximumf>, %56, %cst_31 [0] : vector<16x1xf32> to vector<1xf32>
    %58 = vector.shape_cast %57 : vector<1xf32> to vector<1x1xf32>
    %59 = vector.broadcast %58 : vector<1x1xf32> to vector<16x1xf32>
    %60 = arith.subf %56, %59 : vector<16x1xf32>
    %61 = math.exp %60 : vector<16x1xf32>
    %cst_32 = arith.constant dense<0.000000e+00> : vector<1xf32>
    %62 = vector.multi_reduction <add>, %61, %cst_32 [0] : vector<16x1xf32> to vector<1xf32>
    %63 = vector.shape_cast %62 : vector<1xf32> to vector<1x1xf32>
    %64 = tpu.reciprocal %63 {approx = true} : vector<1x1xf32> -> vector<1x1xf32>
    %65 = vector.broadcast %64 : vector<1x1xf32> to vector<16x1xf32>
    %66 = arith.mulf %61, %65 : vector<16x1xf32>
    %67 = vector.broadcast %66 : vector<16x1xf32> to vector<16x128xf32>
    %68 = arith.mulf %11, %67 : vector<16x128xf32>
    %cst_33 = arith.constant dense<0.000000e+00> : vector<128xf32>
    %69 = vector.multi_reduction <add>, %68, %cst_33 [0] : vector<16x128xf32> to vector<128xf32>
    %70 = vector.shape_cast %69 : vector<128xf32> to vector<1x128xf32>
    %c0_34 = arith.constant 0 : index
    %c0_35 = arith.constant 0 : index
    %c0_36 = arith.constant 0 : index
    %71 = vector.load %arg12[%c0_34, %c0_35, %c0_36] : memref<1x1x128xf32, #tpu.memory_space<vmem>>, vector<1x1x128xf32>
    %72 = vector.shape_cast %71 : vector<1x1x128xf32> to vector<1x128xf32>
    %73 = vector.shape_cast %70 : vector<1x128xf32> to vector<1x1x128xf32>
    tpu.vector_store %arg12[%c0_34, %c0_35, %c0_36], %73 {strides = array<i32>} : memref<1x1x128xf32, #tpu.memory_space<vmem>>, vector<1x1x128xf32>,
    return
  }
  func.func @transform_0(%arg0: i32) -> i32 {
    %c0_i32 = arith.constant 0 : i32
    %c0_i32_0 = arith.constant 0 : i32
    return %c0_i32 : i32
  }
  func.func @transform_1(%arg0: i32) -> (i32, i32, i32) {
    %c0_i32 = arith.constant 0 : i32
    %c0_i32_0 = arith.constant 0 : i32
    %c0_i32_1 = arith.constant 0 : i32
    return %arg0, %c0_i32, %c0_i32_0 : i32, i32, i32
  }
  func.func @transform_2(%arg0: i32) -> (i32, i32, i32) {
    %c0_i32 = arith.constant 0 : i32
    %c0_i32_0 = arith.constant 0 : i32
    %c0_i32_1 = arith.constant 0 : i32
    return %arg0, %c0_i32, %c0_i32_0 : i32, i32, i32
  }
  func.func @transform_3(%arg0: i32) -> (i32, i32, i32) {
    %c0_i32 = arith.constant 0 : i32
    %c0_i32_0 = arith.constant 0 : i32
    %c0_i32_1 = arith.constant 0 : i32
    return %arg0, %c0_i32, %c0_i32_0 : i32, i32, i32
  }
  func.func @transform_4(%arg0: i32) -> (i32, i32) {
    %c0_i32 = arith.constant 0 : i32
    %c0_i32_0 = arith.constant 0 : i32
    %c0_i32_1 = arith.constant 0 : i32
    return %c0_i32, %c0_i32_0 : i32, i32
  }
  func.func @transform_5(%arg0: i32) -> (i32, i32) {
    %c0_i32 = arith.constant 0 : i32
    %c0_i32_0 = arith.constant 0 : i32
    %c0_i32_1 = arith.constant 0 : i32
    return %c0_i32, %c0_i32_0 : i32, i32
  }
  func.func @transform_6(%arg0: i32) -> (i32, i32) {
    %c0_i32 = arith.constant 0 : i32
    %c0_i32_0 = arith.constant 0 : i32
    %c0_i32_1 = arith.constant 0 : i32
    return %c0_i32, %c0_i32_0 : i32, i32
  }
  func.func @transform_7(%arg0: i32) -> (i32, i32) {
    %c0_i32 = arith.constant 0 : i32
    %c0_i32_0 = arith.constant 0 : i32
    %c0_i32_1 = arith.constant 0 : i32
    return %c0_i32, %c0_i32_0 : i32, i32
  }
  func.func @transform_8(%arg0: i32) -> (i32, i32) {
    %c0_i32 = arith.constant 0 : i32
    %c0_i32_0 = arith.constant 0 : i32
    %c0_i32_1 = arith.constant 0 : i32
    return %c0_i32, %c0_i32_0 : i32, i32
  }
  func.func @transform_9(%arg0: i32) -> (i32, i32) {
    %c0_i32 = arith.constant 0 : i32
    %c0_i32_0 = arith.constant 0 : i32
    %c0_i32_1 = arith.constant 0 : i32
    return %c0_i32, %c0_i32_0 : i32, i32
  }
  func.func @transform_10(%arg0: i32) -> (i32, i32) {
    %c0_i32 = arith.constant 0 : i32
    %c0_i32_0 = arith.constant 0 : i32
    %c0_i32_1 = arith.constant 0 : i32
    return %c0_i32, %c0_i32_0 : i32, i32
  }
  func.func @transform_11(%arg0: i32) -> (i32, i32, i32) {
    %c0_i32 = arith.constant 0 : i32
    %c0_i32_0 = arith.constant 0 : i32
    %c0_i32_1 = arith.constant 0 : i32
    return %arg0, %c0_i32, %c0_i32_0 : i32, i32, i32
  }
}

</mosaic_0001>

<llo_original>
// kernel: ftgan_encoder_atten.6
$region0: #{ftgan_encoder_atten.6}
  #allocation0 [shape = 'u32[]', space=smem, size = 0x4, offset = 0x4, fixed_abs, tag = 'smem constant byte address 0x4 - core index']
  #allocation1 [shape = 'u32[144,128]{1,0:T(1,128)}', space=vmem, size = 0x12000, scoped, tag = 'internal scratch']
  #allocation2 [shape = 'f32[1024,128]{1,0:T(8,128)}', space=vmem, size = 0x80000, scoped, tag = 'scratch operand']
  %s0 = inlined_call_operand.vmem [shape: bf16[2,4096,128], index: 0, kind: input, shape index: {}]
  %s1 = inlined_call_operand.vmem [shape: bf16[128,128], index: 1, kind: input, shape index: {}]
  %s2 = inlined_call_operand.vmem [shape: bf16[2,4096,128], index: 2, kind: output, shape index: {0}]
  %s3 = inlined_call_operand.vmem [shape: f32[2,2,128], index: 3, kind: output, shape index: {1}]
  %4 = xla_tuple %s2, %s3
  %s5 = sld [smem:[#allocation0]]
  $region61: #{ftgan_encoder_atten.6} parent=0
    _
  %s7 = ssub.s32 1, %s5
  %s8 = scalar_select 0, %s7, %s5
  loop: start=0, step=1, limit=10
  $region2: #{ftgan_encoder_atten.6} parent=0 // loop_pre_header
    _
  $region3: #{ftgan_encoder_atten.6} parent=0 // loop_header
    %s10 = sphi 0, %s14
    %p11 = scmp.ge.s32.totalorder %s10, 10
    %s17 = sphi 0, %s43
    %s18 = sphi 0, %s39
    %s19 = sphi 0, %s35
    %s20 = sphi 0, %s31
    %s21 = sphi 0, %s17
    %s22 = sphi 0, %s18
    %s23 = sphi 0, %s19
    %s24 = sphi 0, %s20
    %s25 = sphi 0, %s21
    %s26 = sphi 0, %s22
    %s27 = sphi 0, %s23
    %s28 = sphi 0, %s24
    %s50 = sphi 0, %s52
    %s53 = sphi 0, %s50
    %s54 = sphi 0, %s53
    %s70 = sphi 0, %s54
    %s78 = sphi 0, %s80
    %s81 = sphi 0, %s78
    %s82 = sphi 0, %s81
    %s98 = sphi 0, %s82
    %s108 = sphi 0, %s110
    %s111 = sphi 0, %s108
    %s112 = sphi 0, %s111
    %s128 = sphi 0, %s112
    %s136 = sphi 0, %s138
    %s139 = sphi 0, %s136
    %s140 = sphi 0, %s139
    %s156 = sphi 0, %s140
  $region4: #{ftgan_encoder_atten.6} parent=0 // loop_header_branch
    %13 = sbr.rel (%p11) target = $region8
  $region5: #{ftgan_encoder_atten.6} parent=0 // loop_body
    %s15 = ssub.s32 %s10, 1
    %s16 = ssub.s32 %s10, 2
    %s29 = sadd.s32 1, %s20
    %p30 = scmp.ge.s32.totalorder %s29, 1
    %s31 = scalar_select %p30, 0, %s29
    %s32 = sadd.s32 1, %s19
    %s33 = scalar_select %p30, %s32, %s19
    %p34 = scmp.ge.s32.totalorder %s33, 4
    %s35 = scalar_select %p34, 0, %s33
    %s36 = sadd.s32 1, %s18
    %s37 = scalar_select %p34, %s36, %s18
    %p38 = scmp.ge.s32.totalorder %s37, 1
    %s39 = scalar_select %p38, 0, %s37
    %s40 = sadd.s32 1, %s17
    %s41 = scalar_select %p38, %s40, %s17
    %p42 = scmp.ge.s32.totalorder %s41, 2
    %s43 = scalar_select %p42, 0, %s41
    %s44 = ssub.s32 %s17, %s43
    %s45 = ssub.s32 %s19, %s35
    %s46 = sor.u32 %s44, %s45
    %s47 = ssub.s32 %s20, %s31
    %s48 = sor.u32 %s46, %s47
    %p49 = scmp.eq.s32.totalorder %s48, 0
    %s51 = sadd.s32 %s50, 1
    %s52 = scalar_select %p49, %s50, %s51
    %p55 = pneg %p49
    %p56 = scmp.eq.s32.totalorder %s10, 7
    %p57 = por %p55, %p56
    %p58 = scmp.ne.s32.totalorder %s50, %s53
    %p59 = scmp.eq.s32.totalorder %s10, 0
    %p60 = por %p58, %p59
    %p61 = scmp.ne.s32.totalorder %s50, %s53
    %p62 = scmp.eq.s32.totalorder %s15, 7
    %p63 = por %p61, %p62
    %p64 = scmp.ne.s32.totalorder %s53, %s54
    %p65 = scmp.eq.s32.totalorder %s15, 0
    %p66 = por %p64, %p65
    %p67 = scmp.ne.s32.totalorder %s53, %s54
    %p68 = scmp.eq.s32.totalorder %s16, 7
    %p69 = por %p67, %p68
    %p71 = scmp.ne.s32.totalorder %s54, %s70
    %p72 = scmp.eq.s32.totalorder %s16, 0
    %p73 = por %p71, %p72
    %s74 = ssub.s32 %s20, %s31
    %s75 = ssub.s32 %s18, %s39
    %s76 = sor.u32 %s74, %s75
    %p77 = scmp.eq.s32.totalorder %s76, 0
    %s79 = sadd.s32 %s78, 1
    %s80 = scalar_select %p77, %s78, %s79
    %p83 = pneg %p77
    %p84 = scmp.eq.s32.totalorder %s10, 7
    %p85 = por %p83, %p84
    %p86 = scmp.ne.s32.totalorder %s78, %s81
    %p87 = scmp.eq.s32.totalorder %s10, 0
    %p88 = por %p86, %p87
    %p89 = scmp.ne.s32.totalorder %s78, %s81
    %p90 = scmp.eq.s32.totalorder %s15, 7
    %p91 = por %p89, %p90
    %p92 = scmp.ne.s32.totalorder %s81, %s82
    %p93 = scmp.eq.s32.totalorder %s15, 0
    %p94 = por %p92, %p93
    %p95 = scmp.ne.s32.totalorder %s81, %s82
    %p96 = scmp.eq.s32.totalorder %s16, 7
    %p97 = por %p95, %p96
    %p99 = scmp.ne.s32.totalorder %s82, %s98
    %p100 = scmp.eq.s32.totalorder %s16, 0
    %p101 = por %p99, %p100
    %s102 = ssub.s32 %s17, %s43
    %s103 = ssub.s32 %s19, %s35
    %s104 = sor.u32 %s102, %s103
    %s105 = ssub.s32 %s18, %s39
    %s106 = sor.u32 %s104, %s105
    %p107 = scmp.eq.s32.totalorder %s106, 0
    %s109 = sadd.s32 %s108, 1
    %s110 = scalar_select %p107, %s108, %s109
    %p113 = pneg %p107
    %p114 = scmp.eq.s32.totalorder %s10, 7
    %p115 = por %p113, %p114
    %p116 = scmp.ne.s32.totalorder %s108, %s111
    %p117 = scmp.eq.s32.totalorder %s10, 0
    %p118 = por %p116, %p117
    %p119 = scmp.ne.s32.totalorder %s108, %s111
    %p120 = scmp.eq.s32.totalorder %s15, 7
    %p121 = por %p119, %p120
    %p122 = scmp.ne.s32.totalorder %s111, %s112
    %p123 = scmp.eq.s32.totalorder %s15, 0
    %p124 = por %p122, %p123
    %p125 = scmp.ne.s32.totalorder %s111, %s112
    %p126 = scmp.eq.s32.totalorder %s16, 7
    %p127 = por %p125, %p126
    %p129 = scmp.ne.s32.totalorder %s112, %s128
    %p130 = scmp.eq.s32.totalorder %s16, 0
    %p131 = por %p129, %p130
    %s132 = ssub.s32 %s17, %s43
    %s133 = ssub.s32 %s18, %s39
    %s134 = sor.u32 %s132, %s133
    %p135 = scmp.eq.s32.totalorder %s134, 0
    %s137 = sadd.s32 %s136, 1
    %s138 = scalar_select %p135, %s136, %s137
    %p141 = pneg %p135
    %p142 = scmp.eq.s32.totalorder %s10, 7
    %p143 = por %p141, %p142
    %p144 = scmp.ne.s32.totalorder %s136, %s139
    %p145 = scmp.eq.s32.totalorder %s10, 0
    %p146 = por %p144, %p145
    %p147 = scmp.ne.s32.totalorder %s136, %s139
    %p148 = scmp.eq.s32.totalorder %s15, 7
    %p149 = por %p147, %p148
    %p150 = scmp.ne.s32.totalorder %s139, %s140
    %p151 = scmp.eq.s32.totalorder %s15, 0
    %p152 = por %p150, %p151
    %p153 = scmp.ne.s32.totalorder %s139, %s140
    %p154 = scmp.eq.s32.totalorder %s16, 7
    %p155 = por %p153, %p154
    %p157 = scmp.ne.s32.totalorder %s140, %s156
    %p158 = scmp.eq.s32.totalorder %s16, 0
    %p159 = por %p157, %p158
    %p160 = scmp.le.s32.totalorder 1, %s10
    %p161 = scmp.lt.s32.totalorder %s10, 9
    %p162 = pnand %p160, %p161
    %p163 = pneg %p162
    // Predicated region
    $region9: #{ftgan_encoder_atten.6} parent=5 // pred_check
      _
    $region10: #{ftgan_encoder_atten.6} parent=5 // pred_check_branch
      %165 = sbr.rel (%p162) target = $region12
    $region11: #{ftgan_encoder_atten.6} parent=5 // pred_region
      %s166 = ssub.s32 %s10, 1
      // Predicated region
      $region13: #{ftgan_encoder_atten.6} parent=11 // pred_check
        %p167 = pneg %p94
      $region14: #{ftgan_encoder_atten.6} parent=11 // pred_check_branch
        %169 = sbr.rel (%p167) target = $region16
      $region15: #{ftgan_encoder_atten.6} parent=11 // pred_region
        %s170 = smul.u32 16, %s24
        %p171 = scmp.lt.s32.totalorder %s170, 15
        %s172 = scalar_select %p171, %s170, 15
        %p173 = scmp.lt.s32.totalorder %s22, 0
        %s174 = scalar_select %p173, %s22, 0
        %s175 = sadd.s32 %s174, %s172
        %s176 = smul.addr %s175, 4
        %s177 = scalar_lea.vmem %s1, %s176
        %s178 = smul.u32 16, %s24
      $region16: #{ftgan_encoder_atten.6} parent=11 // pred_fallthru
        _
    $region12: #{ftgan_encoder_atten.6} parent=5 // pred_fallthru
      _
    %p179 = scmp.lt.s32.totalorder %s10, 8
    // Predicated region
    $region17: #{ftgan_encoder_atten.6} parent=5 // pred_check
      %p180 = pneg %p179
    $region18: #{ftgan_encoder_atten.6} parent=5 // pred_check_branch
      %182 = sbr.rel (%p180) target = $region20
    $region19: #{ftgan_encoder_atten.6} parent=5 // pred_region
      // Predicated region
      $region21: #{ftgan_encoder_atten.6} parent=19 // pred_check
        %p183 = pneg %p60
      $region22: #{ftgan_encoder_atten.6} parent=19 // pred_check_branch
        %185 = sbr.rel (%p183) target = $region24
      $region23: #{ftgan_encoder_atten.6} parent=19 // pred_region
        %s186 = smul.u32 128, %s19
        %p187 = scmp.lt.s32.totalorder %s17, 1
        %s188 = scalar_select %p187, %s17, 1
        %p189 = scmp.lt.s32.totalorder %s186, 511
        %s190 = scalar_select %p189, %s186, 511
        %p191 = scmp.lt.s32.totalorder %s20, 0
        %s192 = scalar_select %p191, %s20, 0
        %s193 = sadd.s32 %s192, %s190
        %s194 = smul.addr %s188, 512
        %s195 = sadd.s32 %s193, %s194
        %s196 = smul.addr %s195, 4
        %s197 = scalar_lea.vmem %s0, %s196
        %s198 = smul.u32 128, %s19
      $region24: #{ftgan_encoder_atten.6} parent=19 // pred_fallthru
        _
    $region20: #{ftgan_encoder_atten.6} parent=5 // pred_fallthru
      _
    %p199 = scmp.le.s32.totalorder 1, %s10
    %p200 = scmp.lt.s32.totalorder %s10, 9
    %p201 = pnand %p199, %p200
    %p202 = pneg %p201
    // Predicated region
    $region25: #{ftgan_encoder_atten.6} parent=5 // pred_check
      _
    $region26: #{ftgan_encoder_atten.6} parent=5 // pred_check_branch
      %204 = sbr.rel (%p201) target = $region28
    $region27: #{ftgan_encoder_atten.6} parent=5 // pred_region
      %s205 = ssub.s32 %s10, 1
      %s206 = smul.u32 128, %s23
      %p207 = scmp.lt.s32.totalorder %s21, 1
      %s208 = scalar_select %p207, %s21, 1
      %p209 = scmp.lt.s32.totalorder %s206, 511
      %s210 = scalar_select %p209, %s206, 511
      %p211 = scmp.lt.s32.totalorder %s24, 0
      %s212 = scalar_select %p211, %s24, 0
      %s213 = sadd.s32 %s212, %s210
      %s214 = smul.addr %s208, 512
      %s215 = sadd.s32 %s213, %s214
      %s216 = smul.addr %s215, 4
      %s217 = scalar_lea.vmem %s0, %s216
      %p218 = pneg %p66
      %p219 = pneg %p63
      %s220 = smul.u32 16, %s24
      %p221 = scmp.lt.s32.totalorder %s220, 15
      %s222 = scalar_select %p221, %s220, 15
      %p223 = scmp.lt.s32.totalorder %s22, 0
      %s224 = scalar_select %p223, %s22, 0
      %s225 = sadd.s32 %s224, %s222
      %s226 = smul.addr %s225, 4
      %s227 = scalar_lea.vmem %s1, %s226
      %p228 = pneg %p94
      %p229 = pneg %p91
      %p230 = pneg %p124
      %p231 = pneg %p121
      %s232 = smul.u32 128, %s23
      %p233 = scmp.lt.s32.totalorder %s21, 1
      %s234 = scalar_select %p233, %s21, 1
      %p235 = scmp.lt.s32.totalorder %s232, 511
      %s236 = scalar_select %p235, %s232, 511
      %p237 = scmp.lt.s32.totalorder %s22, 0
      %s238 = scalar_select %p237, %s22, 0
      %s239 = sadd.s32 %s238, %s236
      %s240 = smul.addr %s234, 512
      %s241 = sadd.s32 %s239, %s240
      %s242 = smul.addr %s241, 4
      %s243 = scalar_lea.vmem %s2, %s242
      %p244 = pneg %p152
      %p245 = pneg %p149
      %p246 = scmp.lt.s32.totalorder %s21, 1
      %s247 = scalar_select %p246, %s21, 1
      %p248 = scmp.lt.s32.totalorder %s22, 0
      %s249 = scalar_select %p248, %s22, 0
      %s250 = sadd.s32 %s249, %s247
      %s251 = smul.addr %s250, 2
      %s252 = scalar_lea.vmem %s3, %s251
      %s253 = smul.u32 128, %s23
      %p254 = scmp.lt.s32.totalorder %s21, 1
      %s255 = scalar_select %p254, %s21, 1
      %p256 = scmp.lt.s32.totalorder %s253, 511
      %s257 = scalar_select %p256, %s253, 511
      %p258 = scmp.lt.s32.totalorder %s24, 0
      %s259 = scalar_select %p258, %s24, 0
      %s260 = sadd.s32 %s259, %s257
      %s261 = smul.addr %s255, 512
      %s262 = sadd.s32 %s260, %s261
      %s263 = smul.addr %s262, 4
      %s264 = scalar_lea.vmem %s0, %s263
      %s265 = smul.u32 128, %s23
      %s266 = smul.u32 16, %s24
      %p267 = scmp.lt.s32.totalorder %s266, 15
      %s268 = scalar_select %p267, %s266, 15
      %p269 = scmp.lt.s32.totalorder %s22, 0
      %s270 = scalar_select %p269, %s22, 0
      %s271 = sadd.s32 %s270, %s268
      %s272 = smul.addr %s271, 4
      %s273 = scalar_lea.vmem %s1, %s272
      %s274 = smul.u32 16, %s24
      %s275 = smul.u32 128, %s23
      %p276 = scmp.lt.s32.totalorder %s21, 1
      %s277 = scalar_select %p276, %s21, 1
      %p278 = scmp.lt.s32.totalorder %s275, 511
      %s279 = scalar_select %p278, %s275, 511
      %p280 = scmp.lt.s32.totalorder %s22, 0
      %s281 = scalar_select %p280, %s22, 0
      %s282 = sadd.s32 %s281, %s279
      %s283 = smul.addr %s277, 512
      %s284 = sadd.s32 %s282, %s283
      %s285 = smul.addr %s284, 4
      %s286 = scalar_lea.vmem %s2, %s285
      %s287 = smul.u32 128, %s23
      %p288 = scmp.lt.s32.totalorder %s21, 1
      %s289 = scalar_select %p288, %s21, 1
      %p290 = scmp.lt.s32.totalorder %s22, 0
      %s291 = scalar_select %p290, %s22, 0
      %s292 = sadd.s32 %s291, %s289
      %s293 = smul.addr %s292, 2
      %s294 = scalar_lea.vmem %s3, %s293
      %p296 = scmp.eq.s32.totalorder %s24, 0
      // Predicated region
      $region29: #{ftgan_encoder_atten.6} parent=27 // pred_check
        %p297 = pneg %p296
      $region30: #{ftgan_encoder_atten.6} parent=27 // pred_check_branch
        %299 = sbr.rel (%p297) target = $region32
      $region31: #{ftgan_encoder_atten.6} parent=27 // pred_region
        %300 = vst [vmem:[#allocation2] sm:$0xff] 0.0
        %301 = vst [vmem:[#allocation2 + $0x8] sm:$0xff] 0.0
        %302 = vst [vmem:[#allocation2 + $0x10] sm:$0xff] 0.0
        %303 = vst [vmem:[#allocation2 + $0x18] sm:$0xff] 0.0
        %304 = vst [vmem:[#allocation2 + $0x20] sm:$0xff] 0.0
        %305 = vst [vmem:[#allocation2 + $0x28] sm:$0xff] 0.0
        %306 = vst [vmem:[#allocation2 + $0x30] sm:$0xff] 0.0
        %307 = vst [vmem:[#allocation2 + $0x38] sm:$0xff] 0.0
        %308 = vst [vmem:[#allocation2 + $0x40] sm:$0xff] 0.0
        %309 = vst [vmem:[#allocation2 + $0x48] sm:$0xff] 0.0
        %310 = vst [vmem:[#allocation2 + $0x50] sm:$0xff] 0.0
        %311 = vst [vmem:[#allocation2 + $0x58] sm:$0xff] 0.0
        %312 = vst [vmem:[#allocation2 + $0x60] sm:$0xff] 0.0
        %313 = vst [vmem:[#allocation2 + $0x68] sm:$0xff] 0.0
        %314 = vst [vmem:[#allocation2 + $0x70] sm:$0xff] 0.0
        %315 = vst [vmem:[#allocation2 + $0x78] sm:$0xff] 0.0
        %316 = vst [vmem:[#allocation2 + $0x80] sm:$0xff] 0.0
        %317 = vst [vmem:[#allocation2 + $0x88] sm:$0xff] 0.0
        %318 = vst [vmem:[#allocation2 + $0x90] sm:$0xff] 0.0
        %319 = vst [vmem:[#allocation2 + $0x98] sm:$0xff] 0.0
        %320 = vst [vmem:[#allocation2 + $0xa0] sm:$0xff] 0.0
        %321 = vst [vmem:[#allocation2 + $0xa8] sm:$0xff] 0.0
        %322 = vst [vmem:[#allocation2 + $0xb0] sm:$0xff] 0.0
        %323 = vst [vmem:[#allocation2 + $0xb8] sm:$0xff] 0.0
        %324 = vst [vmem:[#allocation2 + $0xc0] sm:$0xff] 0.0
        %325 = vst [vmem:[#allocation2 + $0xc8] sm:$0xff] 0.0
        %326 = vst [vmem:[#allocation2 + $0xd0] sm:$0xff] 0.0
        %327 = vst [vmem:[#allocation2 + $0xd8] sm:$0xff] 0.0
        %328 = vst [vmem:[#allocation2 + $0xe0] sm:$0xff] 0.0
        %329 = vst [vmem:[#allocation2 + $0xe8] sm:$0xff] 0.0
        %330 = vst [vmem:[#allocation2 + $0xf0] sm:$0xff] 0.0
        %331 = vst [vmem:[#allocation2 + $0xf8] sm:$0xff] 0.0
        %332 = vst [vmem:[#allocation2 + $0x100] sm:$0xff] 0.0
        %333 = vst [vmem:[#allocation2 + $0x108] sm:$0xff] 0.0
        %334 = vst [vmem:[#allocation2 + $0x110] sm:$0xff] 0.0
        %335 = vst [vmem:[#allocation2 + $0x118] sm:$0xff] 0.0
        %336 = vst [vmem:[#allocation2 + $0x120] sm:$0xff] 0.0
        %337 = vst [vmem:[#allocation2 + $0x128] sm:$0xff] 0.0
        %338 = vst [vmem:[#allocation2 + $0x130] sm:$0xff] 0.0
        %339 = vst [vmem:[#allocation2 + $0x138] sm:$0xff] 0.0
        %340 = vst [vmem:[#allocation2 + $0x140] sm:$0xff] 0.0
        %341 = vst [vmem:[#allocation2 + $0x148] sm:$0xff] 0.0
        %342 = vst [vmem:[#allocation2 + $0x150] sm:$0xff] 0.0
        %343 = vst [vmem:[#allocation2 + $0x158] sm:$0xff] 0.0
        %344 = vst [vmem:[#allocation2 + $0x160] sm:$0xff] 0.0
        %345 = vst [vmem:[#allocation2 + $0x168] sm:$0xff] 0.0
        %346 = vst [vmem:[#allocation2 + $0x170] sm:$0xff] 0.0
        %347 = vst [vmem:[#allocation2 + $0x178] sm:$0xff] 0.0
        %348 = vst [vmem:[#allocation2 + $0x180] sm:$0xff] 0.0
        %349 = vst [vmem:[#allocation2 + $0x188] sm:$0xff] 0.0
        %350 = vst [vmem:[#allocation2 + $0x190] sm:$0xff] 0.0
        %351 = vst [vmem:[#allocation2 + $0x198] sm:$0xff] 0.0
        %352 = vst [vmem:[#allocation2 + $0x1a0] sm:$0xff] 0.0
        %353 = vst [vmem:[#allocation2 + $0x1a8] sm:$0xff] 0.0
        %354 = vst [vmem:[#allocation2 + $0x1b0] sm:$0xff] 0.0
        %355 = vst [vmem:[#allocation2 + $0x1b8] sm:$0xff] 0.0
        %356 = vst [vmem:[#allocation2 + $0x1c0] sm:$0xff] 0.0
        %357 = vst [vmem:[#allocation2 + $0x1c8] sm:$0xff] 0.0
        %358 = vst [vmem:[#allocation2 + $0x1d0] sm:$0xff] 0.0
        %359 = vst [vmem:[#allocation2 + $0x1d8] sm:$0xff] 0.0
        %360 = vst [vmem:[#allocation2 + $0x1e0] sm:$0xff] 0.0
        %361 = vst [vmem:[#allocation2 + $0x1e8] sm:$0xff] 0.0
        %362 = vst [vmem:[#allocation2 + $0x1f0] sm:$0xff] 0.0
        %363 = vst [vmem:[#allocation2 + $0x1f8] sm:$0xff] 0.0
        %364 = vst [vmem:[#allocation2 + $0x200] sm:$0xff] 0.0
        %365 = vst [vmem:[#allocation2 + $0x208] sm:$0xff] 0.0
        %366 = vst [vmem:[#allocation2 + $0x210] sm:$0xff] 0.0
        %367 = vst [vmem:[#allocation2 + $0x218] sm:$0xff] 0.0
        %368 = vst [vmem:[#allocation2 + $0x220] sm:$0xff] 0.0
        %369 = vst [vmem:[#allocation2 + $0x228] sm:$0xff] 0.0
        %370 = vst [vmem:[#allocation2 + $0x230] sm:$0xff] 0.0
        %371 = vst [vmem:[#allocation2 + $0x238] sm:$0xff] 0.0
        %372 = vst [vmem:[#allocation2 + $0x240] sm:$0xff] 0.0
        %373 = vst [vmem:[#allocation2 + $0x248] sm:$0xff] 0.0
        %374 = vst [vmem:[#allocation2 + $0x250] sm:$0xff] 0.0
        %375 = vst [vmem:[#allocation2 + $0x258] sm:$0xff] 0.0
        %376 = vst [vmem:[#allocation2 + $0x260] sm:$0xff] 0.0
        %377 = vst [vmem:[#allocation2 + $0x268] sm:$0xff] 0.0
        %378 = vst [vmem:[#allocation2 + $0x270] sm:$0xff] 0.0
        %379 = vst [vmem:[#allocation2 + $0x278] sm:$0xff] 0.0
        %380 = vst [vmem:[#allocation2 + $0x280] sm:$0xff] 0.0
        %381 = vst [vmem:[#allocation2 + $0x288] sm:$0xff] 0.0
        %382 = vst [vmem:[#allocation2 + $0x290] sm:$0xff] 0.0
        %383 = vst [vmem:[#allocation2 + $0x298] sm:$0xff] 0.0
        %384 = vst [vmem:[#allocation2 + $0x2a0] sm:$0xff] 0.0
        %385 = vst [vmem:[#allocation2 + $0x2a8] sm:$0xff] 0.0
        %386 = vst [vmem:[#allocation2 + $0x2b0] sm:$0xff] 0.0
        %387 = vst [vmem:[#allocation2 + $0x2b8] sm:$0xff] 0.0
        %388 = vst [vmem:[#allocation2 + $0x2c0] sm:$0xff] 0.0
        %389 = vst [vmem:[#allocation2 + $0x2c8] sm:$0xff] 0.0
        %390 = vst [vmem:[#allocation2 + $0x2d0] sm:$0xff] 0.0
        %391 = vst [vmem:[#allocation2 + $0x2d8] sm:$0xff] 0.0
        %392 = vst [vmem:[#allocation2 + $0x2e0] sm:$0xff] 0.0
        %393 = vst [vmem:[#allocation2 + $0x2e8] sm:$0xff] 0.0
        %394 = vst [vmem:[#allocation2 + $0x2f0] sm:$0xff] 0.0
        %395 = vst [vmem:[#allocation2 + $0x2f8] sm:$0xff] 0.0
        %396 = vst [vmem:[#allocation2 + $0x300] sm:$0xff] 0.0
        %397 = vst [vmem:[#allocation2 + $0x308] sm:$0xff] 0.0
        %398 = vst [vmem:[#allocation2 + $0x310] sm:$0xff] 0.0
        %399 = vst [vmem:[#allocation2 + $0x318] sm:$0xff] 0.0
        %400 = vst [vmem:[#allocation2 + $0x320] sm:$0xff] 0.0
        %401 = vst [vmem:[#allocation2 + $0x328] sm:$0xff] 0.0
        %402 = vst [vmem:[#allocation2 + $0x330] sm:$0xff] 0.0
        %403 = vst [vmem:[#allocation2 + $0x338] sm:$0xff] 0.0
        %404 = vst [vmem:[#allocation2 + $0x340] sm:$0xff] 0.0
        %405 = vst [vmem:[#allocation2 + $0x348] sm:$0xff] 0.0
        %406 = vst [vmem:[#allocation2 + $0x350] sm:$0xff] 0.0
        %407 = vst [vmem:[#allocation2 + $0x358] sm:$0xff] 0.0
        %408 = vst [vmem:[#allocation2 + $0x360] sm:$0xff] 0.0
        %409 = vst [vmem:[#allocation2 + $0x368] sm:$0xff] 0.0
        %410 = vst [vmem:[#allocation2 + $0x370] sm:$0xff] 0.0
        %411 = vst [vmem:[#allocation2 + $0x378] sm:$0xff] 0.0
        %412 = vst [vmem:[#allocation2 + $0x380] sm:$0xff] 0.0
        %413 = vst [vmem:[#allocation2 + $0x388] sm:$0xff] 0.0
        %414 = vst [vmem:[#allocation2 + $0x390] sm:$0xff] 0.0
        %415 = vst [vmem:[#allocation2 + $0x398] sm:$0xff] 0.0
        %416 = vst [vmem:[#allocation2 + $0x3a0] sm:$0xff] 0.0
        %417 = vst [vmem:[#allocation2 + $0x3a8] sm:$0xff] 0.0
        %418 = vst [vmem:[#allocation2 + $0x3b0] sm:$0xff] 0.0
        %419 = vst [vmem:[#allocation2 + $0x3b8] sm:$0xff] 0.0
        %420 = vst [vmem:[#allocation2 + $0x3c0] sm:$0xff] 0.0
        %421 = vst [vmem:[#allocation2 + $0x3c8] sm:$0xff] 0.0
        %422 = vst [vmem:[#allocation2 + $0x3d0] sm:$0xff] 0.0
        %423 = vst [vmem:[#allocation2 + $0x3d8] sm:$0xff] 0.0
        %424 = vst [vmem:[#allocation2 + $0x3e0] sm:$0xff] 0.0
        %425 = vst [vmem:[#allocation2 + $0x3e8] sm:$0xff] 0.0
        %426 = vst [vmem:[#allocation2 + $0x3f0] sm:$0xff] 0.0
        %427 = vst [vmem:[#allocation2 + $0x3f8] sm:$0xff] 0.0
      $region32: #{ftgan_encoder_atten.6} parent=27 // pred_fallthru
        _
      %p428 = scmp.eq.s32.totalorder %s23, 0
      %p429 = pnand %p428, %p296
      %p430 = pneg %p429
      // Predicated region
      $region33: #{ftgan_encoder_atten.6} parent=27 // pred_check
        _
      $region34: #{ftgan_encoder_atten.6} parent=27 // pred_check_branch
        %432 = sbr.rel (%p429) target = $region36
      $region35: #{ftgan_encoder_atten.6} parent=27 // pred_region
        %433 = vst [vmem:[%s294] sm:$0x3] 0.0
      $region36: #{ftgan_encoder_atten.6} parent=27 // pred_fallthru
        _
      %v434 = vld [vmem:[%s264] sm:$0xf]
      %v435 = vld [vmem:[%s264 + $0x4] sm:$0xf]
      %v436 = vld [vmem:[%s264 + $0x8] sm:$0xf]
      %v437 = vld [vmem:[%s264 + $0xc] sm:$0xf]
      %v438 = vld [vmem:[%s264 + $0x10] sm:$0xf]
      %v439 = vld [vmem:[%s264 + $0x14] sm:$0xf]
      %v440 = vld [vmem:[%s264 + $0x18] sm:$0xf]
      %v441 = vld [vmem:[%s264 + $0x1c] sm:$0xf]
      %v442 = vld [vmem:[%s264 + $0x20] sm:$0xf]
      %v443 = vld [vmem:[%s264 + $0x24] sm:$0xf]
      %v444 = vld [vmem:[%s264 + $0x28] sm:$0xf]
      %v445 = vld [vmem:[%s264 + $0x2c] sm:$0xf]
      %v446 = vld [vmem:[%s264 + $0x30] sm:$0xf]
      %v447 = vld [vmem:[%s264 + $0x34] sm:$0xf]
      %v448 = vld [vmem:[%s264 + $0x38] sm:$0xf]
      %v449 = vld [vmem:[%s264 + $0x3c] sm:$0xf]
      %v450 = vld [vmem:[%s264 + $0x40] sm:$0xf]
      %v451 = vld [vmem:[%s264 + $0x44] sm:$0xf]
      %v452 = vld [vmem:[%s264 + $0x48] sm:$0xf]
      %v453 = vld [vmem:[%s264 + $0x4c] sm:$0xf]
      %v454 = vld [vmem:[%s264 + $0x50] sm:$0xf]
      %v455 = vld [vmem:[%s264 + $0x54] sm:$0xf]
      %v456 = vld [vmem:[%s264 + $0x58] sm:$0xf]
      %v457 = vld [vmem:[%s264 + $0x5c] sm:$0xf]
      %v458 = vld [vmem:[%s264 + $0x60] sm:$0xf]
      %v459 = vld [vmem:[%s264 + $0x64] sm:$0xf]
      %v460 = vld [vmem:[%s264 + $0x68] sm:$0xf]
      %v461 = vld [vmem:[%s264 + $0x6c] sm:$0xf]
      %v462 = vld [vmem:[%s264 + $0x70] sm:$0xf]
      %v463 = vld [vmem:[%s264 + $0x74] sm:$0xf]
      %v464 = vld [vmem:[%s264 + $0x78] sm:$0xf]
      %v465 = vld [vmem:[%s264 + $0x7c] sm:$0xf]
      %v466 = vld [vmem:[%s264 + $0x80] sm:$0xf]
      %v467 = vld [vmem:[%s264 + $0x84] sm:$0xf]
      %v468 = vld [vmem:[%s264 + $0x88] sm:$0xf]
      %v469 = vld [vmem:[%s264 + $0x8c] sm:$0xf]
      %v470 = vld [vmem:[%s264 + $0x90] sm:$0xf]
      %v471 = vld [vmem:[%s264 + $0x94] sm:$0xf]
      %v472 = vld [vmem:[%s264 + $0x98] sm:$0xf]
      %v473 = vld [vmem:[%s264 + $0x9c] sm:$0xf]
      %v474 = vld [vmem:[%s264 + $0xa0] sm:$0xf]
      %v475 = vld [vmem:[%s264 + $0xa4] sm:$0xf]
      %v476 = vld [vmem:[%s264 + $0xa8] sm:$0xf]
      %v477 = vld [vmem:[%s264 + $0xac] sm:$0xf]
      %v478 = vld [vmem:[%s264 + $0xb0] sm:$0xf]
      %v479 = vld [vmem:[%s264 + $0xb4] sm:$0xf]
      %v480 = vld [vmem:[%s264 + $0xb8] sm:$0xf]
      %v481 = vld [vmem:[%s264 + $0xbc] sm:$0xf]
      %v482 = vld [vmem:[%s264 + $0xc0] sm:$0xf]
      %v483 = vld [vmem:[%s264 + $0xc4] sm:$0xf]
      %v484 = vld [vmem:[%s264 + $0xc8] sm:$0xf]
      %v485 = vld [vmem:[%s264 + $0xcc] sm:$0xf]
      %v486 = vld [vmem:[%s264 + $0xd0] sm:$0xf]
      %v487 = vld [vmem:[%s264 + $0xd4] sm:$0xf]
      %v488 = vld [vmem:[%s264 + $0xd8] sm:$0xf]
      %v489 = vld [vmem:[%s264 + $0xdc] sm:$0xf]
      %v490 = vld [vmem:[%s264 + $0xe0] sm:$0xf]
      %v491 = vld [vmem:[%s264 + $0xe4] sm:$0xf]
      %v492 = vld [vmem:[%s264 + $0xe8] sm:$0xf]
      %v493 = vld [vmem:[%s264 + $0xec] sm:$0xf]
      %v494 = vld [vmem:[%s264 + $0xf0] sm:$0xf]
      %v495 = vld [vmem:[%s264 + $0xf4] sm:$0xf]
      %v496 = vld [vmem:[%s264 + $0xf8] sm:$0xf]
      %v497 = vld [vmem:[%s264 + $0xfc] sm:$0xf]
      %v498 = vld [vmem:[%s264 + $0x100] sm:$0xf]
      %v499 = vld [vmem:[%s264 + $0x104] sm:$0xf]
      %v500 = vld [vmem:[%s264 + $0x108] sm:$0xf]
      %v501 = vld [vmem:[%s264 + $0x10c] sm:$0xf]
      %v502 = vld [vmem:[%s264 + $0x110] sm:$0xf]
      %v503 = vld [vmem:[%s264 + $0x114] sm:$0xf]
      %v504 = vld [vmem:[%s264 + $0x118] sm:$0xf]
      %v505 = vld [vmem:[%s264 + $0x11c] sm:$0xf]
      %v506 = vld [vmem:[%s264 + $0x120] sm:$0xf]
      %v507 = vld [vmem:[%s264 + $0x124] sm:$0xf]
      %v508 = vld [vmem:[%s264 + $0x128] sm:$0xf]
      %v509 = vld [vmem:[%s264 + $0x12c] sm:$0xf]
      %v510 = vld [vmem:[%s264 + $0x130] sm:$0xf]
      %v511 = vld [vmem:[%s264 + $0x134] sm:$0xf]
      %v512 = vld [vmem:[%s264 + $0x138] sm:$0xf]
      %v513 = vld [vmem:[%s264 + $0x13c] sm:$0xf]
      %v514 = vld [vmem:[%s264 + $0x140] sm:$0xf]
      %v515 = vld [vmem:[%s264 + $0x144] sm:$0xf]
      %v516 = vld [vmem:[%s264 + $0x148] sm:$0xf]
      %v517 = vld [vmem:[%s264 + $0x14c] sm:$0xf]
      %v518 = vld [vmem:[%s264 + $0x150] sm:$0xf]
      %v519 = vld [vmem:[%s264 + $0x154] sm:$0xf]
      %v520 = vld [vmem:[%s264 + $0x158] sm:$0xf]
      %v521 = vld [vmem:[%s264 + $0x15c] sm:$0xf]
      %v522 = vld [vmem:[%s264 + $0x160] sm:$0xf]
      %v523 = vld [vmem:[%s264 + $0x164] sm:$0xf]
      %v524 = vld [vmem:[%s264 + $0x168] sm:$0xf]
      %v525 = vld [vmem:[%s264 + $0x16c] sm:$0xf]
      %v526 = vld [vmem:[%s264 + $0x170] sm:$0xf]
      %v527 = vld [vmem:[%s264 + $0x174] sm:$0xf]
      %v528 = vld [vmem:[%s264 + $0x178] sm:$0xf]
      %v529 = vld [vmem:[%s264 + $0x17c] sm:$0xf]
      %v530 = vld [vmem:[%s264 + $0x180] sm:$0xf]
      %v531 = vld [vmem:[%s264 + $0x184] sm:$0xf]
      %v532 = vld [vmem:[%s264 + $0x188] sm:$0xf]
      %v533 = vld [vmem:[%s264 + $0x18c] sm:$0xf]
      %v534 = vld [vmem:[%s264 + $0x190] sm:$0xf]
      %v535 = vld [vmem:[%s264 + $0x194] sm:$0xf]
      %v536 = vld [vmem:[%s264 + $0x198] sm:$0xf]
      %v537 = vld [vmem:[%s264 + $0x19c] sm:$0xf]
      %v538 = vld [vmem:[%s264 + $0x1a0] sm:$0xf]
      %v539 = vld [vmem:[%s264 + $0x1a4] sm:$0xf]
      %v540 = vld [vmem:[%s264 + $0x1a8] sm:$0xf]
      %v541 = vld [vmem:[%s264 + $0x1ac] sm:$0xf]
      %v542 = vld [vmem:[%s264 + $0x1b0] sm:$0xf]
      %v543 = vld [vmem:[%s264 + $0x1b4] sm:$0xf]
      %v544 = vld [vmem:[%s264 + $0x1b8] sm:$0xf]
      %v545 = vld [vmem:[%s264 + $0x1bc] sm:$0xf]
      %v546 = vld [vmem:[%s264 + $0x1c0] sm:$0xf]
      %v547 = vld [vmem:[%s264 + $0x1c4] sm:$0xf]
      %v548 = vld [vmem:[%s264 + $0x1c8] sm:$0xf]
      %v549 = vld [vmem:[%s264 + $0x1cc] sm:$0xf]
      %v550 = vld [vmem:[%s264 + $0x1d0] sm:$0xf]
      %v551 = vld [vmem:[%s264 + $0x1d4] sm:$0xf]
      %v552 = vld [vmem:[%s264 + $0x1d8] sm:$0xf]
      %v553 = vld [vmem:[%s264 + $0x1dc] sm:$0xf]
      %v554 = vld [vmem:[%s264 + $0x1e0] sm:$0xf]
      %v555 = vld [vmem:[%s264 + $0x1e4] sm:$0xf]
      %v556 = vld [vmem:[%s264 + $0x1e8] sm:$0xf]
      %v557 = vld [vmem:[%s264 + $0x1ec] sm:$0xf]
      %v558 = vld [vmem:[%s264 + $0x1f0] sm:$0xf]
      %v559 = vld [vmem:[%s264 + $0x1f4] sm:$0xf]
      %v560 = vld [vmem:[%s264 + $0x1f8] sm:$0xf]
      %v561 = vld [vmem:[%s264 + $0x1fc] sm:$0xf]
      %v562 = vld [vmem:[#allocation2] sm:$0xff]
      %v563 = vld [vmem:[#allocation2 + $0x8] sm:$0xff]
      %v564 = vld [vmem:[#allocation2 + $0x10] sm:$0xff]
      %v565 = vld [vmem:[#allocation2 + $0x18] sm:$0xff]
      %v566 = vld [vmem:[#allocation2 + $0x20] sm:$0xff]
      %v567 = vld [vmem:[#allocation2 + $0x28] sm:$0xff]
      %v568 = vld [vmem:[#allocation2 + $0x30] sm:$0xff]
      %v569 = vld [vmem:[#allocation2 + $0x38] sm:$0xff]
      %v570 = vld [vmem:[#allocation2 + $0x40] sm:$0xff]
      %v571 = vld [vmem:[#allocation2 + $0x48] sm:$0xff]
      %v572 = vld [vmem:[#allocation2 + $0x50] sm:$0xff]
      %v573 = vld [vmem:[#allocation2 + $0x58] sm:$0xff]
      %v574 = vld [vmem:[#allocation2 + $0x60] sm:$0xff]
      %v575 = vld [vmem:[#allocation2 + $0x68] sm:$0xff]
      %v576 = vld [vmem:[#allocation2 + $0x70] sm:$0xff]
      %v577 = vld [vmem:[#allocation2 + $0x78] sm:$0xff]
      %v578 = vld [vmem:[#allocation2 + $0x80] sm:$0xff]
      %v579 = vld [vmem:[#allocation2 + $0x88] sm:$0xff]
      %v580 = vld [vmem:[#allocation2 + $0x90] sm:$0xff]
      %v581 = vld [vmem:[#allocation2 + $0x98] sm:$0xff]
      %v582 = vld [vmem:[#allocation2 + $0xa0] sm:$0xff]
      %v583 = vld [vmem:[#allocation2 + $0xa8] sm:$0xff]
      %v584 = vld [vmem:[#allocation2 + $0xb0] sm:$0xff]
      %v585 = vld [vmem:[#allocation2 + $0xb8] sm:$0xff]
      %v586 = vld [vmem:[#allocation2 + $0xc0] sm:$0xff]
      %v587 = vld [vmem:[#allocation2 + $0xc8] sm:$0xff]
      %v588 = vld [vmem:[#allocation2 + $0xd0] sm:$0xff]
      %v589 = vld [vmem:[#allocation2 + $0xd8] sm:$0xff]
      %v590 = vld [vmem:[#allocation2 + $0xe0] sm:$0xff]
      %v591 = vld [vmem:[#allocation2 + $0xe8] sm:$0xff]
      %v592 = vld [vmem:[#allocation2 + $0xf0] sm:$0xff]
      %v593 = vld [vmem:[#allocation2 + $0xf8] sm:$0xff]
      %v594 = vld [vmem:[#allocation2 + $0x100] sm:$0xff]
      %v595 = vld [vmem:[#allocation2 + $0x108] sm:$0xff]
      %v596 = vld [vmem:[#allocation2 + $0x110] sm:$0xff]
      %v597 = vld [vmem:[#allocation2 + $0x118] sm:$0xff]
      %v598 = vld [vmem:[#allocation2 + $0x120] sm:$0xff]
      %v599 = vld [vmem:[#allocation2 + $0x128] sm:$0xff]
      %v600 = vld [vmem:[#allocation2 + $0x130] sm:$0xff]
      %v601 = vld [vmem:[#allocation2 + $0x138] sm:$0xff]
      %v602 = vld [vmem:[#allocation2 + $0x140] sm:$0xff]
      %v603 = vld [vmem:[#allocation2 + $0x148] sm:$0xff]
      %v604 = vld [vmem:[#allocation2 + $0x150] sm:$0xff]
      %v605 = vld [vmem:[#allocation2 + $0x158] sm:$0xff]
      %v606 = vld [vmem:[#allocation2 + $0x160] sm:$0xff]
      %v607 = vld [vmem:[#allocation2 + $0x168] sm:$0xff]
      %v608 = vld [vmem:[#allocation2 + $0x170] sm:$0xff]
      %v609 = vld [vmem:[#allocation2 + $0x178] sm:$0xff]
      %v610 = vld [vmem:[#allocation2 + $0x180] sm:$0xff]
      %v611 = vld [vmem:[#allocation2 + $0x188] sm:$0xff]
      %v612 = vld [vmem:[#allocation2 + $0x190] sm:$0xff]
      %v613 = vld [vmem:[#allocation2 + $0x198] sm:$0xff]
      %v614 = vld [vmem:[#allocation2 + $0x1a0] sm:$0xff]
      %v615 = vld [vmem:[#allocation2 + $0x1a8] sm:$0xff]
      %v616 = vld [vmem:[#allocation2 + $0x1b0] sm:$0xff]
      %v617 = vld [vmem:[#allocation2 + $0x1b8] sm:$0xff]
      %v618 = vld [vmem:[#allocation2 + $0x1c0] sm:$0xff]
      %v619 = vld [vmem:[#allocation2 + $0x1c8] sm:$0xff]
      %v620 = vld [vmem:[#allocation2 + $0x1d0] sm:$0xff]
      %v621 = vld [vmem:[#allocation2 + $0x1d8] sm:$0xff]
      %v622 = vld [vmem:[#allocation2 + $0x1e0] sm:$0xff]
      %v623 = vld [vmem:[#allocation2 + $0x1e8] sm:$0xff]
      %v624 = vld [vmem:[#allocation2 + $0x1f0] sm:$0xff]
      %v625 = vld [vmem:[#allocation2 + $0x1f8] sm:$0xff]
      %v626 = vld [vmem:[#allocation2 + $0x200] sm:$0xff]
      %v627 = vld [vmem:[#allocation2 + $0x208] sm:$0xff]
      %v628 = vld [vmem:[#allocation2 + $0x210] sm:$0xff]
      %v629 = vld [vmem:[#allocation2 + $0x218] sm:$0xff]
      %v630 = vld [vmem:[#allocation2 + $0x220] sm:$0xff]
      %v631 = vld [vmem:[#allocation2 + $0x228] sm:$0xff]
      %v632 = vld [vmem:[#allocation2 + $0x230] sm:$0xff]
      %v633 = vld [vmem:[#allocation2 + $0x238] sm:$0xff]
      %v634 = vld [vmem:[#allocation2 + $0x240] sm:$0xff]
      %v635 = vld [vmem:[#allocation2 + $0x248] sm:$0xff]
      %v636 = vld [vmem:[#allocation2 + $0x250] sm:$0xff]
      %v637 = vld [vmem:[#allocation2 + $0x258] sm:$0xff]
      %v638 = vld [vmem:[#allocation2 + $0x260] sm:$0xff]
      %v639 = vld [vmem:[#allocation2 + $0x268] sm:$0xff]
      %v640 = vld [vmem:[#allocation2 + $0x270] sm:$0xff]
      %v641 = vld [vmem:[#allocation2 + $0x278] sm:$0xff]
      %v642 = vld [vmem:[#allocation2 + $0x280] sm:$0xff]
      %v643 = vld [vmem:[#allocation2 + $0x288] sm:$0xff]
      %v644 = vld [vmem:[#allocation2 + $0x290] sm:$0xff]
      %v645 = vld [vmem:[#allocation2 + $0x298] sm:$0xff]
      %v646 = vld [vmem:[#allocation2 + $0x2a0] sm:$0xff]
      %v647 = vld [vmem:[#allocation2 + $0x2a8] sm:$0xff]
      %v648 = vld [vmem:[#allocation2 + $0x2b0] sm:$0xff]
      %v649 = vld [vmem:[#allocation2 + $0x2b8] sm:$0xff]
      %v650 = vld [vmem:[#allocation2 + $0x2c0] sm:$0xff]
      %v651 = vld [vmem:[#allocation2 + $0x2c8] sm:$0xff]
      %v652 = vld [vmem:[#allocation2 + $0x2d0] sm:$0xff]
      %v653 = vld [vmem:[#allocation2 + $0x2d8] sm:$0xff]
      %v654 = vld [vmem:[#allocation2 + $0x2e0] sm:$0xff]
      %v655 = vld [vmem:[#allocation2 + $0x2e8] sm:$0xff]
      %v656 = vld [vmem:[#allocation2 + $0x2f0] sm:$0xff]
      %v657 = vld [vmem:[#allocation2 + $0x2f8] sm:$0xff]
      %v658 = vld [vmem:[#allocation2 + $0x300] sm:$0xff]
      %v659 = vld [vmem:[#allocation2 + $0x308] sm:$0xff]
      %v660 = vld [vmem:[#allocation2 + $0x310] sm:$0xff]
      %v661 = vld [vmem:[#allocation2 + $0x318] sm:$0xff]
      %v662 = vld [vmem:[#allocation2 + $0x320] sm:$0xff]
      %v663 = vld [vmem:[#allocation2 + $0x328] sm:$0xff]
      %v664 = vld [vmem:[#allocation2 + $0x330] sm:$0xff]
      %v665 = vld [vmem:[#allocation2 + $0x338] sm:$0xff]
      %v666 = vld [vmem:[#allocation2 + $0x340] sm:$0xff]
      %v667 = vld [vmem:[#allocation2 + $0x348] sm:$0xff]
      %v668 = vld [vmem:[#allocation2 + $0x350] sm:$0xff]
      %v669 = vld [vmem:[#allocation2 + $0x358] sm:$0xff]
      %v670 = vld [vmem:[#allocation2 + $0x360] sm:$0xff]
      %v671 = vld [vmem:[#allocation2 + $0x368] sm:$0xff]
      %v672 = vld [vmem:[#allocation2 + $0x370] sm:$0xff]
      %v673 = vld [vmem:[#allocation2 + $0x378] sm:$0xff]
      %v674 = vld [vmem:[#allocation2 + $0x380] sm:$0xff]
      %v675 = vld [vmem:[#allocation2 + $0x388] sm:$0xff]
      %v676 = vld [vmem:[#allocation2 + $0x390] sm:$0xff]
      %v677 = vld [vmem:[#allocation2 + $0x398] sm:$0xff]
      %v678 = vld [vmem:[#allocation2 + $0x3a0] sm:$0xff]
      %v679 = vld [vmem:[#allocation2 + $0x3a8] sm:$0xff]
      %v680 = vld [vmem:[#allocation2 + $0x3b0] sm:$0xff]
      %v681 = vld [vmem:[#allocation2 + $0x3b8] sm:$0xff]
      %v682 = vld [vmem:[#allocation2 + $0x3c0] sm:$0xff]
      %v683 = vld [vmem:[#allocation2 + $0x3c8] sm:$0xff]
      %v684 = vld [vmem:[#allocation2 + $0x3d0] sm:$0xff]
      %v685 = vld [vmem:[#allocation2 + $0x3d8] sm:$0xff]
      %v686 = vld [vmem:[#allocation2 + $0x3e0] sm:$0xff]
      %v687 = vld [vmem:[#allocation2 + $0x3e8] sm:$0xff]
      %v688 = vld [vmem:[#allocation2 + $0x3f0] sm:$0xff]
      %v689 = vld [vmem:[#allocation2 + $0x3f8] sm:$0xff]
      %v690 = vld [vmem:[%s273] sm:$0xf]
      %v691 = vld [vmem:[%s273 + $0x4] sm:$0xf]
      %v692 = vld [vmem:[%s273 + $0x8] sm:$0xf]
      %v693 = vld [vmem:[%s273 + $0xc] sm:$0xf]
      %v694 = vld [vmem:[%s273 + $0x10] sm:$0xf]
      %v695 = vld [vmem:[%s273 + $0x14] sm:$0xf]
      %v696 = vld [vmem:[%s273 + $0x18] sm:$0xf]
      %v697 = vld [vmem:[%s273 + $0x1c] sm:$0xf]
      %v698 = vld [vmem:[%s273 + $0x20] sm:$0xf]
      %v699 = vld [vmem:[%s273 + $0x24] sm:$0xf]
      %v700 = vld [vmem:[%s273 + $0x28] sm:$0xf]
      %v701 = vld [vmem:[%s273 + $0x2c] sm:$0xf]
      %v702 = vld [vmem:[%s273 + $0x30] sm:$0xf]
      %v703 = vld [vmem:[%s273 + $0x34] sm:$0xf]
      %v704 = vld [vmem:[%s273 + $0x38] sm:$0xf]
      %v705 = vld [vmem:[%s273 + $0x3c] sm:$0xf]
      %v834 = vunpack.c.l.b16 %v434
      %v835 = vunpack.c.l.b16 %v435
      %v836 = vunpack.c.l.b16 %v436
      %v837 = vunpack.c.l.b16 %v437
      %v838 = vunpack.c.l.b16 %v438
      %v839 = vunpack.c.l.b16 %v439
      %v840 = vunpack.c.l.b16 %v440
      %v841 = vunpack.c.l.b16 %v441
      %v842 = vunpack.c.l.b16 %v442
      %v843 = vunpack.c.l.b16 %v443
      %v844 = vunpack.c.l.b16 %v444
      %v845 = vunpack.c.l.b16 %v445
      %v846 = vunpack.c.l.b16 %v446
      %v847 = vunpack.c.l.b16 %v447
      %v848 = vunpack.c.l.b16 %v448
      %v849 = vunpack.c.l.b16 %v449
      %v850 = vunpack.c.l.b16 %v450
      %v851 = vunpack.c.l.b16 %v451
      %v852 = vunpack.c.l.b16 %v452
      %v853 = vunpack.c.l.b16 %v453
      %v854 = vunpack.c.l.b16 %v454
      %v855 = vunpack.c.l.b16 %v455
      %v856 = vunpack.c.l.b16 %v456
      %v857 = vunpack.c.l.b16 %v457
      %v858 = vunpack.c.l.b16 %v458
      %v859 = vunpack.c.l.b16 %v459
      %v860 = vunpack.c.l.b16 %v460
      %v861 = vunpack.c.l.b16 %v461
      %v862 = vunpack.c.l.b16 %v462
      %v863 = vunpack.c.l.b16 %v463
      %v864 = vunpack.c.l.b16 %v464
      %v865 = vunpack.c.l.b16 %v465
      %v866 = vunpack.c.l.b16 %v466
      %v867 = vunpack.c.l.b16 %v467
      %v868 = vunpack.c.l.b16 %v468
      %v869 = vunpack.c.l.b16 %v469
      %v870 = vunpack.c.l.b16 %v470
      %v871 = vunpack.c.l.b16 %v471
      %v872 = vunpack.c.l.b16 %v472
      %v873 = vunpack.c.l.b16 %v473
      %v874 = vunpack.c.l.b16 %v474
      %v875 = vunpack.c.l.b16 %v475
      %v876 = vunpack.c.l.b16 %v476
      %v877 = vunpack.c.l.b16 %v477
      %v878 = vunpack.c.l.b16 %v478
      %v879 = vunpack.c.l.b16 %v479
      %v880 = vunpack.c.l.b16 %v480
      %v881 = vunpack.c.l.b16 %v481
      %v882 = vunpack.c.l.b16 %v482
      %v883 = vunpack.c.l.b16 %v483
      %v884 = vunpack.c.l.b16 %v484
      %v885 = vunpack.c.l.b16 %v485
      %v886 = vunpack.c.l.b16 %v486
      %v887 = vunpack.c.l.b16 %v487
      %v888 = vunpack.c.l.b16 %v488
      %v889 = vunpack.c.l.b16 %v489
      %v890 = vunpack.c.l.b16 %v490
      %v891 = vunpack.c.l.b16 %v491
      %v892 = vunpack.c.l.b16 %v492
      %v893 = vunpack.c.l.b16 %v493
      %v894 = vunpack.c.l.b16 %v494
      %v895 = vunpack.c.l.b16 %v495
      %v896 = vunpack.c.l.b16 %v496
      %v897 = vunpack.c.l.b16 %v497
      %v898 = vunpack.c.l.b16 %v498
      %v899 = vunpack.c.l.b16 %v499
      %v900 = vunpack.c.l.b16 %v500
      %v901 = vunpack.c.l.b16 %v501
      %v902 = vunpack.c.l.b16 %v502
      %v903 = vunpack.c.l.b16 %v503
      %v904 = vunpack.c.l.b16 %v504
      %v905 = vunpack.c.l.b16 %v505
      %v906 = vunpack.c.l.b16 %v506
      %v907 = vunpack.c.l.b16 %v507
      %v908 = vunpack.c.l.b16 %v508
      %v909 = vunpack.c.l.b16 %v509
      %v910 = vunpack.c.l.b16 %v510
      %v911 = vunpack.c.l.b16 %v511
      %v912 = vunpack.c.l.b16 %v512
      %v913 = vunpack.c.l.b16 %v513
      %v914 = vunpack.c.l.b16 %v514
      %v915 = vunpack.c.l.b16 %v515
      %v916 = vunpack.c.l.b16 %v516
      %v917 = vunpack.c.l.b16 %v517
      %v918 = vunpack.c.l.b16 %v518
      %v919 = vunpack.c.l.b16 %v519
      %v920 = vunpack.c.l.b16 %v520
      %v921 = vunpack.c.l.b16 %v521
      %v922 = vunpack.c.l.b16 %v522
      %v923 = vunpack.c.l.b16 %v523
      %v924 = vunpack.c.l.b16 %v524
      %v925 = vunpack.c.l.b16 %v525
      %v926 = vunpack.c.l.b16 %v526
      %v927 = vunpack.c.l.b16 %v527
      %v928 = vunpack.c.l.b16 %v528
      %v929 = vunpack.c.l.b16 %v529
      %v930 = vunpack.c.l.b16 %v530
      %v931 = vunpack.c.l.b16 %v531
      %v932 = vunpack.c.l.b16 %v532
      %v933 = vunpack.c.l.b16 %v533
      %v934 = vunpack.c.l.b16 %v534
      %v935 = vunpack.c.l.b16 %v535
      %v936 = vunpack.c.l.b16 %v536
      %v937 = vunpack.c.l.b16 %v537
      %v938 = vunpack.c.l.b16 %v538
      %v939 = vunpack.c.l.b16 %v539
      %v940 = vunpack.c.l.b16 %v540
      %v941 = vunpack.c.l.b16 %v541
      %v942 = vunpack.c.l.b16 %v542
      %v943 = vunpack.c.l.b16 %v543
      %v944 = vunpack.c.l.b16 %v544
      %v945 = vunpack.c.l.b16 %v545
      %v946 = vunpack.c.l.b16 %v546
      %v947 = vunpack.c.l.b16 %v547
      %v948 = vunpack.c.l.b16 %v548
      %v949 = vunpack.c.l.b16 %v549
      %v950 = vunpack.c.l.b16 %v550
      %v951 = vunpack.c.l.b16 %v551
      %v952 = vunpack.c.l.b16 %v552
      %v953 = vunpack.c.l.b16 %v553
      %v954 = vunpack.c.l.b16 %v554
      %v955 = vunpack.c.l.b16 %v555
      %v956 = vunpack.c.l.b16 %v556
      %v957 = vunpack.c.l.b16 %v557
      %v958 = vunpack.c.l.b16 %v558
      %v959 = vunpack.c.l.b16 %v559
      %v960 = vunpack.c.l.b16 %v560
      %v961 = vunpack.c.l.b16 %v561
      %v962 = vpack.c.b16 %v835, %v834
      %v963 = vpack.c.b16 %v837, %v836
      %v964 = vpack.c.b16 %v839, %v838
      %v965 = vpack.c.b16 %v841, %v840
      %v966 = vpack.c.b16 %v843, %v842
      %v967 = vpack.c.b16 %v845, %v844
      %v968 = vpack.c.b16 %v847, %v846
      %v969 = vpack.c.b16 %v849, %v848
      %v970 = vpack.c.b16 %v851, %v850
      %v971 = vpack.c.b16 %v853, %v852
      %v972 = vpack.c.b16 %v855, %v854
      %v973 = vpack.c.b16 %v857, %v856
      %v974 = vpack.c.b16 %v859, %v858
      %v975 = vpack.c.b16 %v861, %v860
      %v976 = vpack.c.b16 %v863, %v862
      %v977 = vpack.c.b16 %v865, %v864
      %v978 = vpack.c.b16 %v867, %v866
      %v979 = vpack.c.b16 %v869, %v868
      %v980 = vpack.c.b16 %v871, %v870
      %v981 = vpack.c.b16 %v873, %v872
      %v982 = vpack.c.b16 %v875, %v874
      %v983 = vpack.c.b16 %v877, %v876
      %v984 = vpack.c.b16 %v879, %v878
      %v985 = vpack.c.b16 %v881, %v880
      %v986 = vpack.c.b16 %v883, %v882
      %v987 = vpack.c.b16 %v885, %v884
      %v988 = vpack.c.b16 %v887, %v886
      %v989 = vpack.c.b16 %v889, %v888
      %v990 = vpack.c.b16 %v891, %v890
      %v991 = vpack.c.b16 %v893, %v892
      %v992 = vpack.c.b16 %v895, %v894
      %v993 = vpack.c.b16 %v897, %v896
      %v994 = vpack.c.b16 %v899, %v898
      %v995 = vpack.c.b16 %v901, %v900
      %v996 = vpack.c.b16 %v903, %v902
      %v997 = vpack.c.b16 %v905, %v904
      %v998 = vpack.c.b16 %v907, %v906
      %v999 = vpack.c.b16 %v909, %v908
      %v1000 = vpack.c.b16 %v911, %v910
      %v1001 = vpack.c.b16 %v913, %v912
      %v1002 = vpack.c.b16 %v915, %v914
      %v1003 = vpack.c.b16 %v917, %v916
      %v1004 = vpack.c.b16 %v919, %v918
      %v1005 = vpack.c.b16 %v921, %v920
      %v1006 = vpack.c.b16 %v923, %v922
      %v1007 = vpack.c.b16 %v925, %v924
      %v1008 = vpack.c.b16 %v927, %v926
      %v1009 = vpack.c.b16 %v929, %v928
      %v1010 = vpack.c.b16 %v931, %v930
      %v1011 = vpack.c.b16 %v933, %v932
      %v1012 = vpack.c.b16 %v935, %v934
      %v1013 = vpack.c.b16 %v937, %v936
      %v1014 = vpack.c.b16 %v939, %v938
      %v1015 = vpack.c.b16 %v941, %v940
      %v1016 = vpack.c.b16 %v943, %v942
      %v1017 = vpack.c.b16 %v945, %v944
      %v1018 = vpack.c.b16 %v947, %v946
      %v1019 = vpack.c.b16 %v949, %v948
      %v1020 = vpack.c.b16 %v951, %v950
      %v1021 = vpack.c.b16 %v953, %v952
      %v1022 = vpack.c.b16 %v955, %v954
      %v1023 = vpack.c.b16 %v957, %v956
      %v1024 = vpack.c.b16 %v959, %v958
      %v1025 = vpack.c.b16 %v961, %v960
      %v1106 = vunpack.c.l.b16 %v690
      %v1107 = vunpack.c.l.b16 %v691
      %v1108 = vunpack.c.l.b16 %v692
      %v1109 = vunpack.c.l.b16 %v693
      %v1110 = vunpack.c.l.b16 %v694
      %v1111 = vunpack.c.l.b16 %v695
      %v1112 = vunpack.c.l.b16 %v696
      %v1113 = vunpack.c.l.b16 %v697
      %v1114 = vunpack.c.l.b16 %v698
      %v1115 = vunpack.c.l.b16 %v699
      %v1116 = vunpack.c.l.b16 %v700
      %v1117 = vunpack.c.l.b16 %v701
      %v1118 = vunpack.c.l.b16 %v702
      %v1119 = vunpack.c.l.b16 %v703
      %v1120 = vunpack.c.l.b16 %v704
      %v1121 = vunpack.c.l.b16 %v705
      %v1122 = vpack.c.b16 %v1107, %v1106
      %v1123 = vpack.c.b16 %v1109, %v1108
      %v1124 = vpack.c.b16 %v1111, %v1110
      %v1125 = vpack.c.b16 %v1113, %v1112
      %v1126 = vpack.c.b16 %v1115, %v1114
      %v1127 = vpack.c.b16 %v1117, %v1116
      %v1128 = vpack.c.b16 %v1119, %v1118
      %v1129 = vpack.c.b16 %v1121, %v1120
      %1138 = vmatprep.subr.bf16.mxu0 0
      %1139 = vmatpush1.bf16.msra.mxu0 %v1129
      %1140 = vmatprep.subr.bf16.mxu0 0
      %1141 = vmatpush1.bf16.msra.mxu0 %v1128
      %1142 = vmatprep.subr.bf16.mxu0 0
      %1143 = vmatpush1.bf16.msra.mxu0 %v1127
      %1144 = vmatprep.subr.bf16.mxu0 0
      %1145 = vmatpush1.bf16.msra.mxu0 %v1126
      %1146 = vmatprep.subr.bf16.mxu0 0
      %1147 = vmatpush1.bf16.msra.mxu0 %v1125
      %1148 = vmatprep.subr.bf16.mxu0 0
      %1149 = vmatpush1.bf16.msra.mxu0 %v1124
      %1150 = vmatprep.subr.bf16.mxu0 0
      %1151 = vmatpush1.bf16.msra.mxu0 %v1123
      %1152 = vmatprep.subr.bf16.mxu0 0
      %1153 = vmatpush1.bf16.msra.mxu0 %v1122
      %1154 = vmatprep.subr.bf16.mxu0 0
      %1155 = vmatpush2.bf16.msra.mxu0 0
      %1156 = vmatprep.subr.bf16.mxu0 0
      %1157 = vmatpush2.bf16.msra.mxu0 0
      %1158 = vmatprep.subr.bf16.mxu0 0
      %1159 = vmatpush2.bf16.msra.mxu0 0
      %1160 = vmatprep.subr.bf16.mxu0 0
      %1161 = vmatpush2.bf16.msra.mxu0 0
      %1162 = vmatprep.subr.bf16.mxu0 0
      %1163 = vmatpush2.bf16.msra.mxu0 0
      %1164 = vmatprep.subr.bf16.mxu0 0
      %1165 = vmatpush2.bf16.msra.mxu0 0
      %1166 = vmatprep.subr.bf16.mxu0 0
      %1167 = vmatpush2.bf16.msra.mxu0 0
      %1168 = vmatprep.subr.bf16.mxu0 0
      %1169 = vmatpush2.bf16.msra.mxu0 0
      %1170 = vmatprep.mubr.bf16.mxu0 0
      %1171 = vmatmul.mubr.bf16.gmra.mxu0 %v962
      %v1172 = vpop.f32.mrf.mxu0
      %v1173 = vadd.f32 0.0, %v1172
      %v1174 = vpop.f32.mrf.mxu0
      %v1175 = vpop.f32.mrf.mxu0
      %v1176 = vadd.f32 0.0, %v1175
      %v1177 = vpop.f32.mrf.mxu0
      %1178 = vmatprep.mubr.bf16.mxu0 0
      %1179 = vmatmul.mubr.bf16.gmra.mxu0 %v963
      %v1180 = vpop.f32.mrf.mxu0
      %v1181 = vadd.f32 0.0, %v1180
      %v1182 = vpop.f32.mrf.mxu0
      %v1183 = vpop.f32.mrf.mxu0
      %v1184 = vadd.f32 0.0, %v1183
      %v1185 = vpop.f32.mrf.mxu0
      %1186 = vmatprep.mubr.bf16.mxu0 0
      %1187 = vmatmul.mubr.bf16.gmra.mxu0 %v964
      %v1188 = vpop.f32.mrf.mxu0
      %v1189 = vadd.f32 0.0, %v1188
      %v1190 = vpop.f32.mrf.mxu0
      %v1191 = vpop.f32.mrf.mxu0
      %v1192 = vadd.f32 0.0, %v1191
      %v1193 = vpop.f32.mrf.mxu0
      %1194 = vmatprep.mubr.bf16.mxu0 0
      %1195 = vmatmul.mubr.bf16.gmra.mxu0 %v965
      %v1196 = vpop.f32.mrf.mxu0
      %v1197 = vadd.f32 0.0, %v1196
      %v1198 = vpop.f32.mrf.mxu0
      %v1199 = vpop.f32.mrf.mxu0
      %v1200 = vadd.f32 0.0, %v1199
      %v1201 = vpop.f32.mrf.mxu0
      %1202 = vmatprep.mubr.bf16.mxu0 0
      %1203 = vmatmul.mubr.bf16.gmra.mxu0 %v966
      %v1204 = vpop.f32.mrf.mxu0
      %v1205 = vadd.f32 0.0, %v1204
      %v1206 = vpop.f32.mrf.mxu0
      %v1207 = vpop.f32.mrf.mxu0
      %v1208 = vadd.f32 0.0, %v1207
      %v1209 = vpop.f32.mrf.mxu0
      %1210 = vmatprep.mubr.bf16.mxu0 0
      %1211 = vmatmul.mubr.bf16.gmra.mxu0 %v967
      %v1212 = vpop.f32.mrf.mxu0
      %v1213 = vadd.f32 0.0, %v1212
      %v1214 = vpop.f32.mrf.mxu0
      %v1215 = vpop.f32.mrf.mxu0
      %v1216 = vadd.f32 0.0, %v1215
      %v1217 = vpop.f32.mrf.mxu0
      %1218 = vmatprep.mubr.bf16.mxu0 0
      %1219 = vmatmul.mubr.bf16.gmra.mxu0 %v968
      %v1220 = vpop.f32.mrf.mxu0
      %v1221 = vadd.f32 0.0, %v1220
      %v1222 = vpop.f32.mrf.mxu0
      %v1223 = vpop.f32.mrf.mxu0
      %v1224 = vadd.f32 0.0, %v1223
      %v1225 = vpop.f32.mrf.mxu0
      %1226 = vmatprep.mubr.bf16.mxu0 0
      %1227 = vmatmul.mubr.bf16.gmra.mxu0 %v969
      %v1228 = vpop.f32.mrf.mxu0
      %v1229 = vadd.f32 0.0, %v1228
      %v1230 = vpop.f32.mrf.mxu0
      %v1231 = vpop.f32.mrf.mxu0
      %v1232 = vadd.f32 0.0, %v1231
      %v1233 = vpop.f32.mrf.mxu0
      %1234 = vmatprep.mubr.bf16.mxu0 0
      %1235 = vmatmul.mubr.bf16.gmra.mxu0 %v970
      %v1236 = vpop.f32.mrf.mxu0
      %v1237 = vadd.f32 0.0, %v1236
      %v1238 = vpop.f32.mrf.mxu0
      %v1239 = vpop.f32.mrf.mxu0
      %v1240 = vadd.f32 0.0, %v1239
      %v1241 = vpop.f32.mrf.mxu0
      %1242 = vmatprep.mubr.bf16.mxu0 0
      %1243 = vmatmul.mubr.bf16.gmra.mxu0 %v971
      %v1244 = vpop.f32.mrf.mxu0
      %v1245 = vadd.f32 0.0, %v1244
      %v1246 = vpop.f32.mrf.mxu0
      %v1247 = vpop.f32.mrf.mxu0
      %v1248 = vadd.f32 0.0, %v1247
      %v1249 = vpop.f32.mrf.mxu0
      %1250 = vmatprep.mubr.bf16.mxu0 0
      %1251 = vmatmul.mubr.bf16.gmra.mxu0 %v972
      %v1252 = vpop.f32.mrf.mxu0
      %v1253 = vadd.f32 0.0, %v1252
      %v1254 = vpop.f32.mrf.mxu0
      %v1255 = vpop.f32.mrf.mxu0
      %v1256 = vadd.f32 0.0, %v1255
      %v1257 = vpop.f32.mrf.mxu0
      %1258 = vmatprep.mubr.bf16.mxu0 0
      %1259 = vmatmul.mubr.bf16.gmra.mxu0 %v973
      %v1260 = vpop.f32.mrf.mxu0
      %v1261 = vadd.f32 0.0, %v1260
      %v1262 = vpop.f32.mrf.mxu0
      %v1263 = vpop.f32.mrf.mxu0
      %v1264 = vadd.f32 0.0, %v1263
      %v1265 = vpop.f32.mrf.mxu0
      %1266 = vmatprep.mubr.bf16.mxu0 0
      %1267 = vmatmul.mubr.bf16.gmra.mxu0 %v974
      %v1268 = vpop.f32.mrf.mxu0
      %v1269 = vadd.f32 0.0, %v1268
      %v1270 = vpop.f32.mrf.mxu0
      %v1271 = vpop.f32.mrf.mxu0
      %v1272 = vadd.f32 0.0, %v1271
      %v1273 = vpop.f32.mrf.mxu0
      %1274 = vmatprep.mubr.bf16.mxu0 0
      %1275 = vmatmul.mubr.bf16.gmra.mxu0 %v975
      %v1276 = vpop.f32.mrf.mxu0
      %v1277 = vadd.f32 0.0, %v1276
      %v1278 = vpop.f32.mrf.mxu0
      %v1279 = vpop.f32.mrf.mxu0
      %v1280 = vadd.f32 0.0, %v1279
      %v1281 = vpop.f32.mrf.mxu0
      %1282 = vmatprep.mubr.bf16.mxu0 0
      %1283 = vmatmul.mubr.bf16.gmra.mxu0 %v976
      %v1284 = vpop.f32.mrf.mxu0
      %v1285 = vadd.f32 0.0, %v1284
      %v1286 = vpop.f32.mrf.mxu0
      %v1287 = vpop.f32.mrf.mxu0
      %v1288 = vadd.f32 0.0, %v1287
      %v1289 = vpop.f32.mrf.mxu0
      %1290 = vmatprep.mubr.bf16.mxu0 0
      %1291 = vmatmul.mubr.bf16.gmra.mxu0 %v977
      %v1292 = vpop.f32.mrf.mxu0
      %v1293 = vadd.f32 0.0, %v1292
      %v1294 = vpop.f32.mrf.mxu0
      %v1295 = vpop.f32.mrf.mxu0
      %v1296 = vadd.f32 0.0, %v1295
      %v1297 = vpop.f32.mrf.mxu0
      %1298 = vmatprep.mubr.bf16.mxu0 0
      %1299 = vmatmul.mubr.bf16.gmra.mxu0 %v978
      %v1300 = vpop.f32.mrf.mxu0
      %v1301 = vadd.f32 0.0, %v1300
      %v1302 = vpop.f32.mrf.mxu0
      %v1303 = vpop.f32.mrf.mxu0
      %v1304 = vadd.f32 0.0, %v1303
      %v1305 = vpop.f32.mrf.mxu0
      %1306 = vmatprep.mubr.bf16.mxu0 0
      %1307 = vmatmul.mubr.bf16.gmra.mxu0 %v979
      %v1308 = vpop.f32.mrf.mxu0
      %v1309 = vadd.f32 0.0, %v1308
      %v1310 = vpop.f32.mrf.mxu0
      %v1311 = vpop.f32.mrf.mxu0
      %v1312 = vadd.f32 0.0, %v1311
      %v1313 = vpop.f32.mrf.mxu0
      %1314 = vmatprep.mubr.bf16.mxu0 0
      %1315 = vmatmul.mubr.bf16.gmra.mxu0 %v980
      %v1316 = vpop.f32.mrf.mxu0
      %v1317 = vadd.f32 0.0, %v1316
      %v1318 = vpop.f32.mrf.mxu0
      %v1319 = vpop.f32.mrf.mxu0
      %v1320 = vadd.f32 0.0, %v1319
      %v1321 = vpop.f32.mrf.mxu0
      %1322 = vmatprep.mubr.bf16.mxu0 0
      %1323 = vmatmul.mubr.bf16.gmra.mxu0 %v981
      %v1324 = vpop.f32.mrf.mxu0
      %v1325 = vadd.f32 0.0, %v1324
      %v1326 = vpop.f32.mrf.mxu0
      %v1327 = vpop.f32.mrf.mxu0
      %v1328 = vadd.f32 0.0, %v1327
      %v1329 = vpop.f32.mrf.mxu0
      %1330 = vmatprep.mubr.bf16.mxu0 0
      %1331 = vmatmul.mubr.bf16.gmra.mxu0 %v982
      %v1332 = vpop.f32.mrf.mxu0
      %v1333 = vadd.f32 0.0, %v1332
      %v1334 = vpop.f32.mrf.mxu0
      %v1335 = vpop.f32.mrf.mxu0
      %v1336 = vadd.f32 0.0, %v1335
      %v1337 = vpop.f32.mrf.mxu0
      %1338 = vmatprep.mubr.bf16.mxu0 0
      %1339 = vmatmul.mubr.bf16.gmra.mxu0 %v983
      %v1340 = vpop.f32.mrf.mxu0
      %v1341 = vadd.f32 0.0, %v1340
      %v1342 = vpop.f32.mrf.mxu0
      %v1343 = vpop.f32.mrf.mxu0
      %v1344 = vadd.f32 0.0, %v1343
      %v1345 = vpop.f32.mrf.mxu0
      %1346 = vmatprep.mubr.bf16.mxu0 0
      %1347 = vmatmul.mubr.bf16.gmra.mxu0 %v984
      %v1348 = vpop.f32.mrf.mxu0
      %v1349 = vadd.f32 0.0, %v1348
      %v1350 = vpop.f32.mrf.mxu0
      %v1351 = vpop.f32.mrf.mxu0
      %v1352 = vadd.f32 0.0, %v1351
      %v1353 = vpop.f32.mrf.mxu0
      %1354 = vmatprep.mubr.bf16.mxu0 0
      %1355 = vmatmul.mubr.bf16.gmra.mxu0 %v985
      %v1356 = vpop.f32.mrf.mxu0
      %v1357 = vadd.f32 0.0, %v1356
      %v1358 = vpop.f32.mrf.mxu0
      %v1359 = vpop.f32.mrf.mxu0
      %v1360 = vadd.f32 0.0, %v1359
      %v1361 = vpop.f32.mrf.mxu0
      %1362 = vmatprep.mubr.bf16.mxu0 0
      %1363 = vmatmul.mubr.bf16.gmra.mxu0 %v986
      %v1364 = vpop.f32.mrf.mxu0
      %v1365 = vadd.f32 0.0, %v1364
      %v1366 = vpop.f32.mrf.mxu0
      %v1367 = vpop.f32.mrf.mxu0
      %v1368 = vadd.f32 0.0, %v1367
      %v1369 = vpop.f32.mrf.mxu0
      %1370 = vmatprep.mubr.bf16.mxu0 0
      %1371 = vmatmul.mubr.bf16.gmra.mxu0 %v987
      %v1372 = vpop.f32.mrf.mxu0
      %v1373 = vadd.f32 0.0, %v1372
      %v1374 = vpop.f32.mrf.mxu0
      %v1375 = vpop.f32.mrf.mxu0
      %v1376 = vadd.f32 0.0, %v1375
      %v1377 = vpop.f32.mrf.mxu0
      %1378 = vmatprep.mubr.bf16.mxu0 0
      %1379 = vmatmul.mubr.bf16.gmra.mxu0 %v988
      %v1380 = vpop.f32.mrf.mxu0
      %v1381 = vadd.f32 0.0, %v1380
      %v1382 = vpop.f32.mrf.mxu0
      %v1383 = vpop.f32.mrf.mxu0
      %v1384 = vadd.f32 0.0, %v1383
      %v1385 = vpop.f32.mrf.mxu0
      %1386 = vmatprep.mubr.bf16.mxu0 0
      %1387 = vmatmul.mubr.bf16.gmra.mxu0 %v989
      %v1388 = vpop.f32.mrf.mxu0
      %v1389 = vadd.f32 0.0, %v1388
      %v1390 = vpop.f32.mrf.mxu0
      %v1391 = vpop.f32.mrf.mxu0
      %v1392 = vadd.f32 0.0, %v1391
      %v1393 = vpop.f32.mrf.mxu0
      %1394 = vmatprep.mubr.bf16.mxu0 0
      %1395 = vmatmul.mubr.bf16.gmra.mxu0 %v990
      %v1396 = vpop.f32.mrf.mxu0
      %v1397 = vadd.f32 0.0, %v1396
      %v1398 = vpop.f32.mrf.mxu0
      %v1399 = vpop.f32.mrf.mxu0
      %v1400 = vadd.f32 0.0, %v1399
      %v1401 = vpop.f32.mrf.mxu0
      %1402 = vmatprep.mubr.bf16.mxu0 0
      %1403 = vmatmul.mubr.bf16.gmra.mxu0 %v991
      %v1404 = vpop.f32.mrf.mxu0
      %v1405 = vadd.f32 0.0, %v1404
      %v1406 = vpop.f32.mrf.mxu0
      %v1407 = vpop.f32.mrf.mxu0
      %v1408 = vadd.f32 0.0, %v1407
      %v1409 = vpop.f32.mrf.mxu0
      %1410 = vmatprep.mubr.bf16.mxu0 0
      %1411 = vmatmul.mubr.bf16.gmra.mxu0 %v992
      %v1412 = vpop.f32.mrf.mxu0
      %v1413 = vadd.f32 0.0, %v1412
      %v1414 = vpop.f32.mrf.mxu0
      %v1415 = vpop.f32.mrf.mxu0
      %v1416 = vadd.f32 0.0, %v1415
      %v1417 = vpop.f32.mrf.mxu0
      %1418 = vmatprep.mubr.bf16.mxu0 0
      %1419 = vmatmul.mubr.bf16.gmra.mxu0 %v993
      %v1420 = vpop.f32.mrf.mxu0
      %v1421 = vadd.f32 0.0, %v1420
      %v1422 = vpop.f32.mrf.mxu0
      %v1423 = vpop.f32.mrf.mxu0
      %v1424 = vadd.f32 0.0, %v1423
      %v1425 = vpop.f32.mrf.mxu0
      %1426 = vmatprep.mubr.bf16.mxu0 0
      %1427 = vmatmul.mubr.bf16.gmra.mxu0 %v994
      %v1428 = vpop.f32.mrf.mxu0
      %v1429 = vadd.f32 0.0, %v1428
      %v1430 = vpop.f32.mrf.mxu0
      %v1431 = vpop.f32.mrf.mxu0
      %v1432 = vadd.f32 0.0, %v1431
      %v1433 = vpop.f32.mrf.mxu0
      %1434 = vmatprep.mubr.bf16.mxu0 0
      %1435 = vmatmul.mubr.bf16.gmra.mxu0 %v995
      %v1436 = vpop.f32.mrf.mxu0
      %v1437 = vadd.f32 0.0, %v1436
      %v1438 = vpop.f32.mrf.mxu0
      %v1439 = vpop.f32.mrf.mxu0
      %v1440 = vadd.f32 0.0, %v1439
      %v1441 = vpop.f32.mrf.mxu0
      %1442 = vmatprep.mubr.bf16.mxu0 0
      %1443 = vmatmul.mubr.bf16.gmra.mxu0 %v996
      %v1444 = vpop.f32.mrf.mxu0
      %v1445 = vadd.f32 0.0, %v1444
      %v1446 = vpop.f32.mrf.mxu0
      %v1447 = vpop.f32.mrf.mxu0
      %v1448 = vadd.f32 0.0, %v1447
      %v1449 = vpop.f32.mrf.mxu0
      %1450 = vmatprep.mubr.bf16.mxu0 0
      %1451 = vmatmul.mubr.bf16.gmra.mxu0 %v997
      %v1452 = vpop.f32.mrf.mxu0
      %v1453 = vadd.f32 0.0, %v1452
      %v1454 = vpop.f32.mrf.mxu0
      %v1455 = vpop.f32.mrf.mxu0
      %v1456 = vadd.f32 0.0, %v1455
      %v1457 = vpop.f32.mrf.mxu0
      %1458 = vmatprep.mubr.bf16.mxu0 0
      %1459 = vmatmul.mubr.bf16.gmra.mxu0 %v998
      %v1460 = vpop.f32.mrf.mxu0
      %v1461 = vadd.f32 0.0, %v1460
      %v1462 = vpop.f32.mrf.mxu0
      %v1463 = vpop.f32.mrf.mxu0
      %v1464 = vadd.f32 0.0, %v1463
      %v1465 = vpop.f32.mrf.mxu0
      %1466 = vmatprep.mubr.bf16.mxu0 0
      %1467 = vmatmul.mubr.bf16.gmra.mxu0 %v999
      %v1468 = vpop.f32.mrf.mxu0
      %v1469 = vadd.f32 0.0, %v1468
      %v1470 = vpop.f32.mrf.mxu0
      %v1471 = vpop.f32.mrf.mxu0
      %v1472 = vadd.f32 0.0, %v1471
      %v1473 = vpop.f32.mrf.mxu0
      %1474 = vmatprep.mubr.bf16.mxu0 0
      %1475 = vmatmul.mubr.bf16.gmra.mxu0 %v1000
      %v1476 = vpop.f32.mrf.mxu0
      %v1477 = vadd.f32 0.0, %v1476
      %v1478 = vpop.f32.mrf.mxu0
      %v1479 = vpop.f32.mrf.mxu0
      %v1480 = vadd.f32 0.0, %v1479
      %v1481 = vpop.f32.mrf.mxu0
      %1482 = vmatprep.mubr.bf16.mxu0 0
      %1483 = vmatmul.mubr.bf16.gmra.mxu0 %v1001
      %v1484 = vpop.f32.mrf.mxu0
      %v1485 = vadd.f32 0.0, %v1484
      %v1486 = vpop.f32.mrf.mxu0
      %v1487 = vpop.f32.mrf.mxu0
      %v1488 = vadd.f32 0.0, %v1487
      %v1489 = vpop.f32.mrf.mxu0
      %1490 = vmatprep.mubr.bf16.mxu0 0
      %1491 = vmatmul.mubr.bf16.gmra.mxu0 %v1002
      %v1492 = vpop.f32.mrf.mxu0
      %v1493 = vadd.f32 0.0, %v1492
      %v1494 = vpop.f32.mrf.mxu0
      %v1495 = vpop.f32.mrf.mxu0
      %v1496 = vadd.f32 0.0, %v1495
      %v1497 = vpop.f32.mrf.mxu0
      %1498 = vmatprep.mubr.bf16.mxu0 0
      %1499 = vmatmul.mubr.bf16.gmra.mxu0 %v1003
      %v1500 = vpop.f32.mrf.mxu0
      %v1501 = vadd.f32 0.0, %v1500
      %v1502 = vpop.f32.mrf.mxu0
      %v1503 = vpop.f32.mrf.mxu0
      %v1504 = vadd.f32 0.0, %v1503
      %v1505 = vpop.f32.mrf.mxu0
      %1506 = vmatprep.mubr.bf16.mxu0 0
      %1507 = vmatmul.mubr.bf16.gmra.mxu0 %v1004
      %v1508 = vpop.f32.mrf.mxu0
      %v1509 = vadd.f32 0.0, %v1508
      %v1510 = vpop.f32.mrf.mxu0
      %v1511 = vpop.f32.mrf.mxu0
      %v1512 = vadd.f32 0.0, %v1511
      %v1513 = vpop.f32.mrf.mxu0
      %1514 = vmatprep.mubr.bf16.mxu0 0
      %1515 = vmatmul.mubr.bf16.gmra.mxu0 %v1005
      %v1516 = vpop.f32.mrf.mxu0
      %v1517 = vadd.f32 0.0, %v1516
      %v1518 = vpop.f32.mrf.mxu0
      %v1519 = vpop.f32.mrf.mxu0
      %v1520 = vadd.f32 0.0, %v1519
      %v1521 = vpop.f32.mrf.mxu0
      %1522 = vmatprep.mubr.bf16.mxu0 0
      %1523 = vmatmul.mubr.bf16.gmra.mxu0 %v1006
      %v1524 = vpop.f32.mrf.mxu0
      %v1525 = vadd.f32 0.0, %v1524
      %v1526 = vpop.f32.mrf.mxu0
      %v1527 = vpop.f32.mrf.mxu0
      %v1528 = vadd.f32 0.0, %v1527
      %v1529 = vpop.f32.mrf.mxu0
      %1530 = vmatprep.mubr.bf16.mxu0 0
      %1531 = vmatmul.mubr.bf16.gmra.mxu0 %v1007
      %v1532 = vpop.f32.mrf.mxu0
      %v1533 = vadd.f32 0.0, %v1532
      %v1534 = vpop.f32.mrf.mxu0
      %v1535 = vpop.f32.mrf.mxu0
      %v1536 = vadd.f32 0.0, %v1535
      %v1537 = vpop.f32.mrf.mxu0
      %1538 = vmatprep.mubr.bf16.mxu0 0
      %1539 = vmatmul.mubr.bf16.gmra.mxu0 %v1008
      %v1540 = vpop.f32.mrf.mxu0
      %v1541 = vadd.f32 0.0, %v1540
      %v1542 = vpop.f32.mrf.mxu0
      %v1543 = vpop.f32.mrf.mxu0
      %v1544 = vadd.f32 0.0, %v1543
      %v1545 = vpop.f32.mrf.mxu0
      %1546 = vmatprep.mubr.bf16.mxu0 0
      %1547 = vmatmul.mubr.bf16.gmra.mxu0 %v1009
      %v1548 = vpop.f32.mrf.mxu0
      %v1549 = vadd.f32 0.0, %v1548
      %v1550 = vpop.f32.mrf.mxu0
      %v1551 = vpop.f32.mrf.mxu0
      %v1552 = vadd.f32 0.0, %v1551
      %v1553 = vpop.f32.mrf.mxu0
      %1554 = vmatprep.mubr.bf16.mxu0 0
      %1555 = vmatmul.mubr.bf16.gmra.mxu0 %v1010
      %v1556 = vpop.f32.mrf.mxu0
      %v1557 = vadd.f32 0.0, %v1556
      %v1558 = vpop.f32.mrf.mxu0
      %v1559 = vpop.f32.mrf.mxu0
      %v1560 = vadd.f32 0.0, %v1559
      %v1561 = vpop.f32.mrf.mxu0
      %1562 = vmatprep.mubr.bf16.mxu0 0
      %1563 = vmatmul.mubr.bf16.gmra.mxu0 %v1011
      %v1564 = vpop.f32.mrf.mxu0
      %v1565 = vadd.f32 0.0, %v1564
      %v1566 = vpop.f32.mrf.mxu0
      %v1567 = vpop.f32.mrf.mxu0
      %v1568 = vadd.f32 0.0, %v1567
      %v1569 = vpop.f32.mrf.mxu0
      %1570 = vmatprep.mubr.bf16.mxu0 0
      %1571 = vmatmul.mubr.bf16.gmra.mxu0 %v1012
      %v1572 = vpop.f32.mrf.mxu0
      %v1573 = vadd.f32 0.0, %v1572
      %v1574 = vpop.f32.mrf.mxu0
      %v1575 = vpop.f32.mrf.mxu0
      %v1576 = vadd.f32 0.0, %v1575
      %v1577 = vpop.f32.mrf.mxu0
      %1578 = vmatprep.mubr.bf16.mxu0 0
      %1579 = vmatmul.mubr.bf16.gmra.mxu0 %v1013
      %v1580 = vpop.f32.mrf.mxu0
      %v1581 = vadd.f32 0.0, %v1580
      %v1582 = vpop.f32.mrf.mxu0
      %v1583 = vpop.f32.mrf.mxu0
      %v1584 = vadd.f32 0.0, %v1583
      %v1585 = vpop.f32.mrf.mxu0
      %1586 = vmatprep.mubr.bf16.mxu0 0
      %1587 = vmatmul.mubr.bf16.gmra.mxu0 %v1014
      %v1588 = vpop.f32.mrf.mxu0
      %v1589 = vadd.f32 0.0, %v1588
      %v1590 = vpop.f32.mrf.mxu0
      %v1591 = vpop.f32.mrf.mxu0
      %v1592 = vadd.f32 0.0, %v1591
      %v1593 = vpop.f32.mrf.mxu0
      %1594 = vmatprep.mubr.bf16.mxu0 0
      %1595 = vmatmul.mubr.bf16.gmra.mxu0 %v1015
      %v1596 = vpop.f32.mrf.mxu0
      %v1597 = vadd.f32 0.0, %v1596
      %v1598 = vpop.f32.mrf.mxu0
      %v1599 = vpop.f32.mrf.mxu0
      %v1600 = vadd.f32 0.0, %v1599
      %v1601 = vpop.f32.mrf.mxu0
      %1602 = vmatprep.mubr.bf16.mxu0 0
      %1603 = vmatmul.mubr.bf16.gmra.mxu0 %v1016
      %v1604 = vpop.f32.mrf.mxu0
      %v1605 = vadd.f32 0.0, %v1604
      %v1606 = vpop.f32.mrf.mxu0
      %v1607 = vpop.f32.mrf.mxu0
      %v1608 = vadd.f32 0.0, %v1607
      %v1609 = vpop.f32.mrf.mxu0
      %1610 = vmatprep.mubr.bf16.mxu0 0
      %1611 = vmatmul.mubr.bf16.gmra.mxu0 %v1017
      %v1612 = vpop.f32.mrf.mxu0
      %v1613 = vadd.f32 0.0, %v1612
      %v1614 = vpop.f32.mrf.mxu0
      %v1615 = vpop.f32.mrf.mxu0
      %v1616 = vadd.f32 0.0, %v1615
      %v1617 = vpop.f32.mrf.mxu0
      %1618 = vmatprep.mubr.bf16.mxu0 0
      %1619 = vmatmul.mubr.bf16.gmra.mxu0 %v1018
      %v1620 = vpop.f32.mrf.mxu0
      %v1621 = vadd.f32 0.0, %v1620
      %v1622 = vpop.f32.mrf.mxu0
      %v1623 = vpop.f32.mrf.mxu0
      %v1624 = vadd.f32 0.0, %v1623
      %v1625 = vpop.f32.mrf.mxu0
      %1626 = vmatprep.mubr.bf16.mxu0 0
      %1627 = vmatmul.mubr.bf16.gmra.mxu0 %v1019
      %v1628 = vpop.f32.mrf.mxu0
      %v1629 = vadd.f32 0.0, %v1628
      %v1630 = vpop.f32.mrf.mxu0
      %v1631 = vpop.f32.mrf.mxu0
      %v1632 = vadd.f32 0.0, %v1631
      %v1633 = vpop.f32.mrf.mxu0
      %1634 = vmatprep.mubr.bf16.mxu0 0
      %1635 = vmatmul.mubr.bf16.gmra.mxu0 %v1020
      %v1636 = vpop.f32.mrf.mxu0
      %v1637 = vadd.f32 0.0, %v1636
      %v1638 = vpop.f32.mrf.mxu0
      %v1639 = vpop.f32.mrf.mxu0
      %v1640 = vadd.f32 0.0, %v1639
      %v1641 = vpop.f32.mrf.mxu0
      %1642 = vmatprep.mubr.bf16.mxu0 0
      %1643 = vmatmul.mubr.bf16.gmra.mxu0 %v1021
      %v1644 = vpop.f32.mrf.mxu0
      %v1645 = vadd.f32 0.0, %v1644
      %v1646 = vpop.f32.mrf.mxu0
      %v1647 = vpop.f32.mrf.mxu0
      %v1648 = vadd.f32 0.0, %v1647
      %v1649 = vpop.f32.mrf.mxu0
      %1650 = vmatprep.mubr.bf16.mxu0 0
      %1651 = vmatmul.mubr.bf16.gmra.mxu0 %v1022
      %v1652 = vpop.f32.mrf.mxu0
      %v1653 = vadd.f32 0.0, %v1652
      %v1654 = vpop.f32.mrf.mxu0
      %v1655 = vpop.f32.mrf.mxu0
      %v1656 = vadd.f32 0.0, %v1655
      %v1657 = vpop.f32.mrf.mxu0
      %1658 = vmatprep.mubr.bf16.mxu0 0
      %1659 = vmatmul.mubr.bf16.gmra.mxu0 %v1023
      %v1660 = vpop.f32.mrf.mxu0
      %v1661 = vadd.f32 0.0, %v1660
      %v1662 = vpop.f32.mrf.mxu0
      %v1663 = vpop.f32.mrf.mxu0
      %v1664 = vadd.f32 0.0, %v1663
      %v1665 = vpop.f32.mrf.mxu0
      %1666 = vmatprep.mubr.bf16.mxu0 0
      %1667 = vmatmul.mubr.bf16.gmra.mxu0 %v1024
      %v1668 = vpop.f32.mrf.mxu0
      %v1669 = vadd.f32 0.0, %v1668
      %v1670 = vpop.f32.mrf.mxu0
      %v1671 = vpop.f32.mrf.mxu0
      %v1672 = vadd.f32 0.0, %v1671
      %v1673 = vpop.f32.mrf.mxu0
      %1674 = vmatprep.mubr.bf16.mxu0 0
      %1675 = vmatmul.mubr.bf16.gmra.mxu0 %v1025
      %v1676 = vpop.f32.mrf.mxu0
      %v1677 = vadd.f32 0.0, %v1676
      %v1678 = vpop.f32.mrf.mxu0
      %v1679 = vpop.f32.mrf.mxu0
      %v1680 = vadd.f32 0.0, %v1679
      %v1681 = vpop.f32.mrf.mxu0
      %1682 = vdwg.mxu0
      %v1683 = vadd.f32 %v562, %v1173
      %v1684 = vadd.f32 %v563, %v1176
      %v1685 = vadd.f32 %v564, %v1181
      %v1686 = vadd.f32 %v565, %v1184
      %v1687 = vadd.f32 %v566, %v1189
      %v1688 = vadd.f32 %v567, %v1192
      %v1689 = vadd.f32 %v568, %v1197
      %v1690 = vadd.f32 %v569, %v1200
      %v1691 = vadd.f32 %v570, %v1205
      %v1692 = vadd.f32 %v571, %v1208
      %v1693 = vadd.f32 %v572, %v1213
      %v1694 = vadd.f32 %v573, %v1216
      %v1695 = vadd.f32 %v574, %v1221
      %v1696 = vadd.f32 %v575, %v1224
      %v1697 = vadd.f32 %v576, %v1229
      %v1698 = vadd.f32 %v577, %v1232
      %v1699 = vadd.f32 %v578, %v1237
      %v1700 = vadd.f32 %v579, %v1240
      %v1701 = vadd.f32 %v580, %v1245
      %v1702 = vadd.f32 %v581, %v1248
      %v1703 = vadd.f32 %v582, %v1253
      %v1704 = vadd.f32 %v583, %v1256
      %v1705 = vadd.f32 %v584, %v1261
      %v1706 = vadd.f32 %v585, %v1264
      %v1707 = vadd.f32 %v586, %v1269
      %v1708 = vadd.f32 %v587, %v1272
      %v1709 = vadd.f32 %v588, %v1277
      %v1710 = vadd.f32 %v589, %v1280
      %v1711 = vadd.f32 %v590, %v1285
      %v1712 = vadd.f32 %v591, %v1288
      %v1713 = vadd.f32 %v592, %v1293
      %v1714 = vadd.f32 %v593, %v1296
      %v1715 = vadd.f32 %v594, %v1301
      %v1716 = vadd.f32 %v595, %v1304
      %v1717 = vadd.f32 %v596, %v1309
      %v1718 = vadd.f32 %v597, %v1312
      %v1719 = vadd.f32 %v598, %v1317
      %v1720 = vadd.f32 %v599, %v1320
      %v1721 = vadd.f32 %v600, %v1325
      %v1722 = vadd.f32 %v601, %v1328
      %v1723 = vadd.f32 %v602, %v1333
      %v1724 = vadd.f32 %v603, %v1336
      %v1725 = vadd.f32 %v604, %v1341
      %v1726 = vadd.f32 %v605, %v1344
      %v1727 = vadd.f32 %v606, %v1349
      %v1728 = vadd.f32 %v607, %v1352
      %v1729 = vadd.f32 %v608, %v1357
      %v1730 = vadd.f32 %v609, %v1360
      %v1731 = vadd.f32 %v610, %v1365
      %v1732 = vadd.f32 %v611, %v1368
      %v1733 = vadd.f32 %v612, %v1373
      %v1734 = vadd.f32 %v613, %v1376
      %v1735 = vadd.f32 %v614, %v1381
      %v1736 = vadd.f32 %v615, %v1384
      %v1737 = vadd.f32 %v616, %v1389
      %v1738 = vadd.f32 %v617, %v1392
      %v1739 = vadd.f32 %v618, %v1397
      %v1740 = vadd.f32 %v619, %v1400
      %v1741 = vadd.f32 %v620, %v1405
      %v1742 = vadd.f32 %v621, %v1408
      %v1743 = vadd.f32 %v622, %v1413
      %v1744 = vadd.f32 %v623, %v1416
      %v1745 = vadd.f32 %v624, %v1421
      %v1746 = vadd.f32 %v625, %v1424
      %v1747 = vadd.f32 %v626, %v1429
      %v1748 = vadd.f32 %v627, %v1432
      %v1749 = vadd.f32 %v628, %v1437
      %v1750 = vadd.f32 %v629, %v1440
      %v1751 = vadd.f32 %v630, %v1445
      %v1752 = vadd.f32 %v631, %v1448
      %v1753 = vadd.f32 %v632, %v1453
      %v1754 = vadd.f32 %v633, %v1456
      %v1755 = vadd.f32 %v634, %v1461
      %v1756 = vadd.f32 %v635, %v1464
      %v1757 = vadd.f32 %v636, %v1469
      %v1758 = vadd.f32 %v637, %v1472
      %v1759 = vadd.f32 %v638, %v1477
      %v1760 = vadd.f32 %v639, %v1480
      %v1761 = vadd.f32 %v640, %v1485
      %v1762 = vadd.f32 %v641, %v1488
      %v1763 = vadd.f32 %v642, %v1493
      %v1764 = vadd.f32 %v643, %v1496
      %v1765 = vadd.f32 %v644, %v1501
      %v1766 = vadd.f32 %v645, %v1504
      %v1767 = vadd.f32 %v646, %v1509
      %v1768 = vadd.f32 %v647, %v1512
      %v1769 = vadd.f32 %v648, %v1517
      %v1770 = vadd.f32 %v649, %v1520
      %v1771 = vadd.f32 %v650, %v1525
      %v1772 = vadd.f32 %v651, %v1528
      %v1773 = vadd.f32 %v652, %v1533
      %v1774 = vadd.f32 %v653, %v1536
      %v1775 = vadd.f32 %v654, %v1541
      %v1776 = vadd.f32 %v655, %v1544
      %v1777 = vadd.f32 %v656, %v1549
      %v1778 = vadd.f32 %v657, %v1552
      %v1779 = vadd.f32 %v658, %v1557
      %v1780 = vadd.f32 %v659, %v1560
      %v1781 = vadd.f32 %v660, %v1565
      %v1782 = vadd.f32 %v661, %v1568
      %v1783 = vadd.f32 %v662, %v1573
      %v1784 = vadd.f32 %v663, %v1576
      %v1785 = vadd.f32 %v664, %v1581
      %v1786 = vadd.f32 %v665, %v1584
      %v1787 = vadd.f32 %v666, %v1589
      %v1788 = vadd.f32 %v667, %v1592
      %v1789 = vadd.f32 %v668, %v1597
      %v1790 = vadd.f32 %v669, %v1600
      %v1791 = vadd.f32 %v670, %v1605
      %v1792 = vadd.f32 %v671, %v1608
      %v1793 = vadd.f32 %v672, %v1613
      %v1794 = vadd.f32 %v673, %v1616
      %v1795 = vadd.f32 %v674, %v1621
      %v1796 = vadd.f32 %v675, %v1624
      %v1797 = vadd.f32 %v676, %v1629
      %v1798 = vadd.f32 %v677, %v1632
      %v1799 = vadd.f32 %v678, %v1637
      %v1800 = vadd.f32 %v679, %v1640
      %v1801 = vadd.f32 %v680, %v1645
      %v1802 = vadd.f32 %v681, %v1648
      %v1803 = vadd.f32 %v682, %v1653
      %v1804 = vadd.f32 %v683, %v1656
      %v1805 = vadd.f32 %v684, %v1661
      %v1806 = vadd.f32 %v685, %v1664
      %v1807 = vadd.f32 %v686, %v1669
      %v1808 = vadd.f32 %v687, %v1672
      %v1809 = vadd.f32 %v688, %v1677
      %v1810 = vadd.f32 %v689, %v1680
      %1811 = vst [vmem:[#allocation2] sm:$0xff] %v1683
      %1812 = vst [vmem:[#allocation2 + $0x8] sm:$0xff] %v1684
      %1813 = vst [vmem:[#allocation2 + $0x10] sm:$0xff] %v1685
      %1814 = vst [vmem:[#allocation2 + $0x18] sm:$0xff] %v1686
      %1815 = vst [vmem:[#allocation2 + $0x20] sm:$0xff] %v1687
      %1816 = vst [vmem:[#allocation2 + $0x28] sm:$0xff] %v1688
      %1817 = vst [vmem:[#allocation2 + $0x30] sm:$0xff] %v1689
      %1818 = vst [vmem:[#allocation2 + $0x38] sm:$0xff] %v1690
      %1819 = vst [vmem:[#allocation2 + $0x40] sm:$0xff] %v1691
      %1820 = vst [vmem:[#allocation2 + $0x48] sm:$0xff] %v1692
      %1821 = vst [vmem:[#allocation2 + $0x50] sm:$0xff] %v1693
      %1822 = vst [vmem:[#allocation2 + $0x58] sm:$0xff] %v1694
      %1823 = vst [vmem:[#allocation2 + $0x60] sm:$0xff] %v1695
      %1824 = vst [vmem:[#allocation2 + $0x68] sm:$0xff] %v1696
      %1825 = vst [vmem:[#allocation2 + $0x70] sm:$0xff] %v1697
      %1826 = vst [vmem:[#allocation2 + $0x78] sm:$0xff] %v1698
      %1827 = vst [vmem:[#allocation2 + $0x80] sm:$0xff] %v1699
      %1828 = vst [vmem:[#allocation2 + $0x88] sm:$0xff] %v1700
      %1829 = vst [vmem:[#allocation2 + $0x90] sm:$0xff] %v1701
      %1830 = vst [vmem:[#allocation2 + $0x98] sm:$0xff] %v1702
      %1831 = vst [vmem:[#allocation2 + $0xa0] sm:$0xff] %v1703
      %1832 = vst [vmem:[#allocation2 + $0xa8] sm:$0xff] %v1704
      %1833 = vst [vmem:[#allocation2 + $0xb0] sm:$0xff] %v1705
      %1834 = vst [vmem:[#allocation2 + $0xb8] sm:$0xff] %v1706
      %1835 = vst [vmem:[#allocation2 + $0xc0] sm:$0xff] %v1707
      %1836 = vst [vmem:[#allocation2 + $0xc8] sm:$0xff] %v1708
      %1837 = vst [vmem:[#allocation2 + $0xd0] sm:$0xff] %v1709
      %1838 = vst [vmem:[#allocation2 + $0xd8] sm:$0xff] %v1710
      %1839 = vst [vmem:[#allocation2 + $0xe0] sm:$0xff] %v1711
      %1840 = vst [vmem:[#allocation2 + $0xe8] sm:$0xff] %v1712
      %1841 = vst [vmem:[#allocation2 + $0xf0] sm:$0xff] %v1713
      %1842 = vst [vmem:[#allocation2 + $0xf8] sm:$0xff] %v1714
      %1843 = vst [vmem:[#allocation2 + $0x100] sm:$0xff] %v1715
      %1844 = vst [vmem:[#allocation2 + $0x108] sm:$0xff] %v1716
      %1845 = vst [vmem:[#allocation2 + $0x110] sm:$0xff] %v1717
      %1846 = vst [vmem:[#allocation2 + $0x118] sm:$0xff] %v1718
      %1847 = vst [vmem:[#allocation2 + $0x120] sm:$0xff] %v1719
      %1848 = vst [vmem:[#allocation2 + $0x128] sm:$0xff] %v1720
      %1849 = vst [vmem:[#allocation2 + $0x130] sm:$0xff] %v1721
      %1850 = vst [vmem:[#allocation2 + $0x138] sm:$0xff] %v1722
      %1851 = vst [vmem:[#allocation2 + $0x140] sm:$0xff] %v1723
      %1852 = vst [vmem:[#allocation2 + $0x148] sm:$0xff] %v1724
      %1853 = vst [vmem:[#allocation2 + $0x150] sm:$0xff] %v1725
      %1854 = vst [vmem:[#allocation2 + $0x158] sm:$0xff] %v1726
      %1855 = vst [vmem:[#allocation2 + $0x160] sm:$0xff] %v1727
      %1856 = vst [vmem:[#allocation2 + $0x168] sm:$0xff] %v1728
      %1857 = vst [vmem:[#allocation2 + $0x170] sm:$0xff] %v1729
      %1858 = vst [vmem:[#allocation2 + $0x178] sm:$0xff] %v1730
      %1859 = vst [vmem:[#allocation2 + $0x180] sm:$0xff] %v1731
      %1860 = vst [vmem:[#allocation2 + $0x188] sm:$0xff] %v1732
      %1861 = vst [vmem:[#allocation2 + $0x190] sm:$0xff] %v1733
      %1862 = vst [vmem:[#allocation2 + $0x198] sm:$0xff] %v1734
      %1863 = vst [vmem:[#allocation2 + $0x1a0] sm:$0xff] %v1735
      %1864 = vst [vmem:[#allocation2 + $0x1a8] sm:$0xff] %v1736
      %1865 = vst [vmem:[#allocation2 + $0x1b0] sm:$0xff] %v1737
      %1866 = vst [vmem:[#allocation2 + $0x1b8] sm:$0xff] %v1738
      %1867 = vst [vmem:[#allocation2 + $0x1c0] sm:$0xff] %v1739
      %1868 = vst [vmem:[#allocation2 + $0x1c8] sm:$0xff] %v1740
      %1869 = vst [vmem:[#allocation2 + $0x1d0] sm:$0xff] %v1741
      %1870 = vst [vmem:[#allocation2 + $0x1d8] sm:$0xff] %v1742
      %1871 = vst [vmem:[#allocation2 + $0x1e0] sm:$0xff] %v1743
      %1872 = vst [vmem:[#allocation2 + $0x1e8] sm:$0xff] %v1744
      %1873 = vst [vmem:[#allocation2 + $0x1f0] sm:$0xff] %v1745
      %1874 = vst [vmem:[#allocation2 + $0x1f8] sm:$0xff] %v1746
      %1875 = vst [vmem:[#allocation2 + $0x200] sm:$0xff] %v1747
      %1876 = vst [vmem:[#allocation2 + $0x208] sm:$0xff] %v1748
      %1877 = vst [vmem:[#allocation2 + $0x210] sm:$0xff] %v1749
      %1878 = vst [vmem:[#allocation2 + $0x218] sm:$0xff] %v1750
      %1879 = vst [vmem:[#allocation2 + $0x220] sm:$0xff] %v1751
      %1880 = vst [vmem:[#allocation2 + $0x228] sm:$0xff] %v1752
      %1881 = vst [vmem:[#allocation2 + $0x230] sm:$0xff] %v1753
      %1882 = vst [vmem:[#allocation2 + $0x238] sm:$0xff] %v1754
      %1883 = vst [vmem:[#allocation2 + $0x240] sm:$0xff] %v1755
      %1884 = vst [vmem:[#allocation2 + $0x248] sm:$0xff] %v1756
      %1885 = vst [vmem:[#allocation2 + $0x250] sm:$0xff] %v1757
      %1886 = vst [vmem:[#allocation2 + $0x258] sm:$0xff] %v1758
      %1887 = vst [vmem:[#allocation2 + $0x260] sm:$0xff] %v1759
      %1888 = vst [vmem:[#allocation2 + $0x268] sm:$0xff] %v1760
      %1889 = vst [vmem:[#allocation2 + $0x270] sm:$0xff] %v1761
      %1890 = vst [vmem:[#allocation2 + $0x278] sm:$0xff] %v1762
      %1891 = vst [vmem:[#allocation2 + $0x280] sm:$0xff] %v1763
      %1892 = vst [vmem:[#allocation2 + $0x288] sm:$0xff] %v1764
      %1893 = vst [vmem:[#allocation2 + $0x290] sm:$0xff] %v1765
      %1894 = vst [vmem:[#allocation2 + $0x298] sm:$0xff] %v1766
      %1895 = vst [vmem:[#allocation2 + $0x2a0] sm:$0xff] %v1767
      %1896 = vst [vmem:[#allocation2 + $0x2a8] sm:$0xff] %v1768
      %1897 = vst [vmem:[#allocation2 + $0x2b0] sm:$0xff] %v1769
      %1898 = vst [vmem:[#allocation2 + $0x2b8] sm:$0xff] %v1770
      %1899 = vst [vmem:[#allocation2 + $0x2c0] sm:$0xff] %v1771
      %1900 = vst [vmem:[#allocation2 + $0x2c8] sm:$0xff] %v1772
      %1901 = vst [vmem:[#allocation2 + $0x2d0] sm:$0xff] %v1773
      %1902 = vst [vmem:[#allocation2 + $0x2d8] sm:$0xff] %v1774
      %1903 = vst [vmem:[#allocation2 + $0x2e0] sm:$0xff] %v1775
      %1904 = vst [vmem:[#allocation2 + $0x2e8] sm:$0xff] %v1776
      %1905 = vst [vmem:[#allocation2 + $0x2f0] sm:$0xff] %v1777
      %1906 = vst [vmem:[#allocation2 + $0x2f8] sm:$0xff] %v1778
      %1907 = vst [vmem:[#allocation2 + $0x300] sm:$0xff] %v1779
      %1908 = vst [vmem:[#allocation2 + $0x308] sm:$0xff] %v1780
      %1909 = vst [vmem:[#allocation2 + $0x310] sm:$0xff] %v1781
      %1910 = vst [vmem:[#allocation2 + $0x318] sm:$0xff] %v1782
      %1911 = vst [vmem:[#allocation2 + $0x320] sm:$0xff] %v1783
      %1912 = vst [vmem:[#allocation2 + $0x328] sm:$0xff] %v1784
      %1913 = vst [vmem:[#allocation2 + $0x330] sm:$0xff] %v1785
      %1914 = vst [vmem:[#allocation2 + $0x338] sm:$0xff] %v1786
      %1915 = vst [vmem:[#allocation2 + $0x340] sm:$0xff] %v1787
      %1916 = vst [vmem:[#allocation2 + $0x348] sm:$0xff] %v1788
      %1917 = vst [vmem:[#allocation2 + $0x350] sm:$0xff] %v1789
      %1918 = vst [vmem:[#allocation2 + $0x358] sm:$0xff] %v1790
      %1919 = vst [vmem:[#allocation2 + $0x360] sm:$0xff] %v1791
      %1920 = vst [vmem:[#allocation2 + $0x368] sm:$0xff] %v1792
      %1921 = vst [vmem:[#allocation2 + $0x370] sm:$0xff] %v1793
      %1922 = vst [vmem:[#allocation2 + $0x378] sm:$0xff] %v1794
      %1923 = vst [vmem:[#allocation2 + $0x380] sm:$0xff] %v1795
      %1924 = vst [vmem:[#allocation2 + $0x388] sm:$0xff] %v1796
      %1925 = vst [vmem:[#allocation2 + $0x390] sm:$0xff] %v1797
      %1926 = vst [vmem:[#allocation2 + $0x398] sm:$0xff] %v1798
      %1927 = vst [vmem:[#allocation2 + $0x3a0] sm:$0xff] %v1799
      %1928 = vst [vmem:[#allocation2 + $0x3a8] sm:$0xff] %v1800
      %1929 = vst [vmem:[#allocation2 + $0x3b0] sm:$0xff] %v1801
      %1930 = vst [vmem:[#allocation2 + $0x3b8] sm:$0xff] %v1802
      %1931 = vst [vmem:[#allocation2 + $0x3c0] sm:$0xff] %v1803
      %1932 = vst [vmem:[#allocation2 + $0x3c8] sm:$0xff] %v1804
      %1933 = vst [vmem:[#allocation2 + $0x3d0] sm:$0xff] %v1805
      %1934 = vst [vmem:[#allocation2 + $0x3d8] sm:$0xff] %v1806
      %1935 = vst [vmem:[#allocation2 + $0x3e0] sm:$0xff] %v1807
      %1936 = vst [vmem:[#allocation2 + $0x3e8] sm:$0xff] %v1808
      %1937 = vst [vmem:[#allocation2 + $0x3f0] sm:$0xff] %v1809
      %1938 = vst [vmem:[#allocation2 + $0x3f8] sm:$0xff] %v1810
      // Predicated region
      $region37: #{ftgan_encoder_atten.6} parent=27 // pred_check
        %p1939 = pneg %p296
      $region38: #{ftgan_encoder_atten.6} parent=27 // pred_check_branch
        %1941 = sbr.rel (%p1939) target = $region40
      $region39: #{ftgan_encoder_atten.6} parent=27 // pred_region
        %v1942 = vld [vmem:[#allocation2] sm:$0xff]
        %v1943 = vld [vmem:[#allocation2 + $0x8] sm:$0xff]
        %v1944 = vld [vmem:[#allocation2 + $0x10] sm:$0xff]
        %v1945 = vld [vmem:[#allocation2 + $0x18] sm:$0xff]
        %v1946 = vld [vmem:[#allocation2 + $0x20] sm:$0xff]
        %v1947 = vld [vmem:[#allocation2 + $0x28] sm:$0xff]
        %v1948 = vld [vmem:[#allocation2 + $0x30] sm:$0xff]
        %v1949 = vld [vmem:[#allocation2 + $0x38] sm:$0xff]
        %v1950 = vld [vmem:[#allocation2 + $0x40] sm:$0xff]
        %v1951 = vld [vmem:[#allocation2 + $0x48] sm:$0xff]
        %v1952 = vld [vmem:[#allocation2 + $0x50] sm:$0xff]
        %v1953 = vld [vmem:[#allocation2 + $0x58] sm:$0xff]
        %v1954 = vld [vmem:[#allocation2 + $0x60] sm:$0xff]
        %v1955 = vld [vmem:[#allocation2 + $0x68] sm:$0xff]
        %v1956 = vld [vmem:[#allocation2 + $0x70] sm:$0xff]
        %v1957 = vld [vmem:[#allocation2 + $0x78] sm:$0xff]
        %v1958 = vld [vmem:[#allocation2 + $0x80] sm:$0xff]
        %v1959 = vld [vmem:[#allocation2 + $0x88] sm:$0xff]
        %v1960 = vld [vmem:[#allocation2 + $0x90] sm:$0xff]
        %v1961 = vld [vmem:[#allocation2 + $0x98] sm:$0xff]
        %v1962 = vld [vmem:[#allocation2 + $0xa0] sm:$0xff]
        %v1963 = vld [vmem:[#allocation2 + $0xa8] sm:$0xff]
        %v1964 = vld [vmem:[#allocation2 + $0xb0] sm:$0xff]
        %v1965 = vld [vmem:[#allocation2 + $0xb8] sm:$0xff]
        %v1966 = vld [vmem:[#allocation2 + $0xc0] sm:$0xff]
        %v1967 = vld [vmem:[#allocation2 + $0xc8] sm:$0xff]
        %v1968 = vld [vmem:[#allocation2 + $0xd0] sm:$0xff]
        %v1969 = vld [vmem:[#allocation2 + $0xd8] sm:$0xff]
        %v1970 = vld [vmem:[#allocation2 + $0xe0] sm:$0xff]
        %v1971 = vld [vmem:[#allocation2 + $0xe8] sm:$0xff]
        %v1972 = vld [vmem:[#allocation2 + $0xf0] sm:$0xff]
        %v1973 = vld [vmem:[#allocation2 + $0xf8] sm:$0xff]
        %v1974 = vld [vmem:[#allocation2 + $0x100] sm:$0xff]
        %v1975 = vld [vmem:[#allocation2 + $0x108] sm:$0xff]
        %v1976 = vld [vmem:[#allocation2 + $0x110] sm:$0xff]
        %v1977 = vld [vmem:[#allocation2 + $0x118] sm:$0xff]
        %v1978 = vld [vmem:[#allocation2 + $0x120] sm:$0xff]
        %v1979 = vld [vmem:[#allocation2 + $0x128] sm:$0xff]
        %v1980 = vld [vmem:[#allocation2 + $0x130] sm:$0xff]
        %v1981 = vld [vmem:[#allocation2 + $0x138] sm:$0xff]
        %v1982 = vld [vmem:[#allocation2 + $0x140] sm:$0xff]
        %v1983 = vld [vmem:[#allocation2 + $0x148] sm:$0xff]
        %v1984 = vld [vmem:[#allocation2 + $0x150] sm:$0xff]
        %v1985 = vld [vmem:[#allocation2 + $0x158] sm:$0xff]
        %v1986 = vld [vmem:[#allocation2 + $0x160] sm:$0xff]
        %v1987 = vld [vmem:[#allocation2 + $0x168] sm:$0xff]
        %v1988 = vld [vmem:[#allocation2 + $0x170] sm:$0xff]
        %v1989 = vld [vmem:[#allocation2 + $0x178] sm:$0xff]
        %v1990 = vld [vmem:[#allocation2 + $0x180] sm:$0xff]
        %v1991 = vld [vmem:[#allocation2 + $0x188] sm:$0xff]
        %v1992 = vld [vmem:[#allocation2 + $0x190] sm:$0xff]
        %v1993 = vld [vmem:[#allocation2 + $0x198] sm:$0xff]
        %v1994 = vld [vmem:[#allocation2 + $0x1a0] sm:$0xff]
        %v1995 = vld [vmem:[#allocation2 + $0x1a8] sm:$0xff]
        %v1996 = vld [vmem:[#allocation2 + $0x1b0] sm:$0xff]
        %v1997 = vld [vmem:[#allocation2 + $0x1b8] sm:$0xff]
        %v1998 = vld [vmem:[#allocation2 + $0x1c0] sm:$0xff]
        %v1999 = vld [vmem:[#allocation2 + $0x1c8] sm:$0xff]
        %v2000 = vld [vmem:[#allocation2 + $0x1d0] sm:$0xff]
        %v2001 = vld [vmem:[#allocation2 + $0x1d8] sm:$0xff]
        %v2002 = vld [vmem:[#allocation2 + $0x1e0] sm:$0xff]
        %v2003 = vld [vmem:[#allocation2 + $0x1e8] sm:$0xff]
        %v2004 = vld [vmem:[#allocation2 + $0x1f0] sm:$0xff]
        %v2005 = vld [vmem:[#allocation2 + $0x1f8] sm:$0xff]
        %v2006 = vld [vmem:[#allocation2 + $0x200] sm:$0xff]
        %v2007 = vld [vmem:[#allocation2 + $0x208] sm:$0xff]
        %v2008 = vld [vmem:[#allocation2 + $0x210] sm:$0xff]
        %v2009 = vld [vmem:[#allocation2 + $0x218] sm:$0xff]
        %v2010 = vld [vmem:[#allocation2 + $0x220] sm:$0xff]
        %v2011 = vld [vmem:[#allocation2 + $0x228] sm:$0xff]
        %v2012 = vld [vmem:[#allocation2 + $0x230] sm:$0xff]
        %v2013 = vld [vmem:[#allocation2 + $0x238] sm:$0xff]
        %v2014 = vld [vmem:[#allocation2 + $0x240] sm:$0xff]
        %v2015 = vld [vmem:[#allocation2 + $0x248] sm:$0xff]
        %v2016 = vld [vmem:[#allocation2 + $0x250] sm:$0xff]
        %v2017 = vld [vmem:[#allocation2 + $0x258] sm:$0xff]
        %v2018 = vld [vmem:[#allocation2 + $0x260] sm:$0xff]
        %v2019 = vld [vmem:[#allocation2 + $0x268] sm:$0xff]
        %v2020 = vld [vmem:[#allocation2 + $0x270] sm:$0xff]
        %v2021 = vld [vmem:[#allocation2 + $0x278] sm:$0xff]
        %v2022 = vld [vmem:[#allocation2 + $0x280] sm:$0xff]
        %v2023 = vld [vmem:[#allocation2 + $0x288] sm:$0xff]
        %v2024 = vld [vmem:[#allocation2 + $0x290] sm:$0xff]
        %v2025 = vld [vmem:[#allocation2 + $0x298] sm:$0xff]
        %v2026 = vld [vmem:[#allocation2 + $0x2a0] sm:$0xff]
        %v2027 = vld [vmem:[#allocation2 + $0x2a8] sm:$0xff]
        %v2028 = vld [vmem:[#allocation2 + $0x2b0] sm:$0xff]
        %v2029 = vld [vmem:[#allocation2 + $0x2b8] sm:$0xff]
        %v2030 = vld [vmem:[#allocation2 + $0x2c0] sm:$0xff]
        %v2031 = vld [vmem:[#allocation2 + $0x2c8] sm:$0xff]
        %v2032 = vld [vmem:[#allocation2 + $0x2d0] sm:$0xff]
        %v2033 = vld [vmem:[#allocation2 + $0x2d8] sm:$0xff]
        %v2034 = vld [vmem:[#allocation2 + $0x2e0] sm:$0xff]
        %v2035 = vld [vmem:[#allocation2 + $0x2e8] sm:$0xff]
        %v2036 = vld [vmem:[#allocation2 + $0x2f0] sm:$0xff]
        %v2037 = vld [vmem:[#allocation2 + $0x2f8] sm:$0xff]
        %v2038 = vld [vmem:[#allocation2 + $0x300] sm:$0xff]
        %v2039 = vld [vmem:[#allocation2 + $0x308] sm:$0xff]
        %v2040 = vld [vmem:[#allocation2 + $0x310] sm:$0xff]
        %v2041 = vld [vmem:[#allocation2 + $0x318] sm:$0xff]
        %v2042 = vld [vmem:[#allocation2 + $0x320] sm:$0xff]
        %v2043 = vld [vmem:[#allocation2 + $0x328] sm:$0xff]
        %v2044 = vld [vmem:[#allocation2 + $0x330] sm:$0xff]
        %v2045 = vld [vmem:[#allocation2 + $0x338] sm:$0xff]
        %v2046 = vld [vmem:[#allocation2 + $0x340] sm:$0xff]
        %v2047 = vld [vmem:[#allocation2 + $0x348] sm:$0xff]
        %v2048 = vld [vmem:[#allocation2 + $0x350] sm:$0xff]
        %v2049 = vld [vmem:[#allocation2 + $0x358] sm:$0xff]
        %v2050 = vld [vmem:[#allocation2 + $0x360] sm:$0xff]
        %v2051 = vld [vmem:[#allocation2 + $0x368] sm:$0xff]
        %v2052 = vld [vmem:[#allocation2 + $0x370] sm:$0xff]
        %v2053 = vld [vmem:[#allocation2 + $0x378] sm:$0xff]
        %v2054 = vld [vmem:[#allocation2 + $0x380] sm:$0xff]
        %v2055 = vld [vmem:[#allocation2 + $0x388] sm:$0xff]
        %v2056 = vld [vmem:[#allocation2 + $0x390] sm:$0xff]
        %v2057 = vld [vmem:[#allocation2 + $0x398] sm:$0xff]
        %v2058 = vld [vmem:[#allocation2 + $0x3a0] sm:$0xff]
        %v2059 = vld [vmem:[#allocation2 + $0x3a8] sm:$0xff]
        %v2060 = vld [vmem:[#allocation2 + $0x3b0] sm:$0xff]
        %v2061 = vld [vmem:[#allocation2 + $0x3b8] sm:$0xff]
        %v2062 = vld [vmem:[#allocation2 + $0x3c0] sm:$0xff]
        %v2063 = vld [vmem:[#allocation2 + $0x3c8] sm:$0xff]
        %v2064 = vld [vmem:[#allocation2 + $0x3d0] sm:$0xff]
        %v2065 = vld [vmem:[#allocation2 + $0x3d8] sm:$0xff]
        %v2066 = vld [vmem:[#allocation2 + $0x3e0] sm:$0xff]
        %v2067 = vld [vmem:[#allocation2 + $0x3e8] sm:$0xff]
        %v2068 = vld [vmem:[#allocation2 + $0x3f0] sm:$0xff]
        %v2069 = vld [vmem:[#allocation2 + $0x3f8] sm:$0xff]
        %v2070 = vpack.c.bf16 %v1943, %v1942
        %v2071 = vpack.c.bf16 %v1945, %v1944
        %v2072 = vpack.c.bf16 %v1947, %v1946
        %v2073 = vpack.c.bf16 %v1949, %v1948
        %v2074 = vpack.c.bf16 %v1951, %v1950
        %v2075 = vpack.c.bf16 %v1953, %v1952
        %v2076 = vpack.c.bf16 %v1955, %v1954
        %v2077 = vpack.c.bf16 %v1957, %v1956
        %v2078 = vpack.c.bf16 %v1959, %v1958
        %v2079 = vpack.c.bf16 %v1961, %v1960
        %v2080 = vpack.c.bf16 %v1963, %v1962
        %v2081 = vpack.c.bf16 %v1965, %v1964
        %v2082 = vpack.c.bf16 %v1967, %v1966
        %v2083 = vpack.c.bf16 %v1969, %v1968
        %v2084 = vpack.c.bf16 %v1971, %v1970
        %v2085 = vpack.c.bf16 %v1973, %v1972
        %v2086 = vpack.c.bf16 %v1975, %v1974
        %v2087 = vpack.c.bf16 %v1977, %v1976
        %v2088 = vpack.c.bf16 %v1979, %v1978
        %v2089 = vpack.c.bf16 %v1981, %v1980
        %v2090 = vpack.c.bf16 %v1983, %v1982
        %v2091 = vpack.c.bf16 %v1985, %v1984
        %v2092 = vpack.c.bf16 %v1987, %v1986
        %v2093 = vpack.c.bf16 %v1989, %v1988
        %v2094 = vpack.c.bf16 %v1991, %v1990
        %v2095 = vpack.c.bf16 %v1993, %v1992
        %v2096 = vpack.c.bf16 %v1995, %v1994
        %v2097 = vpack.c.bf16 %v1997, %v1996
        %v2098 = vpack.c.bf16 %v1999, %v1998
        %v2099 = vpack.c.bf16 %v2001, %v2000
        %v2100 = vpack.c.bf16 %v2003, %v2002
        %v2101 = vpack.c.bf16 %v2005, %v2004
        %v2102 = vpack.c.bf16 %v2007, %v2006
        %v2103 = vpack.c.bf16 %v2009, %v2008
        %v2104 = vpack.c.bf16 %v2011, %v2010
        %v2105 = vpack.c.bf16 %v2013, %v2012
        %v2106 = vpack.c.bf16 %v2015, %v2014
        %v2107 = vpack.c.bf16 %v2017, %v2016
        %v2108 = vpack.c.bf16 %v2019, %v2018
        %v2109 = vpack.c.bf16 %v2021, %v2020
        %v2110 = vpack.c.bf16 %v2023, %v2022
        %v2111 = vpack.c.bf16 %v2025, %v2024
        %v2112 = vpack.c.bf16 %v2027, %v2026
        %v2113 = vpack.c.bf16 %v2029, %v2028
        %v2114 = vpack.c.bf16 %v2031, %v2030
        %v2115 = vpack.c.bf16 %v2033, %v2032
        %v2116 = vpack.c.bf16 %v2035, %v2034
        %v2117 = vpack.c.bf16 %v2037, %v2036
        %v2118 = vpack.c.bf16 %v2039, %v2038
        %v2119 = vpack.c.bf16 %v2041, %v2040
        %v2120 = vpack.c.bf16 %v2043, %v2042
        %v2121 = vpack.c.bf16 %v2045, %v2044
        %v2122 = vpack.c.bf16 %v2047, %v2046
        %v2123 = vpack.c.bf16 %v2049, %v2048
        %v2124 = vpack.c.bf16 %v2051, %v2050
        %v2125 = vpack.c.bf16 %v2053, %v2052
        %v2126 = vpack.c.bf16 %v2055, %v2054
        %v2127 = vpack.c.bf16 %v2057, %v2056
        %v2128 = vpack.c.bf16 %v2059, %v2058
        %v2129 = vpack.c.bf16 %v2061, %v2060
        %v2130 = vpack.c.bf16 %v2063, %v2062
        %v2131 = vpack.c.bf16 %v2065, %v2064
        %v2132 = vpack.c.bf16 %v2067, %v2066
        %v2133 = vpack.c.bf16 %v2069, %v2068
        %v2198 = vunpack.c.l.b16 %v2070
        %v2199 = vunpack.c.h.b16 %v2070
        %v2200 = vunpack.c.l.b16 %v2071
        %v2201 = vunpack.c.h.b16 %v2071
        %v2202 = vunpack.c.l.b16 %v2072
        %v2203 = vunpack.c.h.b16 %v2072
        %v2204 = vunpack.c.l.b16 %v2073
        %v2205 = vunpack.c.h.b16 %v2073
        %v2206 = vunpack.c.l.b16 %v2074
        %v2207 = vunpack.c.h.b16 %v2074
        %v2208 = vunpack.c.l.b16 %v2075
        %v2209 = vunpack.c.h.b16 %v2075
        %v2210 = vunpack.c.l.b16 %v2076
        %v2211 = vunpack.c.h.b16 %v2076
        %v2212 = vunpack.c.l.b16 %v2077
        %v2213 = vunpack.c.h.b16 %v2077
        %v2214 = vunpack.c.l.b16 %v2078
        %v2215 = vunpack.c.h.b16 %v2078
        %v2216 = vunpack.c.l.b16 %v2079
        %v2217 = vunpack.c.h.b16 %v2079
        %v2218 = vunpack.c.l.b16 %v2080
        %v2219 = vunpack.c.h.b16 %v2080
        %v2220 = vunpack.c.l.b16 %v2081
        %v2221 = vunpack.c.h.b16 %v2081
        %v2222 = vunpack.c.l.b16 %v2082
        %v2223 = vunpack.c.h.b16 %v2082
        %v2224 = vunpack.c.l.b16 %v2083
        %v2225 = vunpack.c.h.b16 %v2083
        %v2226 = vunpack.c.l.b16 %v2084
        %v2227 = vunpack.c.h.b16 %v2084
        %v2228 = vunpack.c.l.b16 %v2085
        %v2229 = vunpack.c.h.b16 %v2085
        %v2230 = vunpack.c.l.b16 %v2086
        %v2231 = vunpack.c.h.b16 %v2086
        %v2232 = vunpack.c.l.b16 %v2087
        %v2233 = vunpack.c.h.b16 %v2087
        %v2234 = vunpack.c.l.b16 %v2088
        %v2235 = vunpack.c.h.b16 %v2088
        %v2236 = vunpack.c.l.b16 %v2089
        %v2237 = vunpack.c.h.b16 %v2089
        %v2238 = vunpack.c.l.b16 %v2090
        %v2239 = vunpack.c.h.b16 %v2090
        %v2240 = vunpack.c.l.b16 %v2091
        %v2241 = vunpack.c.h.b16 %v2091
        %v2242 = vunpack.c.l.b16 %v2092
        %v2243 = vunpack.c.h.b16 %v2092
        %v2244 = vunpack.c.l.b16 %v2093
        %v2245 = vunpack.c.h.b16 %v2093
        %v2246 = vunpack.c.l.b16 %v2094
        %v2247 = vunpack.c.h.b16 %v2094
        %v2248 = vunpack.c.l.b16 %v2095
        %v2249 = vunpack.c.h.b16 %v2095
        %v2250 = vunpack.c.l.b16 %v2096
        %v2251 = vunpack.c.h.b16 %v2096
        %v2252 = vunpack.c.l.b16 %v2097
        %v2253 = vunpack.c.h.b16 %v2097
        %v2254 = vunpack.c.l.b16 %v2098
        %v2255 = vunpack.c.h.b16 %v2098
        %v2256 = vunpack.c.l.b16 %v2099
        %v2257 = vunpack.c.h.b16 %v2099
        %v2258 = vunpack.c.l.b16 %v2100
        %v2259 = vunpack.c.h.b16 %v2100
        %v2260 = vunpack.c.l.b16 %v2101
        %v2261 = vunpack.c.h.b16 %v2101
        %v2262 = vunpack.c.l.b16 %v2102
        %v2263 = vunpack.c.h.b16 %v2102
        %v2264 = vunpack.c.l.b16 %v2103
        %v2265 = vunpack.c.h.b16 %v2103
        %v2266 = vunpack.c.l.b16 %v2104
        %v2267 = vunpack.c.h.b16 %v2104
        %v2268 = vunpack.c.l.b16 %v2105
        %v2269 = vunpack.c.h.b16 %v2105
        %v2270 = vunpack.c.l.b16 %v2106
        %v2271 = vunpack.c.h.b16 %v2106
        %v2272 = vunpack.c.l.b16 %v2107
        %v2273 = vunpack.c.h.b16 %v2107
        %v2274 = vunpack.c.l.b16 %v2108
        %v2275 = vunpack.c.h.b16 %v2108
        %v2276 = vunpack.c.l.b16 %v2109
        %v2277 = vunpack.c.h.b16 %v2109
        %v2278 = vunpack.c.l.b16 %v2110
        %v2279 = vunpack.c.h.b16 %v2110
        %v2280 = vunpack.c.l.b16 %v2111
        %v2281 = vunpack.c.h.b16 %v2111
        %v2282 = vunpack.c.l.b16 %v2112
        %v2283 = vunpack.c.h.b16 %v2112
        %v2284 = vunpack.c.l.b16 %v2113
        %v2285 = vunpack.c.h.b16 %v2113
        %v2286 = vunpack.c.l.b16 %v2114
        %v2287 = vunpack.c.h.b16 %v2114
        %v2288 = vunpack.c.l.b16 %v2115
        %v2289 = vunpack.c.h.b16 %v2115
        %v2290 = vunpack.c.l.b16 %v2116
        %v2291 = vunpack.c.h.b16 %v2116
        %v2292 = vunpack.c.l.b16 %v2117
        %v2293 = vunpack.c.h.b16 %v2117
        %v2294 = vunpack.c.l.b16 %v2118
        %v2295 = vunpack.c.h.b16 %v2118
        %v2296 = vunpack.c.l.b16 %v2119
        %v2297 = vunpack.c.h.b16 %v2119
        %v2298 = vunpack.c.l.b16 %v2120
        %v2299 = vunpack.c.h.b16 %v2120
        %v2300 = vunpack.c.l.b16 %v2121
        %v2301 = vunpack.c.h.b16 %v2121
        %v2302 = vunpack.c.l.b16 %v2122
        %v2303 = vunpack.c.h.b16 %v2122
        %v2304 = vunpack.c.l.b16 %v2123
        %v2305 = vunpack.c.h.b16 %v2123
        %v2306 = vunpack.c.l.b16 %v2124
        %v2307 = vunpack.c.h.b16 %v2124
        %v2308 = vunpack.c.l.b16 %v2125
        %v2309 = vunpack.c.h.b16 %v2125
        %v2310 = vunpack.c.l.b16 %v2126
        %v2311 = vunpack.c.h.b16 %v2126
        %v2312 = vunpack.c.l.b16 %v2127
        %v2313 = vunpack.c.h.b16 %v2127
        %v2314 = vunpack.c.l.b16 %v2128
        %v2315 = vunpack.c.h.b16 %v2128
        %v2316 = vunpack.c.l.b16 %v2129
        %v2317 = vunpack.c.h.b16 %v2129
        %v2318 = vunpack.c.l.b16 %v2130
        %v2319 = vunpack.c.h.b16 %v2130
        %v2320 = vunpack.c.l.b16 %v2131
        %v2321 = vunpack.c.h.b16 %v2131
        %v2322 = vunpack.c.l.b16 %v2132
        %v2323 = vunpack.c.h.b16 %v2132
        %v2324 = vunpack.c.l.b16 %v2133
        %v2325 = vunpack.c.h.b16 %v2133
        %v2326 = vpack.c.b16 %v2198, %v2198
        %v2327 = vpack.c.b16 %v2199, %v2199
        %v2328 = vpack.c.b16 %v2200, %v2200
        %v2329 = vpack.c.b16 %v2201, %v2201
        %v2330 = vpack.c.b16 %v2202, %v2202
        %v2331 = vpack.c.b16 %v2203, %v2203
        %v2332 = vpack.c.b16 %v2204, %v2204
        %v2333 = vpack.c.b16 %v2205, %v2205
        %v2334 = vpack.c.b16 %v2206, %v2206
        %v2335 = vpack.c.b16 %v2207, %v2207
        %v2336 = vpack.c.b16 %v2208, %v2208
        %v2337 = vpack.c.b16 %v2209, %v2209
        %v2338 = vpack.c.b16 %v2210, %v2210
        %v2339 = vpack.c.b16 %v2211, %v2211
        %v2340 = vpack.c.b16 %v2212, %v2212
        %v2341 = vpack.c.b16 %v2213, %v2213
        %v2342 = vpack.c.b16 %v2214, %v2214
        %v2343 = vpack.c.b16 %v2215, %v2215
        %v2344 = vpack.c.b16 %v2216, %v2216
        %v2345 = vpack.c.b16 %v2217, %v2217
        %v2346 = vpack.c.b16 %v2218, %v2218
        %v2347 = vpack.c.b16 %v2219, %v2219
        %v2348 = vpack.c.b16 %v2220, %v2220
        %v2349 = vpack.c.b16 %v2221, %v2221
        %v2350 = vpack.c.b16 %v2222, %v2222
        %v2351 = vpack.c.b16 %v2223, %v2223
        %v2352 = vpack.c.b16 %v2224, %v2224
        %v2353 = vpack.c.b16 %v2225, %v2225
        %v2354 = vpack.c.b16 %v2226, %v2226
        %v2355 = vpack.c.b16 %v2227, %v2227
        %v2356 = vpack.c.b16 %v2228, %v2228
        %v2357 = vpack.c.b16 %v2229, %v2229
        %v2358 = vpack.c.b16 %v2230, %v2230
        %v2359 = vpack.c.b16 %v2231, %v2231
        %v2360 = vpack.c.b16 %v2232, %v2232
        %v2361 = vpack.c.b16 %v2233, %v2233
        %v2362 = vpack.c.b16 %v2234, %v2234
        %v2363 = vpack.c.b16 %v2235, %v2235
        %v2364 = vpack.c.b16 %v2236, %v2236
        %v2365 = vpack.c.b16 %v2237, %v2237
        %v2366 = vpack.c.b16 %v2238, %v2238
        %v2367 = vpack.c.b16 %v2239, %v2239
        %v2368 = vpack.c.b16 %v2240, %v2240
        %v2369 = vpack.c.b16 %v2241, %v2241
        %v2370 = vpack.c.b16 %v2242, %v2242
        %v2371 = vpack.c.b16 %v2243, %v2243
        %v2372 = vpack.c.b16 %v2244, %v2244
        %v2373 = vpack.c.b16 %v2245, %v2245
        %v2374 = vpack.c.b16 %v2246, %v2246
        %v2375 = vpack.c.b16 %v2247, %v2247
        %v2376 = vpack.c.b16 %v2248, %v2248
        %v2377 = vpack.c.b16 %v2249, %v2249
        %v2378 = vpack.c.b16 %v2250, %v2250
        %v2379 = vpack.c.b16 %v2251, %v2251
        %v2380 = vpack.c.b16 %v2252, %v2252
        %v2381 = vpack.c.b16 %v2253, %v2253
        %v2382 = vpack.c.b16 %v2254, %v2254
        %v2383 = vpack.c.b16 %v2255, %v2255
        %v2384 = vpack.c.b16 %v2256, %v2256
        %v2385 = vpack.c.b16 %v2257, %v2257
        %v2386 = vpack.c.b16 %v2258, %v2258
        %v2387 = vpack.c.b16 %v2259, %v2259
        %v2388 = vpack.c.b16 %v2260, %v2260
        %v2389 = vpack.c.b16 %v2261, %v2261
        %v2390 = vpack.c.b16 %v2262, %v2262
        %v2391 = vpack.c.b16 %v2263, %v2263
        %v2392 = vpack.c.b16 %v2264, %v2264
        %v2393 = vpack.c.b16 %v2265, %v2265
        %v2394 = vpack.c.b16 %v2266, %v2266
        %v2395 = vpack.c.b16 %v2267, %v2267
        %v2396 = vpack.c.b16 %v2268, %v2268
        %v2397 = vpack.c.b16 %v2269, %v2269
        %v2398 = vpack.c.b16 %v2270, %v2270
        %v2399 = vpack.c.b16 %v2271, %v2271
        %v2400 = vpack.c.b16 %v2272, %v2272
        %v2401 = vpack.c.b16 %v2273, %v2273
        %v2402 = vpack.c.b16 %v2274, %v2274
        %v2403 = vpack.c.b16 %v2275, %v2275
        %v2404 = vpack.c.b16 %v2276, %v2276
        %v2405 = vpack.c.b16 %v2277, %v2277
        %v2406 = vpack.c.b16 %v2278, %v2278
        %v2407 = vpack.c.b16 %v2279, %v2279
        %v2408 = vpack.c.b16 %v2280, %v2280
        %v2409 = vpack.c.b16 %v2281, %v2281
        %v2410 = vpack.c.b16 %v2282, %v2282
        %v2411 = vpack.c.b16 %v2283, %v2283
        %v2412 = vpack.c.b16 %v2284, %v2284
        %v2413 = vpack.c.b16 %v2285, %v2285
        %v2414 = vpack.c.b16 %v2286, %v2286
        %v2415 = vpack.c.b16 %v2287, %v2287
        %v2416 = vpack.c.b16 %v2288, %v2288
        %v2417 = vpack.c.b16 %v2289, %v2289
        %v2418 = vpack.c.b16 %v2290, %v2290
        %v2419 = vpack.c.b16 %v2291, %v2291
        %v2420 = vpack.c.b16 %v2292, %v2292
        %v2421 = vpack.c.b16 %v2293, %v2293
        %v2422 = vpack.c.b16 %v2294, %v2294
        %v2423 = vpack.c.b16 %v2295, %v2295
        %v2424 = vpack.c.b16 %v2296, %v2296
        %v2425 = vpack.c.b16 %v2297, %v2297
        %v2426 = vpack.c.b16 %v2298, %v2298
        %v2427 = vpack.c.b16 %v2299, %v2299
        %v2428 = vpack.c.b16 %v2300, %v2300
        %v2429 = vpack.c.b16 %v2301, %v2301
        %v2430 = vpack.c.b16 %v2302, %v2302
        %v2431 = vpack.c.b16 %v2303, %v2303
        %v2432 = vpack.c.b16 %v2304, %v2304
        %v2433 = vpack.c.b16 %v2305, %v2305
        %v2434 = vpack.c.b16 %v2306, %v2306
        %v2435 = vpack.c.b16 %v2307, %v2307
        %v2436 = vpack.c.b16 %v2308, %v2308
        %v2437 = vpack.c.b16 %v2309, %v2309
        %v2438 = vpack.c.b16 %v2310, %v2310
        %v2439 = vpack.c.b16 %v2311, %v2311
        %v2440 = vpack.c.b16 %v2312, %v2312
        %v2441 = vpack.c.b16 %v2313, %v2313
        %v2442 = vpack.c.b16 %v2314, %v2314
        %v2443 = vpack.c.b16 %v2315, %v2315
        %v2444 = vpack.c.b16 %v2316, %v2316
        %v2445 = vpack.c.b16 %v2317, %v2317
        %v2446 = vpack.c.b16 %v2318, %v2318
        %v2447 = vpack.c.b16 %v2319, %v2319
        %v2448 = vpack.c.b16 %v2320, %v2320
        %v2449 = vpack.c.b16 %v2321, %v2321
        %v2450 = vpack.c.b16 %v2322, %v2322
        %v2451 = vpack.c.b16 %v2323, %v2323
        %v2452 = vpack.c.b16 %v2324, %v2324
        %v2453 = vpack.c.b16 %v2325, %v2325
        %2582 = vst [vmem:[%s286] sm:$0xf] %v2326
        %2583 = vst [vmem:[%s286 + $0x4] sm:$0xf] %v2327
        %2584 = vst [vmem:[%s286 + $0x8] sm:$0xf] %v2328
        %2585 = vst [vmem:[%s286 + $0xc] sm:$0xf] %v2329
        %2586 = vst [vmem:[%s286 + $0x10] sm:$0xf] %v2330
        %2587 = vst [vmem:[%s286 + $0x14] sm:$0xf] %v2331
        %2588 = vst [vmem:[%s286 + $0x18] sm:$0xf] %v2332
        %2589 = vst [vmem:[%s286 + $0x1c] sm:$0xf] %v2333
        %2590 = vst [vmem:[%s286 + $0x20] sm:$0xf] %v2334
        %2591 = vst [vmem:[%s286 + $0x24] sm:$0xf] %v2335
        %2592 = vst [vmem:[%s286 + $0x28] sm:$0xf] %v2336
        %2593 = vst [vmem:[%s286 + $0x2c] sm:$0xf] %v2337
        %2594 = vst [vmem:[%s286 + $0x30] sm:$0xf] %v2338
        %2595 = vst [vmem:[%s286 + $0x34] sm:$0xf] %v2339
        %2596 = vst [vmem:[%s286 + $0x38] sm:$0xf] %v2340
        %2597 = vst [vmem:[%s286 + $0x3c] sm:$0xf] %v2341
        %2598 = vst [vmem:[%s286 + $0x40] sm:$0xf] %v2342
        %2599 = vst [vmem:[%s286 + $0x44] sm:$0xf] %v2343
        %2600 = vst [vmem:[%s286 + $0x48] sm:$0xf] %v2344
        %2601 = vst [vmem:[%s286 + $0x4c] sm:$0xf] %v2345
        %2602 = vst [vmem:[%s286 + $0x50] sm:$0xf] %v2346
        %2603 = vst [vmem:[%s286 + $0x54] sm:$0xf] %v2347
        %2604 = vst [vmem:[%s286 + $0x58] sm:$0xf] %v2348
        %2605 = vst [vmem:[%s286 + $0x5c] sm:$0xf] %v2349
        %2606 = vst [vmem:[%s286 + $0x60] sm:$0xf] %v2350
        %2607 = vst [vmem:[%s286 + $0x64] sm:$0xf] %v2351
        %2608 = vst [vmem:[%s286 + $0x68] sm:$0xf] %v2352
        %2609 = vst [vmem:[%s286 + $0x6c] sm:$0xf] %v2353
        %2610 = vst [vmem:[%s286 + $0x70] sm:$0xf] %v2354
        %2611 = vst [vmem:[%s286 + $0x74] sm:$0xf] %v2355
        %2612 = vst [vmem:[%s286 + $0x78] sm:$0xf] %v2356
        %2613 = vst [vmem:[%s286 + $0x7c] sm:$0xf] %v2357
        %2614 = vst [vmem:[%s286 + $0x80] sm:$0xf] %v2358
        %2615 = vst [vmem:[%s286 + $0x84] sm:$0xf] %v2359
        %2616 = vst [vmem:[%s286 + $0x88] sm:$0xf] %v2360
        %2617 = vst [vmem:[%s286 + $0x8c] sm:$0xf] %v2361
        %2618 = vst [vmem:[%s286 + $0x90] sm:$0xf] %v2362
        %2619 = vst [vmem:[%s286 + $0x94] sm:$0xf] %v2363
        %2620 = vst [vmem:[%s286 + $0x98] sm:$0xf] %v2364
        %2621 = vst [vmem:[%s286 + $0x9c] sm:$0xf] %v2365
        %2622 = vst [vmem:[%s286 + $0xa0] sm:$0xf] %v2366
        %2623 = vst [vmem:[%s286 + $0xa4] sm:$0xf] %v2367
        %2624 = vst [vmem:[%s286 + $0xa8] sm:$0xf] %v2368
        %2625 = vst [vmem:[%s286 + $0xac] sm:$0xf] %v2369
        %2626 = vst [vmem:[%s286 + $0xb0] sm:$0xf] %v2370
        %2627 = vst [vmem:[%s286 + $0xb4] sm:$0xf] %v2371
        %2628 = vst [vmem:[%s286 + $0xb8] sm:$0xf] %v2372
        %2629 = vst [vmem:[%s286 + $0xbc] sm:$0xf] %v2373
        %2630 = vst [vmem:[%s286 + $0xc0] sm:$0xf] %v2374
        %2631 = vst [vmem:[%s286 + $0xc4] sm:$0xf] %v2375
        %2632 = vst [vmem:[%s286 + $0xc8] sm:$0xf] %v2376
        %2633 = vst [vmem:[%s286 + $0xcc] sm:$0xf] %v2377
        %2634 = vst [vmem:[%s286 + $0xd0] sm:$0xf] %v2378
        %2635 = vst [vmem:[%s286 + $0xd4] sm:$0xf] %v2379
        %2636 = vst [vmem:[%s286 + $0xd8] sm:$0xf] %v2380
        %2637 = vst [vmem:[%s286 + $0xdc] sm:$0xf] %v2381
        %2638 = vst [vmem:[%s286 + $0xe0] sm:$0xf] %v2382
        %2639 = vst [vmem:[%s286 + $0xe4] sm:$0xf] %v2383
        %2640 = vst [vmem:[%s286 + $0xe8] sm:$0xf] %v2384
        %2641 = vst [vmem:[%s286 + $0xec] sm:$0xf] %v2385
        %2642 = vst [vmem:[%s286 + $0xf0] sm:$0xf] %v2386
        %2643 = vst [vmem:[%s286 + $0xf4] sm:$0xf] %v2387
        %2644 = vst [vmem:[%s286 + $0xf8] sm:$0xf] %v2388
        %2645 = vst [vmem:[%s286 + $0xfc] sm:$0xf] %v2389
        %2646 = vst [vmem:[%s286 + $0x100] sm:$0xf] %v2390
        %2647 = vst [vmem:[%s286 + $0x104] sm:$0xf] %v2391
        %2648 = vst [vmem:[%s286 + $0x108] sm:$0xf] %v2392
        %2649 = vst [vmem:[%s286 + $0x10c] sm:$0xf] %v2393
        %2650 = vst [vmem:[%s286 + $0x110] sm:$0xf] %v2394
        %2651 = vst [vmem:[%s286 + $0x114] sm:$0xf] %v2395
        %2652 = vst [vmem:[%s286 + $0x118] sm:$0xf] %v2396
        %2653 = vst [vmem:[%s286 + $0x11c] sm:$0xf] %v2397
        %2654 = vst [vmem:[%s286 + $0x120] sm:$0xf] %v2398
        %2655 = vst [vmem:[%s286 + $0x124] sm:$0xf] %v2399
        %2656 = vst [vmem:[%s286 + $0x128] sm:$0xf] %v2400
        %2657 = vst [vmem:[%s286 + $0x12c] sm:$0xf] %v2401
        %2658 = vst [vmem:[%s286 + $0x130] sm:$0xf] %v2402
        %2659 = vst [vmem:[%s286 + $0x134] sm:$0xf] %v2403
        %2660 = vst [vmem:[%s286 + $0x138] sm:$0xf] %v2404
        %2661 = vst [vmem:[%s286 + $0x13c] sm:$0xf] %v2405
        %2662 = vst [vmem:[%s286 + $0x140] sm:$0xf] %v2406
        %2663 = vst [vmem:[%s286 + $0x144] sm:$0xf] %v2407
        %2664 = vst [vmem:[%s286 + $0x148] sm:$0xf] %v2408
        %2665 = vst [vmem:[%s286 + $0x14c] sm:$0xf] %v2409
        %2666 = vst [vmem:[%s286 + $0x150] sm:$0xf] %v2410
        %2667 = vst [vmem:[%s286 + $0x154] sm:$0xf] %v2411
        %2668 = vst [vmem:[%s286 + $0x158] sm:$0xf] %v2412
        %2669 = vst [vmem:[%s286 + $0x15c] sm:$0xf] %v2413
        %2670 = vst [vmem:[%s286 + $0x160] sm:$0xf] %v2414
        %2671 = vst [vmem:[%s286 + $0x164] sm:$0xf] %v2415
        %2672 = vst [vmem:[%s286 + $0x168] sm:$0xf] %v2416
        %2673 = vst [vmem:[%s286 + $0x16c] sm:$0xf] %v2417
        %2674 = vst [vmem:[%s286 + $0x170] sm:$0xf] %v2418
        %2675 = vst [vmem:[%s286 + $0x174] sm:$0xf] %v2419
        %2676 = vst [vmem:[%s286 + $0x178] sm:$0xf] %v2420
        %2677 = vst [vmem:[%s286 + $0x17c] sm:$0xf] %v2421
        %2678 = vst [vmem:[%s286 + $0x180] sm:$0xf] %v2422
        %2679 = vst [vmem:[%s286 + $0x184] sm:$0xf] %v2423
        %2680 = vst [vmem:[%s286 + $0x188] sm:$0xf] %v2424
        %2681 = vst [vmem:[%s286 + $0x18c] sm:$0xf] %v2425
        %2682 = vst [vmem:[%s286 + $0x190] sm:$0xf] %v2426
        %2683 = vst [vmem:[%s286 + $0x194] sm:$0xf] %v2427
        %2684 = vst [vmem:[%s286 + $0x198] sm:$0xf] %v2428
        %2685 = vst [vmem:[%s286 + $0x19c] sm:$0xf] %v2429
        %2686 = vst [vmem:[%s286 + $0x1a0] sm:$0xf] %v2430
        %2687 = vst [vmem:[%s286 + $0x1a4] sm:$0xf] %v2431
        %2688 = vst [vmem:[%s286 + $0x1a8] sm:$0xf] %v2432
        %2689 = vst [vmem:[%s286 + $0x1ac] sm:$0xf] %v2433
        %2690 = vst [vmem:[%s286 + $0x1b0] sm:$0xf] %v2434
        %2691 = vst [vmem:[%s286 + $0x1b4] sm:$0xf] %v2435
        %2692 = vst [vmem:[%s286 + $0x1b8] sm:$0xf] %v2436
        %2693 = vst [vmem:[%s286 + $0x1bc] sm:$0xf] %v2437
        %2694 = vst [vmem:[%s286 + $0x1c0] sm:$0xf] %v2438
        %2695 = vst [vmem:[%s286 + $0x1c4] sm:$0xf] %v2439
        %2696 = vst [vmem:[%s286 + $0x1c8] sm:$0xf] %v2440
        %2697 = vst [vmem:[%s286 + $0x1cc] sm:$0xf] %v2441
        %2698 = vst [vmem:[%s286 + $0x1d0] sm:$0xf] %v2442
        %2699 = vst [vmem:[%s286 + $0x1d4] sm:$0xf] %v2443
        %2700 = vst [vmem:[%s286 + $0x1d8] sm:$0xf] %v2444
        %2701 = vst [vmem:[%s286 + $0x1dc] sm:$0xf] %v2445
        %2702 = vst [vmem:[%s286 + $0x1e0] sm:$0xf] %v2446
        %2703 = vst [vmem:[%s286 + $0x1e4] sm:$0xf] %v2447
        %2704 = vst [vmem:[%s286 + $0x1e8] sm:$0xf] %v2448
        %2705 = vst [vmem:[%s286 + $0x1ec] sm:$0xf] %v2449
        %2706 = vst [vmem:[%s286 + $0x1f0] sm:$0xf] %v2450
        %2707 = vst [vmem:[%s286 + $0x1f4] sm:$0xf] %v2451
        %2708 = vst [vmem:[%s286 + $0x1f8] sm:$0xf] %v2452
        %2709 = vst [vmem:[%s286 + $0x1fc] sm:$0xf] %v2453
        %v2710 = vld [vmem:[%s294] sm:$0x1]
        %v2711 = vadd.f32 %v1942, %v1943
        %v2712 = vadd.f32 %v2711, %v1944
        %v2713 = vadd.f32 %v2712, %v1945
        %v2714 = vadd.f32 %v2713, %v1946
        %v2715 = vadd.f32 %v2714, %v1947
        %v2716 = vadd.f32 %v2715, %v1948
        %v2717 = vadd.f32 %v2716, %v1949
        %v2718 = vadd.f32 %v2717, %v1950
        %v2719 = vadd.f32 %v2718, %v1951
        %v2720 = vadd.f32 %v2719, %v1952
        %v2721 = vadd.f32 %v2720, %v1953
        %v2722 = vadd.f32 %v2721, %v1954
        %v2723 = vadd.f32 %v2722, %v1955
        %v2724 = vadd.f32 %v2723, %v1956
        %v2725 = vadd.f32 %v2724, %v1957
        %v2726 = vadd.f32 %v2725, %v1958
        %v2727 = vadd.f32 %v2726, %v1959
        %v2728 = vadd.f32 %v2727, %v1960
        %v2729 = vadd.f32 %v2728, %v1961
        %v2730 = vadd.f32 %v2729, %v1962
        %v2731 = vadd.f32 %v2730, %v1963
        %v2732 = vadd.f32 %v2731, %v1964
        %v2733 = vadd.f32 %v2732, %v1965
        %v2734 = vadd.f32 %v2733, %v1966
        %v2735 = vadd.f32 %v2734, %v1967
        %v2736 = vadd.f32 %v2735, %v1968
        %v2737 = vadd.f32 %v2736, %v1969
        %v2738 = vadd.f32 %v2737, %v1970
        %v2739 = vadd.f32 %v2738, %v1971
        %v2740 = vadd.f32 %v2739, %v1972
        %v2741 = vadd.f32 %v2740, %v1973
        %v2742 = vadd.f32 %v2741, %v1974
        %v2743 = vadd.f32 %v2742, %v1975
        %v2744 = vadd.f32 %v2743, %v1976
        %v2745 = vadd.f32 %v2744, %v1977
        %v2746 = vadd.f32 %v2745, %v1978
        %v2747 = vadd.f32 %v2746, %v1979
        %v2748 = vadd.f32 %v2747, %v1980
        %v2749 = vadd.f32 %v2748, %v1981
        %v2750 = vadd.f32 %v2749, %v1982
        %v2751 = vadd.f32 %v2750, %v1983
        %v2752 = vadd.f32 %v2751, %v1984
        %v2753 = vadd.f32 %v2752, %v1985
        %v2754 = vadd.f32 %v2753, %v1986
        %v2755 = vadd.f32 %v2754, %v1987
        %v2756 = vadd.f32 %v2755, %v1988
        %v2757 = vadd.f32 %v2756, %v1989
        %v2758 = vadd.f32 %v2757, %v1990
        %v2759 = vadd.f32 %v2758, %v1991
        %v2760 = vadd.f32 %v2759, %v1992
        %v2761 = vadd.f32 %v2760, %v1993
        %v2762 = vadd.f32 %v2761, %v1994
        %v2763 = vadd.f32 %v2762, %v1995
        %v2764 = vadd.f32 %v2763, %v1996
        %v2765 = vadd.f32 %v2764, %v1997
        %v2766 = vadd.f32 %v2765, %v1998
        %v2767 = vadd.f32 %v2766, %v1999
        %v2768 = vadd.f32 %v2767, %v2000
        %v2769 = vadd.f32 %v2768, %v2001
        %v2770 = vadd.f32 %v2769, %v2002
        %v2771 = vadd.f32 %v2770, %v2003
        %v2772 = vadd.f32 %v2771, %v2004
        %v2773 = vadd.f32 %v2772, %v2005
        %v2774 = vadd.f32 %v2773, %v2006
        %v2775 = vadd.f32 %v2774, %v2007
        %v2776 = vadd.f32 %v2775, %v2008
        %v2777 = vadd.f32 %v2776, %v2009
        %v2778 = vadd.f32 %v2777, %v2010
        %v2779 = vadd.f32 %v2778, %v2011
        %v2780 = vadd.f32 %v2779, %v2012
        %v2781 = vadd.f32 %v2780, %v2013
        %v2782 = vadd.f32 %v2781, %v2014
        %v2783 = vadd.f32 %v2782, %v2015
        %v2784 = vadd.f32 %v2783, %v2016
        %v2785 = vadd.f32 %v2784, %v2017
        %v2786 = vadd.f32 %v2785, %v2018
        %v2787 = vadd.f32 %v2786, %v2019
        %v2788 = vadd.f32 %v2787, %v2020
        %v2789 = vadd.f32 %v2788, %v2021
        %v2790 = vadd.f32 %v2789, %v2022
        %v2791 = vadd.f32 %v2790, %v2023
        %v2792 = vadd.f32 %v2791, %v2024
        %v2793 = vadd.f32 %v2792, %v2025
        %v2794 = vadd.f32 %v2793, %v2026
        %v2795 = vadd.f32 %v2794, %v2027
        %v2796 = vadd.f32 %v2795, %v2028
        %v2797 = vadd.f32 %v2796, %v2029
        %v2798 = vadd.f32 %v2797, %v2030
        %v2799 = vadd.f32 %v2798, %v2031
        %v2800 = vadd.f32 %v2799, %v2032
        %v2801 = vadd.f32 %v2800, %v2033
        %v2802 = vadd.f32 %v2801, %v2034
        %v2803 = vadd.f32 %v2802, %v2035
        %v2804 = vadd.f32 %v2803, %v2036
        %v2805 = vadd.f32 %v2804, %v2037
        %v2806 = vadd.f32 %v2805, %v2038
        %v2807 = vadd.f32 %v2806, %v2039
        %v2808 = vadd.f32 %v2807, %v2040
        %v2809 = vadd.f32 %v2808, %v2041
        %v2810 = vadd.f32 %v2809, %v2042
        %v2811 = vadd.f32 %v2810, %v2043
        %v2812 = vadd.f32 %v2811, %v2044
        %v2813 = vadd.f32 %v2812, %v2045
        %v2814 = vadd.f32 %v2813, %v2046
        %v2815 = vadd.f32 %v2814, %v2047
        %v2816 = vadd.f32 %v2815, %v2048
        %v2817 = vadd.f32 %v2816, %v2049
        %v2818 = vadd.f32 %v2817, %v2050
        %v2819 = vadd.f32 %v2818, %v2051
        %v2820 = vadd.f32 %v2819, %v2052
        %v2821 = vadd.f32 %v2820, %v2053
        %v2822 = vadd.f32 %v2821, %v2054
        %v2823 = vadd.f32 %v2822, %v2055
        %v2824 = vadd.f32 %v2823, %v2056
        %v2825 = vadd.f32 %v2824, %v2057
        %v2826 = vadd.f32 %v2825, %v2058
        %v2827 = vadd.f32 %v2826, %v2059
        %v2828 = vadd.f32 %v2827, %v2060
        %v2829 = vadd.f32 %v2828, %v2061
        %v2830 = vadd.f32 %v2829, %v2062
        %v2831 = vadd.f32 %v2830, %v2063
        %v2832 = vadd.f32 %v2831, %v2064
        %v2833 = vadd.f32 %v2832, %v2065
        %v2834 = vadd.f32 %v2833, %v2066
        %v2835 = vadd.f32 %v2834, %v2067
        %v2836 = vadd.f32 %v2835, %v2068
        %v2837 = vadd.f32 %v2836, %v2069
        %v2838 = vrot.slane %v2837, 4
        %v2839 = vadd.f32 %v2837, %v2838
        %v2840 = vrot.slane %v2839, 2
        %v2841 = vadd.f32 %v2839, %v2840
        %v2842 = vrot.slane %v2841, 1
        %v2843 = vadd.f32 %v2841, %v2842
        %v2844 = vadd.f32 %v2710, %v2843
        %2845 = vst [vmem:[%s294] sm:$0x1] %v2844
        %v2846 = vld [vmem:[%s294 + $0x1] sm:$0x1]
        %v2847 = vmul.f32 %v1942, %v1942
        %v2848 = vmul.f32 %v1943, %v1943
        %v2849 = vmul.f32 %v1944, %v1944
        %v2850 = vmul.f32 %v1945, %v1945
        %v2851 = vmul.f32 %v1946, %v1946
        %v2852 = vmul.f32 %v1947, %v1947
        %v2853 = vmul.f32 %v1948, %v1948
        %v2854 = vmul.f32 %v1949, %v1949
        %v2855 = vmul.f32 %v1950, %v1950
        %v2856 = vmul.f32 %v1951, %v1951
        %v2857 = vmul.f32 %v1952, %v1952
        %v2858 = vmul.f32 %v1953, %v1953
        %v2859 = vmul.f32 %v1954, %v1954
        %v2860 = vmul.f32 %v1955, %v1955
        %v2861 = vmul.f32 %v1956, %v1956
        %v2862 = vmul.f32 %v1957, %v1957
        %v2863 = vmul.f32 %v1958, %v1958
        %v2864 = vmul.f32 %v1959, %v1959
        %v2865 = vmul.f32 %v1960, %v1960
        %v2866 = vmul.f32 %v1961, %v1961
        %v2867 = vmul.f32 %v1962, %v1962
        %v2868 = vmul.f32 %v1963, %v1963
        %v2869 = vmul.f32 %v1964, %v1964
        %v2870 = vmul.f32 %v1965, %v1965
        %v2871 = vmul.f32 %v1966, %v1966
        %v2872 = vmul.f32 %v1967, %v1967
        %v2873 = vmul.f32 %v1968, %v1968
        %v2874 = vmul.f32 %v1969, %v1969
        %v2875 = vmul.f32 %v1970, %v1970
        %v2876 = vmul.f32 %v1971, %v1971
        %v2877 = vmul.f32 %v1972, %v1972
        %v2878 = vmul.f32 %v1973, %v1973
        %v2879 = vmul.f32 %v1974, %v1974
        %v2880 = vmul.f32 %v1975, %v1975
        %v2881 = vmul.f32 %v1976, %v1976
        %v2882 = vmul.f32 %v1977, %v1977
        %v2883 = vmul.f32 %v1978, %v1978
        %v2884 = vmul.f32 %v1979, %v1979
        %v2885 = vmul.f32 %v1980, %v1980
        %v2886 = vmul.f32 %v1981, %v1981
        %v2887 = vmul.f32 %v1982, %v1982
        %v2888 = vmul.f32 %v1983, %v1983
        %v2889 = vmul.f32 %v1984, %v1984
        %v2890 = vmul.f32 %v1985, %v1985
        %v2891 = vmul.f32 %v1986, %v1986
        %v2892 = vmul.f32 %v1987, %v1987
        %v2893 = vmul.f32 %v1988, %v1988
        %v2894 = vmul.f32 %v1989, %v1989
        %v2895 = vmul.f32 %v1990, %v1990
        %v2896 = vmul.f32 %v1991, %v1991
        %v2897 = vmul.f32 %v1992, %v1992
        %v2898 = vmul.f32 %v1993, %v1993
        %v2899 = vmul.f32 %v1994, %v1994
        %v2900 = vmul.f32 %v1995, %v1995
        %v2901 = vmul.f32 %v1996, %v1996
        %v2902 = vmul.f32 %v1997, %v1997
        %v2903 = vmul.f32 %v1998, %v1998
        %v2904 = vmul.f32 %v1999, %v1999
        %v2905 = vmul.f32 %v2000, %v2000
        %v2906 = vmul.f32 %v2001, %v2001
        %v2907 = vmul.f32 %v2002, %v2002
        %v2908 = vmul.f32 %v2003, %v2003
        %v2909 = vmul.f32 %v2004, %v2004
        %v2910 = vmul.f32 %v2005, %v2005
        %v2911 = vmul.f32 %v2006, %v2006
        %v2912 = vmul.f32 %v2007, %v2007
        %v2913 = vmul.f32 %v2008, %v2008
        %v2914 = vmul.f32 %v2009, %v2009
        %v2915 = vmul.f32 %v2010, %v2010
        %v2916 = vmul.f32 %v2011, %v2011
        %v2917 = vmul.f32 %v2012, %v2012
        %v2918 = vmul.f32 %v2013, %v2013
        %v2919 = vmul.f32 %v2014, %v2014
        %v2920 = vmul.f32 %v2015, %v2015
        %v2921 = vmul.f32 %v2016, %v2016
        %v2922 = vmul.f32 %v2017, %v2017
        %v2923 = vmul.f32 %v2018, %v2018
        %v2924 = vmul.f32 %v2019, %v2019
        %v2925 = vmul.f32 %v2020, %v2020
        %v2926 = vmul.f32 %v2021, %v2021
        %v2927 = vmul.f32 %v2022, %v2022
        %v2928 = vmul.f32 %v2023, %v2023
        %v2929 = vmul.f32 %v2024, %v2024
        %v2930 = vmul.f32 %v2025, %v2025
        %v2931 = vmul.f32 %v2026, %v2026
        %v2932 = vmul.f32 %v2027, %v2027
        %v2933 = vmul.f32 %v2028, %v2028
        %v2934 = vmul.f32 %v2029, %v2029
        %v2935 = vmul.f32 %v2030, %v2030
        %v2936 = vmul.f32 %v2031, %v2031
        %v2937 = vmul.f32 %v2032, %v2032
        %v2938 = vmul.f32 %v2033, %v2033
        %v2939 = vmul.f32 %v2034, %v2034
        %v2940 = vmul.f32 %v2035, %v2035
        %v2941 = vmul.f32 %v2036, %v2036
        %v2942 = vmul.f32 %v2037, %v2037
        %v2943 = vmul.f32 %v2038, %v2038
        %v2944 = vmul.f32 %v2039, %v2039
        %v2945 = vmul.f32 %v2040, %v2040
        %v2946 = vmul.f32 %v2041, %v2041
        %v2947 = vmul.f32 %v2042, %v2042
        %v2948 = vmul.f32 %v2043, %v2043
        %v2949 = vmul.f32 %v2044, %v2044
        %v2950 = vmul.f32 %v2045, %v2045
        %v2951 = vmul.f32 %v2046, %v2046
        %v2952 = vmul.f32 %v2047, %v2047
        %v2953 = vmul.f32 %v2048, %v2048
        %v2954 = vmul.f32 %v2049, %v2049
        %v2955 = vmul.f32 %v2050, %v2050
        %v2956 = vmul.f32 %v2051, %v2051
        %v2957 = vmul.f32 %v2052, %v2052
        %v2958 = vmul.f32 %v2053, %v2053
        %v2959 = vmul.f32 %v2054, %v2054
        %v2960 = vmul.f32 %v2055, %v2055
        %v2961 = vmul.f32 %v2056, %v2056
        %v2962 = vmul.f32 %v2057, %v2057
        %v2963 = vmul.f32 %v2058, %v2058
        %v2964 = vmul.f32 %v2059, %v2059
        %v2965 = vmul.f32 %v2060, %v2060
        %v2966 = vmul.f32 %v2061, %v2061
        %v2967 = vmul.f32 %v2062, %v2062
        %v2968 = vmul.f32 %v2063, %v2063
        %v2969 = vmul.f32 %v2064, %v2064
        %v2970 = vmul.f32 %v2065, %v2065
        %v2971 = vmul.f32 %v2066, %v2066
        %v2972 = vmul.f32 %v2067, %v2067
        %v2973 = vmul.f32 %v2068, %v2068
        %v2974 = vmul.f32 %v2069, %v2069
        %v2975 = vadd.f32 %v2847, %v2848
        %v2976 = vadd.f32 %v2975, %v2849
        %v2977 = vadd.f32 %v2976, %v2850
        %v2978 = vadd.f32 %v2977, %v2851
        %v2979 = vadd.f32 %v2978, %v2852
        %v2980 = vadd.f32 %v2979, %v2853
        %v2981 = vadd.f32 %v2980, %v2854
        %v2982 = vadd.f32 %v2981, %v2855
        %v2983 = vadd.f32 %v2982, %v2856
        %v2984 = vadd.f32 %v2983, %v2857
        %v2985 = vadd.f32 %v2984, %v2858
        %v2986 = vadd.f32 %v2985, %v2859
        %v2987 = vadd.f32 %v2986, %v2860
        %v2988 = vadd.f32 %v2987, %v2861
        %v2989 = vadd.f32 %v2988, %v2862
        %v2990 = vadd.f32 %v2989, %v2863
        %v2991 = vadd.f32 %v2990, %v2864
        %v2992 = vadd.f32 %v2991, %v2865
        %v2993 = vadd.f32 %v2992, %v2866
        %v2994 = vadd.f32 %v2993, %v2867
        %v2995 = vadd.f32 %v2994, %v2868
        %v2996 = vadd.f32 %v2995, %v2869
        %v2997 = vadd.f32 %v2996, %v2870
        %v2998 = vadd.f32 %v2997, %v2871
        %v2999 = vadd.f32 %v2998, %v2872
        %v3000 = vadd.f32 %v2999, %v2873
        %v3001 = vadd.f32 %v3000, %v2874
        %v3002 = vadd.f32 %v3001, %v2875
        %v3003 = vadd.f32 %v3002, %v2876
        %v3004 = vadd.f32 %v3003, %v2877
        %v3005 = vadd.f32 %v3004, %v2878
        %v3006 = vadd.f32 %v3005, %v2879
        %v3007 = vadd.f32 %v3006, %v2880
        %v3008 = vadd.f32 %v3007, %v2881
        %v3009 = vadd.f32 %v3008, %v2882
        %v3010 = vadd.f32 %v3009, %v2883
        %v3011 = vadd.f32 %v3010, %v2884
        %v3012 = vadd.f32 %v3011, %v2885
        %v3013 = vadd.f32 %v3012, %v2886
        %v3014 = vadd.f32 %v3013, %v2887
        %v3015 = vadd.f32 %v3014, %v2888
        %v3016 = vadd.f32 %v3015, %v2889
        %v3017 = vadd.f32 %v3016, %v2890
        %v3018 = vadd.f32 %v3017, %v2891
        %v3019 = vadd.f32 %v3018, %v2892
        %v3020 = vadd.f32 %v3019, %v2893
        %v3021 = vadd.f32 %v3020, %v2894
        %v3022 = vadd.f32 %v3021, %v2895
        %v3023 = vadd.f32 %v3022, %v2896
        %v3024 = vadd.f32 %v3023, %v2897
        %v3025 = vadd.f32 %v3024, %v2898
        %v3026 = vadd.f32 %v3025, %v2899
        %v3027 = vadd.f32 %v3026, %v2900
        %v3028 = vadd.f32 %v3027, %v2901
        %v3029 = vadd.f32 %v3028, %v2902
        %v3030 = vadd.f32 %v3029, %v2903
        %v3031 = vadd.f32 %v3030, %v2904
        %v3032 = vadd.f32 %v3031, %v2905
        %v3033 = vadd.f32 %v3032, %v2906
        %v3034 = vadd.f32 %v3033, %v2907
        %v3035 = vadd.f32 %v3034, %v2908
        %v3036 = vadd.f32 %v3035, %v2909
        %v3037 = vadd.f32 %v3036, %v2910
        %v3038 = vadd.f32 %v3037, %v2911
        %v3039 = vadd.f32 %v3038, %v2912
        %v3040 = vadd.f32 %v3039, %v2913
        %v3041 = vadd.f32 %v3040, %v2914
        %v3042 = vadd.f32 %v3041, %v2915
        %v3043 = vadd.f32 %v3042, %v2916
        %v3044 = vadd.f32 %v3043, %v2917
        %v3045 = vadd.f32 %v3044, %v2918
        %v3046 = vadd.f32 %v3045, %v2919
        %v3047 = vadd.f32 %v3046, %v2920
        %v3048 = vadd.f32 %v3047, %v2921
        %v3049 = vadd.f32 %v3048, %v2922
        %v3050 = vadd.f32 %v3049, %v2923
        %v3051 = vadd.f32 %v3050, %v2924
        %v3052 = vadd.f32 %v3051, %v2925
        %v3053 = vadd.f32 %v3052, %v2926
        %v3054 = vadd.f32 %v3053, %v2927
        %v3055 = vadd.f32 %v3054, %v2928
        %v3056 = vadd.f32 %v3055, %v2929
        %v3057 = vadd.f32 %v3056, %v2930
        %v3058 = vadd.f32 %v3057, %v2931
        %v3059 = vadd.f32 %v3058, %v2932
        %v3060 = vadd.f32 %v3059, %v2933
        %v3061 = vadd.f32 %v3060, %v2934
        %v3062 = vadd.f32 %v3061, %v2935
        %v3063 = vadd.f32 %v3062, %v2936
        %v3064 = vadd.f32 %v3063, %v2937
        %v3065 = vadd.f32 %v3064, %v2938
        %v3066 = vadd.f32 %v3065, %v2939
        %v3067 = vadd.f32 %v3066, %v2940
        %v3068 = vadd.f32 %v3067, %v2941
        %v3069 = vadd.f32 %v3068, %v2942
        %v3070 = vadd.f32 %v3069, %v2943
        %v3071 = vadd.f32 %v3070, %v2944
        %v3072 = vadd.f32 %v3071, %v2945
        %v3073 = vadd.f32 %v3072, %v2946
        %v3074 = vadd.f32 %v3073, %v2947
        %v3075 = vadd.f32 %v3074, %v2948
        %v3076 = vadd.f32 %v3075, %v2949
        %v3077 = vadd.f32 %v3076, %v2950
        %v3078 = vadd.f32 %v3077, %v2951
        %v3079 = vadd.f32 %v3078, %v2952
        %v3080 = vadd.f32 %v3079, %v2953
        %v3081 = vadd.f32 %v3080, %v2954
        %v3082 = vadd.f32 %v3081, %v2955
        %v3083 = vadd.f32 %v3082, %v2956
        %v3084 = vadd.f32 %v3083, %v2957
        %v3085 = vadd.f32 %v3084, %v2958
        %v3086 = vadd.f32 %v3085, %v2959
        %v3087 = vadd.f32 %v3086, %v2960
        %v3088 = vadd.f32 %v3087, %v2961
        %v3089 = vadd.f32 %v3088, %v2962
        %v3090 = vadd.f32 %v3089, %v2963
        %v3091 = vadd.f32 %v3090, %v2964
        %v3092 = vadd.f32 %v3091, %v2965
        %v3093 = vadd.f32 %v3092, %v2966
        %v3094 = vadd.f32 %v3093, %v2967
        %v3095 = vadd.f32 %v3094, %v2968
        %v3096 = vadd.f32 %v3095, %v2969
        %v3097 = vadd.f32 %v3096, %v2970
        %v3098 = vadd.f32 %v3097, %v2971
        %v3099 = vadd.f32 %v3098, %v2972
        %v3100 = vadd.f32 %v3099, %v2973
        %v3101 = vadd.f32 %v3100, %v2974
        %v3102 = vrot.slane %v3101, 4
        %v3103 = vadd.f32 %v3101, %v3102
        %v3104 = vrot.slane %v3103, 2
        %v3105 = vadd.f32 %v3103, %v3104
        %v3106 = vrot.slane %v3105, 1
        %v3107 = vadd.f32 %v3105, %v3106
        %v3108 = vadd.f32 %v2846, %v3107
        %3109 = vst [vmem:[%s294 + $0x1] sm:$0x1] %v3108
      $region40: #{ftgan_encoder_atten.6} parent=27 // pred_fallthru
        _
      %s3110 = smul.u32 128, %s23
      %p3111 = scmp.lt.s32.totalorder %s21, 1
      %s3112 = scalar_select %p3111, %s21, 1
      %p3113 = scmp.lt.s32.totalorder %s3110, 511
      %s3114 = scalar_select %p3113, %s3110, 511
      %p3115 = scmp.lt.s32.totalorder %s22, 0
      %s3116 = scalar_select %p3115, %s22, 0
      %s3117 = sadd.s32 %s3116, %s3114
      %s3118 = smul.addr %s3112, 512
      %s3119 = sadd.s32 %s3117, %s3118
      %s3120 = smul.addr %s3119, 4
      %s3121 = scalar_lea.vmem %s2, %s3120
      %p3122 = scmp.lt.s32.totalorder %s21, 1
      %s3123 = scalar_select %p3122, %s21, 1
      %p3124 = scmp.lt.s32.totalorder %s22, 0
      %s3125 = scalar_select %p3124, %s22, 0
      %s3126 = sadd.s32 %s3125, %s3123
      %s3127 = smul.addr %s3126, 2
      %s3128 = scalar_lea.vmem %s3, %s3127
      // Predicated region
      $region41: #{ftgan_encoder_atten.6} parent=27 // pred_check
        %p3129 = pneg %p121
      $region42: #{ftgan_encoder_atten.6} parent=27 // pred_check_branch
        %3131 = sbr.rel (%p3129) target = $region44
      $region43: #{ftgan_encoder_atten.6} parent=27 // pred_region
        %s3132 = smul.u32 128, %s23
      $region44: #{ftgan_encoder_atten.6} parent=27 // pred_fallthru
        _
      // Predicated region
      $region45: #{ftgan_encoder_atten.6} parent=27 // pred_check
        %p3133 = pneg %p149
      $region46: #{ftgan_encoder_atten.6} parent=27 // pred_check_branch
        %3135 = sbr.rel (%p3133) target = $region48
      $region47: #{ftgan_encoder_atten.6} parent=27 // pred_region
        _
      $region48: #{ftgan_encoder_atten.6} parent=27 // pred_fallthru
        _
    $region28: #{ftgan_encoder_atten.6} parent=5 // pred_fallthru
      _
    %p3136 = scmp.le.s32.totalorder 2, %s10
    // Predicated region
    $region49: #{ftgan_encoder_atten.6} parent=5 // pred_check
      %p3137 = pneg %p3136
    $region50: #{ftgan_encoder_atten.6} parent=5 // pred_check_branch
      %3139 = sbr.rel (%p3137) target = $region52
    $region51: #{ftgan_encoder_atten.6} parent=5 // pred_region
      %s3140 = ssub.s32 %s10, 2
      // Predicated region
      $region53: #{ftgan_encoder_atten.6} parent=51 // pred_check
        %p3141 = pneg %p127
      $region54: #{ftgan_encoder_atten.6} parent=51 // pred_check_branch
        %3143 = sbr.rel (%p3141) target = $region56
      $region55: #{ftgan_encoder_atten.6} parent=51 // pred_region
        %s3144 = smul.u32 128, %s27
        %p3145 = scmp.lt.s32.totalorder %s25, 1
        %s3146 = scalar_select %p3145, %s25, 1
        %p3147 = scmp.lt.s32.totalorder %s3144, 511
        %s3148 = scalar_select %p3147, %s3144, 511
        %p3149 = scmp.lt.s32.totalorder %s26, 0
        %s3150 = scalar_select %p3149, %s26, 0
        %s3151 = sadd.s32 %s3150, %s3148
        %s3152 = smul.addr %s3146, 512
        %s3153 = sadd.s32 %s3151, %s3152
        %s3154 = smul.addr %s3153, 4
        %s3155 = scalar_lea.vmem %s2, %s3154
      $region56: #{ftgan_encoder_atten.6} parent=51 // pred_fallthru
        _
      // Predicated region
      $region57: #{ftgan_encoder_atten.6} parent=51 // pred_check
        %p3156 = pneg %p155
      $region58: #{ftgan_encoder_atten.6} parent=51 // pred_check_branch
        %3158 = sbr.rel (%p3156) target = $region60
      $region59: #{ftgan_encoder_atten.6} parent=51 // pred_region
        %p3159 = scmp.lt.s32.totalorder %s25, 1
        %s3160 = scalar_select %p3159, %s25, 1
        %p3161 = scmp.lt.s32.totalorder %s26, 0
        %s3162 = scalar_select %p3161, %s26, 0
        %s3163 = sadd.s32 %s3162, %s3160
        %s3164 = smul.addr %s3163, 2
        %s3165 = scalar_lea.vmem %s3, %s3164
      $region60: #{ftgan_encoder_atten.6} parent=51 // pred_fallthru
        _
    $region52: #{ftgan_encoder_atten.6} parent=5 // pred_fallthru
      _
  $region6: #{ftgan_encoder_atten.6} parent=0 // loop_footer
    %s14 = sadd.s32 1, %s10
  $region7: #{ftgan_encoder_atten.6} parent=0 // loop_footer_branch
    %9 = sbr.rel target = $region3
  $region8: #{ftgan_encoder_atten.6} parent=0 // loop_exit
    _

// kernel: tile.24
$region0: #{tile.24}
  %s0 = inlined_call_operand.vmem [shape: f32[2,9,4], index: 0, kind: input, shape index: {}]
  %s1 = inlined_call_operand.vmem [shape: f32[2,36], index: 1, kind: output, shape index: {}]
  $region1: #{tile.24} parent=0
    #allocation0 [shape = 'u8[4096]{0}', space=vmem, size = 0x1000, scoped, tag = 'scoped mem for output reshape']
    %s2 = smov 3
    %v3 = vld [vmem:[%s0] ss:$16 sm:%s2]
    %vm4 = vcmask 31744
    %5 = vst.msk [vmem:[#allocation0] sm:$0x3] %vm4, %v3
    %s6 = scalar_lea.vmem %s0, 8
    %s7 = smov 3
    %v8 = vld [vmem:[%s6] ss:$16 sm:%s7]
    %9 = vrot.lane.b32.xlu0 %v8, 32
    %v10 = vpop.permute.xlu0 %9
    %vm11 = vcmask 294144
    %12 = vst.msk [vmem:[#allocation0] sm:$0x3] %vm11, %v10
    %s13 = scalar_lea.vmem %s0, 7
    %s14 = smov 3
    %v15 = vld [vmem:[%s13] ss:$16 sm:%s14]
    %16 = vrot.lane.b32.xlu0 %v15, 28
    %v17 = vpop.permute.xlu0 %16
    %vm18 = vcmask 261344
    %19 = vst.msk [vmem:[#allocation0] sm:$0x3] %vm18, %v17
    %s20 = scalar_lea.vmem %s0, 6
    %s21 = smov 3
    %v22 = vld [vmem:[%s20] ss:$16 sm:%s21]
    %23 = vrot.lane.b32.xlu0 %v22, 24
    %v24 = vpop.permute.xlu0 %23
    %vm25 = vcmask 228544
    %26 = vst.msk [vmem:[#allocation0] sm:$0x3] %vm25, %v24
    %s27 = scalar_lea.vmem %s0, 5
    %s28 = smov 3
    %v29 = vld [vmem:[%s27] ss:$16 sm:%s28]
    %30 = vrot.lane.b32.xlu0 %v29, 20
    %v31 = vpop.permute.xlu0 %30
    %vm32 = vcmask 195744
    %33 = vst.msk [vmem:[#allocation0] sm:$0x3] %vm32, %v31
    %s34 = scalar_lea.vmem %s0, 4
    %s35 = smov 3
    %v36 = vld [vmem:[%s34] ss:$16 sm:%s35]
    %37 = vrot.lane.b32.xlu0 %v36, 16
    %v38 = vpop.permute.xlu0 %37
    %vm39 = vcmask 162944
    %40 = vst.msk [vmem:[#allocation0] sm:$0x3] %vm39, %v38
    %s41 = scalar_lea.vmem %s0, 3
    %s42 = smov 3
    %v43 = vld [vmem:[%s41] ss:$16 sm:%s42]
    %44 = vrot.lane.b32.xlu0 %v43, 12
    %v45 = vpop.permute.xlu0 %44
    %vm46 = vcmask 130144
    %47 = vst.msk [vmem:[#allocation0] sm:$0x3] %vm46, %v45
    %s48 = scalar_lea.vmem %s0, 2
    %s49 = smov 3
    %v50 = vld [vmem:[%s48] ss:$16 sm:%s49]
    %51 = vrot.lane.b32.xlu0 %v50, 8
    %v52 = vpop.permute.xlu0 %51
    %vm53 = vcmask 97344
    %54 = vst.msk [vmem:[#allocation0] sm:$0x3] %vm53, %v52
    %s55 = scalar_lea.vmem %s0, 1
    %s56 = smov 3
    %v57 = vld [vmem:[%s55] ss:$16 sm:%s56]
    %58 = vrot.lane.b32.xlu0 %v57, 4
    %v59 = vpop.permute.xlu0 %58
    %vm60 = vcmask 64544
    %61 = vst.msk [vmem:[#allocation0] sm:$0x3] %vm60, %v59
    %s63 = sshll.u32 1, 2
    %s64 = ssub.s32 %s63, 1
    %v66 = vld [vmem:[#allocation0] sm:%s64]
    %s67 = sshll.u32 1, 2
    %s68 = ssub.s32 %s67, 1
    %69 = vst [vmem:[%s1] sm:%s68] %v66

// kernel: ftgan_encoder_atten.7
$region0: #{ftgan_encoder_atten.7}
  #allocation0 [shape = 'u32[]', space=smem, size = 0x4, offset = 0x4, fixed_abs, tag = 'smem constant byte address 0x4 - core index']
  #allocation1 [shape = 'u32[144,128]{1,0:T(1,128)}', space=vmem, size = 0x12000, scoped, tag = 'internal scratch']
  #allocation2 [shape = 'f32[1024,128]{1,0:T(8,128)}', space=vmem, size = 0x80000, scoped, tag = 'scratch operand']
  %s0 = inlined_call_operand.vmem [shape: f32[2,1,128], index: 0, kind: input, shape index: {}]
  %s1 = inlined_call_operand.vmem [shape: f32[2,1,128], index: 1, kind: input, shape index: {}]
  %s2 = inlined_call_operand.vmem [shape: bf16[2,1024,128], index: 2, kind: input, shape index: {}]
  %s3 = inlined_call_operand.vmem [shape: bf16[128,128], index: 3, kind: input, shape index: {}]
  %s4 = inlined_call_operand.vmem [shape: bf16[2,1024,128], index: 4, kind: output, shape index: {0}]
  %s5 = inlined_call_operand.vmem [shape: f32[2,2,128], index: 5, kind: output, shape index: {1}]
  %6 = xla_tuple %s4, %s5
  %s7 = sld [smem:[#allocation0]]
  $region69: #{ftgan_encoder_atten.7} parent=0
    _
  %s9 = ssub.s32 1, %s7
  %s10 = scalar_select 0, %s9, %s7
  loop: start=0, step=1, limit=4
  $region2: #{ftgan_encoder_atten.7} parent=0 // loop_pre_header
    _
  $region3: #{ftgan_encoder_atten.7} parent=0 // loop_header
    %s12 = sphi 0, %s16
    %p13 = scmp.ge.s32.totalorder %s12, 4
    %s19 = sphi 0, %s45
    %s20 = sphi 0, %s41
    %s21 = sphi 0, %s37
    %s22 = sphi 0, %s33
    %s23 = sphi 0, %s19
    %s24 = sphi 0, %s20
    %s25 = sphi 0, %s21
    %s26 = sphi 0, %s22
    %s27 = sphi 0, %s23
    %s28 = sphi 0, %s24
    %s29 = sphi 0, %s25
    %s30 = sphi 0, %s26
    %s50 = sphi 0, %s52
    %s53 = sphi 0, %s50
    %s54 = sphi 0, %s53
    %s70 = sphi 0, %s54
    %s78 = sphi 0, %s80
    %s81 = sphi 0, %s78
    %s82 = sphi 0, %s81
    %s98 = sphi 0, %s82
    %s108 = sphi 0, %s110
    %s111 = sphi 0, %s108
    %s112 = sphi 0, %s111
    %s128 = sphi 0, %s112
    %s136 = sphi 0, %s138
    %s139 = sphi 0, %s136
    %s140 = sphi 0, %s139
    %s156 = sphi 0, %s140
    %s166 = sphi 0, %s168
    %s169 = sphi 0, %s166
    %s170 = sphi 0, %s169
    %s186 = sphi 0, %s170
    %s194 = sphi 0, %s196
    %s197 = sphi 0, %s194
    %s198 = sphi 0, %s197
    %s214 = sphi 0, %s198
  $region4: #{ftgan_encoder_atten.7} parent=0 // loop_header_branch
    %15 = sbr.rel (%p13) target = $region8
  $region5: #{ftgan_encoder_atten.7} parent=0 // loop_body
    %s17 = ssub.s32 %s12, 1
    %s18 = ssub.s32 %s12, 2
    %s31 = sadd.s32 1, %s22
    %p32 = scmp.ge.s32.totalorder %s31, 1
    %s33 = scalar_select %p32, 0, %s31
    %s34 = sadd.s32 1, %s21
    %s35 = scalar_select %p32, %s34, %s21
    %p36 = scmp.ge.s32.totalorder %s35, 1
    %s37 = scalar_select %p36, 0, %s35
    %s38 = sadd.s32 1, %s20
    %s39 = scalar_select %p36, %s38, %s20
    %p40 = scmp.ge.s32.totalorder %s39, 1
    %s41 = scalar_select %p40, 0, %s39
    %s42 = sadd.s32 1, %s19
    %s43 = scalar_select %p40, %s42, %s19
    %p44 = scmp.ge.s32.totalorder %s43, 2
    %s45 = scalar_select %p44, 0, %s43
    %s46 = ssub.s32 %s19, %s45
    %s47 = ssub.s32 %s22, %s33
    %s48 = sor.u32 %s46, %s47
    %p49 = scmp.eq.s32.totalorder %s48, 0
    %s51 = sadd.s32 %s50, 1
    %s52 = scalar_select %p49, %s50, %s51
    %p55 = pneg %p49
    %p56 = scmp.eq.s32.totalorder %s12, 1
    %p57 = por %p55, %p56
    %p58 = scmp.ne.s32.totalorder %s50, %s53
    %p59 = scmp.eq.s32.totalorder %s12, 0
    %p60 = por %p58, %p59
    %p61 = scmp.ne.s32.totalorder %s50, %s53
    %p62 = scmp.eq.s32.totalorder %s17, 1
    %p63 = por %p61, %p62
    %p64 = scmp.ne.s32.totalorder %s53, %s54
    %p65 = scmp.eq.s32.totalorder %s17, 0
    %p66 = por %p64, %p65
    %p67 = scmp.ne.s32.totalorder %s53, %s54
    %p68 = scmp.eq.s32.totalorder %s18, 1
    %p69 = por %p67, %p68
    %p71 = scmp.ne.s32.totalorder %s54, %s70
    %p72 = scmp.eq.s32.totalorder %s18, 0
    %p73 = por %p71, %p72
    %s74 = ssub.s32 %s19, %s45
    %s75 = ssub.s32 %s22, %s33
    %s76 = sor.u32 %s74, %s75
    %p77 = scmp.eq.s32.totalorder %s76, 0
    %s79 = sadd.s32 %s78, 1
    %s80 = scalar_select %p77, %s78, %s79
    %p83 = pneg %p77
    %p84 = scmp.eq.s32.totalorder %s12, 1
    %p85 = por %p83, %p84
    %p86 = scmp.ne.s32.totalorder %s78, %s81
    %p87 = scmp.eq.s32.totalorder %s12, 0
    %p88 = por %p86, %p87
    %p89 = scmp.ne.s32.totalorder %s78, %s81
    %p90 = scmp.eq.s32.totalorder %s17, 1
    %p91 = por %p89, %p90
    %p92 = scmp.ne.s32.totalorder %s81, %s82
    %p93 = scmp.eq.s32.totalorder %s17, 0
    %p94 = por %p92, %p93
    %p95 = scmp.ne.s32.totalorder %s81, %s82
    %p96 = scmp.eq.s32.totalorder %s18, 1
    %p97 = por %p95, %p96
    %p99 = scmp.ne.s32.totalorder %s82, %s98
    %p100 = scmp.eq.s32.totalorder %s18, 0
    %p101 = por %p99, %p100
    %s102 = ssub.s32 %s19, %s45
    %s103 = ssub.s32 %s21, %s37
    %s104 = sor.u32 %s102, %s103
    %s105 = ssub.s32 %s22, %s33
    %s106 = sor.u32 %s104, %s105
    %p107 = scmp.eq.s32.totalorder %s106, 0
    %s109 = sadd.s32 %s108, 1
    %s110 = scalar_select %p107, %s108, %s109
    %p113 = pneg %p107
    %p114 = scmp.eq.s32.totalorder %s12, 1
    %p115 = por %p113, %p114
    %p116 = scmp.ne.s32.totalorder %s108, %s111
    %p117 = scmp.eq.s32.totalorder %s12, 0
    %p118 = por %p116, %p117
    %p119 = scmp.ne.s32.totalorder %s108, %s111
    %p120 = scmp.eq.s32.totalorder %s17, 1
    %p121 = por %p119, %p120
    %p122 = scmp.ne.s32.totalorder %s111, %s112
    %p123 = scmp.eq.s32.totalorder %s17, 0
    %p124 = por %p122, %p123
    %p125 = scmp.ne.s32.totalorder %s111, %s112
    %p126 = scmp.eq.s32.totalorder %s18, 1
    %p127 = por %p125, %p126
    %p129 = scmp.ne.s32.totalorder %s112, %s128
    %p130 = scmp.eq.s32.totalorder %s18, 0
    %p131 = por %p129, %p130
    %s132 = ssub.s32 %s22, %s33
    %s133 = ssub.s32 %s20, %s41
    %s134 = sor.u32 %s132, %s133
    %p135 = scmp.eq.s32.totalorder %s134, 0
    %s137 = sadd.s32 %s136, 1
    %s138 = scalar_select %p135, %s136, %s137
    %p141 = pneg %p135
    %p142 = scmp.eq.s32.totalorder %s12, 1
    %p143 = por %p141, %p142
    %p144 = scmp.ne.s32.totalorder %s136, %s139
    %p145 = scmp.eq.s32.totalorder %s12, 0
    %p146 = por %p144, %p145
    %p147 = scmp.ne.s32.totalorder %s136, %s139
    %p148 = scmp.eq.s32.totalorder %s17, 1
    %p149 = por %p147, %p148
    %p150 = scmp.ne.s32.totalorder %s139, %s140
    %p151 = scmp.eq.s32.totalorder %s17, 0
    %p152 = por %p150, %p151
    %p153 = scmp.ne.s32.totalorder %s139, %s140
    %p154 = scmp.eq.s32.totalorder %s18, 1
    %p155 = por %p153, %p154
    %p157 = scmp.ne.s32.totalorder %s140, %s156
    %p158 = scmp.eq.s32.totalorder %s18, 0
    %p159 = por %p157, %p158
    %s160 = ssub.s32 %s19, %s45
    %s161 = ssub.s32 %s21, %s37
    %s162 = sor.u32 %s160, %s161
    %s163 = ssub.s32 %s20, %s41
    %s164 = sor.u32 %s162, %s163
    %p165 = scmp.eq.s32.totalorder %s164, 0
    %s167 = sadd.s32 %s166, 1
    %s168 = scalar_select %p165, %s166, %s167
    %p171 = pneg %p165
    %p172 = scmp.eq.s32.totalorder %s12, 1
    %p173 = por %p171, %p172
    %p174 = scmp.ne.s32.totalorder %s166, %s169
    %p175 = scmp.eq.s32.totalorder %s12, 0
    %p176 = por %p174, %p175
    %p177 = scmp.ne.s32.totalorder %s166, %s169
    %p178 = scmp.eq.s32.totalorder %s17, 1
    %p179 = por %p177, %p178
    %p180 = scmp.ne.s32.totalorder %s169, %s170
    %p181 = scmp.eq.s32.totalorder %s17, 0
    %p182 = por %p180, %p181
    %p183 = scmp.ne.s32.totalorder %s169, %s170
    %p184 = scmp.eq.s32.totalorder %s18, 1
    %p185 = por %p183, %p184
    %p187 = scmp.ne.s32.totalorder %s170, %s186
    %p188 = scmp.eq.s32.totalorder %s18, 0
    %p189 = por %p187, %p188
    %s190 = ssub.s32 %s19, %s45
    %s191 = ssub.s32 %s20, %s41
    %s192 = sor.u32 %s190, %s191
    %p193 = scmp.eq.s32.totalorder %s192, 0
    %s195 = sadd.s32 %s194, 1
    %s196 = scalar_select %p193, %s194, %s195
    %p199 = pneg %p193
    %p200 = scmp.eq.s32.totalorder %s12, 1
    %p201 = por %p199, %p200
    %p202 = scmp.ne.s32.totalorder %s194, %s197
    %p203 = scmp.eq.s32.totalorder %s12, 0
    %p204 = por %p202, %p203
    %p205 = scmp.ne.s32.totalorder %s194, %s197
    %p206 = scmp.eq.s32.totalorder %s17, 1
    %p207 = por %p205, %p206
    %p208 = scmp.ne.s32.totalorder %s197, %s198
    %p209 = scmp.eq.s32.totalorder %s17, 0
    %p210 = por %p208, %p209
    %p211 = scmp.ne.s32.totalorder %s197, %s198
    %p212 = scmp.eq.s32.totalorder %s18, 1
    %p213 = por %p211, %p212
    %p215 = scmp.ne.s32.totalorder %s198, %s214
    %p216 = scmp.eq.s32.totalorder %s18, 0
    %p217 = por %p215, %p216
    %p218 = scmp.le.s32.totalorder 1, %s12
    %p219 = scmp.lt.s32.totalorder %s12, 3
    %p220 = pnand %p218, %p219
    %p221 = pneg %p220
    // Predicated region
    $region9: #{ftgan_encoder_atten.7} parent=5 // pred_check
      _
    $region10: #{ftgan_encoder_atten.7} parent=5 // pred_check_branch
      %223 = sbr.rel (%p220) target = $region12
    $region11: #{ftgan_encoder_atten.7} parent=5 // pred_region
      %s224 = ssub.s32 %s12, 1
      // Predicated region
      $region13: #{ftgan_encoder_atten.7} parent=11 // pred_check
        %p225 = pneg %p152
      $region14: #{ftgan_encoder_atten.7} parent=11 // pred_check_branch
        %227 = sbr.rel (%p225) target = $region16
      $region15: #{ftgan_encoder_atten.7} parent=11 // pred_region
        %s228 = smul.u32 16, %s26
        %p229 = scmp.lt.s32.totalorder %s228, 15
        %s230 = scalar_select %p229, %s228, 15
        %p231 = scmp.lt.s32.totalorder %s24, 0
        %s232 = scalar_select %p231, %s24, 0
        %s233 = sadd.s32 %s232, %s230
        %s234 = smul.addr %s233, 4
        %s235 = scalar_lea.vmem %s3, %s234
        %s236 = smul.u32 16, %s26
      $region16: #{ftgan_encoder_atten.7} parent=11 // pred_fallthru
        _
    $region12: #{ftgan_encoder_atten.7} parent=5 // pred_fallthru
      _
    %p237 = scmp.lt.s32.totalorder %s12, 2
    // Predicated region
    $region17: #{ftgan_encoder_atten.7} parent=5 // pred_check
      %p238 = pneg %p237
    $region18: #{ftgan_encoder_atten.7} parent=5 // pred_check_branch
      %240 = sbr.rel (%p238) target = $region20
    $region19: #{ftgan_encoder_atten.7} parent=5 // pred_region
      // Predicated region
      $region21: #{ftgan_encoder_atten.7} parent=19 // pred_check
        %p241 = pneg %p60
      $region22: #{ftgan_encoder_atten.7} parent=19 // pred_check_branch
        %243 = sbr.rel (%p241) target = $region24
      $region23: #{ftgan_encoder_atten.7} parent=19 // pred_region
        %p244 = scmp.lt.s32.totalorder %s19, 1
        %s245 = scalar_select %p244, %s19, 1
        %p246 = scmp.lt.s32.totalorder %s22, 0
        %s247 = scalar_select %p246, %s22, 0
        %s248 = sadd.s32 %s247, %s245
        %s249 = scalar_lea.vmem %s0, %s248
      $region24: #{ftgan_encoder_atten.7} parent=19 // pred_fallthru
        _
      // Predicated region
      $region25: #{ftgan_encoder_atten.7} parent=19 // pred_check
        %p250 = pneg %p88
      $region26: #{ftgan_encoder_atten.7} parent=19 // pred_check_branch
        %252 = sbr.rel (%p250) target = $region28
      $region27: #{ftgan_encoder_atten.7} parent=19 // pred_region
        %p253 = scmp.lt.s32.totalorder %s19, 1
        %s254 = scalar_select %p253, %s19, 1
        %p255 = scmp.lt.s32.totalorder %s22, 0
        %s256 = scalar_select %p255, %s22, 0
        %s257 = sadd.s32 %s256, %s254
        %s258 = scalar_lea.vmem %s1, %s257
      $region28: #{ftgan_encoder_atten.7} parent=19 // pred_fallthru
        _
      // Predicated region
      $region29: #{ftgan_encoder_atten.7} parent=19 // pred_check
        %p259 = pneg %p118
      $region30: #{ftgan_encoder_atten.7} parent=19 // pred_check_branch
        %261 = sbr.rel (%p259) target = $region32
      $region31: #{ftgan_encoder_atten.7} parent=19 // pred_region
        %s262 = smul.u32 128, %s21
        %p263 = scmp.lt.s32.totalorder %s19, 1
        %s264 = scalar_select %p263, %s19, 1
        %p265 = scmp.lt.s32.totalorder %s262, 127
        %s266 = scalar_select %p265, %s262, 127
        %p267 = scmp.lt.s32.totalorder %s22, 0
        %s268 = scalar_select %p267, %s22, 0
        %s269 = sadd.s32 %s268, %s266
        %s270 = smul.addr %s264, 128
        %s271 = sadd.s32 %s269, %s270
        %s272 = smul.addr %s271, 4
        %s273 = scalar_lea.vmem %s2, %s272
        %s274 = smul.u32 128, %s21
      $region32: #{ftgan_encoder_atten.7} parent=19 // pred_fallthru
        _
    $region20: #{ftgan_encoder_atten.7} parent=5 // pred_fallthru
      _
    %p275 = scmp.le.s32.totalorder 1, %s12
    %p276 = scmp.lt.s32.totalorder %s12, 3
    %p277 = pnand %p275, %p276
    %p278 = pneg %p277
    // Predicated region
    $region33: #{ftgan_encoder_atten.7} parent=5 // pred_check
      _
    $region34: #{ftgan_encoder_atten.7} parent=5 // pred_check_branch
      %280 = sbr.rel (%p277) target = $region36
    $region35: #{ftgan_encoder_atten.7} parent=5 // pred_region
      %s281 = ssub.s32 %s12, 1
      %p282 = scmp.lt.s32.totalorder %s23, 1
      %s283 = scalar_select %p282, %s23, 1
      %p284 = scmp.lt.s32.totalorder %s26, 0
      %s285 = scalar_select %p284, %s26, 0
      %s286 = sadd.s32 %s285, %s283
      %s287 = scalar_lea.vmem %s0, %s286
      %p288 = pneg %p66
      %p289 = pneg %p63
      %p290 = scmp.lt.s32.totalorder %s23, 1
      %s291 = scalar_select %p290, %s23, 1
      %p292 = scmp.lt.s32.totalorder %s26, 0
      %s293 = scalar_select %p292, %s26, 0
      %s294 = sadd.s32 %s293, %s291
      %s295 = scalar_lea.vmem %s1, %s294
      %p296 = pneg %p94
      %p297 = pneg %p91
      %s298 = smul.u32 128, %s25
      %p299 = scmp.lt.s32.totalorder %s23, 1
      %s300 = scalar_select %p299, %s23, 1
      %p301 = scmp.lt.s32.totalorder %s298, 127
      %s302 = scalar_select %p301, %s298, 127
      %p303 = scmp.lt.s32.totalorder %s26, 0
      %s304 = scalar_select %p303, %s26, 0
      %s305 = sadd.s32 %s304, %s302
      %s306 = smul.addr %s300, 128
      %s307 = sadd.s32 %s305, %s306
      %s308 = smul.addr %s307, 4
      %s309 = scalar_lea.vmem %s2, %s308
      %p310 = pneg %p124
      %p311 = pneg %p121
      %s312 = smul.u32 16, %s26
      %p313 = scmp.lt.s32.totalorder %s312, 15
      %s314 = scalar_select %p313, %s312, 15
      %p315 = scmp.lt.s32.totalorder %s24, 0
      %s316 = scalar_select %p315, %s24, 0
      %s317 = sadd.s32 %s316, %s314
      %s318 = smul.addr %s317, 4
      %s319 = scalar_lea.vmem %s3, %s318
      %p320 = pneg %p152
      %p321 = pneg %p149
      %p322 = pneg %p182
      %p323 = pneg %p179
      %s324 = smul.u32 128, %s25
      %p325 = scmp.lt.s32.totalorder %s23, 1
      %s326 = scalar_select %p325, %s23, 1
      %p327 = scmp.lt.s32.totalorder %s324, 127
      %s328 = scalar_select %p327, %s324, 127
      %p329 = scmp.lt.s32.totalorder %s24, 0
      %s330 = scalar_select %p329, %s24, 0
      %s331 = sadd.s32 %s330, %s328
      %s332 = smul.addr %s326, 128
      %s333 = sadd.s32 %s331, %s332
      %s334 = smul.addr %s333, 4
      %s335 = scalar_lea.vmem %s4, %s334
      %p336 = pneg %p210
      %p337 = pneg %p207
      %p338 = scmp.lt.s32.totalorder %s23, 1
      %s339 = scalar_select %p338, %s23, 1
      %p340 = scmp.lt.s32.totalorder %s24, 0
      %s341 = scalar_select %p340, %s24, 0
      %s342 = sadd.s32 %s341, %s339
      %s343 = smul.addr %s342, 2
      %s344 = scalar_lea.vmem %s5, %s343
      %p345 = scmp.lt.s32.totalorder %s23, 1
      %s346 = scalar_select %p345, %s23, 1
      %p347 = scmp.lt.s32.totalorder %s26, 0
      %s348 = scalar_select %p347, %s26, 0
      %s349 = sadd.s32 %s348, %s346
      %s350 = scalar_lea.vmem %s0, %s349
      %p351 = scmp.lt.s32.totalorder %s23, 1
      %s352 = scalar_select %p351, %s23, 1
      %p353 = scmp.lt.s32.totalorder %s26, 0
      %s354 = scalar_select %p353, %s26, 0
      %s355 = sadd.s32 %s354, %s352
      %s356 = scalar_lea.vmem %s1, %s355
      %s357 = smul.u32 128, %s25
      %p358 = scmp.lt.s32.totalorder %s23, 1
      %s359 = scalar_select %p358, %s23, 1
      %p360 = scmp.lt.s32.totalorder %s357, 127
      %s361 = scalar_select %p360, %s357, 127
      %p362 = scmp.lt.s32.totalorder %s26, 0
      %s363 = scalar_select %p362, %s26, 0
      %s364 = sadd.s32 %s363, %s361
      %s365 = smul.addr %s359, 128
      %s366 = sadd.s32 %s364, %s365
      %s367 = smul.addr %s366, 4
      %s368 = scalar_lea.vmem %s2, %s367
      %s369 = smul.u32 128, %s25
      %s370 = smul.u32 16, %s26
      %p371 = scmp.lt.s32.totalorder %s370, 15
      %s372 = scalar_select %p371, %s370, 15
      %p373 = scmp.lt.s32.totalorder %s24, 0
      %s374 = scalar_select %p373, %s24, 0
      %s375 = sadd.s32 %s374, %s372
      %s376 = smul.addr %s375, 4
      %s377 = scalar_lea.vmem %s3, %s376
      %s378 = smul.u32 16, %s26
      %s379 = smul.u32 128, %s25
      %p380 = scmp.lt.s32.totalorder %s23, 1
      %s381 = scalar_select %p380, %s23, 1
      %p382 = scmp.lt.s32.totalorder %s379, 127
      %s383 = scalar_select %p382, %s379, 127
      %p384 = scmp.lt.s32.totalorder %s24, 0
      %s385 = scalar_select %p384, %s24, 0
      %s386 = sadd.s32 %s385, %s383
      %s387 = smul.addr %s381, 128
      %s388 = sadd.s32 %s386, %s387
      %s389 = smul.addr %s388, 4
      %s390 = scalar_lea.vmem %s4, %s389
      %s391 = smul.u32 128, %s25
      %p392 = scmp.lt.s32.totalorder %s23, 1
      %s393 = scalar_select %p392, %s23, 1
      %p394 = scmp.lt.s32.totalorder %s24, 0
      %s395 = scalar_select %p394, %s24, 0
      %s396 = sadd.s32 %s395, %s393
      %s397 = smul.addr %s396, 2
      %s398 = scalar_lea.vmem %s5, %s397
      %p400 = scmp.eq.s32.totalorder %s26, 0
      // Predicated region
      $region37: #{ftgan_encoder_atten.7} parent=35 // pred_check
        %p401 = pneg %p400
      $region38: #{ftgan_encoder_atten.7} parent=35 // pred_check_branch
        %403 = sbr.rel (%p401) target = $region40
      $region39: #{ftgan_encoder_atten.7} parent=35 // pred_region
        %404 = vst [vmem:[#allocation2] sm:$0xff] 0.0
        %405 = vst [vmem:[#allocation2 + $0x8] sm:$0xff] 0.0
        %406 = vst [vmem:[#allocation2 + $0x10] sm:$0xff] 0.0
        %407 = vst [vmem:[#allocation2 + $0x18] sm:$0xff] 0.0
        %408 = vst [vmem:[#allocation2 + $0x20] sm:$0xff] 0.0
        %409 = vst [vmem:[#allocation2 + $0x28] sm:$0xff] 0.0
        %410 = vst [vmem:[#allocation2 + $0x30] sm:$0xff] 0.0
        %411 = vst [vmem:[#allocation2 + $0x38] sm:$0xff] 0.0
        %412 = vst [vmem:[#allocation2 + $0x40] sm:$0xff] 0.0
        %413 = vst [vmem:[#allocation2 + $0x48] sm:$0xff] 0.0
        %414 = vst [vmem:[#allocation2 + $0x50] sm:$0xff] 0.0
        %415 = vst [vmem:[#allocation2 + $0x58] sm:$0xff] 0.0
        %416 = vst [vmem:[#allocation2 + $0x60] sm:$0xff] 0.0
        %417 = vst [vmem:[#allocation2 + $0x68] sm:$0xff] 0.0
        %418 = vst [vmem:[#allocation2 + $0x70] sm:$0xff] 0.0
        %419 = vst [vmem:[#allocation2 + $0x78] sm:$0xff] 0.0
        %420 = vst [vmem:[#allocation2 + $0x80] sm:$0xff] 0.0
        %421 = vst [vmem:[#allocation2 + $0x88] sm:$0xff] 0.0
        %422 = vst [vmem:[#allocation2 + $0x90] sm:$0xff] 0.0
        %423 = vst [vmem:[#allocation2 + $0x98] sm:$0xff] 0.0
        %424 = vst [vmem:[#allocation2 + $0xa0] sm:$0xff] 0.0
        %425 = vst [vmem:[#allocation2 + $0xa8] sm:$0xff] 0.0
        %426 = vst [vmem:[#allocation2 + $0xb0] sm:$0xff] 0.0
        %427 = vst [vmem:[#allocation2 + $0xb8] sm:$0xff] 0.0
        %428 = vst [vmem:[#allocation2 + $0xc0] sm:$0xff] 0.0
        %429 = vst [vmem:[#allocation2 + $0xc8] sm:$0xff] 0.0
        %430 = vst [vmem:[#allocation2 + $0xd0] sm:$0xff] 0.0
        %431 = vst [vmem:[#allocation2 + $0xd8] sm:$0xff] 0.0
        %432 = vst [vmem:[#allocation2 + $0xe0] sm:$0xff] 0.0
        %433 = vst [vmem:[#allocation2 + $0xe8] sm:$0xff] 0.0
        %434 = vst [vmem:[#allocation2 + $0xf0] sm:$0xff] 0.0
        %435 = vst [vmem:[#allocation2 + $0xf8] sm:$0xff] 0.0
        %436 = vst [vmem:[#allocation2 + $0x100] sm:$0xff] 0.0
        %437 = vst [vmem:[#allocation2 + $0x108] sm:$0xff] 0.0
        %438 = vst [vmem:[#allocation2 + $0x110] sm:$0xff] 0.0
        %439 = vst [vmem:[#allocation2 + $0x118] sm:$0xff] 0.0
        %440 = vst [vmem:[#allocation2 + $0x120] sm:$0xff] 0.0
        %441 = vst [vmem:[#allocation2 + $0x128] sm:$0xff] 0.0
        %442 = vst [vmem:[#allocation2 + $0x130] sm:$0xff] 0.0
        %443 = vst [vmem:[#allocation2 + $0x138] sm:$0xff] 0.0
        %444 = vst [vmem:[#allocation2 + $0x140] sm:$0xff] 0.0
        %445 = vst [vmem:[#allocation2 + $0x148] sm:$0xff] 0.0
        %446 = vst [vmem:[#allocation2 + $0x150] sm:$0xff] 0.0
        %447 = vst [vmem:[#allocation2 + $0x158] sm:$0xff] 0.0
        %448 = vst [vmem:[#allocation2 + $0x160] sm:$0xff] 0.0
        %449 = vst [vmem:[#allocation2 + $0x168] sm:$0xff] 0.0
        %450 = vst [vmem:[#allocation2 + $0x170] sm:$0xff] 0.0
        %451 = vst [vmem:[#allocation2 + $0x178] sm:$0xff] 0.0
        %452 = vst [vmem:[#allocation2 + $0x180] sm:$0xff] 0.0
        %453 = vst [vmem:[#allocation2 + $0x188] sm:$0xff] 0.0
        %454 = vst [vmem:[#allocation2 + $0x190] sm:$0xff] 0.0
        %455 = vst [vmem:[#allocation2 + $0x198] sm:$0xff] 0.0
        %456 = vst [vmem:[#allocation2 + $0x1a0] sm:$0xff] 0.0
        %457 = vst [vmem:[#allocation2 + $0x1a8] sm:$0xff] 0.0
        %458 = vst [vmem:[#allocation2 + $0x1b0] sm:$0xff] 0.0
        %459 = vst [vmem:[#allocation2 + $0x1b8] sm:$0xff] 0.0
        %460 = vst [vmem:[#allocation2 + $0x1c0] sm:$0xff] 0.0
        %461 = vst [vmem:[#allocation2 + $0x1c8] sm:$0xff] 0.0
        %462 = vst [vmem:[#allocation2 + $0x1d0] sm:$0xff] 0.0
        %463 = vst [vmem:[#allocation2 + $0x1d8] sm:$0xff] 0.0
        %464 = vst [vmem:[#allocation2 + $0x1e0] sm:$0xff] 0.0
        %465 = vst [vmem:[#allocation2 + $0x1e8] sm:$0xff] 0.0
        %466 = vst [vmem:[#allocation2 + $0x1f0] sm:$0xff] 0.0
        %467 = vst [vmem:[#allocation2 + $0x1f8] sm:$0xff] 0.0
        %468 = vst [vmem:[#allocation2 + $0x200] sm:$0xff] 0.0
        %469 = vst [vmem:[#allocation2 + $0x208] sm:$0xff] 0.0
        %470 = vst [vmem:[#allocation2 + $0x210] sm:$0xff] 0.0
        %471 = vst [vmem:[#allocation2 + $0x218] sm:$0xff] 0.0
        %472 = vst [vmem:[#allocation2 + $0x220] sm:$0xff] 0.0
        %473 = vst [vmem:[#allocation2 + $0x228] sm:$0xff] 0.0
        %474 = vst [vmem:[#allocation2 + $0x230] sm:$0xff] 0.0
        %475 = vst [vmem:[#allocation2 + $0x238] sm:$0xff] 0.0
        %476 = vst [vmem:[#allocation2 + $0x240] sm:$0xff] 0.0
        %477 = vst [vmem:[#allocation2 + $0x248] sm:$0xff] 0.0
        %478 = vst [vmem:[#allocation2 + $0x250] sm:$0xff] 0.0
        %479 = vst [vmem:[#allocation2 + $0x258] sm:$0xff] 0.0
        %480 = vst [vmem:[#allocation2 + $0x260] sm:$0xff] 0.0
        %481 = vst [vmem:[#allocation2 + $0x268] sm:$0xff] 0.0
        %482 = vst [vmem:[#allocation2 + $0x270] sm:$0xff] 0.0
        %483 = vst [vmem:[#allocation2 + $0x278] sm:$0xff] 0.0
        %484 = vst [vmem:[#allocation2 + $0x280] sm:$0xff] 0.0
        %485 = vst [vmem:[#allocation2 + $0x288] sm:$0xff] 0.0
        %486 = vst [vmem:[#allocation2 + $0x290] sm:$0xff] 0.0
        %487 = vst [vmem:[#allocation2 + $0x298] sm:$0xff] 0.0
        %488 = vst [vmem:[#allocation2 + $0x2a0] sm:$0xff] 0.0
        %489 = vst [vmem:[#allocation2 + $0x2a8] sm:$0xff] 0.0
        %490 = vst [vmem:[#allocation2 + $0x2b0] sm:$0xff] 0.0
        %491 = vst [vmem:[#allocation2 + $0x2b8] sm:$0xff] 0.0
        %492 = vst [vmem:[#allocation2 + $0x2c0] sm:$0xff] 0.0
        %493 = vst [vmem:[#allocation2 + $0x2c8] sm:$0xff] 0.0
        %494 = vst [vmem:[#allocation2 + $0x2d0] sm:$0xff] 0.0
        %495 = vst [vmem:[#allocation2 + $0x2d8] sm:$0xff] 0.0
        %496 = vst [vmem:[#allocation2 + $0x2e0] sm:$0xff] 0.0
        %497 = vst [vmem:[#allocation2 + $0x2e8] sm:$0xff] 0.0
        %498 = vst [vmem:[#allocation2 + $0x2f0] sm:$0xff] 0.0
        %499 = vst [vmem:[#allocation2 + $0x2f8] sm:$0xff] 0.0
        %500 = vst [vmem:[#allocation2 + $0x300] sm:$0xff] 0.0
        %501 = vst [vmem:[#allocation2 + $0x308] sm:$0xff] 0.0
        %502 = vst [vmem:[#allocation2 + $0x310] sm:$0xff] 0.0
        %503 = vst [vmem:[#allocation2 + $0x318] sm:$0xff] 0.0
        %504 = vst [vmem:[#allocation2 + $0x320] sm:$0xff] 0.0
        %505 = vst [vmem:[#allocation2 + $0x328] sm:$0xff] 0.0
        %506 = vst [vmem:[#allocation2 + $0x330] sm:$0xff] 0.0
        %507 = vst [vmem:[#allocation2 + $0x338] sm:$0xff] 0.0
        %508 = vst [vmem:[#allocation2 + $0x340] sm:$0xff] 0.0
        %509 = vst [vmem:[#allocation2 + $0x348] sm:$0xff] 0.0
        %510 = vst [vmem:[#allocation2 + $0x350] sm:$0xff] 0.0
        %511 = vst [vmem:[#allocation2 + $0x358] sm:$0xff] 0.0
        %512 = vst [vmem:[#allocation2 + $0x360] sm:$0xff] 0.0
        %513 = vst [vmem:[#allocation2 + $0x368] sm:$0xff] 0.0
        %514 = vst [vmem:[#allocation2 + $0x370] sm:$0xff] 0.0
        %515 = vst [vmem:[#allocation2 + $0x378] sm:$0xff] 0.0
        %516 = vst [vmem:[#allocation2 + $0x380] sm:$0xff] 0.0
        %517 = vst [vmem:[#allocation2 + $0x388] sm:$0xff] 0.0
        %518 = vst [vmem:[#allocation2 + $0x390] sm:$0xff] 0.0
        %519 = vst [vmem:[#allocation2 + $0x398] sm:$0xff] 0.0
        %520 = vst [vmem:[#allocation2 + $0x3a0] sm:$0xff] 0.0
        %521 = vst [vmem:[#allocation2 + $0x3a8] sm:$0xff] 0.0
        %522 = vst [vmem:[#allocation2 + $0x3b0] sm:$0xff] 0.0
        %523 = vst [vmem:[#allocation2 + $0x3b8] sm:$0xff] 0.0
        %524 = vst [vmem:[#allocation2 + $0x3c0] sm:$0xff] 0.0
        %525 = vst [vmem:[#allocation2 + $0x3c8] sm:$0xff] 0.0
        %526 = vst [vmem:[#allocation2 + $0x3d0] sm:$0xff] 0.0
        %527 = vst [vmem:[#allocation2 + $0x3d8] sm:$0xff] 0.0
        %528 = vst [vmem:[#allocation2 + $0x3e0] sm:$0xff] 0.0
        %529 = vst [vmem:[#allocation2 + $0x3e8] sm:$0xff] 0.0
        %530 = vst [vmem:[#allocation2 + $0x3f0] sm:$0xff] 0.0
        %531 = vst [vmem:[#allocation2 + $0x3f8] sm:$0xff] 0.0
      $region40: #{ftgan_encoder_atten.7} parent=35 // pred_fallthru
        _
      %p532 = scmp.eq.s32.totalorder %s25, 0
      %p533 = pnand %p532, %p400
      %p534 = pneg %p533
      // Predicated region
      $region41: #{ftgan_encoder_atten.7} parent=35 // pred_check
        _
      $region42: #{ftgan_encoder_atten.7} parent=35 // pred_check_branch
        %536 = sbr.rel (%p533) target = $region44
      $region43: #{ftgan_encoder_atten.7} parent=35 // pred_region
        %537 = vst [vmem:[%s398] sm:$0x3] 0.0
      $region44: #{ftgan_encoder_atten.7} parent=35 // pred_fallthru
        _
      %v538 = vld [vmem:[%s368] sm:$0xf]
      %v539 = vld [vmem:[%s368 + $0x4] sm:$0xf]
      %v540 = vld [vmem:[%s368 + $0x8] sm:$0xf]
      %v541 = vld [vmem:[%s368 + $0xc] sm:$0xf]
      %v542 = vld [vmem:[%s368 + $0x10] sm:$0xf]
      %v543 = vld [vmem:[%s368 + $0x14] sm:$0xf]
      %v544 = vld [vmem:[%s368 + $0x18] sm:$0xf]
      %v545 = vld [vmem:[%s368 + $0x1c] sm:$0xf]
      %v546 = vld [vmem:[%s368 + $0x20] sm:$0xf]
      %v547 = vld [vmem:[%s368 + $0x24] sm:$0xf]
      %v548 = vld [vmem:[%s368 + $0x28] sm:$0xf]
      %v549 = vld [vmem:[%s368 + $0x2c] sm:$0xf]
      %v550 = vld [vmem:[%s368 + $0x30] sm:$0xf]
      %v551 = vld [vmem:[%s368 + $0x34] sm:$0xf]
      %v552 = vld [vmem:[%s368 + $0x38] sm:$0xf]
      %v553 = vld [vmem:[%s368 + $0x3c] sm:$0xf]
      %v554 = vld [vmem:[%s368 + $0x40] sm:$0xf]
      %v555 = vld [vmem:[%s368 + $0x44] sm:$0xf]
      %v556 = vld [vmem:[%s368 + $0x48] sm:$0xf]
      %v557 = vld [vmem:[%s368 + $0x4c] sm:$0xf]
      %v558 = vld [vmem:[%s368 + $0x50] sm:$0xf]
      %v559 = vld [vmem:[%s368 + $0x54] sm:$0xf]
      %v560 = vld [vmem:[%s368 + $0x58] sm:$0xf]
      %v561 = vld [vmem:[%s368 + $0x5c] sm:$0xf]
      %v562 = vld [vmem:[%s368 + $0x60] sm:$0xf]
      %v563 = vld [vmem:[%s368 + $0x64] sm:$0xf]
      %v564 = vld [vmem:[%s368 + $0x68] sm:$0xf]
      %v565 = vld [vmem:[%s368 + $0x6c] sm:$0xf]
      %v566 = vld [vmem:[%s368 + $0x70] sm:$0xf]
      %v567 = vld [vmem:[%s368 + $0x74] sm:$0xf]
      %v568 = vld [vmem:[%s368 + $0x78] sm:$0xf]
      %v569 = vld [vmem:[%s368 + $0x7c] sm:$0xf]
      %v570 = vld [vmem:[%s368 + $0x80] sm:$0xf]
      %v571 = vld [vmem:[%s368 + $0x84] sm:$0xf]
      %v572 = vld [vmem:[%s368 + $0x88] sm:$0xf]
      %v573 = vld [vmem:[%s368 + $0x8c] sm:$0xf]
      %v574 = vld [vmem:[%s368 + $0x90] sm:$0xf]
      %v575 = vld [vmem:[%s368 + $0x94] sm:$0xf]
      %v576 = vld [vmem:[%s368 + $0x98] sm:$0xf]
      %v577 = vld [vmem:[%s368 + $0x9c] sm:$0xf]
      %v578 = vld [vmem:[%s368 + $0xa0] sm:$0xf]
      %v579 = vld [vmem:[%s368 + $0xa4] sm:$0xf]
      %v580 = vld [vmem:[%s368 + $0xa8] sm:$0xf]
      %v581 = vld [vmem:[%s368 + $0xac] sm:$0xf]
      %v582 = vld [vmem:[%s368 + $0xb0] sm:$0xf]
      %v583 = vld [vmem:[%s368 + $0xb4] sm:$0xf]
      %v584 = vld [vmem:[%s368 + $0xb8] sm:$0xf]
      %v585 = vld [vmem:[%s368 + $0xbc] sm:$0xf]
      %v586 = vld [vmem:[%s368 + $0xc0] sm:$0xf]
      %v587 = vld [vmem:[%s368 + $0xc4] sm:$0xf]
      %v588 = vld [vmem:[%s368 + $0xc8] sm:$0xf]
      %v589 = vld [vmem:[%s368 + $0xcc] sm:$0xf]
      %v590 = vld [vmem:[%s368 + $0xd0] sm:$0xf]
      %v591 = vld [vmem:[%s368 + $0xd4] sm:$0xf]
      %v592 = vld [vmem:[%s368 + $0xd8] sm:$0xf]
      %v593 = vld [vmem:[%s368 + $0xdc] sm:$0xf]
      %v594 = vld [vmem:[%s368 + $0xe0] sm:$0xf]
      %v595 = vld [vmem:[%s368 + $0xe4] sm:$0xf]
      %v596 = vld [vmem:[%s368 + $0xe8] sm:$0xf]
      %v597 = vld [vmem:[%s368 + $0xec] sm:$0xf]
      %v598 = vld [vmem:[%s368 + $0xf0] sm:$0xf]
      %v599 = vld [vmem:[%s368 + $0xf4] sm:$0xf]
      %v600 = vld [vmem:[%s368 + $0xf8] sm:$0xf]
      %v601 = vld [vmem:[%s368 + $0xfc] sm:$0xf]
      %v602 = vld [vmem:[%s368 + $0x100] sm:$0xf]
      %v603 = vld [vmem:[%s368 + $0x104] sm:$0xf]
      %v604 = vld [vmem:[%s368 + $0x108] sm:$0xf]
      %v605 = vld [vmem:[%s368 + $0x10c] sm:$0xf]
      %v606 = vld [vmem:[%s368 + $0x110] sm:$0xf]
      %v607 = vld [vmem:[%s368 + $0x114] sm:$0xf]
      %v608 = vld [vmem:[%s368 + $0x118] sm:$0xf]
      %v609 = vld [vmem:[%s368 + $0x11c] sm:$0xf]
      %v610 = vld [vmem:[%s368 + $0x120] sm:$0xf]
      %v611 = vld [vmem:[%s368 + $0x124] sm:$0xf]
      %v612 = vld [vmem:[%s368 + $0x128] sm:$0xf]
      %v613 = vld [vmem:[%s368 + $0x12c] sm:$0xf]
      %v614 = vld [vmem:[%s368 + $0x130] sm:$0xf]
      %v615 = vld [vmem:[%s368 + $0x134] sm:$0xf]
      %v616 = vld [vmem:[%s368 + $0x138] sm:$0xf]
      %v617 = vld [vmem:[%s368 + $0x13c] sm:$0xf]
      %v618 = vld [vmem:[%s368 + $0x140] sm:$0xf]
      %v619 = vld [vmem:[%s368 + $0x144] sm:$0xf]
      %v620 = vld [vmem:[%s368 + $0x148] sm:$0xf]
      %v621 = vld [vmem:[%s368 + $0x14c] sm:$0xf]
      %v622 = vld [vmem:[%s368 + $0x150] sm:$0xf]
      %v623 = vld [vmem:[%s368 + $0x154] sm:$0xf]
      %v624 = vld [vmem:[%s368 + $0x158] sm:$0xf]
      %v625 = vld [vmem:[%s368 + $0x15c] sm:$0xf]
      %v626 = vld [vmem:[%s368 + $0x160] sm:$0xf]
      %v627 = vld [vmem:[%s368 + $0x164] sm:$0xf]
      %v628 = vld [vmem:[%s368 + $0x168] sm:$0xf]
      %v629 = vld [vmem:[%s368 + $0x16c] sm:$0xf]
      %v630 = vld [vmem:[%s368 + $0x170] sm:$0xf]
      %v631 = vld [vmem:[%s368 + $0x174] sm:$0xf]
      %v632 = vld [vmem:[%s368 + $0x178] sm:$0xf]
      %v633 = vld [vmem:[%s368 + $0x17c] sm:$0xf]
      %v634 = vld [vmem:[%s368 + $0x180] sm:$0xf]
      %v635 = vld [vmem:[%s368 + $0x184] sm:$0xf]
      %v636 = vld [vmem:[%s368 + $0x188] sm:$0xf]
      %v637 = vld [vmem:[%s368 + $0x18c] sm:$0xf]
      %v638 = vld [vmem:[%s368 + $0x190] sm:$0xf]
      %v639 = vld [vmem:[%s368 + $0x194] sm:$0xf]
      %v640 = vld [vmem:[%s368 + $0x198] sm:$0xf]
      %v641 = vld [vmem:[%s368 + $0x19c] sm:$0xf]
      %v642 = vld [vmem:[%s368 + $0x1a0] sm:$0xf]
      %v643 = vld [vmem:[%s368 + $0x1a4] sm:$0xf]
      %v644 = vld [vmem:[%s368 + $0x1a8] sm:$0xf]
      %v645 = vld [vmem:[%s368 + $0x1ac] sm:$0xf]
      %v646 = vld [vmem:[%s368 + $0x1b0] sm:$0xf]
      %v647 = vld [vmem:[%s368 + $0x1b4] sm:$0xf]
      %v648 = vld [vmem:[%s368 + $0x1b8] sm:$0xf]
      %v649 = vld [vmem:[%s368 + $0x1bc] sm:$0xf]
      %v650 = vld [vmem:[%s368 + $0x1c0] sm:$0xf]
      %v651 = vld [vmem:[%s368 + $0x1c4] sm:$0xf]
      %v652 = vld [vmem:[%s368 + $0x1c8] sm:$0xf]
      %v653 = vld [vmem:[%s368 + $0x1cc] sm:$0xf]
      %v654 = vld [vmem:[%s368 + $0x1d0] sm:$0xf]
      %v655 = vld [vmem:[%s368 + $0x1d4] sm:$0xf]
      %v656 = vld [vmem:[%s368 + $0x1d8] sm:$0xf]
      %v657 = vld [vmem:[%s368 + $0x1dc] sm:$0xf]
      %v658 = vld [vmem:[%s368 + $0x1e0] sm:$0xf]
      %v659 = vld [vmem:[%s368 + $0x1e4] sm:$0xf]
      %v660 = vld [vmem:[%s368 + $0x1e8] sm:$0xf]
      %v661 = vld [vmem:[%s368 + $0x1ec] sm:$0xf]
      %v662 = vld [vmem:[%s368 + $0x1f0] sm:$0xf]
      %v663 = vld [vmem:[%s368 + $0x1f4] sm:$0xf]
      %v664 = vld [vmem:[%s368 + $0x1f8] sm:$0xf]
      %v665 = vld [vmem:[%s368 + $0x1fc] sm:$0xf]
      %v666 = vunpack.c.l.bf16 %v538
      %v667 = vunpack.c.l.bf16 %v539
      %v668 = vunpack.c.l.bf16 %v540
      %v669 = vunpack.c.l.bf16 %v541
      %v670 = vunpack.c.l.bf16 %v542
      %v671 = vunpack.c.l.bf16 %v543
      %v672 = vunpack.c.l.bf16 %v544
      %v673 = vunpack.c.l.bf16 %v545
      %v674 = vunpack.c.l.bf16 %v546
      %v675 = vunpack.c.l.bf16 %v547
      %v676 = vunpack.c.l.bf16 %v548
      %v677 = vunpack.c.l.bf16 %v549
      %v678 = vunpack.c.l.bf16 %v550
      %v679 = vunpack.c.l.bf16 %v551
      %v680 = vunpack.c.l.bf16 %v552
      %v681 = vunpack.c.l.bf16 %v553
      %v682 = vunpack.c.l.bf16 %v554
      %v683 = vunpack.c.l.bf16 %v555
      %v684 = vunpack.c.l.bf16 %v556
      %v685 = vunpack.c.l.bf16 %v557
      %v686 = vunpack.c.l.bf16 %v558
      %v687 = vunpack.c.l.bf16 %v559
      %v688 = vunpack.c.l.bf16 %v560
      %v689 = vunpack.c.l.bf16 %v561
      %v690 = vunpack.c.l.bf16 %v562
      %v691 = vunpack.c.l.bf16 %v563
      %v692 = vunpack.c.l.bf16 %v564
      %v693 = vunpack.c.l.bf16 %v565
      %v694 = vunpack.c.l.bf16 %v566
      %v695 = vunpack.c.l.bf16 %v567
      %v696 = vunpack.c.l.bf16 %v568
      %v697 = vunpack.c.l.bf16 %v569
      %v698 = vunpack.c.l.bf16 %v570
      %v699 = vunpack.c.l.bf16 %v571
      %v700 = vunpack.c.l.bf16 %v572
      %v701 = vunpack.c.l.bf16 %v573
      %v702 = vunpack.c.l.bf16 %v574
      %v703 = vunpack.c.l.bf16 %v575
      %v704 = vunpack.c.l.bf16 %v576
      %v705 = vunpack.c.l.bf16 %v577
      %v706 = vunpack.c.l.bf16 %v578
      %v707 = vunpack.c.l.bf16 %v579
      %v708 = vunpack.c.l.bf16 %v580
      %v709 = vunpack.c.l.bf16 %v581
      %v710 = vunpack.c.l.bf16 %v582
      %v711 = vunpack.c.l.bf16 %v583
      %v712 = vunpack.c.l.bf16 %v584
      %v713 = vunpack.c.l.bf16 %v585
      %v714 = vunpack.c.l.bf16 %v586
      %v715 = vunpack.c.l.bf16 %v587
      %v716 = vunpack.c.l.bf16 %v588
      %v717 = vunpack.c.l.bf16 %v589
      %v718 = vunpack.c.l.bf16 %v590
      %v719 = vunpack.c.l.bf16 %v591
      %v720 = vunpack.c.l.bf16 %v592
      %v721 = vunpack.c.l.bf16 %v593
      %v722 = vunpack.c.l.bf16 %v594
      %v723 = vunpack.c.l.bf16 %v595
      %v724 = vunpack.c.l.bf16 %v596
      %v725 = vunpack.c.l.bf16 %v597
      %v726 = vunpack.c.l.bf16 %v598
      %v727 = vunpack.c.l.bf16 %v599
      %v728 = vunpack.c.l.bf16 %v600
      %v729 = vunpack.c.l.bf16 %v601
      %v730 = vunpack.c.l.bf16 %v602
      %v731 = vunpack.c.l.bf16 %v603
      %v732 = vunpack.c.l.bf16 %v604
      %v733 = vunpack.c.l.bf16 %v605
      %v734 = vunpack.c.l.bf16 %v606
      %v735 = vunpack.c.l.bf16 %v607
      %v736 = vunpack.c.l.bf16 %v608
      %v737 = vunpack.c.l.bf16 %v609
      %v738 = vunpack.c.l.bf16 %v610
      %v739 = vunpack.c.l.bf16 %v611
      %v740 = vunpack.c.l.bf16 %v612
      %v741 = vunpack.c.l.bf16 %v613
      %v742 = vunpack.c.l.bf16 %v614
      %v743 = vunpack.c.l.bf16 %v615
      %v744 = vunpack.c.l.bf16 %v616
      %v745 = vunpack.c.l.bf16 %v617
      %v746 = vunpack.c.l.bf16 %v618
      %v747 = vunpack.c.l.bf16 %v619
      %v748 = vunpack.c.l.bf16 %v620
      %v749 = vunpack.c.l.bf16 %v621
      %v750 = vunpack.c.l.bf16 %v622
      %v751 = vunpack.c.l.bf16 %v623
      %v752 = vunpack.c.l.bf16 %v624
      %v753 = vunpack.c.l.bf16 %v625
      %v754 = vunpack.c.l.bf16 %v626
      %v755 = vunpack.c.l.bf16 %v627
      %v756 = vunpack.c.l.bf16 %v628
      %v757 = vunpack.c.l.bf16 %v629
      %v758 = vunpack.c.l.bf16 %v630
      %v759 = vunpack.c.l.bf16 %v631
      %v760 = vunpack.c.l.bf16 %v632
      %v761 = vunpack.c.l.bf16 %v633
      %v762 = vunpack.c.l.bf16 %v634
      %v763 = vunpack.c.l.bf16 %v635
      %v764 = vunpack.c.l.bf16 %v636
      %v765 = vunpack.c.l.bf16 %v637
      %v766 = vunpack.c.l.bf16 %v638
      %v767 = vunpack.c.l.bf16 %v639
      %v768 = vunpack.c.l.bf16 %v640
      %v769 = vunpack.c.l.bf16 %v641
      %v770 = vunpack.c.l.bf16 %v642
      %v771 = vunpack.c.l.bf16 %v643
      %v772 = vunpack.c.l.bf16 %v644
      %v773 = vunpack.c.l.bf16 %v645
      %v774 = vunpack.c.l.bf16 %v646
      %v775 = vunpack.c.l.bf16 %v647
      %v776 = vunpack.c.l.bf16 %v648
      %v777 = vunpack.c.l.bf16 %v649
      %v778 = vunpack.c.l.bf16 %v650
      %v779 = vunpack.c.l.bf16 %v651
      %v780 = vunpack.c.l.bf16 %v652
      %v781 = vunpack.c.l.bf16 %v653
      %v782 = vunpack.c.l.bf16 %v654
      %v783 = vunpack.c.l.bf16 %v655
      %v784 = vunpack.c.l.bf16 %v656
      %v785 = vunpack.c.l.bf16 %v657
      %v786 = vunpack.c.l.bf16 %v658
      %v787 = vunpack.c.l.bf16 %v659
      %v788 = vunpack.c.l.bf16 %v660
      %v789 = vunpack.c.l.bf16 %v661
      %v790 = vunpack.c.l.bf16 %v662
      %v791 = vunpack.c.l.bf16 %v663
      %v792 = vunpack.c.l.bf16 %v664
      %v793 = vunpack.c.l.bf16 %v665
      %v794 = vld [vmem:[%s350] sm:$0x1]
      %v796 = vlaneseq
      %v797 = vshrl.u32 %v796, 7
      %v798 = vsub.s32 0, %v797
      %v799 = vrot.slane %v794, %v798
      %v801 = vmul.f32 %v666, %v799
      %v802 = vmul.f32 %v667, %v799
      %v803 = vmul.f32 %v668, %v799
      %v804 = vmul.f32 %v669, %v799
      %v805 = vmul.f32 %v670, %v799
      %v806 = vmul.f32 %v671, %v799
      %v807 = vmul.f32 %v672, %v799
      %v808 = vmul.f32 %v673, %v799
      %v809 = vmul.f32 %v674, %v799
      %v810 = vmul.f32 %v675, %v799
      %v811 = vmul.f32 %v676, %v799
      %v812 = vmul.f32 %v677, %v799
      %v813 = vmul.f32 %v678, %v799
      %v814 = vmul.f32 %v679, %v799
      %v815 = vmul.f32 %v680, %v799
      %v816 = vmul.f32 %v681, %v799
      %v817 = vmul.f32 %v682, %v799
      %v818 = vmul.f32 %v683, %v799
      %v819 = vmul.f32 %v684, %v799
      %v820 = vmul.f32 %v685, %v799
      %v821 = vmul.f32 %v686, %v799
      %v822 = vmul.f32 %v687, %v799
      %v823 = vmul.f32 %v688, %v799
      %v824 = vmul.f32 %v689, %v799
      %v825 = vmul.f32 %v690, %v799
      %v826 = vmul.f32 %v691, %v799
      %v827 = vmul.f32 %v692, %v799
      %v828 = vmul.f32 %v693, %v799
      %v829 = vmul.f32 %v694, %v799
      %v830 = vmul.f32 %v695, %v799
      %v831 = vmul.f32 %v696, %v799
      %v832 = vmul.f32 %v697, %v799
      %v833 = vmul.f32 %v698, %v799
      %v834 = vmul.f32 %v699, %v799
      %v835 = vmul.f32 %v700, %v799
      %v836 = vmul.f32 %v701, %v799
      %v837 = vmul.f32 %v702, %v799
      %v838 = vmul.f32 %v703, %v799
      %v839 = vmul.f32 %v704, %v799
      %v840 = vmul.f32 %v705, %v799
      %v841 = vmul.f32 %v706, %v799
      %v842 = vmul.f32 %v707, %v799
      %v843 = vmul.f32 %v708, %v799
      %v844 = vmul.f32 %v709, %v799
      %v845 = vmul.f32 %v710, %v799
      %v846 = vmul.f32 %v711, %v799
      %v847 = vmul.f32 %v712, %v799
      %v848 = vmul.f32 %v713, %v799
      %v849 = vmul.f32 %v714, %v799
      %v850 = vmul.f32 %v715, %v799
      %v851 = vmul.f32 %v716, %v799
      %v852 = vmul.f32 %v717, %v799
      %v853 = vmul.f32 %v718, %v799
      %v854 = vmul.f32 %v719, %v799
      %v855 = vmul.f32 %v720, %v799
      %v856 = vmul.f32 %v721, %v799
      %v857 = vmul.f32 %v722, %v799
      %v858 = vmul.f32 %v723, %v799
      %v859 = vmul.f32 %v724, %v799
      %v860 = vmul.f32 %v725, %v799
      %v861 = vmul.f32 %v726, %v799
      %v862 = vmul.f32 %v727, %v799
      %v863 = vmul.f32 %v728, %v799
      %v864 = vmul.f32 %v729, %v799
      %v865 = vmul.f32 %v730, %v799
      %v866 = vmul.f32 %v731, %v799
      %v867 = vmul.f32 %v732, %v799
      %v868 = vmul.f32 %v733, %v799
      %v869 = vmul.f32 %v734, %v799
      %v870 = vmul.f32 %v735, %v799
      %v871 = vmul.f32 %v736, %v799
      %v872 = vmul.f32 %v737, %v799
      %v873 = vmul.f32 %v738, %v799
      %v874 = vmul.f32 %v739, %v799
      %v875 = vmul.f32 %v740, %v799
      %v876 = vmul.f32 %v741, %v799
      %v877 = vmul.f32 %v742, %v799
      %v878 = vmul.f32 %v743, %v799
      %v879 = vmul.f32 %v744, %v799
      %v880 = vmul.f32 %v745, %v799
      %v881 = vmul.f32 %v746, %v799
      %v882 = vmul.f32 %v747, %v799
      %v883 = vmul.f32 %v748, %v799
      %v884 = vmul.f32 %v749, %v799
      %v885 = vmul.f32 %v750, %v799
      %v886 = vmul.f32 %v751, %v799
      %v887 = vmul.f32 %v752, %v799
      %v888 = vmul.f32 %v753, %v799
      %v889 = vmul.f32 %v754, %v799
      %v890 = vmul.f32 %v755, %v799
      %v891 = vmul.f32 %v756, %v799
      %v892 = vmul.f32 %v757, %v799
      %v893 = vmul.f32 %v758, %v799
      %v894 = vmul.f32 %v759, %v799
      %v895 = vmul.f32 %v760, %v799
      %v896 = vmul.f32 %v761, %v799
      %v897 = vmul.f32 %v762, %v799
      %v898 = vmul.f32 %v763, %v799
      %v899 = vmul.f32 %v764, %v799
      %v900 = vmul.f32 %v765, %v799
      %v901 = vmul.f32 %v766, %v799
      %v902 = vmul.f32 %v767, %v799
      %v903 = vmul.f32 %v768, %v799
      %v904 = vmul.f32 %v769, %v799
      %v905 = vmul.f32 %v770, %v799
      %v906 = vmul.f32 %v771, %v799
      %v907 = vmul.f32 %v772, %v799
      %v908 = vmul.f32 %v773, %v799
      %v909 = vmul.f32 %v774, %v799
      %v910 = vmul.f32 %v775, %v799
      %v911 = vmul.f32 %v776, %v799
      %v912 = vmul.f32 %v777, %v799
      %v913 = vmul.f32 %v778, %v799
      %v914 = vmul.f32 %v779, %v799
      %v915 = vmul.f32 %v780, %v799
      %v916 = vmul.f32 %v781, %v799
      %v917 = vmul.f32 %v782, %v799
      %v918 = vmul.f32 %v783, %v799
      %v919 = vmul.f32 %v784, %v799
      %v920 = vmul.f32 %v785, %v799
      %v921 = vmul.f32 %v786, %v799
      %v922 = vmul.f32 %v787, %v799
      %v923 = vmul.f32 %v788, %v799
      %v924 = vmul.f32 %v789, %v799
      %v925 = vmul.f32 %v790, %v799
      %v926 = vmul.f32 %v791, %v799
      %v927 = vmul.f32 %v792, %v799
      %v928 = vmul.f32 %v793, %v799
      %v929 = vld [vmem:[%s356] sm:$0x1]
      %v931 = vlaneseq
      %v932 = vshrl.u32 %v931, 7
      %v933 = vsub.s32 0, %v932
      %v934 = vrot.slane %v929, %v933
      %v936 = vadd.f32 %v801, %v934
      %v937 = vadd.f32 %v802, %v934
      %v938 = vadd.f32 %v803, %v934
      %v939 = vadd.f32 %v804, %v934
      %v940 = vadd.f32 %v805, %v934
      %v941 = vadd.f32 %v806, %v934
      %v942 = vadd.f32 %v807, %v934
      %v943 = vadd.f32 %v808, %v934
      %v944 = vadd.f32 %v809, %v934
      %v945 = vadd.f32 %v810, %v934
      %v946 = vadd.f32 %v811, %v934
      %v947 = vadd.f32 %v812, %v934
      %v948 = vadd.f32 %v813, %v934
      %v949 = vadd.f32 %v814, %v934
      %v950 = vadd.f32 %v815, %v934
      %v951 = vadd.f32 %v816, %v934
      %v952 = vadd.f32 %v817, %v934
      %v953 = vadd.f32 %v818, %v934
      %v954 = vadd.f32 %v819, %v934
      %v955 = vadd.f32 %v820, %v934
      %v956 = vadd.f32 %v821, %v934
      %v957 = vadd.f32 %v822, %v934
      %v958 = vadd.f32 %v823, %v934
      %v959 = vadd.f32 %v824, %v934
      %v960 = vadd.f32 %v825, %v934
      %v961 = vadd.f32 %v826, %v934
      %v962 = vadd.f32 %v827, %v934
      %v963 = vadd.f32 %v828, %v934
      %v964 = vadd.f32 %v829, %v934
      %v965 = vadd.f32 %v830, %v934
      %v966 = vadd.f32 %v831, %v934
      %v967 = vadd.f32 %v832, %v934
      %v968 = vadd.f32 %v833, %v934
      %v969 = vadd.f32 %v834, %v934
      %v970 = vadd.f32 %v835, %v934
      %v971 = vadd.f32 %v836, %v934
      %v972 = vadd.f32 %v837, %v934
      %v973 = vadd.f32 %v838, %v934
      %v974 = vadd.f32 %v839, %v934
      %v975 = vadd.f32 %v840, %v934
      %v976 = vadd.f32 %v841, %v934
      %v977 = vadd.f32 %v842, %v934
      %v978 = vadd.f32 %v843, %v934
      %v979 = vadd.f32 %v844, %v934
      %v980 = vadd.f32 %v845, %v934
      %v981 = vadd.f32 %v846, %v934
      %v982 = vadd.f32 %v847, %v934
      %v983 = vadd.f32 %v848, %v934
      %v984 = vadd.f32 %v849, %v934
      %v985 = vadd.f32 %v850, %v934
      %v986 = vadd.f32 %v851, %v934
      %v987 = vadd.f32 %v852, %v934
      %v988 = vadd.f32 %v853, %v934
      %v989 = vadd.f32 %v854, %v934
      %v990 = vadd.f32 %v855, %v934
      %v991 = vadd.f32 %v856, %v934
      %v992 = vadd.f32 %v857, %v934
      %v993 = vadd.f32 %v858, %v934
      %v994 = vadd.f32 %v859, %v934
      %v995 = vadd.f32 %v860, %v934
      %v996 = vadd.f32 %v861, %v934
      %v997 = vadd.f32 %v862, %v934
      %v998 = vadd.f32 %v863, %v934
      %v999 = vadd.f32 %v864, %v934
      %v1000 = vadd.f32 %v865, %v934
      %v1001 = vadd.f32 %v866, %v934
      %v1002 = vadd.f32 %v867, %v934
      %v1003 = vadd.f32 %v868, %v934
      %v1004 = vadd.f32 %v869, %v934
      %v1005 = vadd.f32 %v870, %v934
      %v1006 = vadd.f32 %v871, %v934
      %v1007 = vadd.f32 %v872, %v934
      %v1008 = vadd.f32 %v873, %v934
      %v1009 = vadd.f32 %v874, %v934
      %v1010 = vadd.f32 %v875, %v934
      %v1011 = vadd.f32 %v876, %v934
      %v1012 = vadd.f32 %v877, %v934
      %v1013 = vadd.f32 %v878, %v934
      %v1014 = vadd.f32 %v879, %v934
      %v1015 = vadd.f32 %v880, %v934
      %v1016 = vadd.f32 %v881, %v934
      %v1017 = vadd.f32 %v882, %v934
      %v1018 = vadd.f32 %v883, %v934
      %v1019 = vadd.f32 %v884, %v934
      %v1020 = vadd.f32 %v885, %v934
      %v1021 = vadd.f32 %v886, %v934
      %v1022 = vadd.f32 %v887, %v934
      %v1023 = vadd.f32 %v888, %v934
      %v1024 = vadd.f32 %v889, %v934
      %v1025 = vadd.f32 %v890, %v934
      %v1026 = vadd.f32 %v891, %v934
      %v1027 = vadd.f32 %v892, %v934
      %v1028 = vadd.f32 %v893, %v934
      %v1029 = vadd.f32 %v894, %v934
      %v1030 = vadd.f32 %v895, %v934
      %v1031 = vadd.f32 %v896, %v934
      %v1032 = vadd.f32 %v897, %v934
      %v1033 = vadd.f32 %v898, %v934
      %v1034 = vadd.f32 %v899, %v934
      %v1035 = vadd.f32 %v900, %v934
      %v1036 = vadd.f32 %v901, %v934
      %v1037 = vadd.f32 %v902, %v934
      %v1038 = vadd.f32 %v903, %v934
      %v1039 = vadd.f32 %v904, %v934
      %v1040 = vadd.f32 %v905, %v934
      %v1041 = vadd.f32 %v906, %v934
      %v1042 = vadd.f32 %v907, %v934
      %v1043 = vadd.f32 %v908, %v934
      %v1044 = vadd.f32 %v909, %v934
      %v1045 = vadd.f32 %v910, %v934
      %v1046 = vadd.f32 %v911, %v934
      %v1047 = vadd.f32 %v912, %v934
      %v1048 = vadd.f32 %v913, %v934
      %v1049 = vadd.f32 %v914, %v934
      %v1050 = vadd.f32 %v915, %v934
      %v1051 = vadd.f32 %v916, %v934
      %v1052 = vadd.f32 %v917, %v934
      %v1053 = vadd.f32 %v918, %v934
      %v1054 = vadd.f32 %v919, %v934
      %v1055 = vadd.f32 %v920, %v934
      %v1056 = vadd.f32 %v921, %v934
      %v1057 = vadd.f32 %v922, %v934
      %v1058 = vadd.f32 %v923, %v934
      %v1059 = vadd.f32 %v924, %v934
      %v1060 = vadd.f32 %v925, %v934
      %v1061 = vadd.f32 %v926, %v934
      %v1062 = vadd.f32 %v927, %v934
      %v1063 = vadd.f32 %v928, %v934
      %v1064 = vmax.f32 %v936, 0.0
      %v1065 = vmax.f32 %v937, 0.0
      %v1066 = vmax.f32 %v938, 0.0
      %v1067 = vmax.f32 %v939, 0.0
      %v1068 = vmax.f32 %v940, 0.0
      %v1069 = vmax.f32 %v941, 0.0
      %v1070 = vmax.f32 %v942, 0.0
      %v1071 = vmax.f32 %v943, 0.0
      %v1072 = vmax.f32 %v944, 0.0
      %v1073 = vmax.f32 %v945, 0.0
      %v1074 = vmax.f32 %v946, 0.0
      %v1075 = vmax.f32 %v947, 0.0
      %v1076 = vmax.f32 %v948, 0.0
      %v1077 = vmax.f32 %v949, 0.0
      %v1078 = vmax.f32 %v950, 0.0
      %v1079 = vmax.f32 %v951, 0.0
      %v1080 = vmax.f32 %v952, 0.0
      %v1081 = vmax.f32 %v953, 0.0
      %v1082 = vmax.f32 %v954, 0.0
      %v1083 = vmax.f32 %v955, 0.0
      %v1084 = vmax.f32 %v956, 0.0
      %v1085 = vmax.f32 %v957, 0.0
      %v1086 = vmax.f32 %v958, 0.0
      %v1087 = vmax.f32 %v959, 0.0
      %v1088 = vmax.f32 %v960, 0.0
      %v1089 = vmax.f32 %v961, 0.0
      %v1090 = vmax.f32 %v962, 0.0
      %v1091 = vmax.f32 %v963, 0.0
      %v1092 = vmax.f32 %v964, 0.0
      %v1093 = vmax.f32 %v965, 0.0
      %v1094 = vmax.f32 %v966, 0.0
      %v1095 = vmax.f32 %v967, 0.0
      %v1096 = vmax.f32 %v968, 0.0
      %v1097 = vmax.f32 %v969, 0.0
      %v1098 = vmax.f32 %v970, 0.0
      %v1099 = vmax.f32 %v971, 0.0
      %v1100 = vmax.f32 %v972, 0.0
      %v1101 = vmax.f32 %v973, 0.0
      %v1102 = vmax.f32 %v974, 0.0
      %v1103 = vmax.f32 %v975, 0.0
      %v1104 = vmax.f32 %v976, 0.0
      %v1105 = vmax.f32 %v977, 0.0
      %v1106 = vmax.f32 %v978, 0.0
      %v1107 = vmax.f32 %v979, 0.0
      %v1108 = vmax.f32 %v980, 0.0
      %v1109 = vmax.f32 %v981, 0.0
      %v1110 = vmax.f32 %v982, 0.0
      %v1111 = vmax.f32 %v983, 0.0
      %v1112 = vmax.f32 %v984, 0.0
      %v1113 = vmax.f32 %v985, 0.0
      %v1114 = vmax.f32 %v986, 0.0
      %v1115 = vmax.f32 %v987, 0.0
      %v1116 = vmax.f32 %v988, 0.0
      %v1117 = vmax.f32 %v989, 0.0
      %v1118 = vmax.f32 %v990, 0.0
      %v1119 = vmax.f32 %v991, 0.0
      %v1120 = vmax.f32 %v992, 0.0
      %v1121 = vmax.f32 %v993, 0.0
      %v1122 = vmax.f32 %v994, 0.0
      %v1123 = vmax.f32 %v995, 0.0
      %v1124 = vmax.f32 %v996, 0.0
      %v1125 = vmax.f32 %v997, 0.0
      %v1126 = vmax.f32 %v998, 0.0
      %v1127 = vmax.f32 %v999, 0.0
      %v1128 = vmax.f32 %v1000, 0.0
      %v1129 = vmax.f32 %v1001, 0.0
      %v1130 = vmax.f32 %v1002, 0.0
      %v1131 = vmax.f32 %v1003, 0.0
      %v1132 = vmax.f32 %v1004, 0.0
      %v1133 = vmax.f32 %v1005, 0.0
      %v1134 = vmax.f32 %v1006, 0.0
      %v1135 = vmax.f32 %v1007, 0.0
      %v1136 = vmax.f32 %v1008, 0.0
      %v1137 = vmax.f32 %v1009, 0.0
      %v1138 = vmax.f32 %v1010, 0.0
      %v1139 = vmax.f32 %v1011, 0.0
      %v1140 = vmax.f32 %v1012, 0.0
      %v1141 = vmax.f32 %v1013, 0.0
      %v1142 = vmax.f32 %v1014, 0.0
      %v1143 = vmax.f32 %v1015, 0.0
      %v1144 = vmax.f32 %v1016, 0.0
      %v1145 = vmax.f32 %v1017, 0.0
      %v1146 = vmax.f32 %v1018, 0.0
      %v1147 = vmax.f32 %v1019, 0.0
      %v1148 = vmax.f32 %v1020, 0.0
      %v1149 = vmax.f32 %v1021, 0.0
      %v1150 = vmax.f32 %v1022, 0.0
      %v1151 = vmax.f32 %v1023, 0.0
      %v1152 = vmax.f32 %v1024, 0.0
      %v1153 = vmax.f32 %v1025, 0.0
      %v1154 = vmax.f32 %v1026, 0.0
      %v1155 = vmax.f32 %v1027, 0.0
      %v1156 = vmax.f32 %v1028, 0.0
      %v1157 = vmax.f32 %v1029, 0.0
      %v1158 = vmax.f32 %v1030, 0.0
      %v1159 = vmax.f32 %v1031, 0.0
      %v1160 = vmax.f32 %v1032, 0.0
      %v1161 = vmax.f32 %v1033, 0.0
      %v1162 = vmax.f32 %v1034, 0.0
      %v1163 = vmax.f32 %v1035, 0.0
      %v1164 = vmax.f32 %v1036, 0.0
      %v1165 = vmax.f32 %v1037, 0.0
      %v1166 = vmax.f32 %v1038, 0.0
      %v1167 = vmax.f32 %v1039, 0.0
      %v1168 = vmax.f32 %v1040, 0.0
      %v1169 = vmax.f32 %v1041, 0.0
      %v1170 = vmax.f32 %v1042, 0.0
      %v1171 = vmax.f32 %v1043, 0.0
      %v1172 = vmax.f32 %v1044, 0.0
      %v1173 = vmax.f32 %v1045, 0.0
      %v1174 = vmax.f32 %v1046, 0.0
      %v1175 = vmax.f32 %v1047, 0.0
      %v1176 = vmax.f32 %v1048, 0.0
      %v1177 = vmax.f32 %v1049, 0.0
      %v1178 = vmax.f32 %v1050, 0.0
      %v1179 = vmax.f32 %v1051, 0.0
      %v1180 = vmax.f32 %v1052, 0.0
      %v1181 = vmax.f32 %v1053, 0.0
      %v1182 = vmax.f32 %v1054, 0.0
      %v1183 = vmax.f32 %v1055, 0.0
      %v1184 = vmax.f32 %v1056, 0.0
      %v1185 = vmax.f32 %v1057, 0.0
      %v1186 = vmax.f32 %v1058, 0.0
      %v1187 = vmax.f32 %v1059, 0.0
      %v1188 = vmax.f32 %v1060, 0.0
      %v1189 = vmax.f32 %v1061, 0.0
      %v1190 = vmax.f32 %v1062, 0.0
      %v1191 = vmax.f32 %v1063, 0.0
      %v1192 = vpack.c.bf16 %v1065, %v1064
      %v1193 = vpack.c.bf16 %v1067, %v1066
      %v1194 = vpack.c.bf16 %v1069, %v1068
      %v1195 = vpack.c.bf16 %v1071, %v1070
      %v1196 = vpack.c.bf16 %v1073, %v1072
      %v1197 = vpack.c.bf16 %v1075, %v1074
      %v1198 = vpack.c.bf16 %v1077, %v1076
      %v1199 = vpack.c.bf16 %v1079, %v1078
      %v1200 = vpack.c.bf16 %v1081, %v1080
      %v1201 = vpack.c.bf16 %v1083, %v1082
      %v1202 = vpack.c.bf16 %v1085, %v1084
      %v1203 = vpack.c.bf16 %v1087, %v1086
      %v1204 = vpack.c.bf16 %v1089, %v1088
      %v1205 = vpack.c.bf16 %v1091, %v1090
      %v1206 = vpack.c.bf16 %v1093, %v1092
      %v1207 = vpack.c.bf16 %v1095, %v1094
      %v1208 = vpack.c.bf16 %v1097, %v1096
      %v1209 = vpack.c.bf16 %v1099, %v1098
      %v1210 = vpack.c.bf16 %v1101, %v1100
      %v1211 = vpack.c.bf16 %v1103, %v1102
      %v1212 = vpack.c.bf16 %v1105, %v1104
      %v1213 = vpack.c.bf16 %v1107, %v1106
      %v1214 = vpack.c.bf16 %v1109, %v1108
      %v1215 = vpack.c.bf16 %v1111, %v1110
      %v1216 = vpack.c.bf16 %v1113, %v1112
      %v1217 = vpack.c.bf16 %v1115, %v1114
      %v1218 = vpack.c.bf16 %v1117, %v1116
      %v1219 = vpack.c.bf16 %v1119, %v1118
      %v1220 = vpack.c.bf16 %v1121, %v1120
      %v1221 = vpack.c.bf16 %v1123, %v1122
      %v1222 = vpack.c.bf16 %v1125, %v1124
      %v1223 = vpack.c.bf16 %v1127, %v1126
      %v1224 = vpack.c.bf16 %v1129, %v1128
      %v1225 = vpack.c.bf16 %v1131, %v1130
      %v1226 = vpack.c.bf16 %v1133, %v1132
      %v1227 = vpack.c.bf16 %v1135, %v1134
      %v1228 = vpack.c.bf16 %v1137, %v1136
      %v1229 = vpack.c.bf16 %v1139, %v1138
      %v1230 = vpack.c.bf16 %v1141, %v1140
      %v1231 = vpack.c.bf16 %v1143, %v1142
      %v1232 = vpack.c.bf16 %v1145, %v1144
      %v1233 = vpack.c.bf16 %v1147, %v1146
      %v1234 = vpack.c.bf16 %v1149, %v1148
      %v1235 = vpack.c.bf16 %v1151, %v1150
      %v1236 = vpack.c.bf16 %v1153, %v1152
      %v1237 = vpack.c.bf16 %v1155, %v1154
      %v1238 = vpack.c.bf16 %v1157, %v1156
      %v1239 = vpack.c.bf16 %v1159, %v1158
      %v1240 = vpack.c.bf16 %v1161, %v1160
      %v1241 = vpack.c.bf16 %v1163, %v1162
      %v1242 = vpack.c.bf16 %v1165, %v1164
      %v1243 = vpack.c.bf16 %v1167, %v1166
      %v1244 = vpack.c.bf16 %v1169, %v1168
      %v1245 = vpack.c.bf16 %v1171, %v1170
      %v1246 = vpack.c.bf16 %v1173, %v1172
      %v1247 = vpack.c.bf16 %v1175, %v1174
      %v1248 = vpack.c.bf16 %v1177, %v1176
      %v1249 = vpack.c.bf16 %v1179, %v1178
      %v1250 = vpack.c.bf16 %v1181, %v1180
      %v1251 = vpack.c.bf16 %v1183, %v1182
      %v1252 = vpack.c.bf16 %v1185, %v1184
      %v1253 = vpack.c.bf16 %v1187, %v1186
      %v1254 = vpack.c.bf16 %v1189, %v1188
      %v1255 = vpack.c.bf16 %v1191, %v1190
      %v1256 = vld [vmem:[#allocation2] sm:$0xff]
      %v1257 = vld [vmem:[#allocation2 + $0x8] sm:$0xff]
      %v1258 = vld [vmem:[#allocation2 + $0x10] sm:$0xff]
      %v1259 = vld [vmem:[#allocation2 + $0x18] sm:$0xff]
      %v1260 = vld [vmem:[#allocation2 + $0x20] sm:$0xff]
      %v1261 = vld [vmem:[#allocation2 + $0x28] sm:$0xff]
      %v1262 = vld [vmem:[#allocation2 + $0x30] sm:$0xff]
      %v1263 = vld [vmem:[#allocation2 + $0x38] sm:$0xff]
      %v1264 = vld [vmem:[#allocation2 + $0x40] sm:$0xff]
      %v1265 = vld [vmem:[#allocation2 + $0x48] sm:$0xff]
      %v1266 = vld [vmem:[#allocation2 + $0x50] sm:$0xff]
      %v1267 = vld [vmem:[#allocation2 + $0x58] sm:$0xff]
      %v1268 = vld [vmem:[#allocation2 + $0x60] sm:$0xff]
      %v1269 = vld [vmem:[#allocation2 + $0x68] sm:$0xff]
      %v1270 = vld [vmem:[#allocation2 + $0x70] sm:$0xff]
      %v1271 = vld [vmem:[#allocation2 + $0x78] sm:$0xff]
      %v1272 = vld [vmem:[#allocation2 + $0x80] sm:$0xff]
      %v1273 = vld [vmem:[#allocation2 + $0x88] sm:$0xff]
      %v1274 = vld [vmem:[#allocation2 + $0x90] sm:$0xff]
      %v1275 = vld [vmem:[#allocation2 + $0x98] sm:$0xff]
      %v1276 = vld [vmem:[#allocation2 + $0xa0] sm:$0xff]
      %v1277 = vld [vmem:[#allocation2 + $0xa8] sm:$0xff]
      %v1278 = vld [vmem:[#allocation2 + $0xb0] sm:$0xff]
      %v1279 = vld [vmem:[#allocation2 + $0xb8] sm:$0xff]
      %v1280 = vld [vmem:[#allocation2 + $0xc0] sm:$0xff]
      %v1281 = vld [vmem:[#allocation2 + $0xc8] sm:$0xff]
      %v1282 = vld [vmem:[#allocation2 + $0xd0] sm:$0xff]
      %v1283 = vld [vmem:[#allocation2 + $0xd8] sm:$0xff]
      %v1284 = vld [vmem:[#allocation2 + $0xe0] sm:$0xff]
      %v1285 = vld [vmem:[#allocation2 + $0xe8] sm:$0xff]
      %v1286 = vld [vmem:[#allocation2 + $0xf0] sm:$0xff]
      %v1287 = vld [vmem:[#allocation2 + $0xf8] sm:$0xff]
      %v1288 = vld [vmem:[#allocation2 + $0x100] sm:$0xff]
      %v1289 = vld [vmem:[#allocation2 + $0x108] sm:$0xff]
      %v1290 = vld [vmem:[#allocation2 + $0x110] sm:$0xff]
      %v1291 = vld [vmem:[#allocation2 + $0x118] sm:$0xff]
      %v1292 = vld [vmem:[#allocation2 + $0x120] sm:$0xff]
      %v1293 = vld [vmem:[#allocation2 + $0x128] sm:$0xff]
      %v1294 = vld [vmem:[#allocation2 + $0x130] sm:$0xff]
      %v1295 = vld [vmem:[#allocation2 + $0x138] sm:$0xff]
      %v1296 = vld [vmem:[#allocation2 + $0x140] sm:$0xff]
      %v1297 = vld [vmem:[#allocation2 + $0x148] sm:$0xff]
      %v1298 = vld [vmem:[#allocation2 + $0x150] sm:$0xff]
      %v1299 = vld [vmem:[#allocation2 + $0x158] sm:$0xff]
      %v1300 = vld [vmem:[#allocation2 + $0x160] sm:$0xff]
      %v1301 = vld [vmem:[#allocation2 + $0x168] sm:$0xff]
      %v1302 = vld [vmem:[#allocation2 + $0x170] sm:$0xff]
      %v1303 = vld [vmem:[#allocation2 + $0x178] sm:$0xff]
      %v1304 = vld [vmem:[#allocation2 + $0x180] sm:$0xff]
      %v1305 = vld [vmem:[#allocation2 + $0x188] sm:$0xff]
      %v1306 = vld [vmem:[#allocation2 + $0x190] sm:$0xff]
      %v1307 = vld [vmem:[#allocation2 + $0x198] sm:$0xff]
      %v1308 = vld [vmem:[#allocation2 + $0x1a0] sm:$0xff]
      %v1309 = vld [vmem:[#allocation2 + $0x1a8] sm:$0xff]
      %v1310 = vld [vmem:[#allocation2 + $0x1b0] sm:$0xff]
      %v1311 = vld [vmem:[#allocation2 + $0x1b8] sm:$0xff]
      %v1312 = vld [vmem:[#allocation2 + $0x1c0] sm:$0xff]
      %v1313 = vld [vmem:[#allocation2 + $0x1c8] sm:$0xff]
      %v1314 = vld [vmem:[#allocation2 + $0x1d0] sm:$0xff]
      %v1315 = vld [vmem:[#allocation2 + $0x1d8] sm:$0xff]
      %v1316 = vld [vmem:[#allocation2 + $0x1e0] sm:$0xff]
      %v1317 = vld [vmem:[#allocation2 + $0x1e8] sm:$0xff]
      %v1318 = vld [vmem:[#allocation2 + $0x1f0] sm:$0xff]
      %v1319 = vld [vmem:[#allocation2 + $0x1f8] sm:$0xff]
      %v1320 = vld [vmem:[#allocation2 + $0x200] sm:$0xff]
      %v1321 = vld [vmem:[#allocation2 + $0x208] sm:$0xff]
      %v1322 = vld [vmem:[#allocation2 + $0x210] sm:$0xff]
      %v1323 = vld [vmem:[#allocation2 + $0x218] sm:$0xff]
      %v1324 = vld [vmem:[#allocation2 + $0x220] sm:$0xff]
      %v1325 = vld [vmem:[#allocation2 + $0x228] sm:$0xff]
      %v1326 = vld [vmem:[#allocation2 + $0x230] sm:$0xff]
      %v1327 = vld [vmem:[#allocation2 + $0x238] sm:$0xff]
      %v1328 = vld [vmem:[#allocation2 + $0x240] sm:$0xff]
      %v1329 = vld [vmem:[#allocation2 + $0x248] sm:$0xff]
      %v1330 = vld [vmem:[#allocation2 + $0x250] sm:$0xff]
      %v1331 = vld [vmem:[#allocation2 + $0x258] sm:$0xff]
      %v1332 = vld [vmem:[#allocation2 + $0x260] sm:$0xff]
      %v1333 = vld [vmem:[#allocation2 + $0x268] sm:$0xff]
      %v1334 = vld [vmem:[#allocation2 + $0x270] sm:$0xff]
      %v1335 = vld [vmem:[#allocation2 + $0x278] sm:$0xff]
      %v1336 = vld [vmem:[#allocation2 + $0x280] sm:$0xff]
      %v1337 = vld [vmem:[#allocation2 + $0x288] sm:$0xff]
      %v1338 = vld [vmem:[#allocation2 + $0x290] sm:$0xff]
      %v1339 = vld [vmem:[#allocation2 + $0x298] sm:$0xff]
      %v1340 = vld [vmem:[#allocation2 + $0x2a0] sm:$0xff]
      %v1341 = vld [vmem:[#allocation2 + $0x2a8] sm:$0xff]
      %v1342 = vld [vmem:[#allocation2 + $0x2b0] sm:$0xff]
      %v1343 = vld [vmem:[#allocation2 + $0x2b8] sm:$0xff]
      %v1344 = vld [vmem:[#allocation2 + $0x2c0] sm:$0xff]
      %v1345 = vld [vmem:[#allocation2 + $0x2c8] sm:$0xff]
      %v1346 = vld [vmem:[#allocation2 + $0x2d0] sm:$0xff]
      %v1347 = vld [vmem:[#allocation2 + $0x2d8] sm:$0xff]
      %v1348 = vld [vmem:[#allocation2 + $0x2e0] sm:$0xff]
      %v1349 = vld [vmem:[#allocation2 + $0x2e8] sm:$0xff]
      %v1350 = vld [vmem:[#allocation2 + $0x2f0] sm:$0xff]
      %v1351 = vld [vmem:[#allocation2 + $0x2f8] sm:$0xff]
      %v1352 = vld [vmem:[#allocation2 + $0x300] sm:$0xff]
      %v1353 = vld [vmem:[#allocation2 + $0x308] sm:$0xff]
      %v1354 = vld [vmem:[#allocation2 + $0x310] sm:$0xff]
      %v1355 = vld [vmem:[#allocation2 + $0x318] sm:$0xff]
      %v1356 = vld [vmem:[#allocation2 + $0x320] sm:$0xff]
      %v1357 = vld [vmem:[#allocation2 + $0x328] sm:$0xff]
      %v1358 = vld [vmem:[#allocation2 + $0x330] sm:$0xff]
      %v1359 = vld [vmem:[#allocation2 + $0x338] sm:$0xff]
      %v1360 = vld [vmem:[#allocation2 + $0x340] sm:$0xff]
      %v1361 = vld [vmem:[#allocation2 + $0x348] sm:$0xff]
      %v1362 = vld [vmem:[#allocation2 + $0x350] sm:$0xff]
      %v1363 = vld [vmem:[#allocation2 + $0x358] sm:$0xff]
      %v1364 = vld [vmem:[#allocation2 + $0x360] sm:$0xff]
      %v1365 = vld [vmem:[#allocation2 + $0x368] sm:$0xff]
      %v1366 = vld [vmem:[#allocation2 + $0x370] sm:$0xff]
      %v1367 = vld [vmem:[#allocation2 + $0x378] sm:$0xff]
      %v1368 = vld [vmem:[#allocation2 + $0x380] sm:$0xff]
      %v1369 = vld [vmem:[#allocation2 + $0x388] sm:$0xff]
      %v1370 = vld [vmem:[#allocation2 + $0x390] sm:$0xff]
      %v1371 = vld [vmem:[#allocation2 + $0x398] sm:$0xff]
      %v1372 = vld [vmem:[#allocation2 + $0x3a0] sm:$0xff]
      %v1373 = vld [vmem:[#allocation2 + $0x3a8] sm:$0xff]
      %v1374 = vld [vmem:[#allocation2 + $0x3b0] sm:$0xff]
      %v1375 = vld [vmem:[#allocation2 + $0x3b8] sm:$0xff]
      %v1376 = vld [vmem:[#allocation2 + $0x3c0] sm:$0xff]
      %v1377 = vld [vmem:[#allocation2 + $0x3c8] sm:$0xff]
      %v1378 = vld [vmem:[#allocation2 + $0x3d0] sm:$0xff]
      %v1379 = vld [vmem:[#allocation2 + $0x3d8] sm:$0xff]
      %v1380 = vld [vmem:[#allocation2 + $0x3e0] sm:$0xff]
      %v1381 = vld [vmem:[#allocation2 + $0x3e8] sm:$0xff]
      %v1382 = vld [vmem:[#allocation2 + $0x3f0] sm:$0xff]
      %v1383 = vld [vmem:[#allocation2 + $0x3f8] sm:$0xff]
      %v1384 = vld [vmem:[%s377] sm:$0xf]
      %v1385 = vld [vmem:[%s377 + $0x4] sm:$0xf]
      %v1386 = vld [vmem:[%s377 + $0x8] sm:$0xf]
      %v1387 = vld [vmem:[%s377 + $0xc] sm:$0xf]
      %v1388 = vld [vmem:[%s377 + $0x10] sm:$0xf]
      %v1389 = vld [vmem:[%s377 + $0x14] sm:$0xf]
      %v1390 = vld [vmem:[%s377 + $0x18] sm:$0xf]
      %v1391 = vld [vmem:[%s377 + $0x1c] sm:$0xf]
      %v1392 = vld [vmem:[%s377 + $0x20] sm:$0xf]
      %v1393 = vld [vmem:[%s377 + $0x24] sm:$0xf]
      %v1394 = vld [vmem:[%s377 + $0x28] sm:$0xf]
      %v1395 = vld [vmem:[%s377 + $0x2c] sm:$0xf]
      %v1396 = vld [vmem:[%s377 + $0x30] sm:$0xf]
      %v1397 = vld [vmem:[%s377 + $0x34] sm:$0xf]
      %v1398 = vld [vmem:[%s377 + $0x38] sm:$0xf]
      %v1399 = vld [vmem:[%s377 + $0x3c] sm:$0xf]
      %v1416 = vunpack.c.l.b16 %v1384
      %v1417 = vunpack.c.l.b16 %v1385
      %v1418 = vunpack.c.l.b16 %v1386
      %v1419 = vunpack.c.l.b16 %v1387
      %v1420 = vunpack.c.l.b16 %v1388
      %v1421 = vunpack.c.l.b16 %v1389
      %v1422 = vunpack.c.l.b16 %v1390
      %v1423 = vunpack.c.l.b16 %v1391
      %v1424 = vunpack.c.l.b16 %v1392
      %v1425 = vunpack.c.l.b16 %v1393
      %v1426 = vunpack.c.l.b16 %v1394
      %v1427 = vunpack.c.l.b16 %v1395
      %v1428 = vunpack.c.l.b16 %v1396
      %v1429 = vunpack.c.l.b16 %v1397
      %v1430 = vunpack.c.l.b16 %v1398
      %v1431 = vunpack.c.l.b16 %v1399
      %v1432 = vpack.c.b16 %v1417, %v1416
      %v1433 = vpack.c.b16 %v1419, %v1418
      %v1434 = vpack.c.b16 %v1421, %v1420
      %v1435 = vpack.c.b16 %v1423, %v1422
      %v1436 = vpack.c.b16 %v1425, %v1424
      %v1437 = vpack.c.b16 %v1427, %v1426
      %v1438 = vpack.c.b16 %v1429, %v1428
      %v1439 = vpack.c.b16 %v1431, %v1430
      %1448 = vmatprep.subr.bf16.mxu0 0
      %1449 = vmatpush1.bf16.msra.mxu0 %v1439
      %1450 = vmatprep.subr.bf16.mxu0 0
      %1451 = vmatpush1.bf16.msra.mxu0 %v1438
      %1452 = vmatprep.subr.bf16.mxu0 0
      %1453 = vmatpush1.bf16.msra.mxu0 %v1437
      %1454 = vmatprep.subr.bf16.mxu0 0
      %1455 = vmatpush1.bf16.msra.mxu0 %v1436
      %1456 = vmatprep.subr.bf16.mxu0 0
      %1457 = vmatpush1.bf16.msra.mxu0 %v1435
      %1458 = vmatprep.subr.bf16.mxu0 0
      %1459 = vmatpush1.bf16.msra.mxu0 %v1434
      %1460 = vmatprep.subr.bf16.mxu0 0
      %1461 = vmatpush1.bf16.msra.mxu0 %v1433
      %1462 = vmatprep.subr.bf16.mxu0 0
      %1463 = vmatpush1.bf16.msra.mxu0 %v1432
      %1464 = vmatprep.subr.bf16.mxu0 0
      %1465 = vmatpush2.bf16.msra.mxu0 0
      %1466 = vmatprep.subr.bf16.mxu0 0
      %1467 = vmatpush2.bf16.msra.mxu0 0
      %1468 = vmatprep.subr.bf16.mxu0 0
      %1469 = vmatpush2.bf16.msra.mxu0 0
      %1470 = vmatprep.subr.bf16.mxu0 0
      %1471 = vmatpush2.bf16.msra.mxu0 0
      %1472 = vmatprep.subr.bf16.mxu0 0
      %1473 = vmatpush2.bf16.msra.mxu0 0
      %1474 = vmatprep.subr.bf16.mxu0 0
      %1475 = vmatpush2.bf16.msra.mxu0 0
      %1476 = vmatprep.subr.bf16.mxu0 0
      %1477 = vmatpush2.bf16.msra.mxu0 0
      %1478 = vmatprep.subr.bf16.mxu0 0
      %1479 = vmatpush2.bf16.msra.mxu0 0
      %1480 = vmatprep.mubr.bf16.mxu0 0
      %1481 = vmatmul.mubr.bf16.gmra.mxu0 %v1192
      %v1482 = vpop.f32.mrf.mxu0
      %v1483 = vadd.f32 0.0, %v1482
      %v1484 = vpop.f32.mrf.mxu0
      %v1485 = vpop.f32.mrf.mxu0
      %v1486 = vadd.f32 0.0, %v1485
      %v1487 = vpop.f32.mrf.mxu0
      %1488 = vmatprep.mubr.bf16.mxu0 0
      %1489 = vmatmul.mubr.bf16.gmra.mxu0 %v1193
      %v1490 = vpop.f32.mrf.mxu0
      %v1491 = vadd.f32 0.0, %v1490
      %v1492 = vpop.f32.mrf.mxu0
      %v1493 = vpop.f32.mrf.mxu0
      %v1494 = vadd.f32 0.0, %v1493
      %v1495 = vpop.f32.mrf.mxu0
      %1496 = vmatprep.mubr.bf16.mxu0 0
      %1497 = vmatmul.mubr.bf16.gmra.mxu0 %v1194
      %v1498 = vpop.f32.mrf.mxu0
      %v1499 = vadd.f32 0.0, %v1498
      %v1500 = vpop.f32.mrf.mxu0
      %v1501 = vpop.f32.mrf.mxu0
      %v1502 = vadd.f32 0.0, %v1501
      %v1503 = vpop.f32.mrf.mxu0
      %1504 = vmatprep.mubr.bf16.mxu0 0
      %1505 = vmatmul.mubr.bf16.gmra.mxu0 %v1195
      %v1506 = vpop.f32.mrf.mxu0
      %v1507 = vadd.f32 0.0, %v1506
      %v1508 = vpop.f32.mrf.mxu0
      %v1509 = vpop.f32.mrf.mxu0
      %v1510 = vadd.f32 0.0, %v1509
      %v1511 = vpop.f32.mrf.mxu0
      %1512 = vmatprep.mubr.bf16.mxu0 0
      %1513 = vmatmul.mubr.bf16.gmra.mxu0 %v1196
      %v1514 = vpop.f32.mrf.mxu0
      %v1515 = vadd.f32 0.0, %v1514
      %v1516 = vpop.f32.mrf.mxu0
      %v1517 = vpop.f32.mrf.mxu0
      %v1518 = vadd.f32 0.0, %v1517
      %v1519 = vpop.f32.mrf.mxu0
      %1520 = vmatprep.mubr.bf16.mxu0 0
      %1521 = vmatmul.mubr.bf16.gmra.mxu0 %v1197
      %v1522 = vpop.f32.mrf.mxu0
      %v1523 = vadd.f32 0.0, %v1522
      %v1524 = vpop.f32.mrf.mxu0
      %v1525 = vpop.f32.mrf.mxu0
      %v1526 = vadd.f32 0.0, %v1525
      %v1527 = vpop.f32.mrf.mxu0
      %1528 = vmatprep.mubr.bf16.mxu0 0
      %1529 = vmatmul.mubr.bf16.gmra.mxu0 %v1198
      %v1530 = vpop.f32.mrf.mxu0
      %v1531 = vadd.f32 0.0, %v1530
      %v1532 = vpop.f32.mrf.mxu0
      %v1533 = vpop.f32.mrf.mxu0
      %v1534 = vadd.f32 0.0, %v1533
      %v1535 = vpop.f32.mrf.mxu0
      %1536 = vmatprep.mubr.bf16.mxu0 0
      %1537 = vmatmul.mubr.bf16.gmra.mxu0 %v1199
      %v1538 = vpop.f32.mrf.mxu0
      %v1539 = vadd.f32 0.0, %v1538
      %v1540 = vpop.f32.mrf.mxu0
      %v1541 = vpop.f32.mrf.mxu0
      %v1542 = vadd.f32 0.0, %v1541
      %v1543 = vpop.f32.mrf.mxu0
      %1544 = vmatprep.mubr.bf16.mxu0 0
      %1545 = vmatmul.mubr.bf16.gmra.mxu0 %v1200
      %v1546 = vpop.f32.mrf.mxu0
      %v1547 = vadd.f32 0.0, %v1546
      %v1548 = vpop.f32.mrf.mxu0
      %v1549 = vpop.f32.mrf.mxu0
      %v1550 = vadd.f32 0.0, %v1549
      %v1551 = vpop.f32.mrf.mxu0
      %1552 = vmatprep.mubr.bf16.mxu0 0
      %1553 = vmatmul.mubr.bf16.gmra.mxu0 %v1201
      %v1554 = vpop.f32.mrf.mxu0
      %v1555 = vadd.f32 0.0, %v1554
      %v1556 = vpop.f32.mrf.mxu0
      %v1557 = vpop.f32.mrf.mxu0
      %v1558 = vadd.f32 0.0, %v1557
      %v1559 = vpop.f32.mrf.mxu0
      %1560 = vmatprep.mubr.bf16.mxu0 0
      %1561 = vmatmul.mubr.bf16.gmra.mxu0 %v1202
      %v1562 = vpop.f32.mrf.mxu0
      %v1563 = vadd.f32 0.0, %v1562
      %v1564 = vpop.f32.mrf.mxu0
      %v1565 = vpop.f32.mrf.mxu0
      %v1566 = vadd.f32 0.0, %v1565
      %v1567 = vpop.f32.mrf.mxu0
      %1568 = vmatprep.mubr.bf16.mxu0 0
      %1569 = vmatmul.mubr.bf16.gmra.mxu0 %v1203
      %v1570 = vpop.f32.mrf.mxu0
      %v1571 = vadd.f32 0.0, %v1570
      %v1572 = vpop.f32.mrf.mxu0
      %v1573 = vpop.f32.mrf.mxu0
      %v1574 = vadd.f32 0.0, %v1573
      %v1575 = vpop.f32.mrf.mxu0
      %1576 = vmatprep.mubr.bf16.mxu0 0
      %1577 = vmatmul.mubr.bf16.gmra.mxu0 %v1204
      %v1578 = vpop.f32.mrf.mxu0
      %v1579 = vadd.f32 0.0, %v1578
      %v1580 = vpop.f32.mrf.mxu0
      %v1581 = vpop.f32.mrf.mxu0
      %v1582 = vadd.f32 0.0, %v1581
      %v1583 = vpop.f32.mrf.mxu0
      %1584 = vmatprep.mubr.bf16.mxu0 0
      %1585 = vmatmul.mubr.bf16.gmra.mxu0 %v1205
      %v1586 = vpop.f32.mrf.mxu0
      %v1587 = vadd.f32 0.0, %v1586
      %v1588 = vpop.f32.mrf.mxu0
      %v1589 = vpop.f32.mrf.mxu0
      %v1590 = vadd.f32 0.0, %v1589
      %v1591 = vpop.f32.mrf.mxu0
      %1592 = vmatprep.mubr.bf16.mxu0 0
      %1593 = vmatmul.mubr.bf16.gmra.mxu0 %v1206
      %v1594 = vpop.f32.mrf.mxu0
      %v1595 = vadd.f32 0.0, %v1594
      %v1596 = vpop.f32.mrf.mxu0
      %v1597 = vpop.f32.mrf.mxu0
      %v1598 = vadd.f32 0.0, %v1597
      %v1599 = vpop.f32.mrf.mxu0
      %1600 = vmatprep.mubr.bf16.mxu0 0
      %1601 = vmatmul.mubr.bf16.gmra.mxu0 %v1207
      %v1602 = vpop.f32.mrf.mxu0
      %v1603 = vadd.f32 0.0, %v1602
      %v1604 = vpop.f32.mrf.mxu0
      %v1605 = vpop.f32.mrf.mxu0
      %v1606 = vadd.f32 0.0, %v1605
      %v1607 = vpop.f32.mrf.mxu0
      %1608 = vmatprep.mubr.bf16.mxu0 0
      %1609 = vmatmul.mubr.bf16.gmra.mxu0 %v1208
      %v1610 = vpop.f32.mrf.mxu0
      %v1611 = vadd.f32 0.0, %v1610
      %v1612 = vpop.f32.mrf.mxu0
      %v1613 = vpop.f32.mrf.mxu0
      %v1614 = vadd.f32 0.0, %v1613
      %v1615 = vpop.f32.mrf.mxu0
      %1616 = vmatprep.mubr.bf16.mxu0 0
      %1617 = vmatmul.mubr.bf16.gmra.mxu0 %v1209
      %v1618 = vpop.f32.mrf.mxu0
      %v1619 = vadd.f32 0.0, %v1618
      %v1620 = vpop.f32.mrf.mxu0
      %v1621 = vpop.f32.mrf.mxu0
      %v1622 = vadd.f32 0.0, %v1621
      %v1623 = vpop.f32.mrf.mxu0
      %1624 = vmatprep.mubr.bf16.mxu0 0
      %1625 = vmatmul.mubr.bf16.gmra.mxu0 %v1210
      %v1626 = vpop.f32.mrf.mxu0
      %v1627 = vadd.f32 0.0, %v1626
      %v1628 = vpop.f32.mrf.mxu0
      %v1629 = vpop.f32.mrf.mxu0
      %v1630 = vadd.f32 0.0, %v1629
      %v1631 = vpop.f32.mrf.mxu0
      %1632 = vmatprep.mubr.bf16.mxu0 0
      %1633 = vmatmul.mubr.bf16.gmra.mxu0 %v1211
      %v1634 = vpop.f32.mrf.mxu0
      %v1635 = vadd.f32 0.0, %v1634
      %v1636 = vpop.f32.mrf.mxu0
      %v1637 = vpop.f32.mrf.mxu0
      %v1638 = vadd.f32 0.0, %v1637
      %v1639 = vpop.f32.mrf.mxu0
      %1640 = vmatprep.mubr.bf16.mxu0 0
      %1641 = vmatmul.mubr.bf16.gmra.mxu0 %v1212
      %v1642 = vpop.f32.mrf.mxu0
      %v1643 = vadd.f32 0.0, %v1642
      %v1644 = vpop.f32.mrf.mxu0
      %v1645 = vpop.f32.mrf.mxu0
      %v1646 = vadd.f32 0.0, %v1645
      %v1647 = vpop.f32.mrf.mxu0
      %1648 = vmatprep.mubr.bf16.mxu0 0
      %1649 = vmatmul.mubr.bf16.gmra.mxu0 %v1213
      %v1650 = vpop.f32.mrf.mxu0
      %v1651 = vadd.f32 0.0, %v1650
      %v1652 = vpop.f32.mrf.mxu0
      %v1653 = vpop.f32.mrf.mxu0
      %v1654 = vadd.f32 0.0, %v1653
      %v1655 = vpop.f32.mrf.mxu0
      %1656 = vmatprep.mubr.bf16.mxu0 0
      %1657 = vmatmul.mubr.bf16.gmra.mxu0 %v1214
      %v1658 = vpop.f32.mrf.mxu0
      %v1659 = vadd.f32 0.0, %v1658
      %v1660 = vpop.f32.mrf.mxu0
      %v1661 = vpop.f32.mrf.mxu0
      %v1662 = vadd.f32 0.0, %v1661
      %v1663 = vpop.f32.mrf.mxu0
      %1664 = vmatprep.mubr.bf16.mxu0 0
      %1665 = vmatmul.mubr.bf16.gmra.mxu0 %v1215
      %v1666 = vpop.f32.mrf.mxu0
      %v1667 = vadd.f32 0.0, %v1666
      %v1668 = vpop.f32.mrf.mxu0
      %v1669 = vpop.f32.mrf.mxu0
      %v1670 = vadd.f32 0.0, %v1669
      %v1671 = vpop.f32.mrf.mxu0
      %1672 = vmatprep.mubr.bf16.mxu0 0
      %1673 = vmatmul.mubr.bf16.gmra.mxu0 %v1216
      %v1674 = vpop.f32.mrf.mxu0
      %v1675 = vadd.f32 0.0, %v1674
      %v1676 = vpop.f32.mrf.mxu0
      %v1677 = vpop.f32.mrf.mxu0
      %v1678 = vadd.f32 0.0, %v1677
      %v1679 = vpop.f32.mrf.mxu0
      %1680 = vmatprep.mubr.bf16.mxu0 0
      %1681 = vmatmul.mubr.bf16.gmra.mxu0 %v1217
      %v1682 = vpop.f32.mrf.mxu0
      %v1683 = vadd.f32 0.0, %v1682
      %v1684 = vpop.f32.mrf.mxu0
      %v1685 = vpop.f32.mrf.mxu0
      %v1686 = vadd.f32 0.0, %v1685
      %v1687 = vpop.f32.mrf.mxu0
      %1688 = vmatprep.mubr.bf16.mxu0 0
      %1689 = vmatmul.mubr.bf16.gmra.mxu0 %v1218
      %v1690 = vpop.f32.mrf.mxu0
      %v1691 = vadd.f32 0.0, %v1690
      %v1692 = vpop.f32.mrf.mxu0
      %v1693 = vpop.f32.mrf.mxu0
      %v1694 = vadd.f32 0.0, %v1693
      %v1695 = vpop.f32.mrf.mxu0
      %1696 = vmatprep.mubr.bf16.mxu0 0
      %1697 = vmatmul.mubr.bf16.gmra.mxu0 %v1219
      %v1698 = vpop.f32.mrf.mxu0
      %v1699 = vadd.f32 0.0, %v1698
      %v1700 = vpop.f32.mrf.mxu0
      %v1701 = vpop.f32.mrf.mxu0
      %v1702 = vadd.f32 0.0, %v1701
      %v1703 = vpop.f32.mrf.mxu0
      %1704 = vmatprep.mubr.bf16.mxu0 0
      %1705 = vmatmul.mubr.bf16.gmra.mxu0 %v1220
      %v1706 = vpop.f32.mrf.mxu0
      %v1707 = vadd.f32 0.0, %v1706
      %v1708 = vpop.f32.mrf.mxu0
      %v1709 = vpop.f32.mrf.mxu0
      %v1710 = vadd.f32 0.0, %v1709
      %v1711 = vpop.f32.mrf.mxu0
      %1712 = vmatprep.mubr.bf16.mxu0 0
      %1713 = vmatmul.mubr.bf16.gmra.mxu0 %v1221
      %v1714 = vpop.f32.mrf.mxu0
      %v1715 = vadd.f32 0.0, %v1714
      %v1716 = vpop.f32.mrf.mxu0
      %v1717 = vpop.f32.mrf.mxu0
      %v1718 = vadd.f32 0.0, %v1717
      %v1719 = vpop.f32.mrf.mxu0
      %1720 = vmatprep.mubr.bf16.mxu0 0
      %1721 = vmatmul.mubr.bf16.gmra.mxu0 %v1222
      %v1722 = vpop.f32.mrf.mxu0
      %v1723 = vadd.f32 0.0, %v1722
      %v1724 = vpop.f32.mrf.mxu0
      %v1725 = vpop.f32.mrf.mxu0
      %v1726 = vadd.f32 0.0, %v1725
      %v1727 = vpop.f32.mrf.mxu0
      %1728 = vmatprep.mubr.bf16.mxu0 0
      %1729 = vmatmul.mubr.bf16.gmra.mxu0 %v1223
      %v1730 = vpop.f32.mrf.mxu0
      %v1731 = vadd.f32 0.0, %v1730
      %v1732 = vpop.f32.mrf.mxu0
      %v1733 = vpop.f32.mrf.mxu0
      %v1734 = vadd.f32 0.0, %v1733
      %v1735 = vpop.f32.mrf.mxu0
      %1736 = vmatprep.mubr.bf16.mxu0 0
      %1737 = vmatmul.mubr.bf16.gmra.mxu0 %v1224
      %v1738 = vpop.f32.mrf.mxu0
      %v1739 = vadd.f32 0.0, %v1738
      %v1740 = vpop.f32.mrf.mxu0
      %v1741 = vpop.f32.mrf.mxu0
      %v1742 = vadd.f32 0.0, %v1741
      %v1743 = vpop.f32.mrf.mxu0
      %1744 = vmatprep.mubr.bf16.mxu0 0
      %1745 = vmatmul.mubr.bf16.gmra.mxu0 %v1225
      %v1746 = vpop.f32.mrf.mxu0
      %v1747 = vadd.f32 0.0, %v1746
      %v1748 = vpop.f32.mrf.mxu0
      %v1749 = vpop.f32.mrf.mxu0
      %v1750 = vadd.f32 0.0, %v1749
      %v1751 = vpop.f32.mrf.mxu0
      %1752 = vmatprep.mubr.bf16.mxu0 0
      %1753 = vmatmul.mubr.bf16.gmra.mxu0 %v1226
      %v1754 = vpop.f32.mrf.mxu0
      %v1755 = vadd.f32 0.0, %v1754
      %v1756 = vpop.f32.mrf.mxu0
      %v1757 = vpop.f32.mrf.mxu0
      %v1758 = vadd.f32 0.0, %v1757
      %v1759 = vpop.f32.mrf.mxu0
      %1760 = vmatprep.mubr.bf16.mxu0 0
      %1761 = vmatmul.mubr.bf16.gmra.mxu0 %v1227
      %v1762 = vpop.f32.mrf.mxu0
      %v1763 = vadd.f32 0.0, %v1762
      %v1764 = vpop.f32.mrf.mxu0
      %v1765 = vpop.f32.mrf.mxu0
      %v1766 = vadd.f32 0.0, %v1765
      %v1767 = vpop.f32.mrf.mxu0
      %1768 = vmatprep.mubr.bf16.mxu0 0
      %1769 = vmatmul.mubr.bf16.gmra.mxu0 %v1228
      %v1770 = vpop.f32.mrf.mxu0
      %v1771 = vadd.f32 0.0, %v1770
      %v1772 = vpop.f32.mrf.mxu0
      %v1773 = vpop.f32.mrf.mxu0
      %v1774 = vadd.f32 0.0, %v1773
      %v1775 = vpop.f32.mrf.mxu0
      %1776 = vmatprep.mubr.bf16.mxu0 0
      %1777 = vmatmul.mubr.bf16.gmra.mxu0 %v1229
      %v1778 = vpop.f32.mrf.mxu0
      %v1779 = vadd.f32 0.0, %v1778
      %v1780 = vpop.f32.mrf.mxu0
      %v1781 = vpop.f32.mrf.mxu0
      %v1782 = vadd.f32 0.0, %v1781
      %v1783 = vpop.f32.mrf.mxu0
      %1784 = vmatprep.mubr.bf16.mxu0 0
      %1785 = vmatmul.mubr.bf16.gmra.mxu0 %v1230
      %v1786 = vpop.f32.mrf.mxu0
      %v1787 = vadd.f32 0.0, %v1786
      %v1788 = vpop.f32.mrf.mxu0
      %v1789 = vpop.f32.mrf.mxu0
      %v1790 = vadd.f32 0.0, %v1789
      %v1791 = vpop.f32.mrf.mxu0
      %1792 = vmatprep.mubr.bf16.mxu0 0
      %1793 = vmatmul.mubr.bf16.gmra.mxu0 %v1231
      %v1794 = vpop.f32.mrf.mxu0
      %v1795 = vadd.f32 0.0, %v1794
      %v1796 = vpop.f32.mrf.mxu0
      %v1797 = vpop.f32.mrf.mxu0
      %v1798 = vadd.f32 0.0, %v1797
      %v1799 = vpop.f32.mrf.mxu0
      %1800 = vmatprep.mubr.bf16.mxu0 0
      %1801 = vmatmul.mubr.bf16.gmra.mxu0 %v1232
      %v1802 = vpop.f32.mrf.mxu0
      %v1803 = vadd.f32 0.0, %v1802
      %v1804 = vpop.f32.mrf.mxu0
      %v1805 = vpop.f32.mrf.mxu0
      %v1806 = vadd.f32 0.0, %v1805
      %v1807 = vpop.f32.mrf.mxu0
      %1808 = vmatprep.mubr.bf16.mxu0 0
      %1809 = vmatmul.mubr.bf16.gmra.mxu0 %v1233
      %v1810 = vpop.f32.mrf.mxu0
      %v1811 = vadd.f32 0.0, %v1810
      %v1812 = vpop.f32.mrf.mxu0
      %v1813 = vpop.f32.mrf.mxu0
      %v1814 = vadd.f32 0.0, %v1813
      %v1815 = vpop.f32.mrf.mxu0
      %1816 = vmatprep.mubr.bf16.mxu0 0
      %1817 = vmatmul.mubr.bf16.gmra.mxu0 %v1234
      %v1818 = vpop.f32.mrf.mxu0
      %v1819 = vadd.f32 0.0, %v1818
      %v1820 = vpop.f32.mrf.mxu0
      %v1821 = vpop.f32.mrf.mxu0
      %v1822 = vadd.f32 0.0, %v1821
      %v1823 = vpop.f32.mrf.mxu0
      %1824 = vmatprep.mubr.bf16.mxu0 0
      %1825 = vmatmul.mubr.bf16.gmra.mxu0 %v1235
      %v1826 = vpop.f32.mrf.mxu0
      %v1827 = vadd.f32 0.0, %v1826
      %v1828 = vpop.f32.mrf.mxu0
      %v1829 = vpop.f32.mrf.mxu0
      %v1830 = vadd.f32 0.0, %v1829
      %v1831 = vpop.f32.mrf.mxu0
      %1832 = vmatprep.mubr.bf16.mxu0 0
      %1833 = vmatmul.mubr.bf16.gmra.mxu0 %v1236
      %v1834 = vpop.f32.mrf.mxu0
      %v1835 = vadd.f32 0.0, %v1834
      %v1836 = vpop.f32.mrf.mxu0
      %v1837 = vpop.f32.mrf.mxu0
      %v1838 = vadd.f32 0.0, %v1837
      %v1839 = vpop.f32.mrf.mxu0
      %1840 = vmatprep.mubr.bf16.mxu0 0
      %1841 = vmatmul.mubr.bf16.gmra.mxu0 %v1237
      %v1842 = vpop.f32.mrf.mxu0
      %v1843 = vadd.f32 0.0, %v1842
      %v1844 = vpop.f32.mrf.mxu0
      %v1845 = vpop.f32.mrf.mxu0
      %v1846 = vadd.f32 0.0, %v1845
      %v1847 = vpop.f32.mrf.mxu0
      %1848 = vmatprep.mubr.bf16.mxu0 0
      %1849 = vmatmul.mubr.bf16.gmra.mxu0 %v1238
      %v1850 = vpop.f32.mrf.mxu0
      %v1851 = vadd.f32 0.0, %v1850
      %v1852 = vpop.f32.mrf.mxu0
      %v1853 = vpop.f32.mrf.mxu0
      %v1854 = vadd.f32 0.0, %v1853
      %v1855 = vpop.f32.mrf.mxu0
      %1856 = vmatprep.mubr.bf16.mxu0 0
      %1857 = vmatmul.mubr.bf16.gmra.mxu0 %v1239
      %v1858 = vpop.f32.mrf.mxu0
      %v1859 = vadd.f32 0.0, %v1858
      %v1860 = vpop.f32.mrf.mxu0
      %v1861 = vpop.f32.mrf.mxu0
      %v1862 = vadd.f32 0.0, %v1861
      %v1863 = vpop.f32.mrf.mxu0
      %1864 = vmatprep.mubr.bf16.mxu0 0
      %1865 = vmatmul.mubr.bf16.gmra.mxu0 %v1240
      %v1866 = vpop.f32.mrf.mxu0
      %v1867 = vadd.f32 0.0, %v1866
      %v1868 = vpop.f32.mrf.mxu0
      %v1869 = vpop.f32.mrf.mxu0
      %v1870 = vadd.f32 0.0, %v1869
      %v1871 = vpop.f32.mrf.mxu0
      %1872 = vmatprep.mubr.bf16.mxu0 0
      %1873 = vmatmul.mubr.bf16.gmra.mxu0 %v1241
      %v1874 = vpop.f32.mrf.mxu0
      %v1875 = vadd.f32 0.0, %v1874
      %v1876 = vpop.f32.mrf.mxu0
      %v1877 = vpop.f32.mrf.mxu0
      %v1878 = vadd.f32 0.0, %v1877
      %v1879 = vpop.f32.mrf.mxu0
      %1880 = vmatprep.mubr.bf16.mxu0 0
      %1881 = vmatmul.mubr.bf16.gmra.mxu0 %v1242
      %v1882 = vpop.f32.mrf.mxu0
      %v1883 = vadd.f32 0.0, %v1882
      %v1884 = vpop.f32.mrf.mxu0
      %v1885 = vpop.f32.mrf.mxu0
      %v1886 = vadd.f32 0.0, %v1885
      %v1887 = vpop.f32.mrf.mxu0
      %1888 = vmatprep.mubr.bf16.mxu0 0
      %1889 = vmatmul.mubr.bf16.gmra.mxu0 %v1243
      %v1890 = vpop.f32.mrf.mxu0
      %v1891 = vadd.f32 0.0, %v1890
      %v1892 = vpop.f32.mrf.mxu0
      %v1893 = vpop.f32.mrf.mxu0
      %v1894 = vadd.f32 0.0, %v1893
      %v1895 = vpop.f32.mrf.mxu0
      %1896 = vmatprep.mubr.bf16.mxu0 0
      %1897 = vmatmul.mubr.bf16.gmra.mxu0 %v1244
      %v1898 = vpop.f32.mrf.mxu0
      %v1899 = vadd.f32 0.0, %v1898
      %v1900 = vpop.f32.mrf.mxu0
      %v1901 = vpop.f32.mrf.mxu0
      %v1902 = vadd.f32 0.0, %v1901
      %v1903 = vpop.f32.mrf.mxu0
      %1904 = vmatprep.mubr.bf16.mxu0 0
      %1905 = vmatmul.mubr.bf16.gmra.mxu0 %v1245
      %v1906 = vpop.f32.mrf.mxu0
      %v1907 = vadd.f32 0.0, %v1906
      %v1908 = vpop.f32.mrf.mxu0
      %v1909 = vpop.f32.mrf.mxu0
      %v1910 = vadd.f32 0.0, %v1909
      %v1911 = vpop.f32.mrf.mxu0
      %1912 = vmatprep.mubr.bf16.mxu0 0
      %1913 = vmatmul.mubr.bf16.gmra.mxu0 %v1246
      %v1914 = vpop.f32.mrf.mxu0
      %v1915 = vadd.f32 0.0, %v1914
      %v1916 = vpop.f32.mrf.mxu0
      %v1917 = vpop.f32.mrf.mxu0
      %v1918 = vadd.f32 0.0, %v1917
      %v1919 = vpop.f32.mrf.mxu0
      %1920 = vmatprep.mubr.bf16.mxu0 0
      %1921 = vmatmul.mubr.bf16.gmra.mxu0 %v1247
      %v1922 = vpop.f32.mrf.mxu0
      %v1923 = vadd.f32 0.0, %v1922
      %v1924 = vpop.f32.mrf.mxu0
      %v1925 = vpop.f32.mrf.mxu0
      %v1926 = vadd.f32 0.0, %v1925
      %v1927 = vpop.f32.mrf.mxu0
      %1928 = vmatprep.mubr.bf16.mxu0 0
      %1929 = vmatmul.mubr.bf16.gmra.mxu0 %v1248
      %v1930 = vpop.f32.mrf.mxu0
      %v1931 = vadd.f32 0.0, %v1930
      %v1932 = vpop.f32.mrf.mxu0
      %v1933 = vpop.f32.mrf.mxu0
      %v1934 = vadd.f32 0.0, %v1933
      %v1935 = vpop.f32.mrf.mxu0
      %1936 = vmatprep.mubr.bf16.mxu0 0
      %1937 = vmatmul.mubr.bf16.gmra.mxu0 %v1249
      %v1938 = vpop.f32.mrf.mxu0
      %v1939 = vadd.f32 0.0, %v1938
      %v1940 = vpop.f32.mrf.mxu0
      %v1941 = vpop.f32.mrf.mxu0
      %v1942 = vadd.f32 0.0, %v1941
      %v1943 = vpop.f32.mrf.mxu0
      %1944 = vmatprep.mubr.bf16.mxu0 0
      %1945 = vmatmul.mubr.bf16.gmra.mxu0 %v1250
      %v1946 = vpop.f32.mrf.mxu0
      %v1947 = vadd.f32 0.0, %v1946
      %v1948 = vpop.f32.mrf.mxu0
      %v1949 = vpop.f32.mrf.mxu0
      %v1950 = vadd.f32 0.0, %v1949
      %v1951 = vpop.f32.mrf.mxu0
      %1952 = vmatprep.mubr.bf16.mxu0 0
      %1953 = vmatmul.mubr.bf16.gmra.mxu0 %v1251
      %v1954 = vpop.f32.mrf.mxu0
      %v1955 = vadd.f32 0.0, %v1954
      %v1956 = vpop.f32.mrf.mxu0
      %v1957 = vpop.f32.mrf.mxu0
      %v1958 = vadd.f32 0.0, %v1957
      %v1959 = vpop.f32.mrf.mxu0
      %1960 = vmatprep.mubr.bf16.mxu0 0
      %1961 = vmatmul.mubr.bf16.gmra.mxu0 %v1252
      %v1962 = vpop.f32.mrf.mxu0
      %v1963 = vadd.f32 0.0, %v1962
      %v1964 = vpop.f32.mrf.mxu0
      %v1965 = vpop.f32.mrf.mxu0
      %v1966 = vadd.f32 0.0, %v1965
      %v1967 = vpop.f32.mrf.mxu0
      %1968 = vmatprep.mubr.bf16.mxu0 0
      %1969 = vmatmul.mubr.bf16.gmra.mxu0 %v1253
      %v1970 = vpop.f32.mrf.mxu0
      %v1971 = vadd.f32 0.0, %v1970
      %v1972 = vpop.f32.mrf.mxu0
      %v1973 = vpop.f32.mrf.mxu0
      %v1974 = vadd.f32 0.0, %v1973
      %v1975 = vpop.f32.mrf.mxu0
      %1976 = vmatprep.mubr.bf16.mxu0 0
      %1977 = vmatmul.mubr.bf16.gmra.mxu0 %v1254
      %v1978 = vpop.f32.mrf.mxu0
      %v1979 = vadd.f32 0.0, %v1978
      %v1980 = vpop.f32.mrf.mxu0
      %v1981 = vpop.f32.mrf.mxu0
      %v1982 = vadd.f32 0.0, %v1981
      %v1983 = vpop.f32.mrf.mxu0
      %1984 = vmatprep.mubr.bf16.mxu0 0
      %1985 = vmatmul.mubr.bf16.gmra.mxu0 %v1255
      %v1986 = vpop.f32.mrf.mxu0
      %v1987 = vadd.f32 0.0, %v1986
      %v1988 = vpop.f32.mrf.mxu0
      %v1989 = vpop.f32.mrf.mxu0
      %v1990 = vadd.f32 0.0, %v1989
      %v1991 = vpop.f32.mrf.mxu0
      %1992 = vdwg.mxu0
      %v1993 = vadd.f32 %v1256, %v1483
      %v1994 = vadd.f32 %v1257, %v1486
      %v1995 = vadd.f32 %v1258, %v1491
      %v1996 = vadd.f32 %v1259, %v1494
      %v1997 = vadd.f32 %v1260, %v1499
      %v1998 = vadd.f32 %v1261, %v1502
      %v1999 = vadd.f32 %v1262, %v1507
      %v2000 = vadd.f32 %v1263, %v1510
      %v2001 = vadd.f32 %v1264, %v1515
      %v2002 = vadd.f32 %v1265, %v1518
      %v2003 = vadd.f32 %v1266, %v1523
      %v2004 = vadd.f32 %v1267, %v1526
      %v2005 = vadd.f32 %v1268, %v1531
      %v2006 = vadd.f32 %v1269, %v1534
      %v2007 = vadd.f32 %v1270, %v1539
      %v2008 = vadd.f32 %v1271, %v1542
      %v2009 = vadd.f32 %v1272, %v1547
      %v2010 = vadd.f32 %v1273, %v1550
      %v2011 = vadd.f32 %v1274, %v1555
      %v2012 = vadd.f32 %v1275, %v1558
      %v2013 = vadd.f32 %v1276, %v1563
      %v2014 = vadd.f32 %v1277, %v1566
      %v2015 = vadd.f32 %v1278, %v1571
      %v2016 = vadd.f32 %v1279, %v1574
      %v2017 = vadd.f32 %v1280, %v1579
      %v2018 = vadd.f32 %v1281, %v1582
      %v2019 = vadd.f32 %v1282, %v1587
      %v2020 = vadd.f32 %v1283, %v1590
      %v2021 = vadd.f32 %v1284, %v1595
      %v2022 = vadd.f32 %v1285, %v1598
      %v2023 = vadd.f32 %v1286, %v1603
      %v2024 = vadd.f32 %v1287, %v1606
      %v2025 = vadd.f32 %v1288, %v1611
      %v2026 = vadd.f32 %v1289, %v1614
      %v2027 = vadd.f32 %v1290, %v1619
      %v2028 = vadd.f32 %v1291, %v1622
      %v2029 = vadd.f32 %v1292, %v1627
      %v2030 = vadd.f32 %v1293, %v1630
      %v2031 = vadd.f32 %v1294, %v1635
      %v2032 = vadd.f32 %v1295, %v1638
      %v2033 = vadd.f32 %v1296, %v1643
      %v2034 = vadd.f32 %v1297, %v1646
      %v2035 = vadd.f32 %v1298, %v1651
      %v2036 = vadd.f32 %v1299, %v1654
      %v2037 = vadd.f32 %v1300, %v1659
      %v2038 = vadd.f32 %v1301, %v1662
      %v2039 = vadd.f32 %v1302, %v1667
      %v2040 = vadd.f32 %v1303, %v1670
      %v2041 = vadd.f32 %v1304, %v1675
      %v2042 = vadd.f32 %v1305, %v1678
      %v2043 = vadd.f32 %v1306, %v1683
      %v2044 = vadd.f32 %v1307, %v1686
      %v2045 = vadd.f32 %v1308, %v1691
      %v2046 = vadd.f32 %v1309, %v1694
      %v2047 = vadd.f32 %v1310, %v1699
      %v2048 = vadd.f32 %v1311, %v1702
      %v2049 = vadd.f32 %v1312, %v1707
      %v2050 = vadd.f32 %v1313, %v1710
      %v2051 = vadd.f32 %v1314, %v1715
      %v2052 = vadd.f32 %v1315, %v1718
      %v2053 = vadd.f32 %v1316, %v1723
      %v2054 = vadd.f32 %v1317, %v1726
      %v2055 = vadd.f32 %v1318, %v1731
      %v2056 = vadd.f32 %v1319, %v1734
      %v2057 = vadd.f32 %v1320, %v1739
      %v2058 = vadd.f32 %v1321, %v1742
      %v2059 = vadd.f32 %v1322, %v1747
      %v2060 = vadd.f32 %v1323, %v1750
      %v2061 = vadd.f32 %v1324, %v1755
      %v2062 = vadd.f32 %v1325, %v1758
      %v2063 = vadd.f32 %v1326, %v1763
      %v2064 = vadd.f32 %v1327, %v1766
      %v2065 = vadd.f32 %v1328, %v1771
      %v2066 = vadd.f32 %v1329, %v1774
      %v2067 = vadd.f32 %v1330, %v1779
      %v2068 = vadd.f32 %v1331, %v1782
      %v2069 = vadd.f32 %v1332, %v1787
      %v2070 = vadd.f32 %v1333, %v1790
      %v2071 = vadd.f32 %v1334, %v1795
      %v2072 = vadd.f32 %v1335, %v1798
      %v2073 = vadd.f32 %v1336, %v1803
      %v2074 = vadd.f32 %v1337, %v1806
      %v2075 = vadd.f32 %v1338, %v1811
      %v2076 = vadd.f32 %v1339, %v1814
      %v2077 = vadd.f32 %v1340, %v1819
      %v2078 = vadd.f32 %v1341, %v1822
      %v2079 = vadd.f32 %v1342, %v1827
      %v2080 = vadd.f32 %v1343, %v1830
      %v2081 = vadd.f32 %v1344, %v1835
      %v2082 = vadd.f32 %v1345, %v1838
      %v2083 = vadd.f32 %v1346, %v1843
      %v2084 = vadd.f32 %v1347, %v1846
      %v2085 = vadd.f32 %v1348, %v1851
      %v2086 = vadd.f32 %v1349, %v1854
      %v2087 = vadd.f32 %v1350, %v1859
      %v2088 = vadd.f32 %v1351, %v1862
      %v2089 = vadd.f32 %v1352, %v1867
      %v2090 = vadd.f32 %v1353, %v1870
      %v2091 = vadd.f32 %v1354, %v1875
      %v2092 = vadd.f32 %v1355, %v1878
      %v2093 = vadd.f32 %v1356, %v1883
      %v2094 = vadd.f32 %v1357, %v1886
      %v2095 = vadd.f32 %v1358, %v1891
      %v2096 = vadd.f32 %v1359, %v1894
      %v2097 = vadd.f32 %v1360, %v1899
      %v2098 = vadd.f32 %v1361, %v1902
      %v2099 = vadd.f32 %v1362, %v1907
      %v2100 = vadd.f32 %v1363, %v1910
      %v2101 = vadd.f32 %v1364, %v1915
      %v2102 = vadd.f32 %v1365, %v1918
      %v2103 = vadd.f32 %v1366, %v1923
      %v2104 = vadd.f32 %v1367, %v1926
      %v2105 = vadd.f32 %v1368, %v1931
      %v2106 = vadd.f32 %v1369, %v1934
      %v2107 = vadd.f32 %v1370, %v1939
      %v2108 = vadd.f32 %v1371, %v1942
      %v2109 = vadd.f32 %v1372, %v1947
      %v2110 = vadd.f32 %v1373, %v1950
      %v2111 = vadd.f32 %v1374, %v1955
      %v2112 = vadd.f32 %v1375, %v1958
      %v2113 = vadd.f32 %v1376, %v1963
      %v2114 = vadd.f32 %v1377, %v1966
      %v2115 = vadd.f32 %v1378, %v1971
      %v2116 = vadd.f32 %v1379, %v1974
      %v2117 = vadd.f32 %v1380, %v1979
      %v2118 = vadd.f32 %v1381, %v1982
      %v2119 = vadd.f32 %v1382, %v1987
      %v2120 = vadd.f32 %v1383, %v1990
      %2121 = vst [vmem:[#allocation2] sm:$0xff] %v1993
      %2122 = vst [vmem:[#allocation2 + $0x8] sm:$0xff] %v1994
      %2123 = vst [vmem:[#allocation2 + $0x10] sm:$0xff] %v1995
      %2124 = vst [vmem:[#allocation2 + $0x18] sm:$0xff] %v1996
      %2125 = vst [vmem:[#allocation2 + $0x20] sm:$0xff] %v1997
      %2126 = vst [vmem:[#allocation2 + $0x28] sm:$0xff] %v1998
      %2127 = vst [vmem:[#allocation2 + $0x30] sm:$0xff] %v1999
      %2128 = vst [vmem:[#allocation2 + $0x38] sm:$0xff] %v2000
      %2129 = vst [vmem:[#allocation2 + $0x40] sm:$0xff] %v2001
      %2130 = vst [vmem:[#allocation2 + $0x48] sm:$0xff] %v2002
      %2131 = vst [vmem:[#allocation2 + $0x50] sm:$0xff] %v2003
      %2132 = vst [vmem:[#allocation2 + $0x58] sm:$0xff] %v2004
      %2133 = vst [vmem:[#allocation2 + $0x60] sm:$0xff] %v2005
      %2134 = vst [vmem:[#allocation2 + $0x68] sm:$0xff] %v2006
      %2135 = vst [vmem:[#allocation2 + $0x70] sm:$0xff] %v2007
      %2136 = vst [vmem:[#allocation2 + $0x78] sm:$0xff] %v2008
      %2137 = vst [vmem:[#allocation2 + $0x80] sm:$0xff] %v2009
      %2138 = vst [vmem:[#allocation2 + $0x88] sm:$0xff] %v2010
      %2139 = vst [vmem:[#allocation2 + $0x90] sm:$0xff] %v2011
      %2140 = vst [vmem:[#allocation2 + $0x98] sm:$0xff] %v2012
      %2141 = vst [vmem:[#allocation2 + $0xa0] sm:$0xff] %v2013
      %2142 = vst [vmem:[#allocation2 + $0xa8] sm:$0xff] %v2014
      %2143 = vst [vmem:[#allocation2 + $0xb0] sm:$0xff] %v2015
      %2144 = vst [vmem:[#allocation2 + $0xb8] sm:$0xff] %v2016
      %2145 = vst [vmem:[#allocation2 + $0xc0] sm:$0xff] %v2017
      %2146 = vst [vmem:[#allocation2 + $0xc8] sm:$0xff] %v2018
      %2147 = vst [vmem:[#allocation2 + $0xd0] sm:$0xff] %v2019
      %2148 = vst [vmem:[#allocation2 + $0xd8] sm:$0xff] %v2020
      %2149 = vst [vmem:[#allocation2 + $0xe0] sm:$0xff] %v2021
      %2150 = vst [vmem:[#allocation2 + $0xe8] sm:$0xff] %v2022
      %2151 = vst [vmem:[#allocation2 + $0xf0] sm:$0xff] %v2023
      %2152 = vst [vmem:[#allocation2 + $0xf8] sm:$0xff] %v2024
      %2153 = vst [vmem:[#allocation2 + $0x100] sm:$0xff] %v2025
      %2154 = vst [vmem:[#allocation2 + $0x108] sm:$0xff] %v2026
      %2155 = vst [vmem:[#allocation2 + $0x110] sm:$0xff] %v2027
      %2156 = vst [vmem:[#allocation2 + $0x118] sm:$0xff] %v2028
      %2157 = vst [vmem:[#allocation2 + $0x120] sm:$0xff] %v2029
      %2158 = vst [vmem:[#allocation2 + $0x128] sm:$0xff] %v2030
      %2159 = vst [vmem:[#allocation2 + $0x130] sm:$0xff] %v2031
      %2160 = vst [vmem:[#allocation2 + $0x138] sm:$0xff] %v2032
      %2161 = vst [vmem:[#allocation2 + $0x140] sm:$0xff] %v2033
      %2162 = vst [vmem:[#allocation2 + $0x148] sm:$0xff] %v2034
      %2163 = vst [vmem:[#allocation2 + $0x150] sm:$0xff] %v2035
      %2164 = vst [vmem:[#allocation2 + $0x158] sm:$0xff] %v2036
      %2165 = vst [vmem:[#allocation2 + $0x160] sm:$0xff] %v2037
      %2166 = vst [vmem:[#allocation2 + $0x168] sm:$0xff] %v2038
      %2167 = vst [vmem:[#allocation2 + $0x170] sm:$0xff] %v2039
      %2168 = vst [vmem:[#allocation2 + $0x178] sm:$0xff] %v2040
      %2169 = vst [vmem:[#allocation2 + $0x180] sm:$0xff] %v2041
      %2170 = vst [vmem:[#allocation2 + $0x188] sm:$0xff] %v2042
      %2171 = vst [vmem:[#allocation2 + $0x190] sm:$0xff] %v2043
      %2172 = vst [vmem:[#allocation2 + $0x198] sm:$0xff] %v2044
      %2173 = vst [vmem:[#allocation2 + $0x1a0] sm:$0xff] %v2045
      %2174 = vst [vmem:[#allocation2 + $0x1a8] sm:$0xff] %v2046
      %2175 = vst [vmem:[#allocation2 + $0x1b0] sm:$0xff] %v2047
      %2176 = vst [vmem:[#allocation2 + $0x1b8] sm:$0xff] %v2048
      %2177 = vst [vmem:[#allocation2 + $0x1c0] sm:$0xff] %v2049
      %2178 = vst [vmem:[#allocation2 + $0x1c8] sm:$0xff] %v2050
      %2179 = vst [vmem:[#allocation2 + $0x1d0] sm:$0xff] %v2051
      %2180 = vst [vmem:[#allocation2 + $0x1d8] sm:$0xff] %v2052
      %2181 = vst [vmem:[#allocation2 + $0x1e0] sm:$0xff] %v2053
      %2182 = vst [vmem:[#allocation2 + $0x1e8] sm:$0xff] %v2054
      %2183 = vst [vmem:[#allocation2 + $0x1f0] sm:$0xff] %v2055
      %2184 = vst [vmem:[#allocation2 + $0x1f8] sm:$0xff] %v2056
      %2185 = vst [vmem:[#allocation2 + $0x200] sm:$0xff] %v2057
      %2186 = vst [vmem:[#allocation2 + $0x208] sm:$0xff] %v2058
      %2187 = vst [vmem:[#allocation2 + $0x210] sm:$0xff] %v2059
      %2188 = vst [vmem:[#allocation2 + $0x218] sm:$0xff] %v2060
      %2189 = vst [vmem:[#allocation2 + $0x220] sm:$0xff] %v2061
      %2190 = vst [vmem:[#allocation2 + $0x228] sm:$0xff] %v2062
      %2191 = vst [vmem:[#allocation2 + $0x230] sm:$0xff] %v2063
      %2192 = vst [vmem:[#allocation2 + $0x238] sm:$0xff] %v2064
      %2193 = vst [vmem:[#allocation2 + $0x240] sm:$0xff] %v2065
      %2194 = vst [vmem:[#allocation2 + $0x248] sm:$0xff] %v2066
      %2195 = vst [vmem:[#allocation2 + $0x250] sm:$0xff] %v2067
      %2196 = vst [vmem:[#allocation2 + $0x258] sm:$0xff] %v2068
      %2197 = vst [vmem:[#allocation2 + $0x260] sm:$0xff] %v2069
      %2198 = vst [vmem:[#allocation2 + $0x268] sm:$0xff] %v2070
      %2199 = vst [vmem:[#allocation2 + $0x270] sm:$0xff] %v2071
      %2200 = vst [vmem:[#allocation2 + $0x278] sm:$0xff] %v2072
      %2201 = vst [vmem:[#allocation2 + $0x280] sm:$0xff] %v2073
      %2202 = vst [vmem:[#allocation2 + $0x288] sm:$0xff] %v2074
      %2203 = vst [vmem:[#allocation2 + $0x290] sm:$0xff] %v2075
      %2204 = vst [vmem:[#allocation2 + $0x298] sm:$0xff] %v2076
      %2205 = vst [vmem:[#allocation2 + $0x2a0] sm:$0xff] %v2077
      %2206 = vst [vmem:[#allocation2 + $0x2a8] sm:$0xff] %v2078
      %2207 = vst [vmem:[#allocation2 + $0x2b0] sm:$0xff] %v2079
      %2208 = vst [vmem:[#allocation2 + $0x2b8] sm:$0xff] %v2080
      %2209 = vst [vmem:[#allocation2 + $0x2c0] sm:$0xff] %v2081
      %2210 = vst [vmem:[#allocation2 + $0x2c8] sm:$0xff] %v2082
      %2211 = vst [vmem:[#allocation2 + $0x2d0] sm:$0xff] %v2083
      %2212 = vst [vmem:[#allocation2 + $0x2d8] sm:$0xff] %v2084
      %2213 = vst [vmem:[#allocation2 + $0x2e0] sm:$0xff] %v2085
      %2214 = vst [vmem:[#allocation2 + $0x2e8] sm:$0xff] %v2086
      %2215 = vst [vmem:[#allocation2 + $0x2f0] sm:$0xff] %v2087
      %2216 = vst [vmem:[#allocation2 + $0x2f8] sm:$0xff] %v2088
      %2217 = vst [vmem:[#allocation2 + $0x300] sm:$0xff] %v2089
      %2218 = vst [vmem:[#allocation2 + $0x308] sm:$0xff] %v2090
      %2219 = vst [vmem:[#allocation2 + $0x310] sm:$0xff] %v2091
      %2220 = vst [vmem:[#allocation2 + $0x318] sm:$0xff] %v2092
      %2221 = vst [vmem:[#allocation2 + $0x320] sm:$0xff] %v2093
      %2222 = vst [vmem:[#allocation2 + $0x328] sm:$0xff] %v2094
      %2223 = vst [vmem:[#allocation2 + $0x330] sm:$0xff] %v2095
      %2224 = vst [vmem:[#allocation2 + $0x338] sm:$0xff] %v2096
      %2225 = vst [vmem:[#allocation2 + $0x340] sm:$0xff] %v2097
      %2226 = vst [vmem:[#allocation2 + $0x348] sm:$0xff] %v2098
      %2227 = vst [vmem:[#allocation2 + $0x350] sm:$0xff] %v2099
      %2228 = vst [vmem:[#allocation2 + $0x358] sm:$0xff] %v2100
      %2229 = vst [vmem:[#allocation2 + $0x360] sm:$0xff] %v2101
      %2230 = vst [vmem:[#allocation2 + $0x368] sm:$0xff] %v2102
      %2231 = vst [vmem:[#allocation2 + $0x370] sm:$0xff] %v2103
      %2232 = vst [vmem:[#allocation2 + $0x378] sm:$0xff] %v2104
      %2233 = vst [vmem:[#allocation2 + $0x380] sm:$0xff] %v2105
      %2234 = vst [vmem:[#allocation2 + $0x388] sm:$0xff] %v2106
      %2235 = vst [vmem:[#allocation2 + $0x390] sm:$0xff] %v2107
      %2236 = vst [vmem:[#allocation2 + $0x398] sm:$0xff] %v2108
      %2237 = vst [vmem:[#allocation2 + $0x3a0] sm:$0xff] %v2109
      %2238 = vst [vmem:[#allocation2 + $0x3a8] sm:$0xff] %v2110
      %2239 = vst [vmem:[#allocation2 + $0x3b0] sm:$0xff] %v2111
      %2240 = vst [vmem:[#allocation2 + $0x3b8] sm:$0xff] %v2112
      %2241 = vst [vmem:[#allocation2 + $0x3c0] sm:$0xff] %v2113
      %2242 = vst [vmem:[#allocation2 + $0x3c8] sm:$0xff] %v2114
      %2243 = vst [vmem:[#allocation2 + $0x3d0] sm:$0xff] %v2115
      %2244 = vst [vmem:[#allocation2 + $0x3d8] sm:$0xff] %v2116
      %2245 = vst [vmem:[#allocation2 + $0x3e0] sm:$0xff] %v2117
      %2246 = vst [vmem:[#allocation2 + $0x3e8] sm:$0xff] %v2118
      %2247 = vst [vmem:[#allocation2 + $0x3f0] sm:$0xff] %v2119
      %2248 = vst [vmem:[#allocation2 + $0x3f8] sm:$0xff] %v2120
      // Predicated region
      $region45: #{ftgan_encoder_atten.7} parent=35 // pred_check
        %p2249 = pneg %p400
      $region46: #{ftgan_encoder_atten.7} parent=35 // pred_check_branch
        %2251 = sbr.rel (%p2249) target = $region48
      $region47: #{ftgan_encoder_atten.7} parent=35 // pred_region
        %v2252 = vld [vmem:[#allocation2] sm:$0xff]
        %v2253 = vld [vmem:[#allocation2 + $0x8] sm:$0xff]
        %v2254 = vld [vmem:[#allocation2 + $0x10] sm:$0xff]
        %v2255 = vld [vmem:[#allocation2 + $0x18] sm:$0xff]
        %v2256 = vld [vmem:[#allocation2 + $0x20] sm:$0xff]
        %v2257 = vld [vmem:[#allocation2 + $0x28] sm:$0xff]
        %v2258 = vld [vmem:[#allocation2 + $0x30] sm:$0xff]
        %v2259 = vld [vmem:[#allocation2 + $0x38] sm:$0xff]
        %v2260 = vld [vmem:[#allocation2 + $0x40] sm:$0xff]
        %v2261 = vld [vmem:[#allocation2 + $0x48] sm:$0xff]
        %v2262 = vld [vmem:[#allocation2 + $0x50] sm:$0xff]
        %v2263 = vld [vmem:[#allocation2 + $0x58] sm:$0xff]
        %v2264 = vld [vmem:[#allocation2 + $0x60] sm:$0xff]
        %v2265 = vld [vmem:[#allocation2 + $0x68] sm:$0xff]
        %v2266 = vld [vmem:[#allocation2 + $0x70] sm:$0xff]
        %v2267 = vld [vmem:[#allocation2 + $0x78] sm:$0xff]
        %v2268 = vld [vmem:[#allocation2 + $0x80] sm:$0xff]
        %v2269 = vld [vmem:[#allocation2 + $0x88] sm:$0xff]
        %v2270 = vld [vmem:[#allocation2 + $0x90] sm:$0xff]
        %v2271 = vld [vmem:[#allocation2 + $0x98] sm:$0xff]
        %v2272 = vld [vmem:[#allocation2 + $0xa0] sm:$0xff]
        %v2273 = vld [vmem:[#allocation2 + $0xa8] sm:$0xff]
        %v2274 = vld [vmem:[#allocation2 + $0xb0] sm:$0xff]
        %v2275 = vld [vmem:[#allocation2 + $0xb8] sm:$0xff]
        %v2276 = vld [vmem:[#allocation2 + $0xc0] sm:$0xff]
        %v2277 = vld [vmem:[#allocation2 + $0xc8] sm:$0xff]
        %v2278 = vld [vmem:[#allocation2 + $0xd0] sm:$0xff]
        %v2279 = vld [vmem:[#allocation2 + $0xd8] sm:$0xff]
        %v2280 = vld [vmem:[#allocation2 + $0xe0] sm:$0xff]
        %v2281 = vld [vmem:[#allocation2 + $0xe8] sm:$0xff]
        %v2282 = vld [vmem:[#allocation2 + $0xf0] sm:$0xff]
        %v2283 = vld [vmem:[#allocation2 + $0xf8] sm:$0xff]
        %v2284 = vld [vmem:[#allocation2 + $0x100] sm:$0xff]
        %v2285 = vld [vmem:[#allocation2 + $0x108] sm:$0xff]
        %v2286 = vld [vmem:[#allocation2 + $0x110] sm:$0xff]
        %v2287 = vld [vmem:[#allocation2 + $0x118] sm:$0xff]
        %v2288 = vld [vmem:[#allocation2 + $0x120] sm:$0xff]
        %v2289 = vld [vmem:[#allocation2 + $0x128] sm:$0xff]
        %v2290 = vld [vmem:[#allocation2 + $0x130] sm:$0xff]
        %v2291 = vld [vmem:[#allocation2 + $0x138] sm:$0xff]
        %v2292 = vld [vmem:[#allocation2 + $0x140] sm:$0xff]
        %v2293 = vld [vmem:[#allocation2 + $0x148] sm:$0xff]
        %v2294 = vld [vmem:[#allocation2 + $0x150] sm:$0xff]
        %v2295 = vld [vmem:[#allocation2 + $0x158] sm:$0xff]
        %v2296 = vld [vmem:[#allocation2 + $0x160] sm:$0xff]
        %v2297 = vld [vmem:[#allocation2 + $0x168] sm:$0xff]
        %v2298 = vld [vmem:[#allocation2 + $0x170] sm:$0xff]
        %v2299 = vld [vmem:[#allocation2 + $0x178] sm:$0xff]
        %v2300 = vld [vmem:[#allocation2 + $0x180] sm:$0xff]
        %v2301 = vld [vmem:[#allocation2 + $0x188] sm:$0xff]
        %v2302 = vld [vmem:[#allocation2 + $0x190] sm:$0xff]
        %v2303 = vld [vmem:[#allocation2 + $0x198] sm:$0xff]
        %v2304 = vld [vmem:[#allocation2 + $0x1a0] sm:$0xff]
        %v2305 = vld [vmem:[#allocation2 + $0x1a8] sm:$0xff]
        %v2306 = vld [vmem:[#allocation2 + $0x1b0] sm:$0xff]
        %v2307 = vld [vmem:[#allocation2 + $0x1b8] sm:$0xff]
        %v2308 = vld [vmem:[#allocation2 + $0x1c0] sm:$0xff]
        %v2309 = vld [vmem:[#allocation2 + $0x1c8] sm:$0xff]
        %v2310 = vld [vmem:[#allocation2 + $0x1d0] sm:$0xff]
        %v2311 = vld [vmem:[#allocation2 + $0x1d8] sm:$0xff]
        %v2312 = vld [vmem:[#allocation2 + $0x1e0] sm:$0xff]
        %v2313 = vld [vmem:[#allocation2 + $0x1e8] sm:$0xff]
        %v2314 = vld [vmem:[#allocation2 + $0x1f0] sm:$0xff]
        %v2315 = vld [vmem:[#allocation2 + $0x1f8] sm:$0xff]
        %v2316 = vld [vmem:[#allocation2 + $0x200] sm:$0xff]
        %v2317 = vld [vmem:[#allocation2 + $0x208] sm:$0xff]
        %v2318 = vld [vmem:[#allocation2 + $0x210] sm:$0xff]
        %v2319 = vld [vmem:[#allocation2 + $0x218] sm:$0xff]
        %v2320 = vld [vmem:[#allocation2 + $0x220] sm:$0xff]
        %v2321 = vld [vmem:[#allocation2 + $0x228] sm:$0xff]
        %v2322 = vld [vmem:[#allocation2 + $0x230] sm:$0xff]
        %v2323 = vld [vmem:[#allocation2 + $0x238] sm:$0xff]
        %v2324 = vld [vmem:[#allocation2 + $0x240] sm:$0xff]
        %v2325 = vld [vmem:[#allocation2 + $0x248] sm:$0xff]
        %v2326 = vld [vmem:[#allocation2 + $0x250] sm:$0xff]
        %v2327 = vld [vmem:[#allocation2 + $0x258] sm:$0xff]
        %v2328 = vld [vmem:[#allocation2 + $0x260] sm:$0xff]
        %v2329 = vld [vmem:[#allocation2 + $0x268] sm:$0xff]
        %v2330 = vld [vmem:[#allocation2 + $0x270] sm:$0xff]
        %v2331 = vld [vmem:[#allocation2 + $0x278] sm:$0xff]
        %v2332 = vld [vmem:[#allocation2 + $0x280] sm:$0xff]
        %v2333 = vld [vmem:[#allocation2 + $0x288] sm:$0xff]
        %v2334 = vld [vmem:[#allocation2 + $0x290] sm:$0xff]
        %v2335 = vld [vmem:[#allocation2 + $0x298] sm:$0xff]
        %v2336 = vld [vmem:[#allocation2 + $0x2a0] sm:$0xff]
        %v2337 = vld [vmem:[#allocation2 + $0x2a8] sm:$0xff]
        %v2338 = vld [vmem:[#allocation2 + $0x2b0] sm:$0xff]
        %v2339 = vld [vmem:[#allocation2 + $0x2b8] sm:$0xff]
        %v2340 = vld [vmem:[#allocation2 + $0x2c0] sm:$0xff]
        %v2341 = vld [vmem:[#allocation2 + $0x2c8] sm:$0xff]
        %v2342 = vld [vmem:[#allocation2 + $0x2d0] sm:$0xff]
        %v2343 = vld [vmem:[#allocation2 + $0x2d8] sm:$0xff]
        %v2344 = vld [vmem:[#allocation2 + $0x2e0] sm:$0xff]
        %v2345 = vld [vmem:[#allocation2 + $0x2e8] sm:$0xff]
        %v2346 = vld [vmem:[#allocation2 + $0x2f0] sm:$0xff]
        %v2347 = vld [vmem:[#allocation2 + $0x2f8] sm:$0xff]
        %v2348 = vld [vmem:[#allocation2 + $0x300] sm:$0xff]
        %v2349 = vld [vmem:[#allocation2 + $0x308] sm:$0xff]
        %v2350 = vld [vmem:[#allocation2 + $0x310] sm:$0xff]
        %v2351 = vld [vmem:[#allocation2 + $0x318] sm:$0xff]
        %v2352 = vld [vmem:[#allocation2 + $0x320] sm:$0xff]
        %v2353 = vld [vmem:[#allocation2 + $0x328] sm:$0xff]
        %v2354 = vld [vmem:[#allocation2 + $0x330] sm:$0xff]
        %v2355 = vld [vmem:[#allocation2 + $0x338] sm:$0xff]
        %v2356 = vld [vmem:[#allocation2 + $0x340] sm:$0xff]
        %v2357 = vld [vmem:[#allocation2 + $0x348] sm:$0xff]
        %v2358 = vld [vmem:[#allocation2 + $0x350] sm:$0xff]
        %v2359 = vld [vmem:[#allocation2 + $0x358] sm:$0xff]
        %v2360 = vld [vmem:[#allocation2 + $0x360] sm:$0xff]
        %v2361 = vld [vmem:[#allocation2 + $0x368] sm:$0xff]
        %v2362 = vld [vmem:[#allocation2 + $0x370] sm:$0xff]
        %v2363 = vld [vmem:[#allocation2 + $0x378] sm:$0xff]
        %v2364 = vld [vmem:[#allocation2 + $0x380] sm:$0xff]
        %v2365 = vld [vmem:[#allocation2 + $0x388] sm:$0xff]
        %v2366 = vld [vmem:[#allocation2 + $0x390] sm:$0xff]
        %v2367 = vld [vmem:[#allocation2 + $0x398] sm:$0xff]
        %v2368 = vld [vmem:[#allocation2 + $0x3a0] sm:$0xff]
        %v2369 = vld [vmem:[#allocation2 + $0x3a8] sm:$0xff]
        %v2370 = vld [vmem:[#allocation2 + $0x3b0] sm:$0xff]
        %v2371 = vld [vmem:[#allocation2 + $0x3b8] sm:$0xff]
        %v2372 = vld [vmem:[#allocation2 + $0x3c0] sm:$0xff]
        %v2373 = vld [vmem:[#allocation2 + $0x3c8] sm:$0xff]
        %v2374 = vld [vmem:[#allocation2 + $0x3d0] sm:$0xff]
        %v2375 = vld [vmem:[#allocation2 + $0x3d8] sm:$0xff]
        %v2376 = vld [vmem:[#allocation2 + $0x3e0] sm:$0xff]
        %v2377 = vld [vmem:[#allocation2 + $0x3e8] sm:$0xff]
        %v2378 = vld [vmem:[#allocation2 + $0x3f0] sm:$0xff]
        %v2379 = vld [vmem:[#allocation2 + $0x3f8] sm:$0xff]
        %v2380 = vpack.c.bf16 %v2253, %v2252
        %v2381 = vpack.c.bf16 %v2255, %v2254
        %v2382 = vpack.c.bf16 %v2257, %v2256
        %v2383 = vpack.c.bf16 %v2259, %v2258
        %v2384 = vpack.c.bf16 %v2261, %v2260
        %v2385 = vpack.c.bf16 %v2263, %v2262
        %v2386 = vpack.c.bf16 %v2265, %v2264
        %v2387 = vpack.c.bf16 %v2267, %v2266
        %v2388 = vpack.c.bf16 %v2269, %v2268
        %v2389 = vpack.c.bf16 %v2271, %v2270
        %v2390 = vpack.c.bf16 %v2273, %v2272
        %v2391 = vpack.c.bf16 %v2275, %v2274
        %v2392 = vpack.c.bf16 %v2277, %v2276
        %v2393 = vpack.c.bf16 %v2279, %v2278
        %v2394 = vpack.c.bf16 %v2281, %v2280
        %v2395 = vpack.c.bf16 %v2283, %v2282
        %v2396 = vpack.c.bf16 %v2285, %v2284
        %v2397 = vpack.c.bf16 %v2287, %v2286
        %v2398 = vpack.c.bf16 %v2289, %v2288
        %v2399 = vpack.c.bf16 %v2291, %v2290
        %v2400 = vpack.c.bf16 %v2293, %v2292
        %v2401 = vpack.c.bf16 %v2295, %v2294
        %v2402 = vpack.c.bf16 %v2297, %v2296
        %v2403 = vpack.c.bf16 %v2299, %v2298
        %v2404 = vpack.c.bf16 %v2301, %v2300
        %v2405 = vpack.c.bf16 %v2303, %v2302
        %v2406 = vpack.c.bf16 %v2305, %v2304
        %v2407 = vpack.c.bf16 %v2307, %v2306
        %v2408 = vpack.c.bf16 %v2309, %v2308
        %v2409 = vpack.c.bf16 %v2311, %v2310
        %v2410 = vpack.c.bf16 %v2313, %v2312
        %v2411 = vpack.c.bf16 %v2315, %v2314
        %v2412 = vpack.c.bf16 %v2317, %v2316
        %v2413 = vpack.c.bf16 %v2319, %v2318
        %v2414 = vpack.c.bf16 %v2321, %v2320
        %v2415 = vpack.c.bf16 %v2323, %v2322
        %v2416 = vpack.c.bf16 %v2325, %v2324
        %v2417 = vpack.c.bf16 %v2327, %v2326
        %v2418 = vpack.c.bf16 %v2329, %v2328
        %v2419 = vpack.c.bf16 %v2331, %v2330
        %v2420 = vpack.c.bf16 %v2333, %v2332
        %v2421 = vpack.c.bf16 %v2335, %v2334
        %v2422 = vpack.c.bf16 %v2337, %v2336
        %v2423 = vpack.c.bf16 %v2339, %v2338
        %v2424 = vpack.c.bf16 %v2341, %v2340
        %v2425 = vpack.c.bf16 %v2343, %v2342
        %v2426 = vpack.c.bf16 %v2345, %v2344
        %v2427 = vpack.c.bf16 %v2347, %v2346
        %v2428 = vpack.c.bf16 %v2349, %v2348
        %v2429 = vpack.c.bf16 %v2351, %v2350
        %v2430 = vpack.c.bf16 %v2353, %v2352
        %v2431 = vpack.c.bf16 %v2355, %v2354
        %v2432 = vpack.c.bf16 %v2357, %v2356
        %v2433 = vpack.c.bf16 %v2359, %v2358
        %v2434 = vpack.c.bf16 %v2361, %v2360
        %v2435 = vpack.c.bf16 %v2363, %v2362
        %v2436 = vpack.c.bf16 %v2365, %v2364
        %v2437 = vpack.c.bf16 %v2367, %v2366
        %v2438 = vpack.c.bf16 %v2369, %v2368
        %v2439 = vpack.c.bf16 %v2371, %v2370
        %v2440 = vpack.c.bf16 %v2373, %v2372
        %v2441 = vpack.c.bf16 %v2375, %v2374
        %v2442 = vpack.c.bf16 %v2377, %v2376
        %v2443 = vpack.c.bf16 %v2379, %v2378
        %v2508 = vunpack.c.l.b16 %v2380
        %v2509 = vunpack.c.h.b16 %v2380
        %v2510 = vunpack.c.l.b16 %v2381
        %v2511 = vunpack.c.h.b16 %v2381
        %v2512 = vunpack.c.l.b16 %v2382
        %v2513 = vunpack.c.h.b16 %v2382
        %v2514 = vunpack.c.l.b16 %v2383
        %v2515 = vunpack.c.h.b16 %v2383
        %v2516 = vunpack.c.l.b16 %v2384
        %v2517 = vunpack.c.h.b16 %v2384
        %v2518 = vunpack.c.l.b16 %v2385
        %v2519 = vunpack.c.h.b16 %v2385
        %v2520 = vunpack.c.l.b16 %v2386
        %v2521 = vunpack.c.h.b16 %v2386
        %v2522 = vunpack.c.l.b16 %v2387
        %v2523 = vunpack.c.h.b16 %v2387
        %v2524 = vunpack.c.l.b16 %v2388
        %v2525 = vunpack.c.h.b16 %v2388
        %v2526 = vunpack.c.l.b16 %v2389
        %v2527 = vunpack.c.h.b16 %v2389
        %v2528 = vunpack.c.l.b16 %v2390
        %v2529 = vunpack.c.h.b16 %v2390
        %v2530 = vunpack.c.l.b16 %v2391
        %v2531 = vunpack.c.h.b16 %v2391
        %v2532 = vunpack.c.l.b16 %v2392
        %v2533 = vunpack.c.h.b16 %v2392
        %v2534 = vunpack.c.l.b16 %v2393
        %v2535 = vunpack.c.h.b16 %v2393
        %v2536 = vunpack.c.l.b16 %v2394
        %v2537 = vunpack.c.h.b16 %v2394
        %v2538 = vunpack.c.l.b16 %v2395
        %v2539 = vunpack.c.h.b16 %v2395
        %v2540 = vunpack.c.l.b16 %v2396
        %v2541 = vunpack.c.h.b16 %v2396
        %v2542 = vunpack.c.l.b16 %v2397
        %v2543 = vunpack.c.h.b16 %v2397
        %v2544 = vunpack.c.l.b16 %v2398
        %v2545 = vunpack.c.h.b16 %v2398
        %v2546 = vunpack.c.l.b16 %v2399
        %v2547 = vunpack.c.h.b16 %v2399
        %v2548 = vunpack.c.l.b16 %v2400
        %v2549 = vunpack.c.h.b16 %v2400
        %v2550 = vunpack.c.l.b16 %v2401
        %v2551 = vunpack.c.h.b16 %v2401
        %v2552 = vunpack.c.l.b16 %v2402
        %v2553 = vunpack.c.h.b16 %v2402
        %v2554 = vunpack.c.l.b16 %v2403
        %v2555 = vunpack.c.h.b16 %v2403
        %v2556 = vunpack.c.l.b16 %v2404
        %v2557 = vunpack.c.h.b16 %v2404
        %v2558 = vunpack.c.l.b16 %v2405
        %v2559 = vunpack.c.h.b16 %v2405
        %v2560 = vunpack.c.l.b16 %v2406
        %v2561 = vunpack.c.h.b16 %v2406
        %v2562 = vunpack.c.l.b16 %v2407
        %v2563 = vunpack.c.h.b16 %v2407
        %v2564 = vunpack.c.l.b16 %v2408
        %v2565 = vunpack.c.h.b16 %v2408
        %v2566 = vunpack.c.l.b16 %v2409
        %v2567 = vunpack.c.h.b16 %v2409
        %v2568 = vunpack.c.l.b16 %v2410
        %v2569 = vunpack.c.h.b16 %v2410
        %v2570 = vunpack.c.l.b16 %v2411
        %v2571 = vunpack.c.h.b16 %v2411
        %v2572 = vunpack.c.l.b16 %v2412
        %v2573 = vunpack.c.h.b16 %v2412
        %v2574 = vunpack.c.l.b16 %v2413
        %v2575 = vunpack.c.h.b16 %v2413
        %v2576 = vunpack.c.l.b16 %v2414
        %v2577 = vunpack.c.h.b16 %v2414
        %v2578 = vunpack.c.l.b16 %v2415
        %v2579 = vunpack.c.h.b16 %v2415
        %v2580 = vunpack.c.l.b16 %v2416
        %v2581 = vunpack.c.h.b16 %v2416
        %v2582 = vunpack.c.l.b16 %v2417
        %v2583 = vunpack.c.h.b16 %v2417
        %v2584 = vunpack.c.l.b16 %v2418
        %v2585 = vunpack.c.h.b16 %v2418
        %v2586 = vunpack.c.l.b16 %v2419
        %v2587 = vunpack.c.h.b16 %v2419
        %v2588 = vunpack.c.l.b16 %v2420
        %v2589 = vunpack.c.h.b16 %v2420
        %v2590 = vunpack.c.l.b16 %v2421
        %v2591 = vunpack.c.h.b16 %v2421
        %v2592 = vunpack.c.l.b16 %v2422
        %v2593 = vunpack.c.h.b16 %v2422
        %v2594 = vunpack.c.l.b16 %v2423
        %v2595 = vunpack.c.h.b16 %v2423
        %v2596 = vunpack.c.l.b16 %v2424
        %v2597 = vunpack.c.h.b16 %v2424
        %v2598 = vunpack.c.l.b16 %v2425
        %v2599 = vunpack.c.h.b16 %v2425
        %v2600 = vunpack.c.l.b16 %v2426
        %v2601 = vunpack.c.h.b16 %v2426
        %v2602 = vunpack.c.l.b16 %v2427
        %v2603 = vunpack.c.h.b16 %v2427
        %v2604 = vunpack.c.l.b16 %v2428
        %v2605 = vunpack.c.h.b16 %v2428
        %v2606 = vunpack.c.l.b16 %v2429
        %v2607 = vunpack.c.h.b16 %v2429
        %v2608 = vunpack.c.l.b16 %v2430
        %v2609 = vunpack.c.h.b16 %v2430
        %v2610 = vunpack.c.l.b16 %v2431
        %v2611 = vunpack.c.h.b16 %v2431
        %v2612 = vunpack.c.l.b16 %v2432
        %v2613 = vunpack.c.h.b16 %v2432
        %v2614 = vunpack.c.l.b16 %v2433
        %v2615 = vunpack.c.h.b16 %v2433
        %v2616 = vunpack.c.l.b16 %v2434
        %v2617 = vunpack.c.h.b16 %v2434
        %v2618 = vunpack.c.l.b16 %v2435
        %v2619 = vunpack.c.h.b16 %v2435
        %v2620 = vunpack.c.l.b16 %v2436
        %v2621 = vunpack.c.h.b16 %v2436
        %v2622 = vunpack.c.l.b16 %v2437
        %v2623 = vunpack.c.h.b16 %v2437
        %v2624 = vunpack.c.l.b16 %v2438
        %v2625 = vunpack.c.h.b16 %v2438
        %v2626 = vunpack.c.l.b16 %v2439
        %v2627 = vunpack.c.h.b16 %v2439
        %v2628 = vunpack.c.l.b16 %v2440
        %v2629 = vunpack.c.h.b16 %v2440
        %v2630 = vunpack.c.l.b16 %v2441
        %v2631 = vunpack.c.h.b16 %v2441
        %v2632 = vunpack.c.l.b16 %v2442
        %v2633 = vunpack.c.h.b16 %v2442
        %v2634 = vunpack.c.l.b16 %v2443
        %v2635 = vunpack.c.h.b16 %v2443
        %v2636 = vpack.c.b16 %v2508, %v2508
        %v2637 = vpack.c.b16 %v2509, %v2509
        %v2638 = vpack.c.b16 %v2510, %v2510
        %v2639 = vpack.c.b16 %v2511, %v2511
        %v2640 = vpack.c.b16 %v2512, %v2512
        %v2641 = vpack.c.b16 %v2513, %v2513
        %v2642 = vpack.c.b16 %v2514, %v2514
        %v2643 = vpack.c.b16 %v2515, %v2515
        %v2644 = vpack.c.b16 %v2516, %v2516
        %v2645 = vpack.c.b16 %v2517, %v2517
        %v2646 = vpack.c.b16 %v2518, %v2518
        %v2647 = vpack.c.b16 %v2519, %v2519
        %v2648 = vpack.c.b16 %v2520, %v2520
        %v2649 = vpack.c.b16 %v2521, %v2521
        %v2650 = vpack.c.b16 %v2522, %v2522
        %v2651 = vpack.c.b16 %v2523, %v2523
        %v2652 = vpack.c.b16 %v2524, %v2524
        %v2653 = vpack.c.b16 %v2525, %v2525
        %v2654 = vpack.c.b16 %v2526, %v2526
        %v2655 = vpack.c.b16 %v2527, %v2527
        %v2656 = vpack.c.b16 %v2528, %v2528
        %v2657 = vpack.c.b16 %v2529, %v2529
        %v2658 = vpack.c.b16 %v2530, %v2530
        %v2659 = vpack.c.b16 %v2531, %v2531
        %v2660 = vpack.c.b16 %v2532, %v2532
        %v2661 = vpack.c.b16 %v2533, %v2533
        %v2662 = vpack.c.b16 %v2534, %v2534
        %v2663 = vpack.c.b16 %v2535, %v2535
        %v2664 = vpack.c.b16 %v2536, %v2536
        %v2665 = vpack.c.b16 %v2537, %v2537
        %v2666 = vpack.c.b16 %v2538, %v2538
        %v2667 = vpack.c.b16 %v2539, %v2539
        %v2668 = vpack.c.b16 %v2540, %v2540
        %v2669 = vpack.c.b16 %v2541, %v2541
        %v2670 = vpack.c.b16 %v2542, %v2542
        %v2671 = vpack.c.b16 %v2543, %v2543
        %v2672 = vpack.c.b16 %v2544, %v2544
        %v2673 = vpack.c.b16 %v2545, %v2545
        %v2674 = vpack.c.b16 %v2546, %v2546
        %v2675 = vpack.c.b16 %v2547, %v2547
        %v2676 = vpack.c.b16 %v2548, %v2548
        %v2677 = vpack.c.b16 %v2549, %v2549
        %v2678 = vpack.c.b16 %v2550, %v2550
        %v2679 = vpack.c.b16 %v2551, %v2551
        %v2680 = vpack.c.b16 %v2552, %v2552
        %v2681 = vpack.c.b16 %v2553, %v2553
        %v2682 = vpack.c.b16 %v2554, %v2554
        %v2683 = vpack.c.b16 %v2555, %v2555
        %v2684 = vpack.c.b16 %v2556, %v2556
        %v2685 = vpack.c.b16 %v2557, %v2557
        %v2686 = vpack.c.b16 %v2558, %v2558
        %v2687 = vpack.c.b16 %v2559, %v2559
        %v2688 = vpack.c.b16 %v2560, %v2560
        %v2689 = vpack.c.b16 %v2561, %v2561
        %v2690 = vpack.c.b16 %v2562, %v2562
        %v2691 = vpack.c.b16 %v2563, %v2563
        %v2692 = vpack.c.b16 %v2564, %v2564
        %v2693 = vpack.c.b16 %v2565, %v2565
        %v2694 = vpack.c.b16 %v2566, %v2566
        %v2695 = vpack.c.b16 %v2567, %v2567
        %v2696 = vpack.c.b16 %v2568, %v2568
        %v2697 = vpack.c.b16 %v2569, %v2569
        %v2698 = vpack.c.b16 %v2570, %v2570
        %v2699 = vpack.c.b16 %v2571, %v2571
        %v2700 = vpack.c.b16 %v2572, %v2572
        %v2701 = vpack.c.b16 %v2573, %v2573
        %v2702 = vpack.c.b16 %v2574, %v2574
        %v2703 = vpack.c.b16 %v2575, %v2575
        %v2704 = vpack.c.b16 %v2576, %v2576
        %v2705 = vpack.c.b16 %v2577, %v2577
        %v2706 = vpack.c.b16 %v2578, %v2578
        %v2707 = vpack.c.b16 %v2579, %v2579
        %v2708 = vpack.c.b16 %v2580, %v2580
        %v2709 = vpack.c.b16 %v2581, %v2581
        %v2710 = vpack.c.b16 %v2582, %v2582
        %v2711 = vpack.c.b16 %v2583, %v2583
        %v2712 = vpack.c.b16 %v2584, %v2584
        %v2713 = vpack.c.b16 %v2585, %v2585
        %v2714 = vpack.c.b16 %v2586, %v2586
        %v2715 = vpack.c.b16 %v2587, %v2587
        %v2716 = vpack.c.b16 %v2588, %v2588
        %v2717 = vpack.c.b16 %v2589, %v2589
        %v2718 = vpack.c.b16 %v2590, %v2590
        %v2719 = vpack.c.b16 %v2591, %v2591
        %v2720 = vpack.c.b16 %v2592, %v2592
        %v2721 = vpack.c.b16 %v2593, %v2593
        %v2722 = vpack.c.b16 %v2594, %v2594
        %v2723 = vpack.c.b16 %v2595, %v2595
        %v2724 = vpack.c.b16 %v2596, %v2596
        %v2725 = vpack.c.b16 %v2597, %v2597
        %v2726 = vpack.c.b16 %v2598, %v2598
        %v2727 = vpack.c.b16 %v2599, %v2599
        %v2728 = vpack.c.b16 %v2600, %v2600
        %v2729 = vpack.c.b16 %v2601, %v2601
        %v2730 = vpack.c.b16 %v2602, %v2602
        %v2731 = vpack.c.b16 %v2603, %v2603
        %v2732 = vpack.c.b16 %v2604, %v2604
        %v2733 = vpack.c.b16 %v2605, %v2605
        %v2734 = vpack.c.b16 %v2606, %v2606
        %v2735 = vpack.c.b16 %v2607, %v2607
        %v2736 = vpack.c.b16 %v2608, %v2608
        %v2737 = vpack.c.b16 %v2609, %v2609
        %v2738 = vpack.c.b16 %v2610, %v2610
        %v2739 = vpack.c.b16 %v2611, %v2611
        %v2740 = vpack.c.b16 %v2612, %v2612
        %v2741 = vpack.c.b16 %v2613, %v2613
        %v2742 = vpack.c.b16 %v2614, %v2614
        %v2743 = vpack.c.b16 %v2615, %v2615
        %v2744 = vpack.c.b16 %v2616, %v2616
        %v2745 = vpack.c.b16 %v2617, %v2617
        %v2746 = vpack.c.b16 %v2618, %v2618
        %v2747 = vpack.c.b16 %v2619, %v2619
        %v2748 = vpack.c.b16 %v2620, %v2620
        %v2749 = vpack.c.b16 %v2621, %v2621
        %v2750 = vpack.c.b16 %v2622, %v2622
        %v2751 = vpack.c.b16 %v2623, %v2623
        %v2752 = vpack.c.b16 %v2624, %v2624
        %v2753 = vpack.c.b16 %v2625, %v2625
        %v2754 = vpack.c.b16 %v2626, %v2626
        %v2755 = vpack.c.b16 %v2627, %v2627
        %v2756 = vpack.c.b16 %v2628, %v2628
        %v2757 = vpack.c.b16 %v2629, %v2629
        %v2758 = vpack.c.b16 %v2630, %v2630
        %v2759 = vpack.c.b16 %v2631, %v2631
        %v2760 = vpack.c.b16 %v2632, %v2632
        %v2761 = vpack.c.b16 %v2633, %v2633
        %v2762 = vpack.c.b16 %v2634, %v2634
        %v2763 = vpack.c.b16 %v2635, %v2635
        %2892 = vst [vmem:[%s390] sm:$0xf] %v2636
        %2893 = vst [vmem:[%s390 + $0x4] sm:$0xf] %v2637
        %2894 = vst [vmem:[%s390 + $0x8] sm:$0xf] %v2638
        %2895 = vst [vmem:[%s390 + $0xc] sm:$0xf] %v2639
        %2896 = vst [vmem:[%s390 + $0x10] sm:$0xf] %v2640
        %2897 = vst [vmem:[%s390 + $0x14] sm:$0xf] %v2641
        %2898 = vst [vmem:[%s390 + $0x18] sm:$0xf] %v2642
        %2899 = vst [vmem:[%s390 + $0x1c] sm:$0xf] %v2643
        %2900 = vst [vmem:[%s390 + $0x20] sm:$0xf] %v2644
        %2901 = vst [vmem:[%s390 + $0x24] sm:$0xf] %v2645
        %2902 = vst [vmem:[%s390 + $0x28] sm:$0xf] %v2646
        %2903 = vst [vmem:[%s390 + $0x2c] sm:$0xf] %v2647
        %2904 = vst [vmem:[%s390 + $0x30] sm:$0xf] %v2648
        %2905 = vst [vmem:[%s390 + $0x34] sm:$0xf] %v2649
        %2906 = vst [vmem:[%s390 + $0x38] sm:$0xf] %v2650
        %2907 = vst [vmem:[%s390 + $0x3c] sm:$0xf] %v2651
        %2908 = vst [vmem:[%s390 + $0x40] sm:$0xf] %v2652
        %2909 = vst [vmem:[%s390 + $0x44] sm:$0xf] %v2653
        %2910 = vst [vmem:[%s390 + $0x48] sm:$0xf] %v2654
        %2911 = vst [vmem:[%s390 + $0x4c] sm:$0xf] %v2655
        %2912 = vst [vmem:[%s390 + $0x50] sm:$0xf] %v2656
        %2913 = vst [vmem:[%s390 + $0x54] sm:$0xf] %v2657
        %2914 = vst [vmem:[%s390 + $0x58] sm:$0xf] %v2658
        %2915 = vst [vmem:[%s390 + $0x5c] sm:$0xf] %v2659
        %2916 = vst [vmem:[%s390 + $0x60] sm:$0xf] %v2660
        %2917 = vst [vmem:[%s390 + $0x64] sm:$0xf] %v2661
        %2918 = vst [vmem:[%s390 + $0x68] sm:$0xf] %v2662
        %2919 = vst [vmem:[%s390 + $0x6c] sm:$0xf] %v2663
        %2920 = vst [vmem:[%s390 + $0x70] sm:$0xf] %v2664
        %2921 = vst [vmem:[%s390 + $0x74] sm:$0xf] %v2665
        %2922 = vst [vmem:[%s390 + $0x78] sm:$0xf] %v2666
        %2923 = vst [vmem:[%s390 + $0x7c] sm:$0xf] %v2667
        %2924 = vst [vmem:[%s390 + $0x80] sm:$0xf] %v2668
        %2925 = vst [vmem:[%s390 + $0x84] sm:$0xf] %v2669
        %2926 = vst [vmem:[%s390 + $0x88] sm:$0xf] %v2670
        %2927 = vst [vmem:[%s390 + $0x8c] sm:$0xf] %v2671
        %2928 = vst [vmem:[%s390 + $0x90] sm:$0xf] %v2672
        %2929 = vst [vmem:[%s390 + $0x94] sm:$0xf] %v2673
        %2930 = vst [vmem:[%s390 + $0x98] sm:$0xf] %v2674
        %2931 = vst [vmem:[%s390 + $0x9c] sm:$0xf] %v2675
        %2932 = vst [vmem:[%s390 + $0xa0] sm:$0xf] %v2676
        %2933 = vst [vmem:[%s390 + $0xa4] sm:$0xf] %v2677
        %2934 = vst [vmem:[%s390 + $0xa8] sm:$0xf] %v2678
        %2935 = vst [vmem:[%s390 + $0xac] sm:$0xf] %v2679
        %2936 = vst [vmem:[%s390 + $0xb0] sm:$0xf] %v2680
        %2937 = vst [vmem:[%s390 + $0xb4] sm:$0xf] %v2681
        %2938 = vst [vmem:[%s390 + $0xb8] sm:$0xf] %v2682
        %2939 = vst [vmem:[%s390 + $0xbc] sm:$0xf] %v2683
        %2940 = vst [vmem:[%s390 + $0xc0] sm:$0xf] %v2684
        %2941 = vst [vmem:[%s390 + $0xc4] sm:$0xf] %v2685
        %2942 = vst [vmem:[%s390 + $0xc8] sm:$0xf] %v2686
        %2943 = vst [vmem:[%s390 + $0xcc] sm:$0xf] %v2687
        %2944 = vst [vmem:[%s390 + $0xd0] sm:$0xf] %v2688
        %2945 = vst [vmem:[%s390 + $0xd4] sm:$0xf] %v2689
        %2946 = vst [vmem:[%s390 + $0xd8] sm:$0xf] %v2690
        %2947 = vst [vmem:[%s390 + $0xdc] sm:$0xf] %v2691
        %2948 = vst [vmem:[%s390 + $0xe0] sm:$0xf] %v2692
        %2949 = vst [vmem:[%s390 + $0xe4] sm:$0xf] %v2693
        %2950 = vst [vmem:[%s390 + $0xe8] sm:$0xf] %v2694
        %2951 = vst [vmem:[%s390 + $0xec] sm:$0xf] %v2695
        %2952 = vst [vmem:[%s390 + $0xf0] sm:$0xf] %v2696
        %2953 = vst [vmem:[%s390 + $0xf4] sm:$0xf] %v2697
        %2954 = vst [vmem:[%s390 + $0xf8] sm:$0xf] %v2698
        %2955 = vst [vmem:[%s390 + $0xfc] sm:$0xf] %v2699
        %2956 = vst [vmem:[%s390 + $0x100] sm:$0xf] %v2700
        %2957 = vst [vmem:[%s390 + $0x104] sm:$0xf] %v2701
        %2958 = vst [vmem:[%s390 + $0x108] sm:$0xf] %v2702
        %2959 = vst [vmem:[%s390 + $0x10c] sm:$0xf] %v2703
        %2960 = vst [vmem:[%s390 + $0x110] sm:$0xf] %v2704
        %2961 = vst [vmem:[%s390 + $0x114] sm:$0xf] %v2705
        %2962 = vst [vmem:[%s390 + $0x118] sm:$0xf] %v2706
        %2963 = vst [vmem:[%s390 + $0x11c] sm:$0xf] %v2707
        %2964 = vst [vmem:[%s390 + $0x120] sm:$0xf] %v2708
        %2965 = vst [vmem:[%s390 + $0x124] sm:$0xf] %v2709
        %2966 = vst [vmem:[%s390 + $0x128] sm:$0xf] %v2710
        %2967 = vst [vmem:[%s390 + $0x12c] sm:$0xf] %v2711
        %2968 = vst [vmem:[%s390 + $0x130] sm:$0xf] %v2712
        %2969 = vst [vmem:[%s390 + $0x134] sm:$0xf] %v2713
        %2970 = vst [vmem:[%s390 + $0x138] sm:$0xf] %v2714
        %2971 = vst [vmem:[%s390 + $0x13c] sm:$0xf] %v2715
        %2972 = vst [vmem:[%s390 + $0x140] sm:$0xf] %v2716
        %2973 = vst [vmem:[%s390 + $0x144] sm:$0xf] %v2717
        %2974 = vst [vmem:[%s390 + $0x148] sm:$0xf] %v2718
        %2975 = vst [vmem:[%s390 + $0x14c] sm:$0xf] %v2719
        %2976 = vst [vmem:[%s390 + $0x150] sm:$0xf] %v2720
        %2977 = vst [vmem:[%s390 + $0x154] sm:$0xf] %v2721
        %2978 = vst [vmem:[%s390 + $0x158] sm:$0xf] %v2722
        %2979 = vst [vmem:[%s390 + $0x15c] sm:$0xf] %v2723
        %2980 = vst [vmem:[%s390 + $0x160] sm:$0xf] %v2724
        %2981 = vst [vmem:[%s390 + $0x164] sm:$0xf] %v2725
        %2982 = vst [vmem:[%s390 + $0x168] sm:$0xf] %v2726
        %2983 = vst [vmem:[%s390 + $0x16c] sm:$0xf] %v2727
        %2984 = vst [vmem:[%s390 + $0x170] sm:$0xf] %v2728
        %2985 = vst [vmem:[%s390 + $0x174] sm:$0xf] %v2729
        %2986 = vst [vmem:[%s390 + $0x178] sm:$0xf] %v2730
        %2987 = vst [vmem:[%s390 + $0x17c] sm:$0xf] %v2731
        %2988 = vst [vmem:[%s390 + $0x180] sm:$0xf] %v2732
        %2989 = vst [vmem:[%s390 + $0x184] sm:$0xf] %v2733
        %2990 = vst [vmem:[%s390 + $0x188] sm:$0xf] %v2734
        %2991 = vst [vmem:[%s390 + $0x18c] sm:$0xf] %v2735
        %2992 = vst [vmem:[%s390 + $0x190] sm:$0xf] %v2736
        %2993 = vst [vmem:[%s390 + $0x194] sm:$0xf] %v2737
        %2994 = vst [vmem:[%s390 + $0x198] sm:$0xf] %v2738
        %2995 = vst [vmem:[%s390 + $0x19c] sm:$0xf] %v2739
        %2996 = vst [vmem:[%s390 + $0x1a0] sm:$0xf] %v2740
        %2997 = vst [vmem:[%s390 + $0x1a4] sm:$0xf] %v2741
        %2998 = vst [vmem:[%s390 + $0x1a8] sm:$0xf] %v2742
        %2999 = vst [vmem:[%s390 + $0x1ac] sm:$0xf] %v2743
        %3000 = vst [vmem:[%s390 + $0x1b0] sm:$0xf] %v2744
        %3001 = vst [vmem:[%s390 + $0x1b4] sm:$0xf] %v2745
        %3002 = vst [vmem:[%s390 + $0x1b8] sm:$0xf] %v2746
        %3003 = vst [vmem:[%s390 + $0x1bc] sm:$0xf] %v2747
        %3004 = vst [vmem:[%s390 + $0x1c0] sm:$0xf] %v2748
        %3005 = vst [vmem:[%s390 + $0x1c4] sm:$0xf] %v2749
        %3006 = vst [vmem:[%s390 + $0x1c8] sm:$0xf] %v2750
        %3007 = vst [vmem:[%s390 + $0x1cc] sm:$0xf] %v2751
        %3008 = vst [vmem:[%s390 + $0x1d0] sm:$0xf] %v2752
        %3009 = vst [vmem:[%s390 + $0x1d4] sm:$0xf] %v2753
        %3010 = vst [vmem:[%s390 + $0x1d8] sm:$0xf] %v2754
        %3011 = vst [vmem:[%s390 + $0x1dc] sm:$0xf] %v2755
        %3012 = vst [vmem:[%s390 + $0x1e0] sm:$0xf] %v2756
        %3013 = vst [vmem:[%s390 + $0x1e4] sm:$0xf] %v2757
        %3014 = vst [vmem:[%s390 + $0x1e8] sm:$0xf] %v2758
        %3015 = vst [vmem:[%s390 + $0x1ec] sm:$0xf] %v2759
        %3016 = vst [vmem:[%s390 + $0x1f0] sm:$0xf] %v2760
        %3017 = vst [vmem:[%s390 + $0x1f4] sm:$0xf] %v2761
        %3018 = vst [vmem:[%s390 + $0x1f8] sm:$0xf] %v2762
        %3019 = vst [vmem:[%s390 + $0x1fc] sm:$0xf] %v2763
        %v3020 = vld [vmem:[%s398] sm:$0x1]
        %v3021 = vadd.f32 %v2252, %v2253
        %v3022 = vadd.f32 %v3021, %v2254
        %v3023 = vadd.f32 %v3022, %v2255
        %v3024 = vadd.f32 %v3023, %v2256
        %v3025 = vadd.f32 %v3024, %v2257
        %v3026 = vadd.f32 %v3025, %v2258
        %v3027 = vadd.f32 %v3026, %v2259
        %v3028 = vadd.f32 %v3027, %v2260
        %v3029 = vadd.f32 %v3028, %v2261
        %v3030 = vadd.f32 %v3029, %v2262
        %v3031 = vadd.f32 %v3030, %v2263
        %v3032 = vadd.f32 %v3031, %v2264
        %v3033 = vadd.f32 %v3032, %v2265
        %v3034 = vadd.f32 %v3033, %v2266
        %v3035 = vadd.f32 %v3034, %v2267
        %v3036 = vadd.f32 %v3035, %v2268
        %v3037 = vadd.f32 %v3036, %v2269
        %v3038 = vadd.f32 %v3037, %v2270
        %v3039 = vadd.f32 %v3038, %v2271
        %v3040 = vadd.f32 %v3039, %v2272
        %v3041 = vadd.f32 %v3040, %v2273
        %v3042 = vadd.f32 %v3041, %v2274
        %v3043 = vadd.f32 %v3042, %v2275
        %v3044 = vadd.f32 %v3043, %v2276
        %v3045 = vadd.f32 %v3044, %v2277
        %v3046 = vadd.f32 %v3045, %v2278
        %v3047 = vadd.f32 %v3046, %v2279
        %v3048 = vadd.f32 %v3047, %v2280
        %v3049 = vadd.f32 %v3048, %v2281
        %v3050 = vadd.f32 %v3049, %v2282
        %v3051 = vadd.f32 %v3050, %v2283
        %v3052 = vadd.f32 %v3051, %v2284
        %v3053 = vadd.f32 %v3052, %v2285
        %v3054 = vadd.f32 %v3053, %v2286
        %v3055 = vadd.f32 %v3054, %v2287
        %v3056 = vadd.f32 %v3055, %v2288
        %v3057 = vadd.f32 %v3056, %v2289
        %v3058 = vadd.f32 %v3057, %v2290
        %v3059 = vadd.f32 %v3058, %v2291
        %v3060 = vadd.f32 %v3059, %v2292
        %v3061 = vadd.f32 %v3060, %v2293
        %v3062 = vadd.f32 %v3061, %v2294
        %v3063 = vadd.f32 %v3062, %v2295
        %v3064 = vadd.f32 %v3063, %v2296
        %v3065 = vadd.f32 %v3064, %v2297
        %v3066 = vadd.f32 %v3065, %v2298
        %v3067 = vadd.f32 %v3066, %v2299
        %v3068 = vadd.f32 %v3067, %v2300
        %v3069 = vadd.f32 %v3068, %v2301
        %v3070 = vadd.f32 %v3069, %v2302
        %v3071 = vadd.f32 %v3070, %v2303
        %v3072 = vadd.f32 %v3071, %v2304
        %v3073 = vadd.f32 %v3072, %v2305
        %v3074 = vadd.f32 %v3073, %v2306
        %v3075 = vadd.f32 %v3074, %v2307
        %v3076 = vadd.f32 %v3075, %v2308
        %v3077 = vadd.f32 %v3076, %v2309
        %v3078 = vadd.f32 %v3077, %v2310
        %v3079 = vadd.f32 %v3078, %v2311
        %v3080 = vadd.f32 %v3079, %v2312
        %v3081 = vadd.f32 %v3080, %v2313
        %v3082 = vadd.f32 %v3081, %v2314
        %v3083 = vadd.f32 %v3082, %v2315
        %v3084 = vadd.f32 %v3083, %v2316
        %v3085 = vadd.f32 %v3084, %v2317
        %v3086 = vadd.f32 %v3085, %v2318
        %v3087 = vadd.f32 %v3086, %v2319
        %v3088 = vadd.f32 %v3087, %v2320
        %v3089 = vadd.f32 %v3088, %v2321
        %v3090 = vadd.f32 %v3089, %v2322
        %v3091 = vadd.f32 %v3090, %v2323
        %v3092 = vadd.f32 %v3091, %v2324
        %v3093 = vadd.f32 %v3092, %v2325
        %v3094 = vadd.f32 %v3093, %v2326
        %v3095 = vadd.f32 %v3094, %v2327
        %v3096 = vadd.f32 %v3095, %v2328
        %v3097 = vadd.f32 %v3096, %v2329
        %v3098 = vadd.f32 %v3097, %v2330
        %v3099 = vadd.f32 %v3098, %v2331
        %v3100 = vadd.f32 %v3099, %v2332
        %v3101 = vadd.f32 %v3100, %v2333
        %v3102 = vadd.f32 %v3101, %v2334
        %v3103 = vadd.f32 %v3102, %v2335
        %v3104 = vadd.f32 %v3103, %v2336
        %v3105 = vadd.f32 %v3104, %v2337
        %v3106 = vadd.f32 %v3105, %v2338
        %v3107 = vadd.f32 %v3106, %v2339
        %v3108 = vadd.f32 %v3107, %v2340
        %v3109 = vadd.f32 %v3108, %v2341
        %v3110 = vadd.f32 %v3109, %v2342
        %v3111 = vadd.f32 %v3110, %v2343
        %v3112 = vadd.f32 %v3111, %v2344
        %v3113 = vadd.f32 %v3112, %v2345
        %v3114 = vadd.f32 %v3113, %v2346
        %v3115 = vadd.f32 %v3114, %v2347
        %v3116 = vadd.f32 %v3115, %v2348
        %v3117 = vadd.f32 %v3116, %v2349
        %v3118 = vadd.f32 %v3117, %v2350
        %v3119 = vadd.f32 %v3118, %v2351
        %v3120 = vadd.f32 %v3119, %v2352
        %v3121 = vadd.f32 %v3120, %v2353
        %v3122 = vadd.f32 %v3121, %v2354
        %v3123 = vadd.f32 %v3122, %v2355
        %v3124 = vadd.f32 %v3123, %v2356
        %v3125 = vadd.f32 %v3124, %v2357
        %v3126 = vadd.f32 %v3125, %v2358
        %v3127 = vadd.f32 %v3126, %v2359
        %v3128 = vadd.f32 %v3127, %v2360
        %v3129 = vadd.f32 %v3128, %v2361
        %v3130 = vadd.f32 %v3129, %v2362
        %v3131 = vadd.f32 %v3130, %v2363
        %v3132 = vadd.f32 %v3131, %v2364
        %v3133 = vadd.f32 %v3132, %v2365
        %v3134 = vadd.f32 %v3133, %v2366
        %v3135 = vadd.f32 %v3134, %v2367
        %v3136 = vadd.f32 %v3135, %v2368
        %v3137 = vadd.f32 %v3136, %v2369
        %v3138 = vadd.f32 %v3137, %v2370
        %v3139 = vadd.f32 %v3138, %v2371
        %v3140 = vadd.f32 %v3139, %v2372
        %v3141 = vadd.f32 %v3140, %v2373
        %v3142 = vadd.f32 %v3141, %v2374
        %v3143 = vadd.f32 %v3142, %v2375
        %v3144 = vadd.f32 %v3143, %v2376
        %v3145 = vadd.f32 %v3144, %v2377
        %v3146 = vadd.f32 %v3145, %v2378
        %v3147 = vadd.f32 %v3146, %v2379
        %v3148 = vrot.slane %v3147, 4
        %v3149 = vadd.f32 %v3147, %v3148
        %v3150 = vrot.slane %v3149, 2
        %v3151 = vadd.f32 %v3149, %v3150
        %v3152 = vrot.slane %v3151, 1
        %v3153 = vadd.f32 %v3151, %v3152
        %v3154 = vadd.f32 %v3020, %v3153
        %3155 = vst [vmem:[%s398] sm:$0x1] %v3154
        %v3156 = vld [vmem:[%s398 + $0x1] sm:$0x1]
        %v3157 = vmul.f32 %v2252, %v2252
        %v3158 = vmul.f32 %v2253, %v2253
        %v3159 = vmul.f32 %v2254, %v2254
        %v3160 = vmul.f32 %v2255, %v2255
        %v3161 = vmul.f32 %v2256, %v2256
        %v3162 = vmul.f32 %v2257, %v2257
        %v3163 = vmul.f32 %v2258, %v2258
        %v3164 = vmul.f32 %v2259, %v2259
        %v3165 = vmul.f32 %v2260, %v2260
        %v3166 = vmul.f32 %v2261, %v2261
        %v3167 = vmul.f32 %v2262, %v2262
        %v3168 = vmul.f32 %v2263, %v2263
        %v3169 = vmul.f32 %v2264, %v2264
        %v3170 = vmul.f32 %v2265, %v2265
        %v3171 = vmul.f32 %v2266, %v2266
        %v3172 = vmul.f32 %v2267, %v2267
        %v3173 = vmul.f32 %v2268, %v2268
        %v3174 = vmul.f32 %v2269, %v2269
        %v3175 = vmul.f32 %v2270, %v2270
        %v3176 = vmul.f32 %v2271, %v2271
        %v3177 = vmul.f32 %v2272, %v2272
        %v3178 = vmul.f32 %v2273, %v2273
        %v3179 = vmul.f32 %v2274, %v2274
        %v3180 = vmul.f32 %v2275, %v2275
        %v3181 = vmul.f32 %v2276, %v2276
        %v3182 = vmul.f32 %v2277, %v2277
        %v3183 = vmul.f32 %v2278, %v2278
        %v3184 = vmul.f32 %v2279, %v2279
        %v3185 = vmul.f32 %v2280, %v2280
        %v3186 = vmul.f32 %v2281, %v2281
        %v3187 = vmul.f32 %v2282, %v2282
        %v3188 = vmul.f32 %v2283, %v2283
        %v3189 = vmul.f32 %v2284, %v2284
        %v3190 = vmul.f32 %v2285, %v2285
        %v3191 = vmul.f32 %v2286, %v2286
        %v3192 = vmul.f32 %v2287, %v2287
        %v3193 = vmul.f32 %v2288, %v2288
        %v3194 = vmul.f32 %v2289, %v2289
        %v3195 = vmul.f32 %v2290, %v2290
        %v3196 = vmul.f32 %v2291, %v2291
        %v3197 = vmul.f32 %v2292, %v2292
        %v3198 = vmul.f32 %v2293, %v2293
        %v3199 = vmul.f32 %v2294, %v2294
        %v3200 = vmul.f32 %v2295, %v2295
        %v3201 = vmul.f32 %v2296, %v2296
        %v3202 = vmul.f32 %v2297, %v2297
        %v3203 = vmul.f32 %v2298, %v2298
        %v3204 = vmul.f32 %v2299, %v2299
        %v3205 = vmul.f32 %v2300, %v2300
        %v3206 = vmul.f32 %v2301, %v2301
        %v3207 = vmul.f32 %v2302, %v2302
        %v3208 = vmul.f32 %v2303, %v2303
        %v3209 = vmul.f32 %v2304, %v2304
        %v3210 = vmul.f32 %v2305, %v2305
        %v3211 = vmul.f32 %v2306, %v2306
        %v3212 = vmul.f32 %v2307, %v2307
        %v3213 = vmul.f32 %v2308, %v2308
        %v3214 = vmul.f32 %v2309, %v2309
        %v3215 = vmul.f32 %v2310, %v2310
        %v3216 = vmul.f32 %v2311, %v2311
        %v3217 = vmul.f32 %v2312, %v2312
        %v3218 = vmul.f32 %v2313, %v2313
        %v3219 = vmul.f32 %v2314, %v2314
        %v3220 = vmul.f32 %v2315, %v2315
        %v3221 = vmul.f32 %v2316, %v2316
        %v3222 = vmul.f32 %v2317, %v2317
        %v3223 = vmul.f32 %v2318, %v2318
        %v3224 = vmul.f32 %v2319, %v2319
        %v3225 = vmul.f32 %v2320, %v2320
        %v3226 = vmul.f32 %v2321, %v2321
        %v3227 = vmul.f32 %v2322, %v2322
        %v3228 = vmul.f32 %v2323, %v2323
        %v3229 = vmul.f32 %v2324, %v2324
        %v3230 = vmul.f32 %v2325, %v2325
        %v3231 = vmul.f32 %v2326, %v2326
        %v3232 = vmul.f32 %v2327, %v2327
        %v3233 = vmul.f32 %v2328, %v2328
        %v3234 = vmul.f32 %v2329, %v2329
        %v3235 = vmul.f32 %v2330, %v2330
        %v3236 = vmul.f32 %v2331, %v2331
        %v3237 = vmul.f32 %v2332, %v2332
        %v3238 = vmul.f32 %v2333, %v2333
        %v3239 = vmul.f32 %v2334, %v2334
        %v3240 = vmul.f32 %v2335, %v2335
        %v3241 = vmul.f32 %v2336, %v2336
        %v3242 = vmul.f32 %v2337, %v2337
        %v3243 = vmul.f32 %v2338, %v2338
        %v3244 = vmul.f32 %v2339, %v2339
        %v3245 = vmul.f32 %v2340, %v2340
        %v3246 = vmul.f32 %v2341, %v2341
        %v3247 = vmul.f32 %v2342, %v2342
        %v3248 = vmul.f32 %v2343, %v2343
        %v3249 = vmul.f32 %v2344, %v2344
        %v3250 = vmul.f32 %v2345, %v2345
        %v3251 = vmul.f32 %v2346, %v2346
        %v3252 = vmul.f32 %v2347, %v2347
        %v3253 = vmul.f32 %v2348, %v2348
        %v3254 = vmul.f32 %v2349, %v2349
        %v3255 = vmul.f32 %v2350, %v2350
        %v3256 = vmul.f32 %v2351, %v2351
        %v3257 = vmul.f32 %v2352, %v2352
        %v3258 = vmul.f32 %v2353, %v2353
        %v3259 = vmul.f32 %v2354, %v2354
        %v3260 = vmul.f32 %v2355, %v2355
        %v3261 = vmul.f32 %v2356, %v2356
        %v3262 = vmul.f32 %v2357, %v2357
        %v3263 = vmul.f32 %v2358, %v2358
        %v3264 = vmul.f32 %v2359, %v2359
        %v3265 = vmul.f32 %v2360, %v2360
        %v3266 = vmul.f32 %v2361, %v2361
        %v3267 = vmul.f32 %v2362, %v2362
        %v3268 = vmul.f32 %v2363, %v2363
        %v3269 = vmul.f32 %v2364, %v2364
        %v3270 = vmul.f32 %v2365, %v2365
        %v3271 = vmul.f32 %v2366, %v2366
        %v3272 = vmul.f32 %v2367, %v2367
        %v3273 = vmul.f32 %v2368, %v2368
        %v3274 = vmul.f32 %v2369, %v2369
        %v3275 = vmul.f32 %v2370, %v2370
        %v3276 = vmul.f32 %v2371, %v2371
        %v3277 = vmul.f32 %v2372, %v2372
        %v3278 = vmul.f32 %v2373, %v2373
        %v3279 = vmul.f32 %v2374, %v2374
        %v3280 = vmul.f32 %v2375, %v2375
        %v3281 = vmul.f32 %v2376, %v2376
        %v3282 = vmul.f32 %v2377, %v2377
        %v3283 = vmul.f32 %v2378, %v2378
        %v3284 = vmul.f32 %v2379, %v2379
        %v3285 = vadd.f32 %v3157, %v3158
        %v3286 = vadd.f32 %v3285, %v3159
        %v3287 = vadd.f32 %v3286, %v3160
        %v3288 = vadd.f32 %v3287, %v3161
        %v3289 = vadd.f32 %v3288, %v3162
        %v3290 = vadd.f32 %v3289, %v3163
        %v3291 = vadd.f32 %v3290, %v3164
        %v3292 = vadd.f32 %v3291, %v3165
        %v3293 = vadd.f32 %v3292, %v3166
        %v3294 = vadd.f32 %v3293, %v3167
        %v3295 = vadd.f32 %v3294, %v3168
        %v3296 = vadd.f32 %v3295, %v3169
        %v3297 = vadd.f32 %v3296, %v3170
        %v3298 = vadd.f32 %v3297, %v3171
        %v3299 = vadd.f32 %v3298, %v3172
        %v3300 = vadd.f32 %v3299, %v3173
        %v3301 = vadd.f32 %v3300, %v3174
        %v3302 = vadd.f32 %v3301, %v3175
        %v3303 = vadd.f32 %v3302, %v3176
        %v3304 = vadd.f32 %v3303, %v3177
        %v3305 = vadd.f32 %v3304, %v3178
        %v3306 = vadd.f32 %v3305, %v3179
        %v3307 = vadd.f32 %v3306, %v3180
        %v3308 = vadd.f32 %v3307, %v3181
        %v3309 = vadd.f32 %v3308, %v3182
        %v3310 = vadd.f32 %v3309, %v3183
        %v3311 = vadd.f32 %v3310, %v3184
        %v3312 = vadd.f32 %v3311, %v3185
        %v3313 = vadd.f32 %v3312, %v3186
        %v3314 = vadd.f32 %v3313, %v3187
        %v3315 = vadd.f32 %v3314, %v3188
        %v3316 = vadd.f32 %v3315, %v3189
        %v3317 = vadd.f32 %v3316, %v3190
        %v3318 = vadd.f32 %v3317, %v3191
        %v3319 = vadd.f32 %v3318, %v3192
        %v3320 = vadd.f32 %v3319, %v3193
        %v3321 = vadd.f32 %v3320, %v3194
        %v3322 = vadd.f32 %v3321, %v3195
        %v3323 = vadd.f32 %v3322, %v3196
        %v3324 = vadd.f32 %v3323, %v3197
        %v3325 = vadd.f32 %v3324, %v3198
        %v3326 = vadd.f32 %v3325, %v3199
        %v3327 = vadd.f32 %v3326, %v3200
        %v3328 = vadd.f32 %v3327, %v3201
        %v3329 = vadd.f32 %v3328, %v3202
        %v3330 = vadd.f32 %v3329, %v3203
        %v3331 = vadd.f32 %v3330, %v3204
        %v3332 = vadd.f32 %v3331, %v3205
        %v3333 = vadd.f32 %v3332, %v3206
        %v3334 = vadd.f32 %v3333, %v3207
        %v3335 = vadd.f32 %v3334, %v3208
        %v3336 = vadd.f32 %v3335, %v3209
        %v3337 = vadd.f32 %v3336, %v3210
        %v3338 = vadd.f32 %v3337, %v3211
        %v3339 = vadd.f32 %v3338, %v3212
        %v3340 = vadd.f32 %v3339, %v3213
        %v3341 = vadd.f32 %v3340, %v3214
        %v3342 = vadd.f32 %v3341, %v3215
        %v3343 = vadd.f32 %v3342, %v3216
        %v3344 = vadd.f32 %v3343, %v3217
        %v3345 = vadd.f32 %v3344, %v3218
        %v3346 = vadd.f32 %v3345, %v3219
        %v3347 = vadd.f32 %v3346, %v3220
        %v3348 = vadd.f32 %v3347, %v3221
        %v3349 = vadd.f32 %v3348, %v3222
        %v3350 = vadd.f32 %v3349, %v3223
        %v3351 = vadd.f32 %v3350, %v3224
        %v3352 = vadd.f32 %v3351, %v3225
        %v3353 = vadd.f32 %v3352, %v3226
        %v3354 = vadd.f32 %v3353, %v3227
        %v3355 = vadd.f32 %v3354, %v3228
        %v3356 = vadd.f32 %v3355, %v3229
        %v3357 = vadd.f32 %v3356, %v3230
        %v3358 = vadd.f32 %v3357, %v3231
        %v3359 = vadd.f32 %v3358, %v3232
        %v3360 = vadd.f32 %v3359, %v3233
        %v3361 = vadd.f32 %v3360, %v3234
        %v3362 = vadd.f32 %v3361, %v3235
        %v3363 = vadd.f32 %v3362, %v3236
        %v3364 = vadd.f32 %v3363, %v3237
        %v3365 = vadd.f32 %v3364, %v3238
        %v3366 = vadd.f32 %v3365, %v3239
        %v3367 = vadd.f32 %v3366, %v3240
        %v3368 = vadd.f32 %v3367, %v3241
        %v3369 = vadd.f32 %v3368, %v3242
        %v3370 = vadd.f32 %v3369, %v3243
        %v3371 = vadd.f32 %v3370, %v3244
        %v3372 = vadd.f32 %v3371, %v3245
        %v3373 = vadd.f32 %v3372, %v3246
        %v3374 = vadd.f32 %v3373, %v3247
        %v3375 = vadd.f32 %v3374, %v3248
        %v3376 = vadd.f32 %v3375, %v3249
        %v3377 = vadd.f32 %v3376, %v3250
        %v3378 = vadd.f32 %v3377, %v3251
        %v3379 = vadd.f32 %v3378, %v3252
        %v3380 = vadd.f32 %v3379, %v3253
        %v3381 = vadd.f32 %v3380, %v3254
        %v3382 = vadd.f32 %v3381, %v3255
        %v3383 = vadd.f32 %v3382, %v3256
        %v3384 = vadd.f32 %v3383, %v3257
        %v3385 = vadd.f32 %v3384, %v3258
        %v3386 = vadd.f32 %v3385, %v3259
        %v3387 = vadd.f32 %v3386, %v3260
        %v3388 = vadd.f32 %v3387, %v3261
        %v3389 = vadd.f32 %v3388, %v3262
        %v3390 = vadd.f32 %v3389, %v3263
        %v3391 = vadd.f32 %v3390, %v3264
        %v3392 = vadd.f32 %v3391, %v3265
        %v3393 = vadd.f32 %v3392, %v3266
        %v3394 = vadd.f32 %v3393, %v3267
        %v3395 = vadd.f32 %v3394, %v3268
        %v3396 = vadd.f32 %v3395, %v3269
        %v3397 = vadd.f32 %v3396, %v3270
        %v3398 = vadd.f32 %v3397, %v3271
        %v3399 = vadd.f32 %v3398, %v3272
        %v3400 = vadd.f32 %v3399, %v3273
        %v3401 = vadd.f32 %v3400, %v3274
        %v3402 = vadd.f32 %v3401, %v3275
        %v3403 = vadd.f32 %v3402, %v3276
        %v3404 = vadd.f32 %v3403, %v3277
        %v3405 = vadd.f32 %v3404, %v3278
        %v3406 = vadd.f32 %v3405, %v3279
        %v3407 = vadd.f32 %v3406, %v3280
        %v3408 = vadd.f32 %v3407, %v3281
        %v3409 = vadd.f32 %v3408, %v3282
        %v3410 = vadd.f32 %v3409, %v3283
        %v3411 = vadd.f32 %v3410, %v3284
        %v3412 = vrot.slane %v3411, 4
        %v3413 = vadd.f32 %v3411, %v3412
        %v3414 = vrot.slane %v3413, 2
        %v3415 = vadd.f32 %v3413, %v3414
        %v3416 = vrot.slane %v3415, 1
        %v3417 = vadd.f32 %v3415, %v3416
        %v3418 = vadd.f32 %v3156, %v3417
        %3419 = vst [vmem:[%s398 + $0x1] sm:$0x1] %v3418
      $region48: #{ftgan_encoder_atten.7} parent=35 // pred_fallthru
        _
      %s3420 = smul.u32 128, %s25
      %p3421 = scmp.lt.s32.totalorder %s23, 1
      %s3422 = scalar_select %p3421, %s23, 1
      %p3423 = scmp.lt.s32.totalorder %s3420, 127
      %s3424 = scalar_select %p3423, %s3420, 127
      %p3425 = scmp.lt.s32.totalorder %s24, 0
      %s3426 = scalar_select %p3425, %s24, 0
      %s3427 = sadd.s32 %s3426, %s3424
      %s3428 = smul.addr %s3422, 128
      %s3429 = sadd.s32 %s3427, %s3428
      %s3430 = smul.addr %s3429, 4
      %s3431 = scalar_lea.vmem %s4, %s3430
      %p3432 = scmp.lt.s32.totalorder %s23, 1
      %s3433 = scalar_select %p3432, %s23, 1
      %p3434 = scmp.lt.s32.totalorder %s24, 0
      %s3435 = scalar_select %p3434, %s24, 0
      %s3436 = sadd.s32 %s3435, %s3433
      %s3437 = smul.addr %s3436, 2
      %s3438 = scalar_lea.vmem %s5, %s3437
      // Predicated region
      $region49: #{ftgan_encoder_atten.7} parent=35 // pred_check
        %p3439 = pneg %p179
      $region50: #{ftgan_encoder_atten.7} parent=35 // pred_check_branch
        %3441 = sbr.rel (%p3439) target = $region52
      $region51: #{ftgan_encoder_atten.7} parent=35 // pred_region
        %s3442 = smul.u32 128, %s25
      $region52: #{ftgan_encoder_atten.7} parent=35 // pred_fallthru
        _
      // Predicated region
      $region53: #{ftgan_encoder_atten.7} parent=35 // pred_check
        %p3443 = pneg %p207
      $region54: #{ftgan_encoder_atten.7} parent=35 // pred_check_branch
        %3445 = sbr.rel (%p3443) target = $region56
      $region55: #{ftgan_encoder_atten.7} parent=35 // pred_region
        _
      $region56: #{ftgan_encoder_atten.7} parent=35 // pred_fallthru
        _
    $region36: #{ftgan_encoder_atten.7} parent=5 // pred_fallthru
      _
    %p3446 = scmp.le.s32.totalorder 2, %s12
    // Predicated region
    $region57: #{ftgan_encoder_atten.7} parent=5 // pred_check
      %p3447 = pneg %p3446
    $region58: #{ftgan_encoder_atten.7} parent=5 // pred_check_branch
      %3449 = sbr.rel (%p3447) target = $region60
    $region59: #{ftgan_encoder_atten.7} parent=5 // pred_region
      %s3450 = ssub.s32 %s12, 2
      // Predicated region
      $region61: #{ftgan_encoder_atten.7} parent=59 // pred_check
        %p3451 = pneg %p185
      $region62: #{ftgan_encoder_atten.7} parent=59 // pred_check_branch
        %3453 = sbr.rel (%p3451) target = $region64
      $region63: #{ftgan_encoder_atten.7} parent=59 // pred_region
        %s3454 = smul.u32 128, %s29
        %p3455 = scmp.lt.s32.totalorder %s27, 1
        %s3456 = scalar_select %p3455, %s27, 1
        %p3457 = scmp.lt.s32.totalorder %s3454, 127
        %s3458 = scalar_select %p3457, %s3454, 127
        %p3459 = scmp.lt.s32.totalorder %s28, 0
        %s3460 = scalar_select %p3459, %s28, 0
        %s3461 = sadd.s32 %s3460, %s3458
        %s3462 = smul.addr %s3456, 128
        %s3463 = sadd.s32 %s3461, %s3462
        %s3464 = smul.addr %s3463, 4
        %s3465 = scalar_lea.vmem %s4, %s3464
      $region64: #{ftgan_encoder_atten.7} parent=59 // pred_fallthru
        _
      // Predicated region
      $region65: #{ftgan_encoder_atten.7} parent=59 // pred_check
        %p3466 = pneg %p213
      $region66: #{ftgan_encoder_atten.7} parent=59 // pred_check_branch
        %3468 = sbr.rel (%p3466) target = $region68
      $region67: #{ftgan_encoder_atten.7} parent=59 // pred_region
        %p3469 = scmp.lt.s32.totalorder %s27, 1
        %s3470 = scalar_select %p3469, %s27, 1
        %p3471 = scmp.lt.s32.totalorder %s28, 0
        %s3472 = scalar_select %p3471, %s28, 0
        %s3473 = sadd.s32 %s3472, %s3470
        %s3474 = smul.addr %s3473, 2
        %s3475 = scalar_lea.vmem %s5, %s3474
      $region68: #{ftgan_encoder_atten.7} parent=59 // pred_fallthru
        _
    $region60: #{ftgan_encoder_atten.7} parent=5 // pred_fallthru
      _
  $region6: #{ftgan_encoder_atten.7} parent=0 // loop_footer
    %s16 = sadd.s32 1, %s12
  $region7: #{ftgan_encoder_atten.7} parent=0 // loop_footer_branch
    %11 = sbr.rel target = $region3
  $region8: #{ftgan_encoder_atten.7} parent=0 // loop_exit
    _

// kernel: tile.34
$region0: #{tile.34}
  %s0 = inlined_call_operand.vmem [shape: f32[2,9,8], index: 0, kind: input, shape index: {}]
  %s1 = inlined_call_operand.vmem [shape: f32[2,72], index: 1, kind: output, shape index: {}]
  $region1: #{tile.34} parent=0
    #allocation0 [shape = 'u8[4096]{0}', space=vmem, size = 0x1000, scoped, tag = 'scoped mem for output reshape']
    %s2 = smov 3
    %v3 = vld [vmem:[%s0] ss:$16 sm:%s2]
    %vm4 = vcmask 64512
    %5 = vst.msk [vmem:[#allocation0] sm:$0x3] %vm4, %v3
    %s6 = scalar_lea.vmem %s0, 8
    %s7 = smov 3
    %v8 = vld [vmem:[%s6] ss:$16 sm:%s7]
    %9 = vrot.lane.b32.xlu0 %v8, 64
    %v10 = vpop.permute.xlu0 %9
    %vm11 = vcmask 589312
    %12 = vst.msk [vmem:[#allocation0] sm:$0x3] %vm11, %v10
    %s13 = scalar_lea.vmem %s0, 7
    %s14 = smov 3
    %v15 = vld [vmem:[%s13] ss:$16 sm:%s14]
    %16 = vrot.lane.b32.xlu0 %v15, 56
    %v17 = vpop.permute.xlu0 %16
    %vm18 = vcmask 523712
    %19 = vst.msk [vmem:[#allocation0] sm:$0x3] %vm18, %v17
    %s20 = scalar_lea.vmem %s0, 6
    %s21 = smov 3
    %v22 = vld [vmem:[%s20] ss:$16 sm:%s21]
    %23 = vrot.lane.b32.xlu0 %v22, 48
    %v24 = vpop.permute.xlu0 %23
    %vm25 = vcmask 458112
    %26 = vst.msk [vmem:[#allocation0] sm:$0x3] %vm25, %v24
    %s27 = scalar_lea.vmem %s0, 5
    %s28 = smov 3
    %v29 = vld [vmem:[%s27] ss:$16 sm:%s28]
    %30 = vrot.lane.b32.xlu0 %v29, 40
    %v31 = vpop.permute.xlu0 %30
    %vm32 = vcmask 392512
    %33 = vst.msk [vmem:[#allocation0] sm:$0x3] %vm32, %v31
    %s34 = scalar_lea.vmem %s0, 4
    %s35 = smov 3
    %v36 = vld [vmem:[%s34] ss:$16 sm:%s35]
    %37 = vrot.lane.b32.xlu0 %v36, 32
    %v38 = vpop.permute.xlu0 %37
    %vm39 = vcmask 326912
    %40 = vst.msk [vmem:[#allocation0] sm:$0x3] %vm39, %v38
    %s41 = scalar_lea.vmem %s0, 3
    %s42 = smov 3
    %v43 = vld [vmem:[%s41] ss:$16 sm:%s42]
    %44 = vrot.lane.b32.xlu0 %v43, 24
    %v45 = vpop.permute.xlu0 %44
    %vm46 = vcmask 261312
    %47 = vst.msk [vmem:[#allocation0] sm:$0x3] %vm46, %v45
    %s48 = scalar_lea.vmem %s0, 2
    %s49 = smov 3
    %v50 = vld [vmem:[%s48] ss:$16 sm:%s49]
    %51 = vrot.lane.b32.xlu0 %v50, 16
    %v52 = vpop.permute.xlu0 %51
    %vm53 = vcmask 195712
    %54 = vst.msk [vmem:[#allocation0] sm:$0x3] %vm53, %v52
    %s55 = scalar_lea.vmem %s0, 1
    %s56 = smov 3
    %v57 = vld [vmem:[%s55] ss:$16 sm:%s56]
    %58 = vrot.lane.b32.xlu0 %v57, 8
    %v59 = vpop.permute.xlu0 %58
    %vm60 = vcmask 130112
    %61 = vst.msk [vmem:[#allocation0] sm:$0x3] %vm60, %v59
    %s63 = sshll.u32 1, 2
    %s64 = ssub.s32 %s63, 1
    %v66 = vld [vmem:[#allocation0] sm:%s64]
    %s67 = sshll.u32 1, 2
    %s68 = ssub.s32 %s67, 1
    %69 = vst [vmem:[%s1] sm:%s68] %v66

// kernel: ftgan_encoder_atten.8
$region0: #{ftgan_encoder_atten.8}
  #allocation0 [shape = 'u32[]', space=smem, size = 0x4, offset = 0x4, fixed_abs, tag = 'smem constant byte address 0x4 - core index']
  #allocation1 [shape = 'u32[144,128]{1,0:T(1,128)}', space=vmem, size = 0x12000, scoped, tag = 'internal scratch']
  #allocation2 [shape = 'f32[256,128]{1,0:T(8,128)}', space=vmem, size = 0x20000, scoped, tag = 'scratch operand']
  %s0 = inlined_call_operand.vmem [shape: f32[2,1,128], index: 0, kind: input, shape index: {}]
  %s1 = inlined_call_operand.vmem [shape: f32[2,1,128], index: 1, kind: input, shape index: {}]
  %s2 = inlined_call_operand.vmem [shape: bf16[2,256,128], index: 2, kind: input, shape index: {}]
  %s3 = inlined_call_operand.vmem [shape: bf16[128,128], index: 3, kind: input, shape index: {}]
  %s4 = inlined_call_operand.vmem [shape: bf16[2,256,128], index: 4, kind: output, shape index: {0}]
  %s5 = inlined_call_operand.vmem [shape: f32[2,2,128], index: 5, kind: output, shape index: {1}]
  %6 = xla_tuple %s4, %s5
  %s7 = sld [smem:[#allocation0]]
  $region69: #{ftgan_encoder_atten.8} parent=0
    _
  %s9 = ssub.s32 1, %s7
  %s10 = scalar_select 0, %s9, %s7
  loop: start=0, step=1, limit=4
  $region2: #{ftgan_encoder_atten.8} parent=0 // loop_pre_header
    _
  $region3: #{ftgan_encoder_atten.8} parent=0 // loop_header
    %s12 = sphi 0, %s16
    %p13 = scmp.ge.s32.totalorder %s12, 4
    %s19 = sphi 0, %s45
    %s20 = sphi 0, %s41
    %s21 = sphi 0, %s37
    %s22 = sphi 0, %s33
    %s23 = sphi 0, %s19
    %s24 = sphi 0, %s20
    %s25 = sphi 0, %s21
    %s26 = sphi 0, %s22
    %s27 = sphi 0, %s23
    %s28 = sphi 0, %s24
    %s29 = sphi 0, %s25
    %s30 = sphi 0, %s26
    %s50 = sphi 0, %s52
    %s53 = sphi 0, %s50
    %s54 = sphi 0, %s53
    %s70 = sphi 0, %s54
    %s78 = sphi 0, %s80
    %s81 = sphi 0, %s78
    %s82 = sphi 0, %s81
    %s98 = sphi 0, %s82
    %s108 = sphi 0, %s110
    %s111 = sphi 0, %s108
    %s112 = sphi 0, %s111
    %s128 = sphi 0, %s112
    %s136 = sphi 0, %s138
    %s139 = sphi 0, %s136
    %s140 = sphi 0, %s139
    %s156 = sphi 0, %s140
    %s166 = sphi 0, %s168
    %s169 = sphi 0, %s166
    %s170 = sphi 0, %s169
    %s186 = sphi 0, %s170
    %s194 = sphi 0, %s196
    %s197 = sphi 0, %s194
    %s198 = sphi 0, %s197
    %s214 = sphi 0, %s198
  $region4: #{ftgan_encoder_atten.8} parent=0 // loop_header_branch
    %15 = sbr.rel (%p13) target = $region8
  $region5: #{ftgan_encoder_atten.8} parent=0 // loop_body
    %s17 = ssub.s32 %s12, 1
    %s18 = ssub.s32 %s12, 2
    %s31 = sadd.s32 1, %s22
    %p32 = scmp.ge.s32.totalorder %s31, 1
    %s33 = scalar_select %p32, 0, %s31
    %s34 = sadd.s32 1, %s21
    %s35 = scalar_select %p32, %s34, %s21
    %p36 = scmp.ge.s32.totalorder %s35, 1
    %s37 = scalar_select %p36, 0, %s35
    %s38 = sadd.s32 1, %s20
    %s39 = scalar_select %p36, %s38, %s20
    %p40 = scmp.ge.s32.totalorder %s39, 1
    %s41 = scalar_select %p40, 0, %s39
    %s42 = sadd.s32 1, %s19
    %s43 = scalar_select %p40, %s42, %s19
    %p44 = scmp.ge.s32.totalorder %s43, 2
    %s45 = scalar_select %p44, 0, %s43
    %s46 = ssub.s32 %s19, %s45
    %s47 = ssub.s32 %s22, %s33
    %s48 = sor.u32 %s46, %s47
    %p49 = scmp.eq.s32.totalorder %s48, 0
    %s51 = sadd.s32 %s50, 1
    %s52 = scalar_select %p49, %s50, %s51
    %p55 = pneg %p49
    %p56 = scmp.eq.s32.totalorder %s12, 1
    %p57 = por %p55, %p56
    %p58 = scmp.ne.s32.totalorder %s50, %s53
    %p59 = scmp.eq.s32.totalorder %s12, 0
    %p60 = por %p58, %p59
    %p61 = scmp.ne.s32.totalorder %s50, %s53
    %p62 = scmp.eq.s32.totalorder %s17, 1
    %p63 = por %p61, %p62
    %p64 = scmp.ne.s32.totalorder %s53, %s54
    %p65 = scmp.eq.s32.totalorder %s17, 0
    %p66 = por %p64, %p65
    %p67 = scmp.ne.s32.totalorder %s53, %s54
    %p68 = scmp.eq.s32.totalorder %s18, 1
    %p69 = por %p67, %p68
    %p71 = scmp.ne.s32.totalorder %s54, %s70
    %p72 = scmp.eq.s32.totalorder %s18, 0
    %p73 = por %p71, %p72
    %s74 = ssub.s32 %s19, %s45
    %s75 = ssub.s32 %s22, %s33
    %s76 = sor.u32 %s74, %s75
    %p77 = scmp.eq.s32.totalorder %s76, 0
    %s79 = sadd.s32 %s78, 1
    %s80 = scalar_select %p77, %s78, %s79
    %p83 = pneg %p77
    %p84 = scmp.eq.s32.totalorder %s12, 1
    %p85 = por %p83, %p84
    %p86 = scmp.ne.s32.totalorder %s78, %s81
    %p87 = scmp.eq.s32.totalorder %s12, 0
    %p88 = por %p86, %p87
    %p89 = scmp.ne.s32.totalorder %s78, %s81
    %p90 = scmp.eq.s32.totalorder %s17, 1
    %p91 = por %p89, %p90
    %p92 = scmp.ne.s32.totalorder %s81, %s82
    %p93 = scmp.eq.s32.totalorder %s17, 0
    %p94 = por %p92, %p93
    %p95 = scmp.ne.s32.totalorder %s81, %s82
    %p96 = scmp.eq.s32.totalorder %s18, 1
    %p97 = por %p95, %p96
    %p99 = scmp.ne.s32.totalorder %s82, %s98
    %p100 = scmp.eq.s32.totalorder %s18, 0
    %p101 = por %p99, %p100
    %s102 = ssub.s32 %s19, %s45
    %s103 = ssub.s32 %s21, %s37
    %s104 = sor.u32 %s102, %s103
    %s105 = ssub.s32 %s22, %s33
    %s106 = sor.u32 %s104, %s105
    %p107 = scmp.eq.s32.totalorder %s106, 0
    %s109 = sadd.s32 %s108, 1
    %s110 = scalar_select %p107, %s108, %s109
    %p113 = pneg %p107
    %p114 = scmp.eq.s32.totalorder %s12, 1
    %p115 = por %p113, %p114
    %p116 = scmp.ne.s32.totalorder %s108, %s111
    %p117 = scmp.eq.s32.totalorder %s12, 0
    %p118 = por %p116, %p117
    %p119 = scmp.ne.s32.totalorder %s108, %s111
    %p120 = scmp.eq.s32.totalorder %s17, 1
    %p121 = por %p119, %p120
    %p122 = scmp.ne.s32.totalorder %s111, %s112
    %p123 = scmp.eq.s32.totalorder %s17, 0
    %p124 = por %p122, %p123
    %p125 = scmp.ne.s32.totalorder %s111, %s112
    %p126 = scmp.eq.s32.totalorder %s18, 1
    %p127 = por %p125, %p126
    %p129 = scmp.ne.s32.totalorder %s112, %s128
    %p130 = scmp.eq.s32.totalorder %s18, 0
    %p131 = por %p129, %p130
    %s132 = ssub.s32 %s22, %s33
    %s133 = ssub.s32 %s20, %s41
    %s134 = sor.u32 %s132, %s133
    %p135 = scmp.eq.s32.totalorder %s134, 0
    %s137 = sadd.s32 %s136, 1
    %s138 = scalar_select %p135, %s136, %s137
    %p141 = pneg %p135
    %p142 = scmp.eq.s32.totalorder %s12, 1
    %p143 = por %p141, %p142
    %p144 = scmp.ne.s32.totalorder %s136, %s139
    %p145 = scmp.eq.s32.totalorder %s12, 0
    %p146 = por %p144, %p145
    %p147 = scmp.ne.s32.totalorder %s136, %s139
    %p148 = scmp.eq.s32.totalorder %s17, 1
    %p149 = por %p147, %p148
    %p150 = scmp.ne.s32.totalorder %s139, %s140
    %p151 = scmp.eq.s32.totalorder %s17, 0
    %p152 = por %p150, %p151
    %p153 = scmp.ne.s32.totalorder %s139, %s140
    %p154 = scmp.eq.s32.totalorder %s18, 1
    %p155 = por %p153, %p154
    %p157 = scmp.ne.s32.totalorder %s140, %s156
    %p158 = scmp.eq.s32.totalorder %s18, 0
    %p159 = por %p157, %p158
    %s160 = ssub.s32 %s19, %s45
    %s161 = ssub.s32 %s21, %s37
    %s162 = sor.u32 %s160, %s161
    %s163 = ssub.s32 %s20, %s41
    %s164 = sor.u32 %s162, %s163
    %p165 = scmp.eq.s32.totalorder %s164, 0
    %s167 = sadd.s32 %s166, 1
    %s168 = scalar_select %p165, %s166, %s167
    %p171 = pneg %p165
    %p172 = scmp.eq.s32.totalorder %s12, 1
    %p173 = por %p171, %p172
    %p174 = scmp.ne.s32.totalorder %s166, %s169
    %p175 = scmp.eq.s32.totalorder %s12, 0
    %p176 = por %p174, %p175
    %p177 = scmp.ne.s32.totalorder %s166, %s169
    %p178 = scmp.eq.s32.totalorder %s17, 1
    %p179 = por %p177, %p178
    %p180 = scmp.ne.s32.totalorder %s169, %s170
    %p181 = scmp.eq.s32.totalorder %s17, 0
    %p182 = por %p180, %p181
    %p183 = scmp.ne.s32.totalorder %s169, %s170
    %p184 = scmp.eq.s32.totalorder %s18, 1
    %p185 = por %p183, %p184
    %p187 = scmp.ne.s32.totalorder %s170, %s186
    %p188 = scmp.eq.s32.totalorder %s18, 0
    %p189 = por %p187, %p188
    %s190 = ssub.s32 %s19, %s45
    %s191 = ssub.s32 %s20, %s41
    %s192 = sor.u32 %s190, %s191
    %p193 = scmp.eq.s32.totalorder %s192, 0
    %s195 = sadd.s32 %s194, 1
    %s196 = scalar_select %p193, %s194, %s195
    %p199 = pneg %p193
    %p200 = scmp.eq.s32.totalorder %s12, 1
    %p201 = por %p199, %p200
    %p202 = scmp.ne.s32.totalorder %s194, %s197
    %p203 = scmp.eq.s32.totalorder %s12, 0
    %p204 = por %p202, %p203
    %p205 = scmp.ne.s32.totalorder %s194, %s197
    %p206 = scmp.eq.s32.totalorder %s17, 1
    %p207 = por %p205, %p206
    %p208 = scmp.ne.s32.totalorder %s197, %s198
    %p209 = scmp.eq.s32.totalorder %s17, 0
    %p210 = por %p208, %p209
    %p211 = scmp.ne.s32.totalorder %s197, %s198
    %p212 = scmp.eq.s32.totalorder %s18, 1
    %p213 = por %p211, %p212
    %p215 = scmp.ne.s32.totalorder %s198, %s214
    %p216 = scmp.eq.s32.totalorder %s18, 0
    %p217 = por %p215, %p216
    %p218 = scmp.le.s32.totalorder 1, %s12
    %p219 = scmp.lt.s32.totalorder %s12, 3
    %p220 = pnand %p218, %p219
    %p221 = pneg %p220
    // Predicated region
    $region9: #{ftgan_encoder_atten.8} parent=5 // pred_check
      _
    $region10: #{ftgan_encoder_atten.8} parent=5 // pred_check_branch
      %223 = sbr.rel (%p220) target = $region12
    $region11: #{ftgan_encoder_atten.8} parent=5 // pred_region
      %s224 = ssub.s32 %s12, 1
      // Predicated region
      $region13: #{ftgan_encoder_atten.8} parent=11 // pred_check
        %p225 = pneg %p152
      $region14: #{ftgan_encoder_atten.8} parent=11 // pred_check_branch
        %227 = sbr.rel (%p225) target = $region16
      $region15: #{ftgan_encoder_atten.8} parent=11 // pred_region
        %s228 = smul.u32 16, %s26
        %p229 = scmp.lt.s32.totalorder %s228, 15
        %s230 = scalar_select %p229, %s228, 15
        %p231 = scmp.lt.s32.totalorder %s24, 0
        %s232 = scalar_select %p231, %s24, 0
        %s233 = sadd.s32 %s232, %s230
        %s234 = smul.addr %s233, 4
        %s235 = scalar_lea.vmem %s3, %s234
        %s236 = smul.u32 16, %s26
      $region16: #{ftgan_encoder_atten.8} parent=11 // pred_fallthru
        _
    $region12: #{ftgan_encoder_atten.8} parent=5 // pred_fallthru
      _
    %p237 = scmp.lt.s32.totalorder %s12, 2
    // Predicated region
    $region17: #{ftgan_encoder_atten.8} parent=5 // pred_check
      %p238 = pneg %p237
    $region18: #{ftgan_encoder_atten.8} parent=5 // pred_check_branch
      %240 = sbr.rel (%p238) target = $region20
    $region19: #{ftgan_encoder_atten.8} parent=5 // pred_region
      // Predicated region
      $region21: #{ftgan_encoder_atten.8} parent=19 // pred_check
        %p241 = pneg %p60
      $region22: #{ftgan_encoder_atten.8} parent=19 // pred_check_branch
        %243 = sbr.rel (%p241) target = $region24
      $region23: #{ftgan_encoder_atten.8} parent=19 // pred_region
        %p244 = scmp.lt.s32.totalorder %s19, 1
        %s245 = scalar_select %p244, %s19, 1
        %p246 = scmp.lt.s32.totalorder %s22, 0
        %s247 = scalar_select %p246, %s22, 0
        %s248 = sadd.s32 %s247, %s245
        %s249 = scalar_lea.vmem %s0, %s248
      $region24: #{ftgan_encoder_atten.8} parent=19 // pred_fallthru
        _
      // Predicated region
      $region25: #{ftgan_encoder_atten.8} parent=19 // pred_check
        %p250 = pneg %p88
      $region26: #{ftgan_encoder_atten.8} parent=19 // pred_check_branch
        %252 = sbr.rel (%p250) target = $region28
      $region27: #{ftgan_encoder_atten.8} parent=19 // pred_region
        %p253 = scmp.lt.s32.totalorder %s19, 1
        %s254 = scalar_select %p253, %s19, 1
        %p255 = scmp.lt.s32.totalorder %s22, 0
        %s256 = scalar_select %p255, %s22, 0
        %s257 = sadd.s32 %s256, %s254
        %s258 = scalar_lea.vmem %s1, %s257
      $region28: #{ftgan_encoder_atten.8} parent=19 // pred_fallthru
        _
      // Predicated region
      $region29: #{ftgan_encoder_atten.8} parent=19 // pred_check
        %p259 = pneg %p118
      $region30: #{ftgan_encoder_atten.8} parent=19 // pred_check_branch
        %261 = sbr.rel (%p259) target = $region32
      $region31: #{ftgan_encoder_atten.8} parent=19 // pred_region
        %s262 = smul.u32 32, %s21
        %p263 = scmp.lt.s32.totalorder %s19, 1
        %s264 = scalar_select %p263, %s19, 1
        %p265 = scmp.lt.s32.totalorder %s262, 31
        %s266 = scalar_select %p265, %s262, 31
        %p267 = scmp.lt.s32.totalorder %s22, 0
        %s268 = scalar_select %p267, %s22, 0
        %s269 = sadd.s32 %s268, %s266
        %s270 = smul.addr %s264, 32
        %s271 = sadd.s32 %s269, %s270
        %s272 = smul.addr %s271, 4
        %s273 = scalar_lea.vmem %s2, %s272
        %s274 = smul.u32 32, %s21
      $region32: #{ftgan_encoder_atten.8} parent=19 // pred_fallthru
        _
    $region20: #{ftgan_encoder_atten.8} parent=5 // pred_fallthru
      _
    %p275 = scmp.le.s32.totalorder 1, %s12
    %p276 = scmp.lt.s32.totalorder %s12, 3
    %p277 = pnand %p275, %p276
    %p278 = pneg %p277
    // Predicated region
    $region33: #{ftgan_encoder_atten.8} parent=5 // pred_check
      _
    $region34: #{ftgan_encoder_atten.8} parent=5 // pred_check_branch
      %280 = sbr.rel (%p277) target = $region36
    $region35: #{ftgan_encoder_atten.8} parent=5 // pred_region
      %s281 = ssub.s32 %s12, 1
      %p282 = scmp.lt.s32.totalorder %s23, 1
      %s283 = scalar_select %p282, %s23, 1
      %p284 = scmp.lt.s32.totalorder %s26, 0
      %s285 = scalar_select %p284, %s26, 0
      %s286 = sadd.s32 %s285, %s283
      %s287 = scalar_lea.vmem %s0, %s286
      %p288 = pneg %p66
      %p289 = pneg %p63
      %p290 = scmp.lt.s32.totalorder %s23, 1
      %s291 = scalar_select %p290, %s23, 1
      %p292 = scmp.lt.s32.totalorder %s26, 0
      %s293 = scalar_select %p292, %s26, 0
      %s294 = sadd.s32 %s293, %s291
      %s295 = scalar_lea.vmem %s1, %s294
      %p296 = pneg %p94
      %p297 = pneg %p91
      %s298 = smul.u32 32, %s25
      %p299 = scmp.lt.s32.totalorder %s23, 1
      %s300 = scalar_select %p299, %s23, 1
      %p301 = scmp.lt.s32.totalorder %s298, 31
      %s302 = scalar_select %p301, %s298, 31
      %p303 = scmp.lt.s32.totalorder %s26, 0
      %s304 = scalar_select %p303, %s26, 0
      %s305 = sadd.s32 %s304, %s302
      %s306 = smul.addr %s300, 32
      %s307 = sadd.s32 %s305, %s306
      %s308 = smul.addr %s307, 4
      %s309 = scalar_lea.vmem %s2, %s308
      %p310 = pneg %p124
      %p311 = pneg %p121
      %s312 = smul.u32 16, %s26
      %p313 = scmp.lt.s32.totalorder %s312, 15
      %s314 = scalar_select %p313, %s312, 15
      %p315 = scmp.lt.s32.totalorder %s24, 0
      %s316 = scalar_select %p315, %s24, 0
      %s317 = sadd.s32 %s316, %s314
      %s318 = smul.addr %s317, 4
      %s319 = scalar_lea.vmem %s3, %s318
      %p320 = pneg %p152
      %p321 = pneg %p149
      %p322 = pneg %p182
      %p323 = pneg %p179
      %s324 = smul.u32 32, %s25
      %p325 = scmp.lt.s32.totalorder %s23, 1
      %s326 = scalar_select %p325, %s23, 1
      %p327 = scmp.lt.s32.totalorder %s324, 31
      %s328 = scalar_select %p327, %s324, 31
      %p329 = scmp.lt.s32.totalorder %s24, 0
      %s330 = scalar_select %p329, %s24, 0
      %s331 = sadd.s32 %s330, %s328
      %s332 = smul.addr %s326, 32
      %s333 = sadd.s32 %s331, %s332
      %s334 = smul.addr %s333, 4
      %s335 = scalar_lea.vmem %s4, %s334
      %p336 = pneg %p210
      %p337 = pneg %p207
      %p338 = scmp.lt.s32.totalorder %s23, 1
      %s339 = scalar_select %p338, %s23, 1
      %p340 = scmp.lt.s32.totalorder %s24, 0
      %s341 = scalar_select %p340, %s24, 0
      %s342 = sadd.s32 %s341, %s339
      %s343 = smul.addr %s342, 2
      %s344 = scalar_lea.vmem %s5, %s343
      %p345 = scmp.lt.s32.totalorder %s23, 1
      %s346 = scalar_select %p345, %s23, 1
      %p347 = scmp.lt.s32.totalorder %s26, 0
      %s348 = scalar_select %p347, %s26, 0
      %s349 = sadd.s32 %s348, %s346
      %s350 = scalar_lea.vmem %s0, %s349
      %p351 = scmp.lt.s32.totalorder %s23, 1
      %s352 = scalar_select %p351, %s23, 1
      %p353 = scmp.lt.s32.totalorder %s26, 0
      %s354 = scalar_select %p353, %s26, 0
      %s355 = sadd.s32 %s354, %s352
      %s356 = scalar_lea.vmem %s1, %s355
      %s357 = smul.u32 32, %s25
      %p358 = scmp.lt.s32.totalorder %s23, 1
      %s359 = scalar_select %p358, %s23, 1
      %p360 = scmp.lt.s32.totalorder %s357, 31
      %s361 = scalar_select %p360, %s357, 31
      %p362 = scmp.lt.s32.totalorder %s26, 0
      %s363 = scalar_select %p362, %s26, 0
      %s364 = sadd.s32 %s363, %s361
      %s365 = smul.addr %s359, 32
      %s366 = sadd.s32 %s364, %s365
      %s367 = smul.addr %s366, 4
      %s368 = scalar_lea.vmem %s2, %s367
      %s369 = smul.u32 32, %s25
      %s370 = smul.u32 16, %s26
      %p371 = scmp.lt.s32.totalorder %s370, 15
      %s372 = scalar_select %p371, %s370, 15
      %p373 = scmp.lt.s32.totalorder %s24, 0
      %s374 = scalar_select %p373, %s24, 0
      %s375 = sadd.s32 %s374, %s372
      %s376 = smul.addr %s375, 4
      %s377 = scalar_lea.vmem %s3, %s376
      %s378 = smul.u32 16, %s26
      %s379 = smul.u32 32, %s25
      %p380 = scmp.lt.s32.totalorder %s23, 1
      %s381 = scalar_select %p380, %s23, 1
      %p382 = scmp.lt.s32.totalorder %s379, 31
      %s383 = scalar_select %p382, %s379, 31
      %p384 = scmp.lt.s32.totalorder %s24, 0
      %s385 = scalar_select %p384, %s24, 0
      %s386 = sadd.s32 %s385, %s383
      %s387 = smul.addr %s381, 32
      %s388 = sadd.s32 %s386, %s387
      %s389 = smul.addr %s388, 4
      %s390 = scalar_lea.vmem %s4, %s389
      %s391 = smul.u32 32, %s25
      %p392 = scmp.lt.s32.totalorder %s23, 1
      %s393 = scalar_select %p392, %s23, 1
      %p394 = scmp.lt.s32.totalorder %s24, 0
      %s395 = scalar_select %p394, %s24, 0
      %s396 = sadd.s32 %s395, %s393
      %s397 = smul.addr %s396, 2
      %s398 = scalar_lea.vmem %s5, %s397
      %p400 = scmp.eq.s32.totalorder %s26, 0
      // Predicated region
      $region37: #{ftgan_encoder_atten.8} parent=35 // pred_check
        %p401 = pneg %p400
      $region38: #{ftgan_encoder_atten.8} parent=35 // pred_check_branch
        %403 = sbr.rel (%p401) target = $region40
      $region39: #{ftgan_encoder_atten.8} parent=35 // pred_region
        %404 = vst [vmem:[#allocation2] sm:$0xff] 0.0
        %405 = vst [vmem:[#allocation2 + $0x8] sm:$0xff] 0.0
        %406 = vst [vmem:[#allocation2 + $0x10] sm:$0xff] 0.0
        %407 = vst [vmem:[#allocation2 + $0x18] sm:$0xff] 0.0
        %408 = vst [vmem:[#allocation2 + $0x20] sm:$0xff] 0.0
        %409 = vst [vmem:[#allocation2 + $0x28] sm:$0xff] 0.0
        %410 = vst [vmem:[#allocation2 + $0x30] sm:$0xff] 0.0
        %411 = vst [vmem:[#allocation2 + $0x38] sm:$0xff] 0.0
        %412 = vst [vmem:[#allocation2 + $0x40] sm:$0xff] 0.0
        %413 = vst [vmem:[#allocation2 + $0x48] sm:$0xff] 0.0
        %414 = vst [vmem:[#allocation2 + $0x50] sm:$0xff] 0.0
        %415 = vst [vmem:[#allocation2 + $0x58] sm:$0xff] 0.0
        %416 = vst [vmem:[#allocation2 + $0x60] sm:$0xff] 0.0
        %417 = vst [vmem:[#allocation2 + $0x68] sm:$0xff] 0.0
        %418 = vst [vmem:[#allocation2 + $0x70] sm:$0xff] 0.0
        %419 = vst [vmem:[#allocation2 + $0x78] sm:$0xff] 0.0
        %420 = vst [vmem:[#allocation2 + $0x80] sm:$0xff] 0.0
        %421 = vst [vmem:[#allocation2 + $0x88] sm:$0xff] 0.0
        %422 = vst [vmem:[#allocation2 + $0x90] sm:$0xff] 0.0
        %423 = vst [vmem:[#allocation2 + $0x98] sm:$0xff] 0.0
        %424 = vst [vmem:[#allocation2 + $0xa0] sm:$0xff] 0.0
        %425 = vst [vmem:[#allocation2 + $0xa8] sm:$0xff] 0.0
        %426 = vst [vmem:[#allocation2 + $0xb0] sm:$0xff] 0.0
        %427 = vst [vmem:[#allocation2 + $0xb8] sm:$0xff] 0.0
        %428 = vst [vmem:[#allocation2 + $0xc0] sm:$0xff] 0.0
        %429 = vst [vmem:[#allocation2 + $0xc8] sm:$0xff] 0.0
        %430 = vst [vmem:[#allocation2 + $0xd0] sm:$0xff] 0.0
        %431 = vst [vmem:[#allocation2 + $0xd8] sm:$0xff] 0.0
        %432 = vst [vmem:[#allocation2 + $0xe0] sm:$0xff] 0.0
        %433 = vst [vmem:[#allocation2 + $0xe8] sm:$0xff] 0.0
        %434 = vst [vmem:[#allocation2 + $0xf0] sm:$0xff] 0.0
        %435 = vst [vmem:[#allocation2 + $0xf8] sm:$0xff] 0.0
      $region40: #{ftgan_encoder_atten.8} parent=35 // pred_fallthru
        _
      %p436 = scmp.eq.s32.totalorder %s25, 0
      %p437 = pnand %p436, %p400
      %p438 = pneg %p437
      // Predicated region
      $region41: #{ftgan_encoder_atten.8} parent=35 // pred_check
        _
      $region42: #{ftgan_encoder_atten.8} parent=35 // pred_check_branch
        %440 = sbr.rel (%p437) target = $region44
      $region43: #{ftgan_encoder_atten.8} parent=35 // pred_region
        %441 = vst [vmem:[%s398] sm:$0x3] 0.0
      $region44: #{ftgan_encoder_atten.8} parent=35 // pred_fallthru
        _
      %v442 = vld [vmem:[%s368] sm:$0xf]
      %v443 = vld [vmem:[%s368 + $0x4] sm:$0xf]
      %v444 = vld [vmem:[%s368 + $0x8] sm:$0xf]
      %v445 = vld [vmem:[%s368 + $0xc] sm:$0xf]
      %v446 = vld [vmem:[%s368 + $0x10] sm:$0xf]
      %v447 = vld [vmem:[%s368 + $0x14] sm:$0xf]
      %v448 = vld [vmem:[%s368 + $0x18] sm:$0xf]
      %v449 = vld [vmem:[%s368 + $0x1c] sm:$0xf]
      %v450 = vld [vmem:[%s368 + $0x20] sm:$0xf]
      %v451 = vld [vmem:[%s368 + $0x24] sm:$0xf]
      %v452 = vld [vmem:[%s368 + $0x28] sm:$0xf]
      %v453 = vld [vmem:[%s368 + $0x2c] sm:$0xf]
      %v454 = vld [vmem:[%s368 + $0x30] sm:$0xf]
      %v455 = vld [vmem:[%s368 + $0x34] sm:$0xf]
      %v456 = vld [vmem:[%s368 + $0x38] sm:$0xf]
      %v457 = vld [vmem:[%s368 + $0x3c] sm:$0xf]
      %v458 = vld [vmem:[%s368 + $0x40] sm:$0xf]
      %v459 = vld [vmem:[%s368 + $0x44] sm:$0xf]
      %v460 = vld [vmem:[%s368 + $0x48] sm:$0xf]
      %v461 = vld [vmem:[%s368 + $0x4c] sm:$0xf]
      %v462 = vld [vmem:[%s368 + $0x50] sm:$0xf]
      %v463 = vld [vmem:[%s368 + $0x54] sm:$0xf]
      %v464 = vld [vmem:[%s368 + $0x58] sm:$0xf]
      %v465 = vld [vmem:[%s368 + $0x5c] sm:$0xf]
      %v466 = vld [vmem:[%s368 + $0x60] sm:$0xf]
      %v467 = vld [vmem:[%s368 + $0x64] sm:$0xf]
      %v468 = vld [vmem:[%s368 + $0x68] sm:$0xf]
      %v469 = vld [vmem:[%s368 + $0x6c] sm:$0xf]
      %v470 = vld [vmem:[%s368 + $0x70] sm:$0xf]
      %v471 = vld [vmem:[%s368 + $0x74] sm:$0xf]
      %v472 = vld [vmem:[%s368 + $0x78] sm:$0xf]
      %v473 = vld [vmem:[%s368 + $0x7c] sm:$0xf]
      %v474 = vunpack.c.l.bf16 %v442
      %v475 = vunpack.c.l.bf16 %v443
      %v476 = vunpack.c.l.bf16 %v444
      %v477 = vunpack.c.l.bf16 %v445
      %v478 = vunpack.c.l.bf16 %v446
      %v479 = vunpack.c.l.bf16 %v447
      %v480 = vunpack.c.l.bf16 %v448
      %v481 = vunpack.c.l.bf16 %v449
      %v482 = vunpack.c.l.bf16 %v450
      %v483 = vunpack.c.l.bf16 %v451
      %v484 = vunpack.c.l.bf16 %v452
      %v485 = vunpack.c.l.bf16 %v453
      %v486 = vunpack.c.l.bf16 %v454
      %v487 = vunpack.c.l.bf16 %v455
      %v488 = vunpack.c.l.bf16 %v456
      %v489 = vunpack.c.l.bf16 %v457
      %v490 = vunpack.c.l.bf16 %v458
      %v491 = vunpack.c.l.bf16 %v459
      %v492 = vunpack.c.l.bf16 %v460
      %v493 = vunpack.c.l.bf16 %v461
      %v494 = vunpack.c.l.bf16 %v462
      %v495 = vunpack.c.l.bf16 %v463
      %v496 = vunpack.c.l.bf16 %v464
      %v497 = vunpack.c.l.bf16 %v465
      %v498 = vunpack.c.l.bf16 %v466
      %v499 = vunpack.c.l.bf16 %v467
      %v500 = vunpack.c.l.bf16 %v468
      %v501 = vunpack.c.l.bf16 %v469
      %v502 = vunpack.c.l.bf16 %v470
      %v503 = vunpack.c.l.bf16 %v471
      %v504 = vunpack.c.l.bf16 %v472
      %v505 = vunpack.c.l.bf16 %v473
      %v506 = vld [vmem:[%s350] sm:$0x1]
      %v508 = vlaneseq
      %v509 = vshrl.u32 %v508, 7
      %v510 = vsub.s32 0, %v509
      %v511 = vrot.slane %v506, %v510
      %v513 = vmul.f32 %v474, %v511
      %v514 = vmul.f32 %v475, %v511
      %v515 = vmul.f32 %v476, %v511
      %v516 = vmul.f32 %v477, %v511
      %v517 = vmul.f32 %v478, %v511
      %v518 = vmul.f32 %v479, %v511
      %v519 = vmul.f32 %v480, %v511
      %v520 = vmul.f32 %v481, %v511
      %v521 = vmul.f32 %v482, %v511
      %v522 = vmul.f32 %v483, %v511
      %v523 = vmul.f32 %v484, %v511
      %v524 = vmul.f32 %v485, %v511
      %v525 = vmul.f32 %v486, %v511
      %v526 = vmul.f32 %v487, %v511
      %v527 = vmul.f32 %v488, %v511
      %v528 = vmul.f32 %v489, %v511
      %v529 = vmul.f32 %v490, %v511
      %v530 = vmul.f32 %v491, %v511
      %v531 = vmul.f32 %v492, %v511
      %v532 = vmul.f32 %v493, %v511
      %v533 = vmul.f32 %v494, %v511
      %v534 = vmul.f32 %v495, %v511
      %v535 = vmul.f32 %v496, %v511
      %v536 = vmul.f32 %v497, %v511
      %v537 = vmul.f32 %v498, %v511
      %v538 = vmul.f32 %v499, %v511
      %v539 = vmul.f32 %v500, %v511
      %v540 = vmul.f32 %v501, %v511
      %v541 = vmul.f32 %v502, %v511
      %v542 = vmul.f32 %v503, %v511
      %v543 = vmul.f32 %v504, %v511
      %v544 = vmul.f32 %v505, %v511
      %v545 = vld [vmem:[%s356] sm:$0x1]
      %v547 = vlaneseq
      %v548 = vshrl.u32 %v547, 7
      %v549 = vsub.s32 0, %v548
      %v550 = vrot.slane %v545, %v549
      %v552 = vadd.f32 %v513, %v550
      %v553 = vadd.f32 %v514, %v550
      %v554 = vadd.f32 %v515, %v550
      %v555 = vadd.f32 %v516, %v550
      %v556 = vadd.f32 %v517, %v550
      %v557 = vadd.f32 %v518, %v550
      %v558 = vadd.f32 %v519, %v550
      %v559 = vadd.f32 %v520, %v550
      %v560 = vadd.f32 %v521, %v550
      %v561 = vadd.f32 %v522, %v550
      %v562 = vadd.f32 %v523, %v550
      %v563 = vadd.f32 %v524, %v550
      %v564 = vadd.f32 %v525, %v550
      %v565 = vadd.f32 %v526, %v550
      %v566 = vadd.f32 %v527, %v550
      %v567 = vadd.f32 %v528, %v550
      %v568 = vadd.f32 %v529, %v550
      %v569 = vadd.f32 %v530, %v550
      %v570 = vadd.f32 %v531, %v550
      %v571 = vadd.f32 %v532, %v550
      %v572 = vadd.f32 %v533, %v550
      %v573 = vadd.f32 %v534, %v550
      %v574 = vadd.f32 %v535, %v550
      %v575 = vadd.f32 %v536, %v550
      %v576 = vadd.f32 %v537, %v550
      %v577 = vadd.f32 %v538, %v550
      %v578 = vadd.f32 %v539, %v550
      %v579 = vadd.f32 %v540, %v550
      %v580 = vadd.f32 %v541, %v550
      %v581 = vadd.f32 %v542, %v550
      %v582 = vadd.f32 %v543, %v550
      %v583 = vadd.f32 %v544, %v550
      %v584 = vmax.f32 %v552, 0.0
      %v585 = vmax.f32 %v553, 0.0
      %v586 = vmax.f32 %v554, 0.0
      %v587 = vmax.f32 %v555, 0.0
      %v588 = vmax.f32 %v556, 0.0
      %v589 = vmax.f32 %v557, 0.0
      %v590 = vmax.f32 %v558, 0.0
      %v591 = vmax.f32 %v559, 0.0
      %v592 = vmax.f32 %v560, 0.0
      %v593 = vmax.f32 %v561, 0.0
      %v594 = vmax.f32 %v562, 0.0
      %v595 = vmax.f32 %v563, 0.0
      %v596 = vmax.f32 %v564, 0.0
      %v597 = vmax.f32 %v565, 0.0
      %v598 = vmax.f32 %v566, 0.0
      %v599 = vmax.f32 %v567, 0.0
      %v600 = vmax.f32 %v568, 0.0
      %v601 = vmax.f32 %v569, 0.0
      %v602 = vmax.f32 %v570, 0.0
      %v603 = vmax.f32 %v571, 0.0
      %v604 = vmax.f32 %v572, 0.0
      %v605 = vmax.f32 %v573, 0.0
      %v606 = vmax.f32 %v574, 0.0
      %v607 = vmax.f32 %v575, 0.0
      %v608 = vmax.f32 %v576, 0.0
      %v609 = vmax.f32 %v577, 0.0
      %v610 = vmax.f32 %v578, 0.0
      %v611 = vmax.f32 %v579, 0.0
      %v612 = vmax.f32 %v580, 0.0
      %v613 = vmax.f32 %v581, 0.0
      %v614 = vmax.f32 %v582, 0.0
      %v615 = vmax.f32 %v583, 0.0
      %v616 = vpack.c.bf16 %v585, %v584
      %v617 = vpack.c.bf16 %v587, %v586
      %v618 = vpack.c.bf16 %v589, %v588
      %v619 = vpack.c.bf16 %v591, %v590
      %v620 = vpack.c.bf16 %v593, %v592
      %v621 = vpack.c.bf16 %v595, %v594
      %v622 = vpack.c.bf16 %v597, %v596
      %v623 = vpack.c.bf16 %v599, %v598
      %v624 = vpack.c.bf16 %v601, %v600
      %v625 = vpack.c.bf16 %v603, %v602
      %v626 = vpack.c.bf16 %v605, %v604
      %v627 = vpack.c.bf16 %v607, %v606
      %v628 = vpack.c.bf16 %v609, %v608
      %v629 = vpack.c.bf16 %v611, %v610
      %v630 = vpack.c.bf16 %v613, %v612
      %v631 = vpack.c.bf16 %v615, %v614
      %v632 = vld [vmem:[#allocation2] sm:$0xff]
      %v633 = vld [vmem:[#allocation2 + $0x8] sm:$0xff]
      %v634 = vld [vmem:[#allocation2 + $0x10] sm:$0xff]
      %v635 = vld [vmem:[#allocation2 + $0x18] sm:$0xff]
      %v636 = vld [vmem:[#allocation2 + $0x20] sm:$0xff]
      %v637 = vld [vmem:[#allocation2 + $0x28] sm:$0xff]
      %v638 = vld [vmem:[#allocation2 + $0x30] sm:$0xff]
      %v639 = vld [vmem:[#allocation2 + $0x38] sm:$0xff]
      %v640 = vld [vmem:[#allocation2 + $0x40] sm:$0xff]
      %v641 = vld [vmem:[#allocation2 + $0x48] sm:$0xff]
      %v642 = vld [vmem:[#allocation2 + $0x50] sm:$0xff]
      %v643 = vld [vmem:[#allocation2 + $0x58] sm:$0xff]
      %v644 = vld [vmem:[#allocation2 + $0x60] sm:$0xff]
      %v645 = vld [vmem:[#allocation2 + $0x68] sm:$0xff]
      %v646 = vld [vmem:[#allocation2 + $0x70] sm:$0xff]
      %v647 = vld [vmem:[#allocation2 + $0x78] sm:$0xff]
      %v648 = vld [vmem:[#allocation2 + $0x80] sm:$0xff]
      %v649 = vld [vmem:[#allocation2 + $0x88] sm:$0xff]
      %v650 = vld [vmem:[#allocation2 + $0x90] sm:$0xff]
      %v651 = vld [vmem:[#allocation2 + $0x98] sm:$0xff]
      %v652 = vld [vmem:[#allocation2 + $0xa0] sm:$0xff]
      %v653 = vld [vmem:[#allocation2 + $0xa8] sm:$0xff]
      %v654 = vld [vmem:[#allocation2 + $0xb0] sm:$0xff]
      %v655 = vld [vmem:[#allocation2 + $0xb8] sm:$0xff]
      %v656 = vld [vmem:[#allocation2 + $0xc0] sm:$0xff]
      %v657 = vld [vmem:[#allocation2 + $0xc8] sm:$0xff]
      %v658 = vld [vmem:[#allocation2 + $0xd0] sm:$0xff]
      %v659 = vld [vmem:[#allocation2 + $0xd8] sm:$0xff]
      %v660 = vld [vmem:[#allocation2 + $0xe0] sm:$0xff]
      %v661 = vld [vmem:[#allocation2 + $0xe8] sm:$0xff]
      %v662 = vld [vmem:[#allocation2 + $0xf0] sm:$0xff]
      %v663 = vld [vmem:[#allocation2 + $0xf8] sm:$0xff]
      %v664 = vld [vmem:[%s377] sm:$0xf]
      %v665 = vld [vmem:[%s377 + $0x4] sm:$0xf]
      %v666 = vld [vmem:[%s377 + $0x8] sm:$0xf]
      %v667 = vld [vmem:[%s377 + $0xc] sm:$0xf]
      %v668 = vld [vmem:[%s377 + $0x10] sm:$0xf]
      %v669 = vld [vmem:[%s377 + $0x14] sm:$0xf]
      %v670 = vld [vmem:[%s377 + $0x18] sm:$0xf]
      %v671 = vld [vmem:[%s377 + $0x1c] sm:$0xf]
      %v672 = vld [vmem:[%s377 + $0x20] sm:$0xf]
      %v673 = vld [vmem:[%s377 + $0x24] sm:$0xf]
      %v674 = vld [vmem:[%s377 + $0x28] sm:$0xf]
      %v675 = vld [vmem:[%s377 + $0x2c] sm:$0xf]
      %v676 = vld [vmem:[%s377 + $0x30] sm:$0xf]
      %v677 = vld [vmem:[%s377 + $0x34] sm:$0xf]
      %v678 = vld [vmem:[%s377 + $0x38] sm:$0xf]
      %v679 = vld [vmem:[%s377 + $0x3c] sm:$0xf]
      %v696 = vunpack.c.l.b16 %v664
      %v697 = vunpack.c.l.b16 %v665
      %v698 = vunpack.c.l.b16 %v666
      %v699 = vunpack.c.l.b16 %v667
      %v700 = vunpack.c.l.b16 %v668
      %v701 = vunpack.c.l.b16 %v669
      %v702 = vunpack.c.l.b16 %v670
      %v703 = vunpack.c.l.b16 %v671
      %v704 = vunpack.c.l.b16 %v672
      %v705 = vunpack.c.l.b16 %v673
      %v706 = vunpack.c.l.b16 %v674
      %v707 = vunpack.c.l.b16 %v675
      %v708 = vunpack.c.l.b16 %v676
      %v709 = vunpack.c.l.b16 %v677
      %v710 = vunpack.c.l.b16 %v678
      %v711 = vunpack.c.l.b16 %v679
      %v712 = vpack.c.b16 %v697, %v696
      %v713 = vpack.c.b16 %v699, %v698
      %v714 = vpack.c.b16 %v701, %v700
      %v715 = vpack.c.b16 %v703, %v702
      %v716 = vpack.c.b16 %v705, %v704
      %v717 = vpack.c.b16 %v707, %v706
      %v718 = vpack.c.b16 %v709, %v708
      %v719 = vpack.c.b16 %v711, %v710
      %728 = vmatprep.subr.bf16.mxu0 0
      %729 = vmatpush1.bf16.msra.mxu0 %v719
      %730 = vmatprep.subr.bf16.mxu0 0
      %731 = vmatpush1.bf16.msra.mxu0 %v718
      %732 = vmatprep.subr.bf16.mxu0 0
      %733 = vmatpush1.bf16.msra.mxu0 %v717
      %734 = vmatprep.subr.bf16.mxu0 0
      %735 = vmatpush1.bf16.msra.mxu0 %v716
      %736 = vmatprep.subr.bf16.mxu0 0
      %737 = vmatpush1.bf16.msra.mxu0 %v715
      %738 = vmatprep.subr.bf16.mxu0 0
      %739 = vmatpush1.bf16.msra.mxu0 %v714
      %740 = vmatprep.subr.bf16.mxu0 0
      %741 = vmatpush1.bf16.msra.mxu0 %v713
      %742 = vmatprep.subr.bf16.mxu0 0
      %743 = vmatpush1.bf16.msra.mxu0 %v712
      %744 = vmatprep.subr.bf16.mxu0 0
      %745 = vmatpush2.bf16.msra.mxu0 0
      %746 = vmatprep.subr.bf16.mxu0 0
      %747 = vmatpush2.bf16.msra.mxu0 0
      %748 = vmatprep.subr.bf16.mxu0 0
      %749 = vmatpush2.bf16.msra.mxu0 0
      %750 = vmatprep.subr.bf16.mxu0 0
      %751 = vmatpush2.bf16.msra.mxu0 0
      %752 = vmatprep.subr.bf16.mxu0 0
      %753 = vmatpush2.bf16.msra.mxu0 0
      %754 = vmatprep.subr.bf16.mxu0 0
      %755 = vmatpush2.bf16.msra.mxu0 0
      %756 = vmatprep.subr.bf16.mxu0 0
      %757 = vmatpush2.bf16.msra.mxu0 0
      %758 = vmatprep.subr.bf16.mxu0 0
      %759 = vmatpush2.bf16.msra.mxu0 0
      %760 = vmatprep.mubr.bf16.mxu0 0
      %761 = vmatmul.mubr.bf16.gmra.mxu0 %v616
      %v762 = vpop.f32.mrf.mxu0
      %v763 = vadd.f32 0.0, %v762
      %v764 = vpop.f32.mrf.mxu0
      %v765 = vpop.f32.mrf.mxu0
      %v766 = vadd.f32 0.0, %v765
      %v767 = vpop.f32.mrf.mxu0
      %768 = vmatprep.mubr.bf16.mxu0 0
      %769 = vmatmul.mubr.bf16.gmra.mxu0 %v617
      %v770 = vpop.f32.mrf.mxu0
      %v771 = vadd.f32 0.0, %v770
      %v772 = vpop.f32.mrf.mxu0
      %v773 = vpop.f32.mrf.mxu0
      %v774 = vadd.f32 0.0, %v773
      %v775 = vpop.f32.mrf.mxu0
      %776 = vmatprep.mubr.bf16.mxu0 0
      %777 = vmatmul.mubr.bf16.gmra.mxu0 %v618
      %v778 = vpop.f32.mrf.mxu0
      %v779 = vadd.f32 0.0, %v778
      %v780 = vpop.f32.mrf.mxu0
      %v781 = vpop.f32.mrf.mxu0
      %v782 = vadd.f32 0.0, %v781
      %v783 = vpop.f32.mrf.mxu0
      %784 = vmatprep.mubr.bf16.mxu0 0
      %785 = vmatmul.mubr.bf16.gmra.mxu0 %v619
      %v786 = vpop.f32.mrf.mxu0
      %v787 = vadd.f32 0.0, %v786
      %v788 = vpop.f32.mrf.mxu0
      %v789 = vpop.f32.mrf.mxu0
      %v790 = vadd.f32 0.0, %v789
      %v791 = vpop.f32.mrf.mxu0
      %792 = vmatprep.mubr.bf16.mxu0 0
      %793 = vmatmul.mubr.bf16.gmra.mxu0 %v620
      %v794 = vpop.f32.mrf.mxu0
      %v795 = vadd.f32 0.0, %v794
      %v796 = vpop.f32.mrf.mxu0
      %v797 = vpop.f32.mrf.mxu0
      %v798 = vadd.f32 0.0, %v797
      %v799 = vpop.f32.mrf.mxu0
      %800 = vmatprep.mubr.bf16.mxu0 0
      %801 = vmatmul.mubr.bf16.gmra.mxu0 %v621
      %v802 = vpop.f32.mrf.mxu0
      %v803 = vadd.f32 0.0, %v802
      %v804 = vpop.f32.mrf.mxu0
      %v805 = vpop.f32.mrf.mxu0
      %v806 = vadd.f32 0.0, %v805
      %v807 = vpop.f32.mrf.mxu0
      %808 = vmatprep.mubr.bf16.mxu0 0
      %809 = vmatmul.mubr.bf16.gmra.mxu0 %v622
      %v810 = vpop.f32.mrf.mxu0
      %v811 = vadd.f32 0.0, %v810
      %v812 = vpop.f32.mrf.mxu0
      %v813 = vpop.f32.mrf.mxu0
      %v814 = vadd.f32 0.0, %v813
      %v815 = vpop.f32.mrf.mxu0
      %816 = vmatprep.mubr.bf16.mxu0 0
      %817 = vmatmul.mubr.bf16.gmra.mxu0 %v623
      %v818 = vpop.f32.mrf.mxu0
      %v819 = vadd.f32 0.0, %v818
      %v820 = vpop.f32.mrf.mxu0
      %v821 = vpop.f32.mrf.mxu0
      %v822 = vadd.f32 0.0, %v821
      %v823 = vpop.f32.mrf.mxu0
      %824 = vmatprep.mubr.bf16.mxu0 0
      %825 = vmatmul.mubr.bf16.gmra.mxu0 %v624
      %v826 = vpop.f32.mrf.mxu0
      %v827 = vadd.f32 0.0, %v826
      %v828 = vpop.f32.mrf.mxu0
      %v829 = vpop.f32.mrf.mxu0
      %v830 = vadd.f32 0.0, %v829
      %v831 = vpop.f32.mrf.mxu0
      %832 = vmatprep.mubr.bf16.mxu0 0
      %833 = vmatmul.mubr.bf16.gmra.mxu0 %v625
      %v834 = vpop.f32.mrf.mxu0
      %v835 = vadd.f32 0.0, %v834
      %v836 = vpop.f32.mrf.mxu0
      %v837 = vpop.f32.mrf.mxu0
      %v838 = vadd.f32 0.0, %v837
      %v839 = vpop.f32.mrf.mxu0
      %840 = vmatprep.mubr.bf16.mxu0 0
      %841 = vmatmul.mubr.bf16.gmra.mxu0 %v626
      %v842 = vpop.f32.mrf.mxu0
      %v843 = vadd.f32 0.0, %v842
      %v844 = vpop.f32.mrf.mxu0
      %v845 = vpop.f32.mrf.mxu0
      %v846 = vadd.f32 0.0, %v845
      %v847 = vpop.f32.mrf.mxu0
      %848 = vmatprep.mubr.bf16.mxu0 0
      %849 = vmatmul.mubr.bf16.gmra.mxu0 %v627
      %v850 = vpop.f32.mrf.mxu0
      %v851 = vadd.f32 0.0, %v850
      %v852 = vpop.f32.mrf.mxu0
      %v853 = vpop.f32.mrf.mxu0
      %v854 = vadd.f32 0.0, %v853
      %v855 = vpop.f32.mrf.mxu0
      %856 = vmatprep.mubr.bf16.mxu0 0
      %857 = vmatmul.mubr.bf16.gmra.mxu0 %v628
      %v858 = vpop.f32.mrf.mxu0
      %v859 = vadd.f32 0.0, %v858
      %v860 = vpop.f32.mrf.mxu0
      %v861 = vpop.f32.mrf.mxu0
      %v862 = vadd.f32 0.0, %v861
      %v863 = vpop.f32.mrf.mxu0
      %864 = vmatprep.mubr.bf16.mxu0 0
      %865 = vmatmul.mubr.bf16.gmra.mxu0 %v629
      %v866 = vpop.f32.mrf.mxu0
      %v867 = vadd.f32 0.0, %v866
      %v868 = vpop.f32.mrf.mxu0
      %v869 = vpop.f32.mrf.mxu0
      %v870 = vadd.f32 0.0, %v869
      %v871 = vpop.f32.mrf.mxu0
      %872 = vmatprep.mubr.bf16.mxu0 0
      %873 = vmatmul.mubr.bf16.gmra.mxu0 %v630
      %v874 = vpop.f32.mrf.mxu0
      %v875 = vadd.f32 0.0, %v874
      %v876 = vpop.f32.mrf.mxu0
      %v877 = vpop.f32.mrf.mxu0
      %v878 = vadd.f32 0.0, %v877
      %v879 = vpop.f32.mrf.mxu0
      %880 = vmatprep.mubr.bf16.mxu0 0
      %881 = vmatmul.mubr.bf16.gmra.mxu0 %v631
      %v882 = vpop.f32.mrf.mxu0
      %v883 = vadd.f32 0.0, %v882
      %v884 = vpop.f32.mrf.mxu0
      %v885 = vpop.f32.mrf.mxu0
      %v886 = vadd.f32 0.0, %v885
      %v887 = vpop.f32.mrf.mxu0
      %888 = vdwg.mxu0
      %v889 = vadd.f32 %v632, %v763
      %v890 = vadd.f32 %v633, %v766
      %v891 = vadd.f32 %v634, %v771
      %v892 = vadd.f32 %v635, %v774
      %v893 = vadd.f32 %v636, %v779
      %v894 = vadd.f32 %v637, %v782
      %v895 = vadd.f32 %v638, %v787
      %v896 = vadd.f32 %v639, %v790
      %v897 = vadd.f32 %v640, %v795
      %v898 = vadd.f32 %v641, %v798
      %v899 = vadd.f32 %v642, %v803
      %v900 = vadd.f32 %v643, %v806
      %v901 = vadd.f32 %v644, %v811
      %v902 = vadd.f32 %v645, %v814
      %v903 = vadd.f32 %v646, %v819
      %v904 = vadd.f32 %v647, %v822
      %v905 = vadd.f32 %v648, %v827
      %v906 = vadd.f32 %v649, %v830
      %v907 = vadd.f32 %v650, %v835
      %v908 = vadd.f32 %v651, %v838
      %v909 = vadd.f32 %v652, %v843
      %v910 = vadd.f32 %v653, %v846
      %v911 = vadd.f32 %v654, %v851
      %v912 = vadd.f32 %v655, %v854
      %v913 = vadd.f32 %v656, %v859
      %v914 = vadd.f32 %v657, %v862
      %v915 = vadd.f32 %v658, %v867
      %v916 = vadd.f32 %v659, %v870
      %v917 = vadd.f32 %v660, %v875
      %v918 = vadd.f32 %v661, %v878
      %v919 = vadd.f32 %v662, %v883
      %v920 = vadd.f32 %v663, %v886
      %921 = vst [vmem:[#allocation2] sm:$0xff] %v889
      %922 = vst [vmem:[#allocation2 + $0x8] sm:$0xff] %v890
      %923 = vst [vmem:[#allocation2 + $0x10] sm:$0xff] %v891
      %924 = vst [vmem:[#allocation2 + $0x18] sm:$0xff] %v892
      %925 = vst [vmem:[#allocation2 + $0x20] sm:$0xff] %v893
      %926 = vst [vmem:[#allocation2 + $0x28] sm:$0xff] %v894
      %927 = vst [vmem:[#allocation2 + $0x30] sm:$0xff] %v895
      %928 = vst [vmem:[#allocation2 + $0x38] sm:$0xff] %v896
      %929 = vst [vmem:[#allocation2 + $0x40] sm:$0xff] %v897
      %930 = vst [vmem:[#allocation2 + $0x48] sm:$0xff] %v898
      %931 = vst [vmem:[#allocation2 + $0x50] sm:$0xff] %v899
      %932 = vst [vmem:[#allocation2 + $0x58] sm:$0xff] %v900
      %933 = vst [vmem:[#allocation2 + $0x60] sm:$0xff] %v901
      %934 = vst [vmem:[#allocation2 + $0x68] sm:$0xff] %v902
      %935 = vst [vmem:[#allocation2 + $0x70] sm:$0xff] %v903
      %936 = vst [vmem:[#allocation2 + $0x78] sm:$0xff] %v904
      %937 = vst [vmem:[#allocation2 + $0x80] sm:$0xff] %v905
      %938 = vst [vmem:[#allocation2 + $0x88] sm:$0xff] %v906
      %939 = vst [vmem:[#allocation2 + $0x90] sm:$0xff] %v907
      %940 = vst [vmem:[#allocation2 + $0x98] sm:$0xff] %v908
      %941 = vst [vmem:[#allocation2 + $0xa0] sm:$0xff] %v909
      %942 = vst [vmem:[#allocation2 + $0xa8] sm:$0xff] %v910
      %943 = vst [vmem:[#allocation2 + $0xb0] sm:$0xff] %v911
      %944 = vst [vmem:[#allocation2 + $0xb8] sm:$0xff] %v912
      %945 = vst [vmem:[#allocation2 + $0xc0] sm:$0xff] %v913
      %946 = vst [vmem:[#allocation2 + $0xc8] sm:$0xff] %v914
      %947 = vst [vmem:[#allocation2 + $0xd0] sm:$0xff] %v915
      %948 = vst [vmem:[#allocation2 + $0xd8] sm:$0xff] %v916
      %949 = vst [vmem:[#allocation2 + $0xe0] sm:$0xff] %v917
      %950 = vst [vmem:[#allocation2 + $0xe8] sm:$0xff] %v918
      %951 = vst [vmem:[#allocation2 + $0xf0] sm:$0xff] %v919
      %952 = vst [vmem:[#allocation2 + $0xf8] sm:$0xff] %v920
      // Predicated region
      $region45: #{ftgan_encoder_atten.8} parent=35 // pred_check
        %p953 = pneg %p400
      $region46: #{ftgan_encoder_atten.8} parent=35 // pred_check_branch
        %955 = sbr.rel (%p953) target = $region48
      $region47: #{ftgan_encoder_atten.8} parent=35 // pred_region
        %v956 = vld [vmem:[#allocation2] sm:$0xff]
        %v957 = vld [vmem:[#allocation2 + $0x8] sm:$0xff]
        %v958 = vld [vmem:[#allocation2 + $0x10] sm:$0xff]
        %v959 = vld [vmem:[#allocation2 + $0x18] sm:$0xff]
        %v960 = vld [vmem:[#allocation2 + $0x20] sm:$0xff]
        %v961 = vld [vmem:[#allocation2 + $0x28] sm:$0xff]
        %v962 = vld [vmem:[#allocation2 + $0x30] sm:$0xff]
        %v963 = vld [vmem:[#allocation2 + $0x38] sm:$0xff]
        %v964 = vld [vmem:[#allocation2 + $0x40] sm:$0xff]
        %v965 = vld [vmem:[#allocation2 + $0x48] sm:$0xff]
        %v966 = vld [vmem:[#allocation2 + $0x50] sm:$0xff]
        %v967 = vld [vmem:[#allocation2 + $0x58] sm:$0xff]
        %v968 = vld [vmem:[#allocation2 + $0x60] sm:$0xff]
        %v969 = vld [vmem:[#allocation2 + $0x68] sm:$0xff]
        %v970 = vld [vmem:[#allocation2 + $0x70] sm:$0xff]
        %v971 = vld [vmem:[#allocation2 + $0x78] sm:$0xff]
        %v972 = vld [vmem:[#allocation2 + $0x80] sm:$0xff]
        %v973 = vld [vmem:[#allocation2 + $0x88] sm:$0xff]
        %v974 = vld [vmem:[#allocation2 + $0x90] sm:$0xff]
        %v975 = vld [vmem:[#allocation2 + $0x98] sm:$0xff]
        %v976 = vld [vmem:[#allocation2 + $0xa0] sm:$0xff]
        %v977 = vld [vmem:[#allocation2 + $0xa8] sm:$0xff]
        %v978 = vld [vmem:[#allocation2 + $0xb0] sm:$0xff]
        %v979 = vld [vmem:[#allocation2 + $0xb8] sm:$0xff]
        %v980 = vld [vmem:[#allocation2 + $0xc0] sm:$0xff]
        %v981 = vld [vmem:[#allocation2 + $0xc8] sm:$0xff]
        %v982 = vld [vmem:[#allocation2 + $0xd0] sm:$0xff]
        %v983 = vld [vmem:[#allocation2 + $0xd8] sm:$0xff]
        %v984 = vld [vmem:[#allocation2 + $0xe0] sm:$0xff]
        %v985 = vld [vmem:[#allocation2 + $0xe8] sm:$0xff]
        %v986 = vld [vmem:[#allocation2 + $0xf0] sm:$0xff]
        %v987 = vld [vmem:[#allocation2 + $0xf8] sm:$0xff]
        %v988 = vpack.c.bf16 %v957, %v956
        %v989 = vpack.c.bf16 %v959, %v958
        %v990 = vpack.c.bf16 %v961, %v960
        %v991 = vpack.c.bf16 %v963, %v962
        %v992 = vpack.c.bf16 %v965, %v964
        %v993 = vpack.c.bf16 %v967, %v966
        %v994 = vpack.c.bf16 %v969, %v968
        %v995 = vpack.c.bf16 %v971, %v970
        %v996 = vpack.c.bf16 %v973, %v972
        %v997 = vpack.c.bf16 %v975, %v974
        %v998 = vpack.c.bf16 %v977, %v976
        %v999 = vpack.c.bf16 %v979, %v978
        %v1000 = vpack.c.bf16 %v981, %v980
        %v1001 = vpack.c.bf16 %v983, %v982
        %v1002 = vpack.c.bf16 %v985, %v984
        %v1003 = vpack.c.bf16 %v987, %v986
        %v1020 = vunpack.c.l.b16 %v988
        %v1021 = vunpack.c.h.b16 %v988
        %v1022 = vunpack.c.l.b16 %v989
        %v1023 = vunpack.c.h.b16 %v989
        %v1024 = vunpack.c.l.b16 %v990
        %v1025 = vunpack.c.h.b16 %v990
        %v1026 = vunpack.c.l.b16 %v991
        %v1027 = vunpack.c.h.b16 %v991
        %v1028 = vunpack.c.l.b16 %v992
        %v1029 = vunpack.c.h.b16 %v992
        %v1030 = vunpack.c.l.b16 %v993
        %v1031 = vunpack.c.h.b16 %v993
        %v1032 = vunpack.c.l.b16 %v994
        %v1033 = vunpack.c.h.b16 %v994
        %v1034 = vunpack.c.l.b16 %v995
        %v1035 = vunpack.c.h.b16 %v995
        %v1036 = vunpack.c.l.b16 %v996
        %v1037 = vunpack.c.h.b16 %v996
        %v1038 = vunpack.c.l.b16 %v997
        %v1039 = vunpack.c.h.b16 %v997
        %v1040 = vunpack.c.l.b16 %v998
        %v1041 = vunpack.c.h.b16 %v998
        %v1042 = vunpack.c.l.b16 %v999
        %v1043 = vunpack.c.h.b16 %v999
        %v1044 = vunpack.c.l.b16 %v1000
        %v1045 = vunpack.c.h.b16 %v1000
        %v1046 = vunpack.c.l.b16 %v1001
        %v1047 = vunpack.c.h.b16 %v1001
        %v1048 = vunpack.c.l.b16 %v1002
        %v1049 = vunpack.c.h.b16 %v1002
        %v1050 = vunpack.c.l.b16 %v1003
        %v1051 = vunpack.c.h.b16 %v1003
        %v1052 = vpack.c.b16 %v1020, %v1020
        %v1053 = vpack.c.b16 %v1021, %v1021
        %v1054 = vpack.c.b16 %v1022, %v1022
        %v1055 = vpack.c.b16 %v1023, %v1023
        %v1056 = vpack.c.b16 %v1024, %v1024
        %v1057 = vpack.c.b16 %v1025, %v1025
        %v1058 = vpack.c.b16 %v1026, %v1026
        %v1059 = vpack.c.b16 %v1027, %v1027
        %v1060 = vpack.c.b16 %v1028, %v1028
        %v1061 = vpack.c.b16 %v1029, %v1029
        %v1062 = vpack.c.b16 %v1030, %v1030
        %v1063 = vpack.c.b16 %v1031, %v1031
        %v1064 = vpack.c.b16 %v1032, %v1032
        %v1065 = vpack.c.b16 %v1033, %v1033
        %v1066 = vpack.c.b16 %v1034, %v1034
        %v1067 = vpack.c.b16 %v1035, %v1035
        %v1068 = vpack.c.b16 %v1036, %v1036
        %v1069 = vpack.c.b16 %v1037, %v1037
        %v1070 = vpack.c.b16 %v1038, %v1038
        %v1071 = vpack.c.b16 %v1039, %v1039
        %v1072 = vpack.c.b16 %v1040, %v1040
        %v1073 = vpack.c.b16 %v1041, %v1041
        %v1074 = vpack.c.b16 %v1042, %v1042
        %v1075 = vpack.c.b16 %v1043, %v1043
        %v1076 = vpack.c.b16 %v1044, %v1044
        %v1077 = vpack.c.b16 %v1045, %v1045
        %v1078 = vpack.c.b16 %v1046, %v1046
        %v1079 = vpack.c.b16 %v1047, %v1047
        %v1080 = vpack.c.b16 %v1048, %v1048
        %v1081 = vpack.c.b16 %v1049, %v1049
        %v1082 = vpack.c.b16 %v1050, %v1050
        %v1083 = vpack.c.b16 %v1051, %v1051
        %1116 = vst [vmem:[%s390] sm:$0xf] %v1052
        %1117 = vst [vmem:[%s390 + $0x4] sm:$0xf] %v1053
        %1118 = vst [vmem:[%s390 + $0x8] sm:$0xf] %v1054
        %1119 = vst [vmem:[%s390 + $0xc] sm:$0xf] %v1055
        %1120 = vst [vmem:[%s390 + $0x10] sm:$0xf] %v1056
        %1121 = vst [vmem:[%s390 + $0x14] sm:$0xf] %v1057
        %1122 = vst [vmem:[%s390 + $0x18] sm:$0xf] %v1058
        %1123 = vst [vmem:[%s390 + $0x1c] sm:$0xf] %v1059
        %1124 = vst [vmem:[%s390 + $0x20] sm:$0xf] %v1060
        %1125 = vst [vmem:[%s390 + $0x24] sm:$0xf] %v1061
        %1126 = vst [vmem:[%s390 + $0x28] sm:$0xf] %v1062
        %1127 = vst [vmem:[%s390 + $0x2c] sm:$0xf] %v1063
        %1128 = vst [vmem:[%s390 + $0x30] sm:$0xf] %v1064
        %1129 = vst [vmem:[%s390 + $0x34] sm:$0xf] %v1065
        %1130 = vst [vmem:[%s390 + $0x38] sm:$0xf] %v1066
        %1131 = vst [vmem:[%s390 + $0x3c] sm:$0xf] %v1067
        %1132 = vst [vmem:[%s390 + $0x40] sm:$0xf] %v1068
        %1133 = vst [vmem:[%s390 + $0x44] sm:$0xf] %v1069
        %1134 = vst [vmem:[%s390 + $0x48] sm:$0xf] %v1070
        %1135 = vst [vmem:[%s390 + $0x4c] sm:$0xf] %v1071
        %1136 = vst [vmem:[%s390 + $0x50] sm:$0xf] %v1072
        %1137 = vst [vmem:[%s390 + $0x54] sm:$0xf] %v1073
        %1138 = vst [vmem:[%s390 + $0x58] sm:$0xf] %v1074
        %1139 = vst [vmem:[%s390 + $0x5c] sm:$0xf] %v1075
        %1140 = vst [vmem:[%s390 + $0x60] sm:$0xf] %v1076
        %1141 = vst [vmem:[%s390 + $0x64] sm:$0xf] %v1077
        %1142 = vst [vmem:[%s390 + $0x68] sm:$0xf] %v1078
        %1143 = vst [vmem:[%s390 + $0x6c] sm:$0xf] %v1079
        %1144 = vst [vmem:[%s390 + $0x70] sm:$0xf] %v1080
        %1145 = vst [vmem:[%s390 + $0x74] sm:$0xf] %v1081
        %1146 = vst [vmem:[%s390 + $0x78] sm:$0xf] %v1082
        %1147 = vst [vmem:[%s390 + $0x7c] sm:$0xf] %v1083
        %v1148 = vld [vmem:[%s398] sm:$0x1]
        %v1149 = vadd.f32 %v956, %v957
        %v1150 = vadd.f32 %v1149, %v958
        %v1151 = vadd.f32 %v1150, %v959
        %v1152 = vadd.f32 %v1151, %v960
        %v1153 = vadd.f32 %v1152, %v961
        %v1154 = vadd.f32 %v1153, %v962
        %v1155 = vadd.f32 %v1154, %v963
        %v1156 = vadd.f32 %v1155, %v964
        %v1157 = vadd.f32 %v1156, %v965
        %v1158 = vadd.f32 %v1157, %v966
        %v1159 = vadd.f32 %v1158, %v967
        %v1160 = vadd.f32 %v1159, %v968
        %v1161 = vadd.f32 %v1160, %v969
        %v1162 = vadd.f32 %v1161, %v970
        %v1163 = vadd.f32 %v1162, %v971
        %v1164 = vadd.f32 %v1163, %v972
        %v1165 = vadd.f32 %v1164, %v973
        %v1166 = vadd.f32 %v1165, %v974
        %v1167 = vadd.f32 %v1166, %v975
        %v1168 = vadd.f32 %v1167, %v976
        %v1169 = vadd.f32 %v1168, %v977
        %v1170 = vadd.f32 %v1169, %v978
        %v1171 = vadd.f32 %v1170, %v979
        %v1172 = vadd.f32 %v1171, %v980
        %v1173 = vadd.f32 %v1172, %v981
        %v1174 = vadd.f32 %v1173, %v982
        %v1175 = vadd.f32 %v1174, %v983
        %v1176 = vadd.f32 %v1175, %v984
        %v1177 = vadd.f32 %v1176, %v985
        %v1178 = vadd.f32 %v1177, %v986
        %v1179 = vadd.f32 %v1178, %v987
        %v1180 = vrot.slane %v1179, 4
        %v1181 = vadd.f32 %v1179, %v1180
        %v1182 = vrot.slane %v1181, 2
        %v1183 = vadd.f32 %v1181, %v1182
        %v1184 = vrot.slane %v1183, 1
        %v1185 = vadd.f32 %v1183, %v1184
        %v1186 = vadd.f32 %v1148, %v1185
        %1187 = vst [vmem:[%s398] sm:$0x1] %v1186
        %v1188 = vld [vmem:[%s398 + $0x1] sm:$0x1]
        %v1189 = vmul.f32 %v956, %v956
        %v1190 = vmul.f32 %v957, %v957
        %v1191 = vmul.f32 %v958, %v958
        %v1192 = vmul.f32 %v959, %v959
        %v1193 = vmul.f32 %v960, %v960
        %v1194 = vmul.f32 %v961, %v961
        %v1195 = vmul.f32 %v962, %v962
        %v1196 = vmul.f32 %v963, %v963
        %v1197 = vmul.f32 %v964, %v964
        %v1198 = vmul.f32 %v965, %v965
        %v1199 = vmul.f32 %v966, %v966
        %v1200 = vmul.f32 %v967, %v967
        %v1201 = vmul.f32 %v968, %v968
        %v1202 = vmul.f32 %v969, %v969
        %v1203 = vmul.f32 %v970, %v970
        %v1204 = vmul.f32 %v971, %v971
        %v1205 = vmul.f32 %v972, %v972
        %v1206 = vmul.f32 %v973, %v973
        %v1207 = vmul.f32 %v974, %v974
        %v1208 = vmul.f32 %v975, %v975
        %v1209 = vmul.f32 %v976, %v976
        %v1210 = vmul.f32 %v977, %v977
        %v1211 = vmul.f32 %v978, %v978
        %v1212 = vmul.f32 %v979, %v979
        %v1213 = vmul.f32 %v980, %v980
        %v1214 = vmul.f32 %v981, %v981
        %v1215 = vmul.f32 %v982, %v982
        %v1216 = vmul.f32 %v983, %v983
        %v1217 = vmul.f32 %v984, %v984
        %v1218 = vmul.f32 %v985, %v985
        %v1219 = vmul.f32 %v986, %v986
        %v1220 = vmul.f32 %v987, %v987
        %v1221 = vadd.f32 %v1189, %v1190
        %v1222 = vadd.f32 %v1221, %v1191
        %v1223 = vadd.f32 %v1222, %v1192
        %v1224 = vadd.f32 %v1223, %v1193
        %v1225 = vadd.f32 %v1224, %v1194
        %v1226 = vadd.f32 %v1225, %v1195
        %v1227 = vadd.f32 %v1226, %v1196
        %v1228 = vadd.f32 %v1227, %v1197
        %v1229 = vadd.f32 %v1228, %v1198
        %v1230 = vadd.f32 %v1229, %v1199
        %v1231 = vadd.f32 %v1230, %v1200
        %v1232 = vadd.f32 %v1231, %v1201
        %v1233 = vadd.f32 %v1232, %v1202
        %v1234 = vadd.f32 %v1233, %v1203
        %v1235 = vadd.f32 %v1234, %v1204
        %v1236 = vadd.f32 %v1235, %v1205
        %v1237 = vadd.f32 %v1236, %v1206
        %v1238 = vadd.f32 %v1237, %v1207
        %v1239 = vadd.f32 %v1238, %v1208
        %v1240 = vadd.f32 %v1239, %v1209
        %v1241 = vadd.f32 %v1240, %v1210
        %v1242 = vadd.f32 %v1241, %v1211
        %v1243 = vadd.f32 %v1242, %v1212
        %v1244 = vadd.f32 %v1243, %v1213
        %v1245 = vadd.f32 %v1244, %v1214
        %v1246 = vadd.f32 %v1245, %v1215
        %v1247 = vadd.f32 %v1246, %v1216
        %v1248 = vadd.f32 %v1247, %v1217
        %v1249 = vadd.f32 %v1248, %v1218
        %v1250 = vadd.f32 %v1249, %v1219
        %v1251 = vadd.f32 %v1250, %v1220
        %v1252 = vrot.slane %v1251, 4
        %v1253 = vadd.f32 %v1251, %v1252
        %v1254 = vrot.slane %v1253, 2
        %v1255 = vadd.f32 %v1253, %v1254
        %v1256 = vrot.slane %v1255, 1
        %v1257 = vadd.f32 %v1255, %v1256
        %v1258 = vadd.f32 %v1188, %v1257
        %1259 = vst [vmem:[%s398 + $0x1] sm:$0x1] %v1258
      $region48: #{ftgan_encoder_atten.8} parent=35 // pred_fallthru
        _
      %s1260 = smul.u32 32, %s25
      %p1261 = scmp.lt.s32.totalorder %s23, 1
      %s1262 = scalar_select %p1261, %s23, 1
      %p1263 = scmp.lt.s32.totalorder %s1260, 31
      %s1264 = scalar_select %p1263, %s1260, 31
      %p1265 = scmp.lt.s32.totalorder %s24, 0
      %s1266 = scalar_select %p1265, %s24, 0
      %s1267 = sadd.s32 %s1266, %s1264
      %s1268 = smul.addr %s1262, 32
      %s1269 = sadd.s32 %s1267, %s1268
      %s1270 = smul.addr %s1269, 4
      %s1271 = scalar_lea.vmem %s4, %s1270
      %p1272 = scmp.lt.s32.totalorder %s23, 1
      %s1273 = scalar_select %p1272, %s23, 1
      %p1274 = scmp.lt.s32.totalorder %s24, 0
      %s1275 = scalar_select %p1274, %s24, 0
      %s1276 = sadd.s32 %s1275, %s1273
      %s1277 = smul.addr %s1276, 2
      %s1278 = scalar_lea.vmem %s5, %s1277
      // Predicated region
      $region49: #{ftgan_encoder_atten.8} parent=35 // pred_check
        %p1279 = pneg %p179
      $region50: #{ftgan_encoder_atten.8} parent=35 // pred_check_branch
        %1281 = sbr.rel (%p1279) target = $region52
      $region51: #{ftgan_encoder_atten.8} parent=35 // pred_region
        %s1282 = smul.u32 32, %s25
      $region52: #{ftgan_encoder_atten.8} parent=35 // pred_fallthru
        _
      // Predicated region
      $region53: #{ftgan_encoder_atten.8} parent=35 // pred_check
        %p1283 = pneg %p207
      $region54: #{ftgan_encoder_atten.8} parent=35 // pred_check_branch
        %1285 = sbr.rel (%p1283) target = $region56
      $region55: #{ftgan_encoder_atten.8} parent=35 // pred_region
        _
      $region56: #{ftgan_encoder_atten.8} parent=35 // pred_fallthru
        _
    $region36: #{ftgan_encoder_atten.8} parent=5 // pred_fallthru
      _
    %p1286 = scmp.le.s32.totalorder 2, %s12
    // Predicated region
    $region57: #{ftgan_encoder_atten.8} parent=5 // pred_check
      %p1287 = pneg %p1286
    $region58: #{ftgan_encoder_atten.8} parent=5 // pred_check_branch
      %1289 = sbr.rel (%p1287) target = $region60
    $region59: #{ftgan_encoder_atten.8} parent=5 // pred_region
      %s1290 = ssub.s32 %s12, 2
      // Predicated region
      $region61: #{ftgan_encoder_atten.8} parent=59 // pred_check
        %p1291 = pneg %p185
      $region62: #{ftgan_encoder_atten.8} parent=59 // pred_check_branch
        %1293 = sbr.rel (%p1291) target = $region64
      $region63: #{ftgan_encoder_atten.8} parent=59 // pred_region
        %s1294 = smul.u32 32, %s29
        %p1295 = scmp.lt.s32.totalorder %s27, 1
        %s1296 = scalar_select %p1295, %s27, 1
        %p1297 = scmp.lt.s32.totalorder %s1294, 31
        %s1298 = scalar_select %p1297, %s1294, 31
        %p1299 = scmp.lt.s32.totalorder %s28, 0
        %s1300 = scalar_select %p1299, %s28, 0
        %s1301 = sadd.s32 %s1300, %s1298
        %s1302 = smul.addr %s1296, 32
        %s1303 = sadd.s32 %s1301, %s1302
        %s1304 = smul.addr %s1303, 4
        %s1305 = scalar_lea.vmem %s4, %s1304
      $region64: #{ftgan_encoder_atten.8} parent=59 // pred_fallthru
        _
      // Predicated region
      $region65: #{ftgan_encoder_atten.8} parent=59 // pred_check
        %p1306 = pneg %p213
      $region66: #{ftgan_encoder_atten.8} parent=59 // pred_check_branch
        %1308 = sbr.rel (%p1306) target = $region68
      $region67: #{ftgan_encoder_atten.8} parent=59 // pred_region
        %p1309 = scmp.lt.s32.totalorder %s27, 1
        %s1310 = scalar_select %p1309, %s27, 1
        %p1311 = scmp.lt.s32.totalorder %s28, 0
        %s1312 = scalar_select %p1311, %s28, 0
        %s1313 = sadd.s32 %s1312, %s1310
        %s1314 = smul.addr %s1313, 2
        %s1315 = scalar_lea.vmem %s5, %s1314
      $region68: #{ftgan_encoder_atten.8} parent=59 // pred_fallthru
        _
    $region60: #{ftgan_encoder_atten.8} parent=5 // pred_fallthru
      _
  $region6: #{ftgan_encoder_atten.8} parent=0 // loop_footer
    %s16 = sadd.s32 1, %s12
  $region7: #{ftgan_encoder_atten.8} parent=0 // loop_footer_branch
    %11 = sbr.rel target = $region3
  $region8: #{ftgan_encoder_atten.8} parent=0 // loop_exit
    _

// kernel: ftgan_encoder_atten.9
$region0: #{ftgan_encoder_atten.9}
  #allocation0 [shape = 'u32[]', space=smem, size = 0x4, offset = 0x4, fixed_abs, tag = 'smem constant byte address 0x4 - core index']
  #allocation1 [shape = 'u32[144,128]{1,0:T(1,128)}', space=vmem, size = 0x12000, scoped, tag = 'internal scratch']
  #allocation2 [shape = 'f32[128,128]{1,0:T(8,128)}', space=vmem, size = 0x10000, scoped, tag = 'scratch operand']
  %s0 = inlined_call_operand.vmem [shape: bf16[128,256], index: 0, kind: input, shape index: {}]
  %s1 = inlined_call_operand.vmem [shape: bf16[256,128], index: 1, kind: input, shape index: {}]
  %s2 = inlined_call_operand.vmem [shape: f32[128,128], index: 2, kind: output, shape index: {}]
  %s3 = sld [smem:[#allocation0]]
  $region26: #{ftgan_encoder_atten.9} parent=0
    _
  %s5 = ssub.s32 1, %s3
  %s6 = scalar_select 0, %s5, %s3
  // Predicated region
  $region2: #{ftgan_encoder_atten.9} parent=0 // pred_check
    _
  $region3: #{ftgan_encoder_atten.9} parent=0 // pred_check_branch
    %8 = sbr.rel (0) target = $region5
  $region4: #{ftgan_encoder_atten.9} parent=0 // pred_region
    _
  $region5: #{ftgan_encoder_atten.9} parent=0 // pred_fallthru
    _
  // Predicated region
  $region6: #{ftgan_encoder_atten.9} parent=0 // pred_check
    _
  $region7: #{ftgan_encoder_atten.9} parent=0 // pred_check_branch
    %10 = sbr.rel (0) target = $region9
  $region8: #{ftgan_encoder_atten.9} parent=0 // pred_region
    _
  $region9: #{ftgan_encoder_atten.9} parent=0 // pred_fallthru
    _
  %p12 = scmp.eq.s32.totalorder 0, 0
  // Predicated region
  $region10: #{ftgan_encoder_atten.9} parent=0 // pred_check
    %p13 = pneg %p12
  $region11: #{ftgan_encoder_atten.9} parent=0 // pred_check_branch
    %15 = sbr.rel (%p13) target = $region13
  $region12: #{ftgan_encoder_atten.9} parent=0 // pred_region
    %16 = vst [vmem:[#allocation2] sm:$0xff] 0.0
    %17 = vst [vmem:[#allocation2 + $0x8] sm:$0xff] 0.0
    %18 = vst [vmem:[#allocation2 + $0x10] sm:$0xff] 0.0
    %19 = vst [vmem:[#allocation2 + $0x18] sm:$0xff] 0.0
    %20 = vst [vmem:[#allocation2 + $0x20] sm:$0xff] 0.0
    %21 = vst [vmem:[#allocation2 + $0x28] sm:$0xff] 0.0
    %22 = vst [vmem:[#allocation2 + $0x30] sm:$0xff] 0.0
    %23 = vst [vmem:[#allocation2 + $0x38] sm:$0xff] 0.0
    %24 = vst [vmem:[#allocation2 + $0x40] sm:$0xff] 0.0
    %25 = vst [vmem:[#allocation2 + $0x48] sm:$0xff] 0.0
    %26 = vst [vmem:[#allocation2 + $0x50] sm:$0xff] 0.0
    %27 = vst [vmem:[#allocation2 + $0x58] sm:$0xff] 0.0
    %28 = vst [vmem:[#allocation2 + $0x60] sm:$0xff] 0.0
    %29 = vst [vmem:[#allocation2 + $0x68] sm:$0xff] 0.0
    %30 = vst [vmem:[#allocation2 + $0x70] sm:$0xff] 0.0
    %31 = vst [vmem:[#allocation2 + $0x78] sm:$0xff] 0.0
  $region13: #{ftgan_encoder_atten.9} parent=0 // pred_fallthru
    _
  %v32 = vld [vmem:[#allocation2] sm:$0xff]
  %v33 = vld [vmem:[#allocation2 + $0x8] sm:$0xff]
  %v34 = vld [vmem:[#allocation2 + $0x10] sm:$0xff]
  %v35 = vld [vmem:[#allocation2 + $0x18] sm:$0xff]
  %v36 = vld [vmem:[#allocation2 + $0x20] sm:$0xff]
  %v37 = vld [vmem:[#allocation2 + $0x28] sm:$0xff]
  %v38 = vld [vmem:[#allocation2 + $0x30] sm:$0xff]
  %v39 = vld [vmem:[#allocation2 + $0x38] sm:$0xff]
  %v40 = vld [vmem:[#allocation2 + $0x40] sm:$0xff]
  %v41 = vld [vmem:[#allocation2 + $0x48] sm:$0xff]
  %v42 = vld [vmem:[#allocation2 + $0x50] sm:$0xff]
  %v43 = vld [vmem:[#allocation2 + $0x58] sm:$0xff]
  %v44 = vld [vmem:[#allocation2 + $0x60] sm:$0xff]
  %v45 = vld [vmem:[#allocation2 + $0x68] sm:$0xff]
  %v46 = vld [vmem:[#allocation2 + $0x70] sm:$0xff]
  %v47 = vld [vmem:[#allocation2 + $0x78] sm:$0xff]
  %v48 = vld [vmem:[%s0] sm:$0xff]
  %v49 = vld [vmem:[%s0 + $0x8] sm:$0xff]
  %v50 = vld [vmem:[%s0 + $0x10] sm:$0xff]
  %v51 = vld [vmem:[%s0 + $0x18] sm:$0xff]
  %v52 = vld [vmem:[%s0 + $0x20] sm:$0xff]
  %v53 = vld [vmem:[%s0 + $0x28] sm:$0xff]
  %v54 = vld [vmem:[%s0 + $0x30] sm:$0xff]
  %v55 = vld [vmem:[%s0 + $0x38] sm:$0xff]
  %v56 = vld [vmem:[%s0 + $0x40] sm:$0xff]
  %v57 = vld [vmem:[%s0 + $0x48] sm:$0xff]
  %v58 = vld [vmem:[%s0 + $0x50] sm:$0xff]
  %v59 = vld [vmem:[%s0 + $0x58] sm:$0xff]
  %v60 = vld [vmem:[%s0 + $0x60] sm:$0xff]
  %v61 = vld [vmem:[%s0 + $0x68] sm:$0xff]
  %v62 = vld [vmem:[%s0 + $0x70] sm:$0xff]
  %v63 = vld [vmem:[%s0 + $0x78] sm:$0xff]
  %v64 = vld [vmem:[%s1] sm:$0xf]
  %v65 = vld [vmem:[%s1 + $0x4] sm:$0xf]
  %v66 = vld [vmem:[%s1 + $0x8] sm:$0xf]
  %v67 = vld [vmem:[%s1 + $0xc] sm:$0xf]
  %v68 = vld [vmem:[%s1 + $0x10] sm:$0xf]
  %v69 = vld [vmem:[%s1 + $0x14] sm:$0xf]
  %v70 = vld [vmem:[%s1 + $0x18] sm:$0xf]
  %v71 = vld [vmem:[%s1 + $0x1c] sm:$0xf]
  %v72 = vld [vmem:[%s1 + $0x20] sm:$0xf]
  %v73 = vld [vmem:[%s1 + $0x24] sm:$0xf]
  %v74 = vld [vmem:[%s1 + $0x28] sm:$0xf]
  %v75 = vld [vmem:[%s1 + $0x2c] sm:$0xf]
  %v76 = vld [vmem:[%s1 + $0x30] sm:$0xf]
  %v77 = vld [vmem:[%s1 + $0x34] sm:$0xf]
  %v78 = vld [vmem:[%s1 + $0x38] sm:$0xf]
  %v79 = vld [vmem:[%s1 + $0x3c] sm:$0xf]
  %v80 = vld [vmem:[%s1 + $0x40] sm:$0xf]
  %v81 = vld [vmem:[%s1 + $0x44] sm:$0xf]
  %v82 = vld [vmem:[%s1 + $0x48] sm:$0xf]
  %v83 = vld [vmem:[%s1 + $0x4c] sm:$0xf]
  %v84 = vld [vmem:[%s1 + $0x50] sm:$0xf]
  %v85 = vld [vmem:[%s1 + $0x54] sm:$0xf]
  %v86 = vld [vmem:[%s1 + $0x58] sm:$0xf]
  %v87 = vld [vmem:[%s1 + $0x5c] sm:$0xf]
  %v88 = vld [vmem:[%s1 + $0x60] sm:$0xf]
  %v89 = vld [vmem:[%s1 + $0x64] sm:$0xf]
  %v90 = vld [vmem:[%s1 + $0x68] sm:$0xf]
  %v91 = vld [vmem:[%s1 + $0x6c] sm:$0xf]
  %v92 = vld [vmem:[%s1 + $0x70] sm:$0xf]
  %v93 = vld [vmem:[%s1 + $0x74] sm:$0xf]
  %v94 = vld [vmem:[%s1 + $0x78] sm:$0xf]
  %v95 = vld [vmem:[%s1 + $0x7c] sm:$0xf]
  %v112 = vunpack.c.l.b16 %v48
  %v113 = vunpack.c.h.b16 %v48
  %v114 = vunpack.c.l.b16 %v49
  %v115 = vunpack.c.h.b16 %v49
  %v116 = vunpack.c.l.b16 %v50
  %v117 = vunpack.c.h.b16 %v50
  %v118 = vunpack.c.l.b16 %v51
  %v119 = vunpack.c.h.b16 %v51
  %v120 = vunpack.c.l.b16 %v52
  %v121 = vunpack.c.h.b16 %v52
  %v122 = vunpack.c.l.b16 %v53
  %v123 = vunpack.c.h.b16 %v53
  %v124 = vunpack.c.l.b16 %v54
  %v125 = vunpack.c.h.b16 %v54
  %v126 = vunpack.c.l.b16 %v55
  %v127 = vunpack.c.h.b16 %v55
  %v128 = vunpack.c.l.b16 %v56
  %v129 = vunpack.c.h.b16 %v56
  %v130 = vunpack.c.l.b16 %v57
  %v131 = vunpack.c.h.b16 %v57
  %v132 = vunpack.c.l.b16 %v58
  %v133 = vunpack.c.h.b16 %v58
  %v134 = vunpack.c.l.b16 %v59
  %v135 = vunpack.c.h.b16 %v59
  %v136 = vunpack.c.l.b16 %v60
  %v137 = vunpack.c.h.b16 %v60
  %v138 = vunpack.c.l.b16 %v61
  %v139 = vunpack.c.h.b16 %v61
  %v140 = vunpack.c.l.b16 %v62
  %v141 = vunpack.c.h.b16 %v62
  %v142 = vunpack.c.l.b16 %v63
  %v143 = vunpack.c.h.b16 %v63
  %v144 = vpack.c.b16 %v114, %v112
  %v145 = vpack.c.b16 %v115, %v113
  %v146 = vpack.c.b16 %v118, %v116
  %v147 = vpack.c.b16 %v119, %v117
  %v148 = vpack.c.b16 %v122, %v120
  %v149 = vpack.c.b16 %v123, %v121
  %v150 = vpack.c.b16 %v126, %v124
  %v151 = vpack.c.b16 %v127, %v125
  %v152 = vpack.c.b16 %v130, %v128
  %v153 = vpack.c.b16 %v131, %v129
  %v154 = vpack.c.b16 %v134, %v132
  %v155 = vpack.c.b16 %v135, %v133
  %v156 = vpack.c.b16 %v138, %v136
  %v157 = vpack.c.b16 %v139, %v137
  %v158 = vpack.c.b16 %v142, %v140
  %v159 = vpack.c.b16 %v143, %v141
  %v208 = vunpack.c.l.b16 %v64
  %v209 = vunpack.c.l.b16 %v65
  %v210 = vunpack.c.l.b16 %v66
  %v211 = vunpack.c.l.b16 %v67
  %v212 = vunpack.c.l.b16 %v68
  %v213 = vunpack.c.l.b16 %v69
  %v214 = vunpack.c.l.b16 %v70
  %v215 = vunpack.c.l.b16 %v71
  %v216 = vunpack.c.l.b16 %v72
  %v217 = vunpack.c.l.b16 %v73
  %v218 = vunpack.c.l.b16 %v74
  %v219 = vunpack.c.l.b16 %v75
  %v220 = vunpack.c.l.b16 %v76
  %v221 = vunpack.c.l.b16 %v77
  %v222 = vunpack.c.l.b16 %v78
  %v223 = vunpack.c.l.b16 %v79
  %v224 = vunpack.c.l.b16 %v80
  %v225 = vunpack.c.l.b16 %v81
  %v226 = vunpack.c.l.b16 %v82
  %v227 = vunpack.c.l.b16 %v83
  %v228 = vunpack.c.l.b16 %v84
  %v229 = vunpack.c.l.b16 %v85
  %v230 = vunpack.c.l.b16 %v86
  %v231 = vunpack.c.l.b16 %v87
  %v232 = vunpack.c.l.b16 %v88
  %v233 = vunpack.c.l.b16 %v89
  %v234 = vunpack.c.l.b16 %v90
  %v235 = vunpack.c.l.b16 %v91
  %v236 = vunpack.c.l.b16 %v92
  %v237 = vunpack.c.l.b16 %v93
  %v238 = vunpack.c.l.b16 %v94
  %v239 = vunpack.c.l.b16 %v95
  %v240 = vpack.c.b16 %v209, %v208
  %v241 = vpack.c.b16 %v211, %v210
  %v242 = vpack.c.b16 %v213, %v212
  %v243 = vpack.c.b16 %v215, %v214
  %v244 = vpack.c.b16 %v217, %v216
  %v245 = vpack.c.b16 %v219, %v218
  %v246 = vpack.c.b16 %v221, %v220
  %v247 = vpack.c.b16 %v223, %v222
  %v248 = vpack.c.b16 %v225, %v224
  %v249 = vpack.c.b16 %v227, %v226
  %v250 = vpack.c.b16 %v229, %v228
  %v251 = vpack.c.b16 %v231, %v230
  %v252 = vpack.c.b16 %v233, %v232
  %v253 = vpack.c.b16 %v235, %v234
  %v254 = vpack.c.b16 %v237, %v236
  %v255 = vpack.c.b16 %v239, %v238
  %272 = vmatprep.subr.bf16.mxu0 0
  %273 = vmatpush1.bf16.msra.mxu0 %v247
  %274 = vmatprep.subr.bf16.mxu0 0
  %275 = vmatpush1.bf16.msra.mxu0 %v246
  %276 = vmatprep.subr.bf16.mxu0 0
  %277 = vmatpush1.bf16.msra.mxu0 %v245
  %278 = vmatprep.subr.bf16.mxu0 0
  %279 = vmatpush1.bf16.msra.mxu0 %v244
  %280 = vmatprep.subr.bf16.mxu0 0
  %281 = vmatpush1.bf16.msra.mxu0 %v243
  %282 = vmatprep.subr.bf16.mxu0 0
  %283 = vmatpush1.bf16.msra.mxu0 %v242
  %284 = vmatprep.subr.bf16.mxu0 0
  %285 = vmatpush1.bf16.msra.mxu0 %v241
  %286 = vmatprep.subr.bf16.mxu0 0
  %287 = vmatpush1.bf16.msra.mxu0 %v240
  %288 = vmatprep.subr.bf16.mxu0 0
  %289 = vmatpush2.bf16.msra.mxu0 %v255
  %290 = vmatprep.subr.bf16.mxu0 0
  %291 = vmatpush2.bf16.msra.mxu0 %v254
  %292 = vmatprep.subr.bf16.mxu0 0
  %293 = vmatpush2.bf16.msra.mxu0 %v253
  %294 = vmatprep.subr.bf16.mxu0 0
  %295 = vmatpush2.bf16.msra.mxu0 %v252
  %296 = vmatprep.subr.bf16.mxu0 0
  %297 = vmatpush2.bf16.msra.mxu0 %v251
  %298 = vmatprep.subr.bf16.mxu0 0
  %299 = vmatpush2.bf16.msra.mxu0 %v250
  %300 = vmatprep.subr.bf16.mxu0 0
  %301 = vmatpush2.bf16.msra.mxu0 %v249
  %302 = vmatprep.subr.bf16.mxu0 0
  %303 = vmatpush2.bf16.msra.mxu0 %v248
  %304 = vmatprep.mubr.bf16.mxu0 %v145
  %305 = vmatmul.mubr.bf16.gmra.mxu0 %v144
  %v306 = vpop.f32.mrf.mxu0
  %v307 = vadd.f32 0.0, %v306
  %v308 = vpop.f32.mrf.mxu0
  %v309 = vpop.f32.mrf.mxu0
  %v310 = vadd.f32 0.0, %v309
  %v311 = vpop.f32.mrf.mxu0
  %312 = vmatprep.mubr.bf16.mxu0 %v147
  %313 = vmatmul.mubr.bf16.gmra.mxu0 %v146
  %v314 = vpop.f32.mrf.mxu0
  %v315 = vadd.f32 0.0, %v314
  %v316 = vpop.f32.mrf.mxu0
  %v317 = vpop.f32.mrf.mxu0
  %v318 = vadd.f32 0.0, %v317
  %v319 = vpop.f32.mrf.mxu0
  %320 = vmatprep.mubr.bf16.mxu0 %v149
  %321 = vmatmul.mubr.bf16.gmra.mxu0 %v148
  %v322 = vpop.f32.mrf.mxu0
  %v323 = vadd.f32 0.0, %v322
  %v324 = vpop.f32.mrf.mxu0
  %v325 = vpop.f32.mrf.mxu0
  %v326 = vadd.f32 0.0, %v325
  %v327 = vpop.f32.mrf.mxu0
  %328 = vmatprep.mubr.bf16.mxu0 %v151
  %329 = vmatmul.mubr.bf16.gmra.mxu0 %v150
  %v330 = vpop.f32.mrf.mxu0
  %v331 = vadd.f32 0.0, %v330
  %v332 = vpop.f32.mrf.mxu0
  %v333 = vpop.f32.mrf.mxu0
  %v334 = vadd.f32 0.0, %v333
  %v335 = vpop.f32.mrf.mxu0
  %336 = vmatprep.mubr.bf16.mxu0 %v153
  %337 = vmatmul.mubr.bf16.gmra.mxu0 %v152
  %v338 = vpop.f32.mrf.mxu0
  %v339 = vadd.f32 0.0, %v338
  %v340 = vpop.f32.mrf.mxu0
  %v341 = vpop.f32.mrf.mxu0
  %v342 = vadd.f32 0.0, %v341
  %v343 = vpop.f32.mrf.mxu0
  %344 = vmatprep.mubr.bf16.mxu0 %v155
  %345 = vmatmul.mubr.bf16.gmra.mxu0 %v154
  %v346 = vpop.f32.mrf.mxu0
  %v347 = vadd.f32 0.0, %v346
  %v348 = vpop.f32.mrf.mxu0
  %v349 = vpop.f32.mrf.mxu0
  %v350 = vadd.f32 0.0, %v349
  %v351 = vpop.f32.mrf.mxu0
  %352 = vmatprep.mubr.bf16.mxu0 %v157
  %353 = vmatmul.mubr.bf16.gmra.mxu0 %v156
  %v354 = vpop.f32.mrf.mxu0
  %v355 = vadd.f32 0.0, %v354
  %v356 = vpop.f32.mrf.mxu0
  %v357 = vpop.f32.mrf.mxu0
  %v358 = vadd.f32 0.0, %v357
  %v359 = vpop.f32.mrf.mxu0
  %360 = vmatprep.mubr.bf16.mxu0 %v159
  %361 = vmatmul.mubr.bf16.gmra.mxu0 %v158
  %v362 = vpop.f32.mrf.mxu0
  %v363 = vadd.f32 0.0, %v362
  %v364 = vpop.f32.mrf.mxu0
  %v365 = vpop.f32.mrf.mxu0
  %v366 = vadd.f32 0.0, %v365
  %v367 = vpop.f32.mrf.mxu0
  %368 = vdwg.mxu0
  %v369 = vadd.f32 %v32, %v307
  %v370 = vadd.f32 %v33, %v310
  %v371 = vadd.f32 %v34, %v315
  %v372 = vadd.f32 %v35, %v318
  %v373 = vadd.f32 %v36, %v323
  %v374 = vadd.f32 %v37, %v326
  %v375 = vadd.f32 %v38, %v331
  %v376 = vadd.f32 %v39, %v334
  %v377 = vadd.f32 %v40, %v339
  %v378 = vadd.f32 %v41, %v342
  %v379 = vadd.f32 %v42, %v347
  %v380 = vadd.f32 %v43, %v350
  %v381 = vadd.f32 %v44, %v355
  %v382 = vadd.f32 %v45, %v358
  %v383 = vadd.f32 %v46, %v363
  %v384 = vadd.f32 %v47, %v366
  %385 = vst [vmem:[#allocation2] sm:$0xff] %v369
  %386 = vst [vmem:[#allocation2 + $0x8] sm:$0xff] %v370
  %387 = vst [vmem:[#allocation2 + $0x10] sm:$0xff] %v371
  %388 = vst [vmem:[#allocation2 + $0x18] sm:$0xff] %v372
  %389 = vst [vmem:[#allocation2 + $0x20] sm:$0xff] %v373
  %390 = vst [vmem:[#allocation2 + $0x28] sm:$0xff] %v374
  %391 = vst [vmem:[#allocation2 + $0x30] sm:$0xff] %v375
  %392 = vst [vmem:[#allocation2 + $0x38] sm:$0xff] %v376
  %393 = vst [vmem:[#allocation2 + $0x40] sm:$0xff] %v377
  %394 = vst [vmem:[#allocation2 + $0x48] sm:$0xff] %v378
  %395 = vst [vmem:[#allocation2 + $0x50] sm:$0xff] %v379
  %396 = vst [vmem:[#allocation2 + $0x58] sm:$0xff] %v380
  %397 = vst [vmem:[#allocation2 + $0x60] sm:$0xff] %v381
  %398 = vst [vmem:[#allocation2 + $0x68] sm:$0xff] %v382
  %399 = vst [vmem:[#allocation2 + $0x70] sm:$0xff] %v383
  %400 = vst [vmem:[#allocation2 + $0x78] sm:$0xff] %v384
  // Predicated region
  $region14: #{ftgan_encoder_atten.9} parent=0 // pred_check
    %p401 = pneg %p12
  $region15: #{ftgan_encoder_atten.9} parent=0 // pred_check_branch
    %403 = sbr.rel (%p401) target = $region17
  $region16: #{ftgan_encoder_atten.9} parent=0 // pred_region
    %v404 = vld [vmem:[#allocation2] sm:$0xff]
    %v405 = vld [vmem:[#allocation2 + $0x8] sm:$0xff]
    %v406 = vld [vmem:[#allocation2 + $0x10] sm:$0xff]
    %v407 = vld [vmem:[#allocation2 + $0x18] sm:$0xff]
    %v408 = vld [vmem:[#allocation2 + $0x20] sm:$0xff]
    %v409 = vld [vmem:[#allocation2 + $0x28] sm:$0xff]
    %v410 = vld [vmem:[#allocation2 + $0x30] sm:$0xff]
    %v411 = vld [vmem:[#allocation2 + $0x38] sm:$0xff]
    %v412 = vld [vmem:[#allocation2 + $0x40] sm:$0xff]
    %v413 = vld [vmem:[#allocation2 + $0x48] sm:$0xff]
    %v414 = vld [vmem:[#allocation2 + $0x50] sm:$0xff]
    %v415 = vld [vmem:[#allocation2 + $0x58] sm:$0xff]
    %v416 = vld [vmem:[#allocation2 + $0x60] sm:$0xff]
    %v417 = vld [vmem:[#allocation2 + $0x68] sm:$0xff]
    %v418 = vld [vmem:[#allocation2 + $0x70] sm:$0xff]
    %v419 = vld [vmem:[#allocation2 + $0x78] sm:$0xff]
    %420 = vst [vmem:[%s2] sm:$0xff] %v404
    %421 = vst [vmem:[%s2 + $0x8] sm:$0xff] %v405
    %422 = vst [vmem:[%s2 + $0x10] sm:$0xff] %v406
    %423 = vst [vmem:[%s2 + $0x18] sm:$0xff] %v407
    %424 = vst [vmem:[%s2 + $0x20] sm:$0xff] %v408
    %425 = vst [vmem:[%s2 + $0x28] sm:$0xff] %v409
    %426 = vst [vmem:[%s2 + $0x30] sm:$0xff] %v410
    %427 = vst [vmem:[%s2 + $0x38] sm:$0xff] %v411
    %428 = vst [vmem:[%s2 + $0x40] sm:$0xff] %v412
    %429 = vst [vmem:[%s2 + $0x48] sm:$0xff] %v413
    %430 = vst [vmem:[%s2 + $0x50] sm:$0xff] %v414
    %431 = vst [vmem:[%s2 + $0x58] sm:$0xff] %v415
    %432 = vst [vmem:[%s2 + $0x60] sm:$0xff] %v416
    %433 = vst [vmem:[%s2 + $0x68] sm:$0xff] %v417
    %434 = vst [vmem:[%s2 + $0x70] sm:$0xff] %v418
    %435 = vst [vmem:[%s2 + $0x78] sm:$0xff] %v419
  $region17: #{ftgan_encoder_atten.9} parent=0 // pred_fallthru
    _
  // Predicated region
  $region18: #{ftgan_encoder_atten.9} parent=0 // pred_check
    _
  $region19: #{ftgan_encoder_atten.9} parent=0 // pred_check_branch
    %437 = sbr.rel (0) target = $region21
  $region20: #{ftgan_encoder_atten.9} parent=0 // pred_region
    _
  $region21: #{ftgan_encoder_atten.9} parent=0 // pred_fallthru
    _
  // Predicated region
  $region22: #{ftgan_encoder_atten.9} parent=0 // pred_check
    _
  $region23: #{ftgan_encoder_atten.9} parent=0 // pred_check_branch
    %439 = sbr.rel (0) target = $region25
  $region24: #{ftgan_encoder_atten.9} parent=0 // pred_region
    _
  $region25: #{ftgan_encoder_atten.9} parent=0 // pred_fallthru
    _

// kernel: mul.17
$region0: #{mul.17}
  #allocation0 [shape = 's32[1]{0}', space=sflag, size = 0x4, scoped, tag = 'scoped memory for mul.17']
  %s0 = inlined_call_operand.vmem [shape: f32[2,1,128], index: 0, kind: input, shape index: {}]
  %s1 = inlined_call_operand.vmem [shape: f32[2,1,128], index: 1, kind: input, shape index: {}]
  %s2 = inlined_call_operand.vmem [shape: f32[2,1,128], index: 2, kind: output, shape index: {}]
  %v3 = vld [vmem:[%s0] sm:$0x1]
  %v4 = vld [vmem:[%s1] sm:$0x1]
  %5 = xla_tuple %v3, %v4
  %6 = xla_tuple %5
  %v7 = vmul.f32 %v3, %v4
  %8 = xla_tuple %v7
  %9 = vst [vmem:[%s2] sm:$0x1] %v7
  %s10 = scalar_lea.vmem %s0, 1
  %v11 = vld [vmem:[%s10] sm:$0x1]
  %s12 = scalar_lea.vmem %s1, 1
  %v13 = vld [vmem:[%s12] sm:$0x1]
  %14 = xla_tuple %v11, %v13
  %15 = xla_tuple %14
  %v16 = vmul.f32 %v11, %v13
  %17 = xla_tuple %v16
  %s18 = scalar_lea.vmem %s2, 1
  %19 = vst [vmem:[%s18] sm:$0x1] %v16

// kernel: ftgan_encoder_atten.10
$region0: #{ftgan_encoder_atten.10}
  #allocation0 [shape = 'u32[]', space=smem, size = 0x4, offset = 0x4, fixed_abs, tag = 'smem constant byte address 0x4 - core index']
  #allocation1 [shape = 'u32[144,128]{1,0:T(1,128)}', space=vmem, size = 0x12000, scoped, tag = 'internal scratch']
  #allocation2 [shape = 'f32[32,128]{1,0:T(8,128)}', space=vmem, size = 0x4000, scoped, tag = 'scratch operand']
  %s0 = inlined_call_operand.vmem [shape: bf16[32,384], index: 0, kind: input, shape index: {}]
  %s1 = inlined_call_operand.vmem [shape: bf16[384,128], index: 1, kind: input, shape index: {}]
  %s2 = inlined_call_operand.vmem [shape: f32[32,128], index: 2, kind: output, shape index: {}]
  %s3 = sld [smem:[#allocation0]]
  $region26: #{ftgan_encoder_atten.10} parent=0
    _
  %s5 = ssub.s32 1, %s3
  %s6 = scalar_select 0, %s5, %s3
  // Predicated region
  $region2: #{ftgan_encoder_atten.10} parent=0 // pred_check
    _
  $region3: #{ftgan_encoder_atten.10} parent=0 // pred_check_branch
    %8 = sbr.rel (0) target = $region5
  $region4: #{ftgan_encoder_atten.10} parent=0 // pred_region
    _
  $region5: #{ftgan_encoder_atten.10} parent=0 // pred_fallthru
    _
  // Predicated region
  $region6: #{ftgan_encoder_atten.10} parent=0 // pred_check
    _
  $region7: #{ftgan_encoder_atten.10} parent=0 // pred_check_branch
    %10 = sbr.rel (0) target = $region9
  $region8: #{ftgan_encoder_atten.10} parent=0 // pred_region
    _
  $region9: #{ftgan_encoder_atten.10} parent=0 // pred_fallthru
    _
  %p12 = scmp.eq.s32.totalorder 0, 0
  // Predicated region
  $region10: #{ftgan_encoder_atten.10} parent=0 // pred_check
    %p13 = pneg %p12
  $region11: #{ftgan_encoder_atten.10} parent=0 // pred_check_branch
    %15 = sbr.rel (%p13) target = $region13
  $region12: #{ftgan_encoder_atten.10} parent=0 // pred_region
    %16 = vst [vmem:[#allocation2] sm:$0xff] 0.0
    %17 = vst [vmem:[#allocation2 + $0x8] sm:$0xff] 0.0
    %18 = vst [vmem:[#allocation2 + $0x10] sm:$0xff] 0.0
    %19 = vst [vmem:[#allocation2 + $0x18] sm:$0xff] 0.0
  $region13: #{ftgan_encoder_atten.10} parent=0 // pred_fallthru
    _
  %v20 = vld [vmem:[#allocation2] sm:$0xff]
  %v21 = vld [vmem:[#allocation2 + $0x8] sm:$0xff]
  %v22 = vld [vmem:[#allocation2 + $0x10] sm:$0xff]
  %v23 = vld [vmem:[#allocation2 + $0x18] sm:$0xff]
  %v24 = vld [vmem:[%s0] sm:$0xff]
  %v25 = vld [vmem:[%s0 + $0x8] sm:$0xf]
  %v26 = vld [vmem:[%s0 + $0xc] sm:$0xff]
  %v27 = vld [vmem:[%s0 + $0x14] sm:$0xf]
  %v28 = vld [vmem:[%s0 + $0x18] sm:$0xff]
  %v29 = vld [vmem:[%s0 + $0x20] sm:$0xf]
  %v30 = vld [vmem:[%s0 + $0x24] sm:$0xff]
  %v31 = vld [vmem:[%s0 + $0x2c] sm:$0xf]
  %v32 = vld [vmem:[%s1] sm:$0xf]
  %v33 = vld [vmem:[%s1 + $0x4] sm:$0xf]
  %v34 = vld [vmem:[%s1 + $0x8] sm:$0xf]
  %v35 = vld [vmem:[%s1 + $0xc] sm:$0xf]
  %v36 = vld [vmem:[%s1 + $0x10] sm:$0xf]
  %v37 = vld [vmem:[%s1 + $0x14] sm:$0xf]
  %v38 = vld [vmem:[%s1 + $0x18] sm:$0xf]
  %v39 = vld [vmem:[%s1 + $0x1c] sm:$0xf]
  %v40 = vld [vmem:[%s1 + $0x20] sm:$0xf]
  %v41 = vld [vmem:[%s1 + $0x24] sm:$0xf]
  %v42 = vld [vmem:[%s1 + $0x28] sm:$0xf]
  %v43 = vld [vmem:[%s1 + $0x2c] sm:$0xf]
  %v44 = vld [vmem:[%s1 + $0x30] sm:$0xf]
  %v45 = vld [vmem:[%s1 + $0x34] sm:$0xf]
  %v46 = vld [vmem:[%s1 + $0x38] sm:$0xf]
  %v47 = vld [vmem:[%s1 + $0x3c] sm:$0xf]
  %v48 = vld [vmem:[%s1 + $0x40] sm:$0xf]
  %v49 = vld [vmem:[%s1 + $0x44] sm:$0xf]
  %v50 = vld [vmem:[%s1 + $0x48] sm:$0xf]
  %v51 = vld [vmem:[%s1 + $0x4c] sm:$0xf]
  %v52 = vld [vmem:[%s1 + $0x50] sm:$0xf]
  %v53 = vld [vmem:[%s1 + $0x54] sm:$0xf]
  %v54 = vld [vmem:[%s1 + $0x58] sm:$0xf]
  %v55 = vld [vmem:[%s1 + $0x5c] sm:$0xf]
  %v56 = vld [vmem:[%s1 + $0x60] sm:$0xf]
  %v57 = vld [vmem:[%s1 + $0x64] sm:$0xf]
  %v58 = vld [vmem:[%s1 + $0x68] sm:$0xf]
  %v59 = vld [vmem:[%s1 + $0x6c] sm:$0xf]
  %v60 = vld [vmem:[%s1 + $0x70] sm:$0xf]
  %v61 = vld [vmem:[%s1 + $0x74] sm:$0xf]
  %v62 = vld [vmem:[%s1 + $0x78] sm:$0xf]
  %v63 = vld [vmem:[%s1 + $0x7c] sm:$0xf]
  %v64 = vld [vmem:[%s1 + $0x80] sm:$0xf]
  %v65 = vld [vmem:[%s1 + $0x84] sm:$0xf]
  %v66 = vld [vmem:[%s1 + $0x88] sm:$0xf]
  %v67 = vld [vmem:[%s1 + $0x8c] sm:$0xf]
  %v68 = vld [vmem:[%s1 + $0x90] sm:$0xf]
  %v69 = vld [vmem:[%s1 + $0x94] sm:$0xf]
  %v70 = vld [vmem:[%s1 + $0x98] sm:$0xf]
  %v71 = vld [vmem:[%s1 + $0x9c] sm:$0xf]
  %v72 = vld [vmem:[%s1 + $0xa0] sm:$0xf]
  %v73 = vld [vmem:[%s1 + $0xa4] sm:$0xf]
  %v74 = vld [vmem:[%s1 + $0xa8] sm:$0xf]
  %v75 = vld [vmem:[%s1 + $0xac] sm:$0xf]
  %v76 = vld [vmem:[%s1 + $0xb0] sm:$0xf]
  %v77 = vld [vmem:[%s1 + $0xb4] sm:$0xf]
  %v78 = vld [vmem:[%s1 + $0xb8] sm:$0xf]
  %v79 = vld [vmem:[%s1 + $0xbc] sm:$0xf]
  %v88 = vunpack.c.l.b16 %v24
  %v89 = vunpack.c.h.b16 %v24
  %v90 = vunpack.c.l.b16 %v25
  %v91 = vunpack.c.l.b16 %v26
  %v92 = vunpack.c.h.b16 %v26
  %v93 = vunpack.c.l.b16 %v27
  %v94 = vunpack.c.l.b16 %v28
  %v95 = vunpack.c.h.b16 %v28
  %v96 = vunpack.c.l.b16 %v29
  %v97 = vunpack.c.l.b16 %v30
  %v98 = vunpack.c.h.b16 %v30
  %v99 = vunpack.c.l.b16 %v31
  %v100 = vpack.c.b16 %v91, %v88
  %v101 = vpack.c.b16 %v92, %v89
  %v102 = vpack.c.b16 %v93, %v90
  %v103 = vpack.c.b16 %v97, %v94
  %v104 = vpack.c.b16 %v98, %v95
  %v105 = vpack.c.b16 %v99, %v96
  %v160 = vunpack.c.l.b16 %v32
  %v161 = vunpack.c.l.b16 %v33
  %v162 = vunpack.c.l.b16 %v34
  %v163 = vunpack.c.l.b16 %v35
  %v164 = vunpack.c.l.b16 %v36
  %v165 = vunpack.c.l.b16 %v37
  %v166 = vunpack.c.l.b16 %v38
  %v167 = vunpack.c.l.b16 %v39
  %v168 = vunpack.c.l.b16 %v40
  %v169 = vunpack.c.l.b16 %v41
  %v170 = vunpack.c.l.b16 %v42
  %v171 = vunpack.c.l.b16 %v43
  %v172 = vunpack.c.l.b16 %v44
  %v173 = vunpack.c.l.b16 %v45
  %v174 = vunpack.c.l.b16 %v46
  %v175 = vunpack.c.l.b16 %v47
  %v176 = vunpack.c.l.b16 %v48
  %v177 = vunpack.c.l.b16 %v49
  %v178 = vunpack.c.l.b16 %v50
  %v179 = vunpack.c.l.b16 %v51
  %v180 = vunpack.c.l.b16 %v52
  %v181 = vunpack.c.l.b16 %v53
  %v182 = vunpack.c.l.b16 %v54
  %v183 = vunpack.c.l.b16 %v55
  %v184 = vunpack.c.l.b16 %v56
  %v185 = vunpack.c.l.b16 %v57
  %v186 = vunpack.c.l.b16 %v58
  %v187 = vunpack.c.l.b16 %v59
  %v188 = vunpack.c.l.b16 %v60
  %v189 = vunpack.c.l.b16 %v61
  %v190 = vunpack.c.l.b16 %v62
  %v191 = vunpack.c.l.b16 %v63
  %v192 = vunpack.c.l.b16 %v64
  %v193 = vunpack.c.l.b16 %v65
  %v194 = vunpack.c.l.b16 %v66
  %v195 = vunpack.c.l.b16 %v67
  %v196 = vunpack.c.l.b16 %v68
  %v197 = vunpack.c.l.b16 %v69
  %v198 = vunpack.c.l.b16 %v70
  %v199 = vunpack.c.l.b16 %v71
  %v200 = vunpack.c.l.b16 %v72
  %v201 = vunpack.c.l.b16 %v73
  %v202 = vunpack.c.l.b16 %v74
  %v203 = vunpack.c.l.b16 %v75
  %v204 = vunpack.c.l.b16 %v76
  %v205 = vunpack.c.l.b16 %v77
  %v206 = vunpack.c.l.b16 %v78
  %v207 = vunpack.c.l.b16 %v79
  %v208 = vpack.c.b16 %v161, %v160
  %v209 = vpack.c.b16 %v163, %v162
  %v210 = vpack.c.b16 %v165, %v164
  %v211 = vpack.c.b16 %v167, %v166
  %v212 = vpack.c.b16 %v169, %v168
  %v213 = vpack.c.b16 %v171, %v170
  %v214 = vpack.c.b16 %v173, %v172
  %v215 = vpack.c.b16 %v175, %v174
  %v216 = vpack.c.b16 %v177, %v176
  %v217 = vpack.c.b16 %v179, %v178
  %v218 = vpack.c.b16 %v181, %v180
  %v219 = vpack.c.b16 %v183, %v182
  %v220 = vpack.c.b16 %v185, %v184
  %v221 = vpack.c.b16 %v187, %v186
  %v222 = vpack.c.b16 %v189, %v188
  %v223 = vpack.c.b16 %v191, %v190
  %v224 = vpack.c.b16 %v193, %v192
  %v225 = vpack.c.b16 %v195, %v194
  %v226 = vpack.c.b16 %v197, %v196
  %v227 = vpack.c.b16 %v199, %v198
  %v228 = vpack.c.b16 %v201, %v200
  %v229 = vpack.c.b16 %v203, %v202
  %v230 = vpack.c.b16 %v205, %v204
  %v231 = vpack.c.b16 %v207, %v206
  %256 = vmatprep.subr.bf16.mxu0 0
  %257 = vmatpush1.bf16.msra.mxu0 %v215
  %258 = vmatprep.subr.bf16.mxu0 0
  %259 = vmatpush1.bf16.msra.mxu0 %v214
  %260 = vmatprep.subr.bf16.mxu0 0
  %261 = vmatpush1.bf16.msra.mxu0 %v213
  %262 = vmatprep.subr.bf16.mxu0 0
  %263 = vmatpush1.bf16.msra.mxu0 %v212
  %264 = vmatprep.subr.bf16.mxu0 0
  %265 = vmatpush1.bf16.msra.mxu0 %v211
  %266 = vmatprep.subr.bf16.mxu0 0
  %267 = vmatpush1.bf16.msra.mxu0 %v210
  %268 = vmatprep.subr.bf16.mxu0 0
  %269 = vmatpush1.bf16.msra.mxu0 %v209
  %270 = vmatprep.subr.bf16.mxu0 0
  %271 = vmatpush1.bf16.msra.mxu0 %v208
  %272 = vmatprep.subr.bf16.mxu0 0
  %273 = vmatpush2.bf16.msra.mxu0 %v223
  %274 = vmatprep.subr.bf16.mxu0 0
  %275 = vmatpush2.bf16.msra.mxu0 %v222
  %276 = vmatprep.subr.bf16.mxu0 0
  %277 = vmatpush2.bf16.msra.mxu0 %v221
  %278 = vmatprep.subr.bf16.mxu0 0
  %279 = vmatpush2.bf16.msra.mxu0 %v220
  %280 = vmatprep.subr.bf16.mxu0 0
  %281 = vmatpush2.bf16.msra.mxu0 %v219
  %282 = vmatprep.subr.bf16.mxu0 0
  %283 = vmatpush2.bf16.msra.mxu0 %v218
  %284 = vmatprep.subr.bf16.mxu0 0
  %285 = vmatpush2.bf16.msra.mxu0 %v217
  %286 = vmatprep.subr.bf16.mxu0 0
  %287 = vmatpush2.bf16.msra.mxu0 %v216
  %288 = vmatprep.mubr.bf16.mxu0 %v101
  %289 = vmatmul.mubr.bf16.gmra.mxu0 %v100
  %v290 = vpop.f32.mrf.mxu0
  %v291 = vadd.f32 0.0, %v290
  %v292 = vpop.f32.mrf.mxu0
  %v293 = vpop.f32.mrf.mxu0
  %v294 = vadd.f32 0.0, %v293
  %v295 = vpop.f32.mrf.mxu0
  %296 = vmatprep.mubr.bf16.mxu0 %v104
  %297 = vmatmul.mubr.bf16.gmra.mxu0 %v103
  %v298 = vpop.f32.mrf.mxu0
  %v299 = vadd.f32 0.0, %v298
  %v300 = vpop.f32.mrf.mxu0
  %v301 = vpop.f32.mrf.mxu0
  %v302 = vadd.f32 0.0, %v301
  %v303 = vpop.f32.mrf.mxu0
  %304 = vdwg.mxu0
  %305 = vmatprep.subr.bf16.mxu0 0
  %306 = vmatpush1.bf16.msra.mxu0 %v231
  %307 = vmatprep.subr.bf16.mxu0 0
  %308 = vmatpush1.bf16.msra.mxu0 %v230
  %309 = vmatprep.subr.bf16.mxu0 0
  %310 = vmatpush1.bf16.msra.mxu0 %v229
  %311 = vmatprep.subr.bf16.mxu0 0
  %312 = vmatpush1.bf16.msra.mxu0 %v228
  %313 = vmatprep.subr.bf16.mxu0 0
  %314 = vmatpush1.bf16.msra.mxu0 %v227
  %315 = vmatprep.subr.bf16.mxu0 0
  %316 = vmatpush1.bf16.msra.mxu0 %v226
  %317 = vmatprep.subr.bf16.mxu0 0
  %318 = vmatpush1.bf16.msra.mxu0 %v225
  %319 = vmatprep.subr.bf16.mxu0 0
  %320 = vmatpush1.bf16.msra.mxu0 %v224
  %321 = vmatprep.subr.bf16.mxu0 0
  %322 = vmatpush2.bf16.msra.mxu0 0
  %323 = vmatprep.subr.bf16.mxu0 0
  %324 = vmatpush2.bf16.msra.mxu0 0
  %325 = vmatprep.subr.bf16.mxu0 0
  %326 = vmatpush2.bf16.msra.mxu0 0
  %327 = vmatprep.subr.bf16.mxu0 0
  %328 = vmatpush2.bf16.msra.mxu0 0
  %329 = vmatprep.subr.bf16.mxu0 0
  %330 = vmatpush2.bf16.msra.mxu0 0
  %331 = vmatprep.subr.bf16.mxu0 0
  %332 = vmatpush2.bf16.msra.mxu0 0
  %333 = vmatprep.subr.bf16.mxu0 0
  %334 = vmatpush2.bf16.msra.mxu0 0
  %335 = vmatprep.subr.bf16.mxu0 0
  %336 = vmatpush2.bf16.msra.mxu0 0
  %337 = vmatprep.mubr.bf16.mxu0 0
  %338 = vmatmul.mubr.bf16.gmra.mxu0 %v102
  %v339 = vpop.f32.mrf.mxu0
  %v340 = vadd.f32 %v291, %v339
  %v341 = vpop.f32.mrf.mxu0
  %v342 = vpop.f32.mrf.mxu0
  %v343 = vadd.f32 %v294, %v342
  %v344 = vpop.f32.mrf.mxu0
  %345 = vmatprep.mubr.bf16.mxu0 0
  %346 = vmatmul.mubr.bf16.gmra.mxu0 %v105
  %v347 = vpop.f32.mrf.mxu0
  %v348 = vadd.f32 %v299, %v347
  %v349 = vpop.f32.mrf.mxu0
  %v350 = vpop.f32.mrf.mxu0
  %v351 = vadd.f32 %v302, %v350
  %v352 = vpop.f32.mrf.mxu0
  %353 = vdwg.mxu0
  %v354 = vadd.f32 %v20, %v340
  %v355 = vadd.f32 %v21, %v343
  %v356 = vadd.f32 %v22, %v348
  %v357 = vadd.f32 %v23, %v351
  %358 = vst [vmem:[#allocation2] sm:$0xff] %v354
  %359 = vst [vmem:[#allocation2 + $0x8] sm:$0xff] %v355
  %360 = vst [vmem:[#allocation2 + $0x10] sm:$0xff] %v356
  %361 = vst [vmem:[#allocation2 + $0x18] sm:$0xff] %v357
  // Predicated region
  $region14: #{ftgan_encoder_atten.10} parent=0 // pred_check
    %p362 = pneg %p12
  $region15: #{ftgan_encoder_atten.10} parent=0 // pred_check_branch
    %364 = sbr.rel (%p362) target = $region17
  $region16: #{ftgan_encoder_atten.10} parent=0 // pred_region
    %v365 = vld [vmem:[#allocation2] sm:$0xff]
    %v366 = vld [vmem:[#allocation2 + $0x8] sm:$0xff]
    %v367 = vld [vmem:[#allocation2 + $0x10] sm:$0xff]
    %v368 = vld [vmem:[#allocation2 + $0x18] sm:$0xff]
    %369 = vst [vmem:[%s2] sm:$0xff] %v365
    %370 = vst [vmem:[%s2 + $0x8] sm:$0xff] %v366
    %371 = vst [vmem:[%s2 + $0x10] sm:$0xff] %v367
    %372 = vst [vmem:[%s2 + $0x18] sm:$0xff] %v368
  $region17: #{ftgan_encoder_atten.10} parent=0 // pred_fallthru
    _
  // Predicated region
  $region18: #{ftgan_encoder_atten.10} parent=0 // pred_check
    _
  $region19: #{ftgan_encoder_atten.10} parent=0 // pred_check_branch
    %374 = sbr.rel (0) target = $region21
  $region20: #{ftgan_encoder_atten.10} parent=0 // pred_region
    _
  $region21: #{ftgan_encoder_atten.10} parent=0 // pred_fallthru
    _
  // Predicated region
  $region22: #{ftgan_encoder_atten.10} parent=0 // pred_check
    _
  $region23: #{ftgan_encoder_atten.10} parent=0 // pred_check_branch
    %376 = sbr.rel (0) target = $region25
  $region24: #{ftgan_encoder_atten.10} parent=0 // pred_region
    _
  $region25: #{ftgan_encoder_atten.10} parent=0 // pred_fallthru
    _

// kernel: ftgan_encoder_atten.11
$region0: #{ftgan_encoder_atten.11}
  #allocation0 [shape = 'u32[]', space=smem, size = 0x4, offset = 0x4, fixed_abs, tag = 'smem constant byte address 0x4 - core index']
  #allocation1 [shape = 'u32[144,128]{1,0:T(1,128)}', space=vmem, size = 0x12000, scoped, tag = 'internal scratch']
  %s0 = inlined_call_operand.vmem [shape: f32[2], index: 0, kind: input, shape index: {}]
  %s1 = inlined_call_operand.vmem [shape: f32[2,1,128], index: 1, kind: input, shape index: {}]
  %s2 = inlined_call_operand.vmem [shape: f32[2,1,128], index: 2, kind: input, shape index: {}]
  %s3 = inlined_call_operand.vmem [shape: f32[2,16,128], index: 3, kind: input, shape index: {}]
  %s4 = inlined_call_operand.vmem [shape: bf16[128,128], index: 4, kind: input, shape index: {}]
  %s5 = inlined_call_operand.vmem [shape: f32[1,128], index: 5, kind: input, shape index: {}]
  %s6 = inlined_call_operand.vmem [shape: bf16[128,128], index: 6, kind: input, shape index: {}]
  %s7 = inlined_call_operand.vmem [shape: f32[1,128], index: 7, kind: input, shape index: {}]
  %s8 = inlined_call_operand.vmem [shape: bf16[128,128], index: 8, kind: input, shape index: {}]
  %s9 = inlined_call_operand.vmem [shape: f32[1,128], index: 9, kind: input, shape index: {}]
  %s10 = inlined_call_operand.vmem [shape: f32[1,128], index: 10, kind: input, shape index: {}]
  %s11 = inlined_call_operand.vmem [shape: f32[2,1,128], index: 11, kind: output, shape index: {}]
  %s12 = sld [smem:[#allocation0]]
  $region81: #{ftgan_encoder_atten.11} parent=0
    _
  %s14 = ssub.s32 1, %s12
  %s15 = scalar_select 0, %s14, %s12
  $region1: #{ftgan_encoder_atten.11} parent=0
    #allocation2 [shape = 'u8[512]{0}', space=smem, size = 0x200, scoped, tag = 'input window, operand 0, single buffered']
    #allocation3 [shape = 's32[2]{0}', space=sflag, size = 0x8, scoped, tag = 'scoped memory for ftgan_encoder_atten.11']
    %16 = vsyncpa [#allocation3], 0
    loop: start=0, step=1, limit=4
    $region2: #{ftgan_encoder_atten.11} parent=1 // loop_pre_header
      _
    $region3: #{ftgan_encoder_atten.11} parent=1 // loop_header
      %s18 = sphi 0, %s22
      %p19 = scmp.ge.s32.totalorder %s18, 4
      %s26 = sphi 0, %s26
      %s28 = sphi 0, %s26
      %s29 = sphi 0, %s28
      %s43 = sphi 0, %s29
      %s49 = sphi 0, %s51
      %s52 = sphi 0, %s49
      %s53 = sphi 0, %s52
      %s69 = sphi 0, %s53
      %s75 = sphi 0, %s77
      %s78 = sphi 0, %s75
      %s79 = sphi 0, %s78
      %s95 = sphi 0, %s79
      %s101 = sphi 0, %s103
      %s104 = sphi 0, %s101
      %s105 = sphi 0, %s104
      %s121 = sphi 0, %s105
      %s125 = sphi 0, %s125
      %s127 = sphi 0, %s125
      %s128 = sphi 0, %s127
      %s142 = sphi 0, %s128
      %s146 = sphi 0, %s146
      %s148 = sphi 0, %s146
      %s149 = sphi 0, %s148
      %s163 = sphi 0, %s149
      %s167 = sphi 0, %s167
      %s169 = sphi 0, %s167
      %s170 = sphi 0, %s169
      %s184 = sphi 0, %s170
      %s188 = sphi 0, %s188
      %s190 = sphi 0, %s188
      %s191 = sphi 0, %s190
      %s205 = sphi 0, %s191
      %s209 = sphi 0, %s209
      %s211 = sphi 0, %s209
      %s212 = sphi 0, %s211
      %s226 = sphi 0, %s212
      %s230 = sphi 0, %s230
      %s232 = sphi 0, %s230
      %s233 = sphi 0, %s232
      %s247 = sphi 0, %s233
      %s251 = sphi 0, %s251
      %s253 = sphi 0, %s251
      %s254 = sphi 0, %s253
      %s268 = sphi 0, %s254
      %s274 = sphi 0, %s276
      %s277 = sphi 0, %s274
      %s278 = sphi 0, %s277
      %s294 = sphi 0, %s278
    $region4: #{ftgan_encoder_atten.11} parent=1 // loop_header_branch
      %21 = sbr.rel (%p19) target = $region8
    $region5: #{ftgan_encoder_atten.11} parent=1 // loop_body
      %s23 = ssub.s32 %s18, 1
      %s24 = ssub.s32 %s18, 2
      %s25 = sadd.s32 %s18, 1
      %s27 = sadd.s32 %s26, 1
      %p30 = scmp.eq.s32.totalorder %s18, 1
      %p31 = scmp.ne.s32.totalorder %s26, %s28
      %p32 = scmp.eq.s32.totalorder %s18, 0
      %p33 = por %p31, %p32
      %p34 = scmp.ne.s32.totalorder %s26, %s28
      %p35 = scmp.eq.s32.totalorder %s23, 1
      %p36 = por %p34, %p35
      %p37 = scmp.ne.s32.totalorder %s28, %s29
      %p38 = scmp.eq.s32.totalorder %s23, 0
      %p39 = por %p37, %p38
      %p40 = scmp.ne.s32.totalorder %s28, %s29
      %p41 = scmp.eq.s32.totalorder %s24, 1
      %p42 = por %p40, %p41
      %p44 = scmp.ne.s32.totalorder %s29, %s43
      %p45 = scmp.eq.s32.totalorder %s24, 0
      %p46 = por %p44, %p45
      %s47 = ssub.s32 %s18, %s25
      %p48 = scmp.eq.s32.totalorder %s47, 0
      %s50 = sadd.s32 %s49, 1
      %s51 = scalar_select %p48, %s49, %s50
      %p54 = pneg %p48
      %p55 = scmp.eq.s32.totalorder %s18, 1
      %p56 = por %p54, %p55
      %p57 = scmp.ne.s32.totalorder %s49, %s52
      %p58 = scmp.eq.s32.totalorder %s18, 0
      %p59 = por %p57, %p58
      %p60 = scmp.ne.s32.totalorder %s49, %s52
      %p61 = scmp.eq.s32.totalorder %s23, 1
      %p62 = por %p60, %p61
      %p63 = scmp.ne.s32.totalorder %s52, %s53
      %p64 = scmp.eq.s32.totalorder %s23, 0
      %p65 = por %p63, %p64
      %p66 = scmp.ne.s32.totalorder %s52, %s53
      %p67 = scmp.eq.s32.totalorder %s24, 1
      %p68 = por %p66, %p67
      %p70 = scmp.ne.s32.totalorder %s53, %s69
      %p71 = scmp.eq.s32.totalorder %s24, 0
      %p72 = por %p70, %p71
      %s73 = ssub.s32 %s18, %s25
      %p74 = scmp.eq.s32.totalorder %s73, 0
      %s76 = sadd.s32 %s75, 1
      %s77 = scalar_select %p74, %s75, %s76
      %p80 = pneg %p74
      %p81 = scmp.eq.s32.totalorder %s18, 1
      %p82 = por %p80, %p81
      %p83 = scmp.ne.s32.totalorder %s75, %s78
      %p84 = scmp.eq.s32.totalorder %s18, 0
      %p85 = por %p83, %p84
      %p86 = scmp.ne.s32.totalorder %s75, %s78
      %p87 = scmp.eq.s32.totalorder %s23, 1
      %p88 = por %p86, %p87
      %p89 = scmp.ne.s32.totalorder %s78, %s79
      %p90 = scmp.eq.s32.totalorder %s23, 0
      %p91 = por %p89, %p90
      %p92 = scmp.ne.s32.totalorder %s78, %s79
      %p93 = scmp.eq.s32.totalorder %s24, 1
      %p94 = por %p92, %p93
      %p96 = scmp.ne.s32.totalorder %s79, %s95
      %p97 = scmp.eq.s32.totalorder %s24, 0
      %p98 = por %p96, %p97
      %s99 = ssub.s32 %s18, %s25
      %p100 = scmp.eq.s32.totalorder %s99, 0
      %s102 = sadd.s32 %s101, 1
      %s103 = scalar_select %p100, %s101, %s102
      %p106 = pneg %p100
      %p107 = scmp.eq.s32.totalorder %s18, 1
      %p108 = por %p106, %p107
      %p109 = scmp.ne.s32.totalorder %s101, %s104
      %p110 = scmp.eq.s32.totalorder %s18, 0
      %p111 = por %p109, %p110
      %p112 = scmp.ne.s32.totalorder %s101, %s104
      %p113 = scmp.eq.s32.totalorder %s23, 1
      %p114 = por %p112, %p113
      %p115 = scmp.ne.s32.totalorder %s104, %s105
      %p116 = scmp.eq.s32.totalorder %s23, 0
      %p117 = por %p115, %p116
      %p118 = scmp.ne.s32.totalorder %s104, %s105
      %p119 = scmp.eq.s32.totalorder %s24, 1
      %p120 = por %p118, %p119
      %p122 = scmp.ne.s32.totalorder %s105, %s121
      %p123 = scmp.eq.s32.totalorder %s24, 0
      %p124 = por %p122, %p123
      %s126 = sadd.s32 %s125, 1
      %p129 = scmp.eq.s32.totalorder %s18, 1
      %p130 = scmp.ne.s32.totalorder %s125, %s127
      %p131 = scmp.eq.s32.totalorder %s18, 0
      %p132 = por %p130, %p131
      %p133 = scmp.ne.s32.totalorder %s125, %s127
      %p134 = scmp.eq.s32.totalorder %s23, 1
      %p135 = por %p133, %p134
      %p136 = scmp.ne.s32.totalorder %s127, %s128
      %p137 = scmp.eq.s32.totalorder %s23, 0
      %p138 = por %p136, %p137
      %p139 = scmp.ne.s32.totalorder %s127, %s128
      %p140 = scmp.eq.s32.totalorder %s24, 1
      %p141 = por %p139, %p140
      %p143 = scmp.ne.s32.totalorder %s128, %s142
      %p144 = scmp.eq.s32.totalorder %s24, 0
      %p145 = por %p143, %p144
      %s147 = sadd.s32 %s146, 1
      %p150 = scmp.eq.s32.totalorder %s18, 1
      %p151 = scmp.ne.s32.totalorder %s146, %s148
      %p152 = scmp.eq.s32.totalorder %s18, 0
      %p153 = por %p151, %p152
      %p154 = scmp.ne.s32.totalorder %s146, %s148
      %p155 = scmp.eq.s32.totalorder %s23, 1
      %p156 = por %p154, %p155
      %p157 = scmp.ne.s32.totalorder %s148, %s149
      %p158 = scmp.eq.s32.totalorder %s23, 0
      %p159 = por %p157, %p158
      %p160 = scmp.ne.s32.totalorder %s148, %s149
      %p161 = scmp.eq.s32.totalorder %s24, 1
      %p162 = por %p160, %p161
      %p164 = scmp.ne.s32.totalorder %s149, %s163
      %p165 = scmp.eq.s32.totalorder %s24, 0
      %p166 = por %p164, %p165
      %s168 = sadd.s32 %s167, 1
      %p171 = scmp.eq.s32.totalorder %s18, 1
      %p172 = scmp.ne.s32.totalorder %s167, %s169
      %p173 = scmp.eq.s32.totalorder %s18, 0
      %p174 = por %p172, %p173
      %p175 = scmp.ne.s32.totalorder %s167, %s169
      %p176 = scmp.eq.s32.totalorder %s23, 1
      %p177 = por %p175, %p176
      %p178 = scmp.ne.s32.totalorder %s169, %s170
      %p179 = scmp.eq.s32.totalorder %s23, 0
      %p180 = por %p178, %p179
      %p181 = scmp.ne.s32.totalorder %s169, %s170
      %p182 = scmp.eq.s32.totalorder %s24, 1
      %p183 = por %p181, %p182
      %p185 = scmp.ne.s32.totalorder %s170, %s184
      %p186 = scmp.eq.s32.totalorder %s24, 0
      %p187 = por %p185, %p186
      %s189 = sadd.s32 %s188, 1
      %p192 = scmp.eq.s32.totalorder %s18, 1
      %p193 = scmp.ne.s32.totalorder %s188, %s190
      %p194 = scmp.eq.s32.totalorder %s18, 0
      %p195 = por %p193, %p194
      %p196 = scmp.ne.s32.totalorder %s188, %s190
      %p197 = scmp.eq.s32.totalorder %s23, 1
      %p198 = por %p196, %p197
      %p199 = scmp.ne.s32.totalorder %s190, %s191
      %p200 = scmp.eq.s32.totalorder %s23, 0
      %p201 = por %p199, %p200
      %p202 = scmp.ne.s32.totalorder %s190, %s191
      %p203 = scmp.eq.s32.totalorder %s24, 1
      %p204 = por %p202, %p203
      %p206 = scmp.ne.s32.totalorder %s191, %s205
      %p207 = scmp.eq.s32.totalorder %s24, 0
      %p208 = por %p206, %p207
      %s210 = sadd.s32 %s209, 1
      %p213 = scmp.eq.s32.totalorder %s18, 1
      %p214 = scmp.ne.s32.totalorder %s209, %s211
      %p215 = scmp.eq.s32.totalorder %s18, 0
      %p216 = por %p214, %p215
      %p217 = scmp.ne.s32.totalorder %s209, %s211
      %p218 = scmp.eq.s32.totalorder %s23, 1
      %p219 = por %p217, %p218
      %p220 = scmp.ne.s32.totalorder %s211, %s212
      %p221 = scmp.eq.s32.totalorder %s23, 0
      %p222 = por %p220, %p221
      %p223 = scmp.ne.s32.totalorder %s211, %s212
      %p224 = scmp.eq.s32.totalorder %s24, 1
      %p225 = por %p223, %p224
      %p227 = scmp.ne.s32.totalorder %s212, %s226
      %p228 = scmp.eq.s32.totalorder %s24, 0
      %p229 = por %p227, %p228
      %s231 = sadd.s32 %s230, 1
      %p234 = scmp.eq.s32.totalorder %s18, 1
      %p235 = scmp.ne.s32.totalorder %s230, %s232
      %p236 = scmp.eq.s32.totalorder %s18, 0
      %p237 = por %p235, %p236
      %p238 = scmp.ne.s32.totalorder %s230, %s232
      %p239 = scmp.eq.s32.totalorder %s23, 1
      %p240 = por %p238, %p239
      %p241 = scmp.ne.s32.totalorder %s232, %s233
      %p242 = scmp.eq.s32.totalorder %s23, 0
      %p243 = por %p241, %p242
      %p244 = scmp.ne.s32.totalorder %s232, %s233
      %p245 = scmp.eq.s32.totalorder %s24, 1
      %p246 = por %p244, %p245
      %p248 = scmp.ne.s32.totalorder %s233, %s247
      %p249 = scmp.eq.s32.totalorder %s24, 0
      %p250 = por %p248, %p249
      %s252 = sadd.s32 %s251, 1
      %p255 = scmp.eq.s32.totalorder %s18, 1
      %p256 = scmp.ne.s32.totalorder %s251, %s253
      %p257 = scmp.eq.s32.totalorder %s18, 0
      %p258 = por %p256, %p257
      %p259 = scmp.ne.s32.totalorder %s251, %s253
      %p260 = scmp.eq.s32.totalorder %s23, 1
      %p261 = por %p259, %p260
      %p262 = scmp.ne.s32.totalorder %s253, %s254
      %p263 = scmp.eq.s32.totalorder %s23, 0
      %p264 = por %p262, %p263
      %p265 = scmp.ne.s32.totalorder %s253, %s254
      %p266 = scmp.eq.s32.totalorder %s24, 1
      %p267 = por %p265, %p266
      %p269 = scmp.ne.s32.totalorder %s254, %s268
      %p270 = scmp.eq.s32.totalorder %s24, 0
      %p271 = por %p269, %p270
      %s272 = ssub.s32 %s18, %s25
      %p273 = scmp.eq.s32.totalorder %s272, 0
      %s275 = sadd.s32 %s274, 1
      %s276 = scalar_select %p273, %s274, %s275
      %p279 = pneg %p273
      %p280 = scmp.eq.s32.totalorder %s18, 1
      %p281 = por %p279, %p280
      %p282 = scmp.ne.s32.totalorder %s274, %s277
      %p283 = scmp.eq.s32.totalorder %s18, 0
      %p284 = por %p282, %p283
      %p285 = scmp.ne.s32.totalorder %s274, %s277
      %p286 = scmp.eq.s32.totalorder %s23, 1
      %p287 = por %p285, %p286
      %p288 = scmp.ne.s32.totalorder %s277, %s278
      %p289 = scmp.eq.s32.totalorder %s23, 0
      %p290 = por %p288, %p289
      %p291 = scmp.ne.s32.totalorder %s277, %s278
      %p292 = scmp.eq.s32.totalorder %s24, 1
      %p293 = por %p291, %p292
      %p295 = scmp.ne.s32.totalorder %s278, %s294
      %p296 = scmp.eq.s32.totalorder %s24, 0
      %p297 = por %p295, %p296
      %p298 = scmp.le.s32.totalorder 1, %s18
      %p299 = scmp.lt.s32.totalorder %s18, 3
      %p300 = pnand %p298, %p299
      %p301 = pneg %p300
      // Predicated region
      $region9: #{ftgan_encoder_atten.11} parent=5 // pred_check
        _
      $region10: #{ftgan_encoder_atten.11} parent=5 // pred_check_branch
        %303 = sbr.rel (%p300) target = $region12
      $region11: #{ftgan_encoder_atten.11} parent=5 // pred_region
        %s304 = ssub.s32 %s18, 1
        // Predicated region
        $region13: #{ftgan_encoder_atten.11} parent=11 // pred_check
          %p305 = pneg %p39
        $region14: #{ftgan_encoder_atten.11} parent=11 // pred_check_branch
          %307 = sbr.rel (%p305) target = $region16
        $region15: #{ftgan_encoder_atten.11} parent=11 // pred_region
          %s309 = ssub.s32 16, 16
          %310 = vsyncadd [#allocation3], %s309
          %s312 = sshll.u32 %s0, 4
          %s313 = int_to_ptr.vmem [resolvable:$true] %s312
          %315 = dma.vmem_to_smem %s313, 16, [#allocation2], [#allocation3]
        $region16: #{ftgan_encoder_atten.11} parent=11 // pred_fallthru
          _
        // Predicated region
        $region17: #{ftgan_encoder_atten.11} parent=11 // pred_check
          %p316 = pneg %p138
        $region18: #{ftgan_encoder_atten.11} parent=11 // pred_check_branch
          %318 = sbr.rel (%p316) target = $region20
        $region19: #{ftgan_encoder_atten.11} parent=11 // pred_region
          _
        $region20: #{ftgan_encoder_atten.11} parent=11 // pred_fallthru
          _
        // Predicated region
        $region21: #{ftgan_encoder_atten.11} parent=11 // pred_check
          %p319 = pneg %p159
        $region22: #{ftgan_encoder_atten.11} parent=11 // pred_check_branch
          %321 = sbr.rel (%p319) target = $region24
        $region23: #{ftgan_encoder_atten.11} parent=11 // pred_region
          _
        $region24: #{ftgan_encoder_atten.11} parent=11 // pred_fallthru
          _
        // Predicated region
        $region25: #{ftgan_encoder_atten.11} parent=11 // pred_check
          %p322 = pneg %p180
        $region26: #{ftgan_encoder_atten.11} parent=11 // pred_check_branch
          %324 = sbr.rel (%p322) target = $region28
        $region27: #{ftgan_encoder_atten.11} parent=11 // pred_region
          _
        $region28: #{ftgan_encoder_atten.11} parent=11 // pred_fallthru
          _
        // Predicated region
        $region29: #{ftgan_encoder_atten.11} parent=11 // pred_check
          %p325 = pneg %p201
        $region30: #{ftgan_encoder_atten.11} parent=11 // pred_check_branch
          %327 = sbr.rel (%p325) target = $region32
        $region31: #{ftgan_encoder_atten.11} parent=11 // pred_region
          _
        $region32: #{ftgan_encoder_atten.11} parent=11 // pred_fallthru
          _
        // Predicated region
        $region33: #{ftgan_encoder_atten.11} parent=11 // pred_check
          %p328 = pneg %p222
        $region34: #{ftgan_encoder_atten.11} parent=11 // pred_check_branch
          %330 = sbr.rel (%p328) target = $region36
        $region35: #{ftgan_encoder_atten.11} parent=11 // pred_region
          _
        $region36: #{ftgan_encoder_atten.11} parent=11 // pred_fallthru
          _
        // Predicated region
        $region37: #{ftgan_encoder_atten.11} parent=11 // pred_check
          %p331 = pneg %p243
        $region38: #{ftgan_encoder_atten.11} parent=11 // pred_check_branch
          %333 = sbr.rel (%p331) target = $region40
        $region39: #{ftgan_encoder_atten.11} parent=11 // pred_region
          _
        $region40: #{ftgan_encoder_atten.11} parent=11 // pred_fallthru
          _
        // Predicated region
        $region41: #{ftgan_encoder_atten.11} parent=11 // pred_check
          %p334 = pneg %p264
        $region42: #{ftgan_encoder_atten.11} parent=11 // pred_check_branch
          %336 = sbr.rel (%p334) target = $region44
        $region43: #{ftgan_encoder_atten.11} parent=11 // pred_region
          _
        $region44: #{ftgan_encoder_atten.11} parent=11 // pred_fallthru
          _
      $region12: #{ftgan_encoder_atten.11} parent=5 // pred_fallthru
        _
      %p337 = scmp.lt.s32.totalorder %s18, 2
      // Predicated region
      $region45: #{ftgan_encoder_atten.11} parent=5 // pred_check
        %p338 = pneg %p337
      $region46: #{ftgan_encoder_atten.11} parent=5 // pred_check_branch
        %340 = sbr.rel (%p338) target = $region48
      $region47: #{ftgan_encoder_atten.11} parent=5 // pred_region
        // Predicated region
        $region49: #{ftgan_encoder_atten.11} parent=47 // pred_check
          %p341 = pneg %p59
        $region50: #{ftgan_encoder_atten.11} parent=47 // pred_check_branch
          %343 = sbr.rel (%p341) target = $region52
        $region51: #{ftgan_encoder_atten.11} parent=47 // pred_region
          %p344 = scmp.lt.s32.totalorder %s18, 1
          %s345 = scalar_select %p344, %s18, 1
          %s346 = scalar_lea.vmem %s1, %s345
        $region52: #{ftgan_encoder_atten.11} parent=47 // pred_fallthru
          _
        // Predicated region
        $region53: #{ftgan_encoder_atten.11} parent=47 // pred_check
          %p347 = pneg %p85
        $region54: #{ftgan_encoder_atten.11} parent=47 // pred_check_branch
          %349 = sbr.rel (%p347) target = $region56
        $region55: #{ftgan_encoder_atten.11} parent=47 // pred_region
          %p350 = scmp.lt.s32.totalorder %s18, 1
          %s351 = scalar_select %p350, %s18, 1
          %s352 = scalar_lea.vmem %s2, %s351
        $region56: #{ftgan_encoder_atten.11} parent=47 // pred_fallthru
          _
        // Predicated region
        $region57: #{ftgan_encoder_atten.11} parent=47 // pred_check
          %p353 = pneg %p111
        $region58: #{ftgan_encoder_atten.11} parent=47 // pred_check_branch
          %355 = sbr.rel (%p353) target = $region60
        $region59: #{ftgan_encoder_atten.11} parent=47 // pred_region
          %p356 = scmp.lt.s32.totalorder %s18, 1
          %s357 = scalar_select %p356, %s18, 1
          %s358 = smul.addr %s357, 2
          %s359 = smul.addr %s358, 8
          %s360 = scalar_lea.vmem %s3, %s359
        $region60: #{ftgan_encoder_atten.11} parent=47 // pred_fallthru
          _
      $region48: #{ftgan_encoder_atten.11} parent=5 // pred_fallthru
        _
      %p361 = scmp.le.s32.totalorder 1, %s18
      %p362 = scmp.lt.s32.totalorder %s18, 3
      %p363 = pnand %p361, %p362
      %p364 = pneg %p363
      // Predicated region
      $region61: #{ftgan_encoder_atten.11} parent=5 // pred_check
        _
      $region62: #{ftgan_encoder_atten.11} parent=5 // pred_check_branch
        %366 = sbr.rel (%p363) target = $region64
      $region63: #{ftgan_encoder_atten.11} parent=5 // pred_region
        %s367 = ssub.s32 %s18, 1
        // Predicated region
        $region65: #{ftgan_encoder_atten.11} parent=63 // pred_check
          %p368 = pneg %p39
        $region66: #{ftgan_encoder_atten.11} parent=63 // pred_check_branch
          %370 = sbr.rel (%p368) target = $region68
        $region67: #{ftgan_encoder_atten.11} parent=63 // pred_region
          %371 = dma.done [#allocation3], 16
        $region68: #{ftgan_encoder_atten.11} parent=63 // pred_fallthru
          _
        %372 = sfence
        %p373 = pneg %p39
        %p374 = pneg %p36
        %p375 = scmp.lt.s32.totalorder %s23, 1
        %s376 = scalar_select %p375, %s23, 1
        %s377 = scalar_lea.vmem %s1, %s376
        %p378 = pneg %p65
        %p379 = pneg %p62
        %p380 = scmp.lt.s32.totalorder %s23, 1
        %s381 = scalar_select %p380, %s23, 1
        %s382 = scalar_lea.vmem %s2, %s381
        %p383 = pneg %p91
        %p384 = pneg %p88
        %p385 = scmp.lt.s32.totalorder %s23, 1
        %s386 = scalar_select %p385, %s23, 1
        %s387 = smul.addr %s386, 2
        %s388 = smul.addr %s387, 8
        %s389 = scalar_lea.vmem %s3, %s388
        %p390 = pneg %p117
        %p391 = pneg %p114
        %p392 = pneg %p138
        %p393 = pneg %p135
        %p394 = pneg %p159
        %p395 = pneg %p156
        %p396 = pneg %p180
        %p397 = pneg %p177
        %p398 = pneg %p201
        %p399 = pneg %p198
        %p400 = pneg %p222
        %p401 = pneg %p219
        %p402 = pneg %p243
        %p403 = pneg %p240
        %p404 = pneg %p264
        %p405 = pneg %p261
        %p406 = pneg %p290
        %p407 = pneg %p287
        %p408 = scmp.lt.s32.totalorder %s23, 1
        %s409 = scalar_select %p408, %s23, 1
        %s410 = scalar_lea.vmem %s11, %s409
        %p411 = scmp.lt.s32.totalorder %s23, 1
        %s412 = scalar_select %p411, %s23, 1
        %s413 = scalar_lea.vmem %s1, %s412
        %p414 = scmp.lt.s32.totalorder %s23, 1
        %s415 = scalar_select %p414, %s23, 1
        %s416 = scalar_lea.vmem %s2, %s415
        %p417 = scmp.lt.s32.totalorder %s23, 1
        %s418 = scalar_select %p417, %s23, 1
        %s419 = smul.addr %s418, 2
        %s420 = smul.addr %s419, 8
        %s421 = scalar_lea.vmem %s3, %s420
        %p422 = scmp.lt.s32.totalorder %s23, 1
        %s423 = scalar_select %p422, %s23, 1
        %s424 = scalar_lea.vmem %s11, %s423
        %v426 = vld [vmem:[%s421] sm:$0xff]
        %v427 = vld [vmem:[%s421 + $0x8] sm:$0xff]
        %v428 = vld [vmem:[%s413] sm:$0x1]
        %v430 = vlaneseq
        %v431 = vshrl.u32 %v430, 7
        %v432 = vsub.s32 0, %v431
        %v433 = vrot.slane %v428, %v432
        %v435 = vmul.f32 %v426, %v433
        %v436 = vmul.f32 %v427, %v433
        %v437 = vld [vmem:[%s416] sm:$0x1]
        %v439 = vlaneseq
        %v440 = vshrl.u32 %v439, 7
        %v441 = vsub.s32 0, %v440
        %v442 = vrot.slane %v437, %v441
        %v444 = vadd.f32 %v435, %v442
        %v445 = vadd.f32 %v436, %v442
        %v446 = vmax.f32 %v444, 0.0
        %v447 = vmax.f32 %v445, 0.0
        %v448 = vpack.c.bf16 %v447, %v446
        %v449 = vld [vmem:[%s4] sm:$0xf]
        %v450 = vld [vmem:[%s4 + $0x4] sm:$0xf]
        %v451 = vld [vmem:[%s4 + $0x8] sm:$0xf]
        %v452 = vld [vmem:[%s4 + $0xc] sm:$0xf]
        %v453 = vld [vmem:[%s4 + $0x10] sm:$0xf]
        %v454 = vld [vmem:[%s4 + $0x14] sm:$0xf]
        %v455 = vld [vmem:[%s4 + $0x18] sm:$0xf]
        %v456 = vld [vmem:[%s4 + $0x1c] sm:$0xf]
        %v457 = vld [vmem:[%s4 + $0x20] sm:$0xf]
        %v458 = vld [vmem:[%s4 + $0x24] sm:$0xf]
        %v459 = vld [vmem:[%s4 + $0x28] sm:$0xf]
        %v460 = vld [vmem:[%s4 + $0x2c] sm:$0xf]
        %v461 = vld [vmem:[%s4 + $0x30] sm:$0xf]
        %v462 = vld [vmem:[%s4 + $0x34] sm:$0xf]
        %v463 = vld [vmem:[%s4 + $0x38] sm:$0xf]
        %v464 = vld [vmem:[%s4 + $0x3c] sm:$0xf]
        %v465 = vld [vmem:[%s5] sm:$0x1]
        %v467 = vlaneseq
        %v468 = vshrl.u32 %v467, 7
        %v469 = vsub.s32 0, %v468
        %v470 = vrot.slane %v465, %v469
        %v488 = vunpack.c.l.b16 %v449
        %v489 = vunpack.c.l.b16 %v450
        %v490 = vunpack.c.l.b16 %v451
        %v491 = vunpack.c.l.b16 %v452
        %v492 = vunpack.c.l.b16 %v453
        %v493 = vunpack.c.l.b16 %v454
        %v494 = vunpack.c.l.b16 %v455
        %v495 = vunpack.c.l.b16 %v456
        %v496 = vunpack.c.l.b16 %v457
        %v497 = vunpack.c.l.b16 %v458
        %v498 = vunpack.c.l.b16 %v459
        %v499 = vunpack.c.l.b16 %v460
        %v500 = vunpack.c.l.b16 %v461
        %v501 = vunpack.c.l.b16 %v462
        %v502 = vunpack.c.l.b16 %v463
        %v503 = vunpack.c.l.b16 %v464
        %v504 = vpack.c.b16 %v489, %v488
        %v505 = vpack.c.b16 %v491, %v490
        %v506 = vpack.c.b16 %v493, %v492
        %v507 = vpack.c.b16 %v495, %v494
        %v508 = vpack.c.b16 %v497, %v496
        %v509 = vpack.c.b16 %v499, %v498
        %v510 = vpack.c.b16 %v501, %v500
        %v511 = vpack.c.b16 %v503, %v502
        %520 = vmatprep.subr.bf16.mxu0 0
        %521 = vmatpush1.bf16.msra.mxu0 %v511
        %522 = vmatprep.subr.bf16.mxu0 0
        %523 = vmatpush1.bf16.msra.mxu0 %v510
        %524 = vmatprep.subr.bf16.mxu0 0
        %525 = vmatpush1.bf16.msra.mxu0 %v509
        %526 = vmatprep.subr.bf16.mxu0 0
        %527 = vmatpush1.bf16.msra.mxu0 %v508
        %528 = vmatprep.subr.bf16.mxu0 0
        %529 = vmatpush1.bf16.msra.mxu0 %v507
        %530 = vmatprep.subr.bf16.mxu0 0
        %531 = vmatpush1.bf16.msra.mxu0 %v506
        %532 = vmatprep.subr.bf16.mxu0 0
        %533 = vmatpush1.bf16.msra.mxu0 %v505
        %534 = vmatprep.subr.bf16.mxu0 0
        %535 = vmatpush1.bf16.msra.mxu0 %v504
        %536 = vmatprep.subr.bf16.mxu0 0
        %537 = vmatpush2.bf16.msra.mxu0 0
        %538 = vmatprep.subr.bf16.mxu0 0
        %539 = vmatpush2.bf16.msra.mxu0 0
        %540 = vmatprep.subr.bf16.mxu0 0
        %541 = vmatpush2.bf16.msra.mxu0 0
        %542 = vmatprep.subr.bf16.mxu0 0
        %543 = vmatpush2.bf16.msra.mxu0 0
        %544 = vmatprep.subr.bf16.mxu0 0
        %545 = vmatpush2.bf16.msra.mxu0 0
        %546 = vmatprep.subr.bf16.mxu0 0
        %547 = vmatpush2.bf16.msra.mxu0 0
        %548 = vmatprep.subr.bf16.mxu0 0
        %549 = vmatpush2.bf16.msra.mxu0 0
        %550 = vmatprep.subr.bf16.mxu0 0
        %551 = vmatpush2.bf16.msra.mxu0 0
        %552 = vmatprep.mubr.bf16.mxu0 0
        %553 = vmatmul.mubr.bf16.gmra.mxu0 %v448
        %v554 = vpop.f32.mrf.mxu0
        %v555 = vadd.f32 %v470, %v554
        %v556 = vpop.f32.mrf.mxu0
        %v557 = vpop.f32.mrf.mxu0
        %v558 = vadd.f32 %v470, %v557
        %v559 = vpop.f32.mrf.mxu0
        %560 = vdwg.mxu0
        %v561 = vld [vmem:[%s6] sm:$0xf]
        %v562 = vld [vmem:[%s6 + $0x4] sm:$0xf]
        %v563 = vld [vmem:[%s6 + $0x8] sm:$0xf]
        %v564 = vld [vmem:[%s6 + $0xc] sm:$0xf]
        %v565 = vld [vmem:[%s6 + $0x10] sm:$0xf]
        %v566 = vld [vmem:[%s6 + $0x14] sm:$0xf]
        %v567 = vld [vmem:[%s6 + $0x18] sm:$0xf]
        %v568 = vld [vmem:[%s6 + $0x1c] sm:$0xf]
        %v569 = vld [vmem:[%s6 + $0x20] sm:$0xf]
        %v570 = vld [vmem:[%s6 + $0x24] sm:$0xf]
        %v571 = vld [vmem:[%s6 + $0x28] sm:$0xf]
        %v572 = vld [vmem:[%s6 + $0x2c] sm:$0xf]
        %v573 = vld [vmem:[%s6 + $0x30] sm:$0xf]
        %v574 = vld [vmem:[%s6 + $0x34] sm:$0xf]
        %v575 = vld [vmem:[%s6 + $0x38] sm:$0xf]
        %v576 = vld [vmem:[%s6 + $0x3c] sm:$0xf]
        %v577 = vld [vmem:[%s7] sm:$0x1]
        %v579 = vlaneseq
        %v580 = vshrl.u32 %v579, 7
        %v581 = vsub.s32 0, %v580
        %v582 = vrot.slane %v577, %v581
        %v600 = vunpack.c.l.b16 %v561
        %v601 = vunpack.c.l.b16 %v562
        %v602 = vunpack.c.l.b16 %v563
        %v603 = vunpack.c.l.b16 %v564
        %v604 = vunpack.c.l.b16 %v565
        %v605 = vunpack.c.l.b16 %v566
        %v606 = vunpack.c.l.b16 %v567
        %v607 = vunpack.c.l.b16 %v568
        %v608 = vunpack.c.l.b16 %v569
        %v609 = vunpack.c.l.b16 %v570
        %v610 = vunpack.c.l.b16 %v571
        %v611 = vunpack.c.l.b16 %v572
        %v612 = vunpack.c.l.b16 %v573
        %v613 = vunpack.c.l.b16 %v574
        %v614 = vunpack.c.l.b16 %v575
        %v615 = vunpack.c.l.b16 %v576
        %v616 = vpack.c.b16 %v601, %v600
        %v617 = vpack.c.b16 %v603, %v602
        %v618 = vpack.c.b16 %v605, %v604
        %v619 = vpack.c.b16 %v607, %v606
        %v620 = vpack.c.b16 %v609, %v608
        %v621 = vpack.c.b16 %v611, %v610
        %v622 = vpack.c.b16 %v613, %v612
        %v623 = vpack.c.b16 %v615, %v614
        %632 = vmatprep.subr.bf16.mxu0 0
        %633 = vmatpush1.bf16.msra.mxu0 %v623
        %634 = vmatprep.subr.bf16.mxu0 0
        %635 = vmatpush1.bf16.msra.mxu0 %v622
        %636 = vmatprep.subr.bf16.mxu0 0
        %637 = vmatpush1.bf16.msra.mxu0 %v621
        %638 = vmatprep.subr.bf16.mxu0 0
        %639 = vmatpush1.bf16.msra.mxu0 %v620
        %640 = vmatprep.subr.bf16.mxu0 0
        %641 = vmatpush1.bf16.msra.mxu0 %v619
        %642 = vmatprep.subr.bf16.mxu0 0
        %643 = vmatpush1.bf16.msra.mxu0 %v618
        %644 = vmatprep.subr.bf16.mxu0 0
        %645 = vmatpush1.bf16.msra.mxu0 %v617
        %646 = vmatprep.subr.bf16.mxu0 0
        %647 = vmatpush1.bf16.msra.mxu0 %v616
        %648 = vmatprep.subr.bf16.mxu0 0
        %649 = vmatpush2.bf16.msra.mxu0 0
        %650 = vmatprep.subr.bf16.mxu0 0
        %651 = vmatpush2.bf16.msra.mxu0 0
        %652 = vmatprep.subr.bf16.mxu0 0
        %653 = vmatpush2.bf16.msra.mxu0 0
        %654 = vmatprep.subr.bf16.mxu0 0
        %655 = vmatpush2.bf16.msra.mxu0 0
        %656 = vmatprep.subr.bf16.mxu0 0
        %657 = vmatpush2.bf16.msra.mxu0 0
        %658 = vmatprep.subr.bf16.mxu0 0
        %659 = vmatpush2.bf16.msra.mxu0 0
        %660 = vmatprep.subr.bf16.mxu0 0
        %661 = vmatpush2.bf16.msra.mxu0 0
        %662 = vmatprep.subr.bf16.mxu0 0
        %663 = vmatpush2.bf16.msra.mxu0 0
        %664 = vmatprep.mubr.bf16.mxu0 0
        %665 = vmatmul.mubr.bf16.gmra.mxu0 %v448
        %v666 = vpop.f32.mrf.mxu0
        %v667 = vadd.f32 %v582, %v666
        %v668 = vpop.f32.mrf.mxu0
        %v669 = vpop.f32.mrf.mxu0
        %v670 = vadd.f32 %v582, %v669
        %v671 = vpop.f32.mrf.mxu0
        %672 = vdwg.mxu0
        %v673 = vld [vmem:[%s8] sm:$0xf]
        %v674 = vld [vmem:[%s8 + $0x4] sm:$0xf]
        %v675 = vld [vmem:[%s8 + $0x8] sm:$0xf]
        %v676 = vld [vmem:[%s8 + $0xc] sm:$0xf]
        %v677 = vld [vmem:[%s8 + $0x10] sm:$0xf]
        %v678 = vld [vmem:[%s8 + $0x14] sm:$0xf]
        %v679 = vld [vmem:[%s8 + $0x18] sm:$0xf]
        %v680 = vld [vmem:[%s8 + $0x1c] sm:$0xf]
        %v681 = vld [vmem:[%s8 + $0x20] sm:$0xf]
        %v682 = vld [vmem:[%s8 + $0x24] sm:$0xf]
        %v683 = vld [vmem:[%s8 + $0x28] sm:$0xf]
        %v684 = vld [vmem:[%s8 + $0x2c] sm:$0xf]
        %v685 = vld [vmem:[%s8 + $0x30] sm:$0xf]
        %v686 = vld [vmem:[%s8 + $0x34] sm:$0xf]
        %v687 = vld [vmem:[%s8 + $0x38] sm:$0xf]
        %v688 = vld [vmem:[%s8 + $0x3c] sm:$0xf]
        %v689 = vld [vmem:[%s9] sm:$0x1]
        %v691 = vlaneseq
        %v692 = vshrl.u32 %v691, 7
        %v693 = vsub.s32 0, %v692
        %v694 = vrot.slane %v689, %v693
        %v712 = vunpack.c.l.b16 %v673
        %v713 = vunpack.c.l.b16 %v674
        %v714 = vunpack.c.l.b16 %v675
        %v715 = vunpack.c.l.b16 %v676
        %v716 = vunpack.c.l.b16 %v677
        %v717 = vunpack.c.l.b16 %v678
        %v718 = vunpack.c.l.b16 %v679
        %v719 = vunpack.c.l.b16 %v680
        %v720 = vunpack.c.l.b16 %v681
        %v721 = vunpack.c.l.b16 %v682
        %v722 = vunpack.c.l.b16 %v683
        %v723 = vunpack.c.l.b16 %v684
        %v724 = vunpack.c.l.b16 %v685
        %v725 = vunpack.c.l.b16 %v686
        %v726 = vunpack.c.l.b16 %v687
        %v727 = vunpack.c.l.b16 %v688
        %v728 = vpack.c.b16 %v713, %v712
        %v729 = vpack.c.b16 %v715, %v714
        %v730 = vpack.c.b16 %v717, %v716
        %v731 = vpack.c.b16 %v719, %v718
        %v732 = vpack.c.b16 %v721, %v720
        %v733 = vpack.c.b16 %v723, %v722
        %v734 = vpack.c.b16 %v725, %v724
        %v735 = vpack.c.b16 %v727, %v726
        %744 = vmatprep.subr.bf16.mxu0 0
        %745 = vmatpush1.bf16.msra.mxu0 %v735
        %746 = vmatprep.subr.bf16.mxu0 0
        %747 = vmatpush1.bf16.msra.mxu0 %v734
        %748 = vmatprep.subr.bf16.mxu0 0
        %749 = vmatpush1.bf16.msra.mxu0 %v733
        %750 = vmatprep.subr.bf16.mxu0 0
        %751 = vmatpush1.bf16.msra.mxu0 %v732
        %752 = vmatprep.subr.bf16.mxu0 0
        %753 = vmatpush1.bf16.msra.mxu0 %v731
        %754 = vmatprep.subr.bf16.mxu0 0
        %755 = vmatpush1.bf16.msra.mxu0 %v730
        %756 = vmatprep.subr.bf16.mxu0 0
        %757 = vmatpush1.bf16.msra.mxu0 %v729
        %758 = vmatprep.subr.bf16.mxu0 0
        %759 = vmatpush1.bf16.msra.mxu0 %v728
        %760 = vmatprep.subr.bf16.mxu0 0
        %761 = vmatpush2.bf16.msra.mxu0 0
        %762 = vmatprep.subr.bf16.mxu0 0
        %763 = vmatpush2.bf16.msra.mxu0 0
        %764 = vmatprep.subr.bf16.mxu0 0
        %765 = vmatpush2.bf16.msra.mxu0 0
        %766 = vmatprep.subr.bf16.mxu0 0
        %767 = vmatpush2.bf16.msra.mxu0 0
        %768 = vmatprep.subr.bf16.mxu0 0
        %769 = vmatpush2.bf16.msra.mxu0 0
        %770 = vmatprep.subr.bf16.mxu0 0
        %771 = vmatpush2.bf16.msra.mxu0 0
        %772 = vmatprep.subr.bf16.mxu0 0
        %773 = vmatpush2.bf16.msra.mxu0 0
        %774 = vmatprep.subr.bf16.mxu0 0
        %775 = vmatpush2.bf16.msra.mxu0 0
        %776 = vmatprep.mubr.bf16.mxu0 0
        %777 = vmatmul.mubr.bf16.gmra.mxu0 %v448
        %v778 = vpop.f32.mrf.mxu0
        %v779 = vadd.f32 %v694, %v778
        %v780 = vpop.f32.mrf.mxu0
        %v781 = vpop.f32.mrf.mxu0
        %v782 = vadd.f32 %v694, %v781
        %v783 = vpop.f32.mrf.mxu0
        %784 = vdwg.mxu0
        %v785 = vpack.c.bf16 %v558, %v555
        %v786 = vpack.c.bf16 %v670, %v667
        %787 = vmatprep.subr.bf16.mxu0 0
        %788 = vmatpush1.bf16.xpose.msra.mxu0 0
        %789 = vmatprep.subr.bf16.mxu0 0
        %790 = vmatpush1.bf16.xpose.msra.mxu0 0
        %791 = vmatprep.subr.bf16.mxu0 0
        %792 = vmatpush1.bf16.xpose.msra.mxu0 0
        %793 = vmatprep.subr.bf16.mxu0 0
        %794 = vmatpush1.bf16.xpose.msra.mxu0 0
        %795 = vmatprep.subr.bf16.mxu0 0
        %796 = vmatpush1.bf16.xpose.msra.mxu0 0
        %797 = vmatprep.subr.bf16.mxu0 0
        %798 = vmatpush1.bf16.xpose.msra.mxu0 0
        %799 = vmatprep.subr.bf16.mxu0 0
        %800 = vmatpush1.bf16.xpose.msra.mxu0 0
        %801 = vmatprep.subr.bf16.mxu0 0
        %802 = vmatpush1.bf16.xpose.msra.mxu0 %v786
        %803 = vmatprep.subr.bf16.mxu0 0
        %804 = vmatpush2.bf16.xpose.msra.mxu0 0
        %805 = vmatprep.subr.bf16.mxu0 0
        %806 = vmatpush2.bf16.xpose.msra.mxu0 0
        %807 = vmatprep.subr.bf16.mxu0 0
        %808 = vmatpush2.bf16.xpose.msra.mxu0 0
        %809 = vmatprep.subr.bf16.mxu0 0
        %810 = vmatpush2.bf16.xpose.msra.mxu0 0
        %811 = vmatprep.subr.bf16.mxu0 0
        %812 = vmatpush2.bf16.xpose.msra.mxu0 0
        %813 = vmatprep.subr.bf16.mxu0 0
        %814 = vmatpush2.bf16.xpose.msra.mxu0 0
        %815 = vmatprep.subr.bf16.mxu0 0
        %816 = vmatpush2.bf16.xpose.msra.mxu0 0
        %817 = vmatprep.subr.bf16.mxu0 0
        %818 = vmatpush2.bf16.xpose.msra.mxu0 0
        %819 = vmatprep.mubr.bf16.mxu0 0
        %820 = vmatmul.mubr.bf16.gmra.mxu0 %v785
        %v821 = vpop.f32.mrf.mxu0
        %v822 = vadd.f32 0.0, %v821
        %v823 = vpop.f32.mrf.mxu0
        %v824 = vpop.f32.mrf.mxu0
        %v825 = vadd.f32 0.0, %v824
        %v826 = vpop.f32.mrf.mxu0
        %827 = vdwg.mxu0
        %vm828 = vcmask 130048
        %v829 = vsel %vm828, %v822, -inf
        %830 = vmax.xlane.f32.xlu0 %v829
        %v831 = vpop.xlane.xlu0 %830
        %v832 = vsel %vm828, %v825, -inf
        %833 = vmax.xlane.f32.xlu0 %v832
        %v834 = vpop.xlane.xlu0 %833
        %v835 = vsub.f32 %v822, %v831
        %v836 = vsub.f32 %v825, %v834
        %v837 = vmul.f32 %v835, 1.442695
        %v838 = vpow.pop %v837
        %v839 = vmul.f32 %v836, 1.442695
        %v840 = vpow.pop %v839
        %v841 = vsel %vm828, %v838, 0.0
        %842 = vadd.xlane.f32.xlu0 %v841
        %v843 = vpop.xlane.xlu0 %842
        %v844 = vsel %vm828, %v840, 0.0
        %845 = vadd.xlane.f32.xlu0 %v844
        %v846 = vpop.xlane.xlu0 %845
        %v847 = vrcp.pop %v843
        %v848 = vrcp.pop %v846
        %v849 = vmul.f32 %v838, %v847
        %v850 = vmul.f32 %v840, %v848
        %v851 = vpack.c.bf16 %v850, %v849
        %v852 = vpack.c.bf16 %v782, %v779
        %v854 = vsel %vm828, %v851, 0
        %856 = vmatprep.subr.bf16.mxu0 0
        %857 = vmatpush1.bf16.msra.mxu0 0
        %858 = vmatprep.subr.bf16.mxu0 0
        %859 = vmatpush1.bf16.msra.mxu0 0
        %860 = vmatprep.subr.bf16.mxu0 0
        %861 = vmatpush1.bf16.msra.mxu0 0
        %862 = vmatprep.subr.bf16.mxu0 0
        %863 = vmatpush1.bf16.msra.mxu0 0
        %864 = vmatprep.subr.bf16.mxu0 0
        %865 = vmatpush1.bf16.msra.mxu0 0
        %866 = vmatprep.subr.bf16.mxu0 0
        %867 = vmatpush1.bf16.msra.mxu0 0
        %868 = vmatprep.subr.bf16.mxu0 0
        %869 = vmatpush1.bf16.msra.mxu0 0
        %870 = vmatprep.subr.bf16.mxu0 0
        %871 = vmatpush1.bf16.msra.mxu0 %v852
        %872 = vmatprep.subr.bf16.mxu0 0
        %873 = vmatpush2.bf16.msra.mxu0 0
        %874 = vmatprep.subr.bf16.mxu0 0
        %875 = vmatpush2.bf16.msra.mxu0 0
        %876 = vmatprep.subr.bf16.mxu0 0
        %877 = vmatpush2.bf16.msra.mxu0 0
        %878 = vmatprep.subr.bf16.mxu0 0
        %879 = vmatpush2.bf16.msra.mxu0 0
        %880 = vmatprep.subr.bf16.mxu0 0
        %881 = vmatpush2.bf16.msra.mxu0 0
        %882 = vmatprep.subr.bf16.mxu0 0
        %883 = vmatpush2.bf16.msra.mxu0 0
        %884 = vmatprep.subr.bf16.mxu0 0
        %885 = vmatpush2.bf16.msra.mxu0 0
        %886 = vmatprep.subr.bf16.mxu0 0
        %887 = vmatpush2.bf16.msra.mxu0 0
        %888 = vmatprep.mubr.bf16.mxu0 0
        %889 = vmatmul.mubr.bf16.gmra.mxu0 %v854
        %v890 = vpop.f32.mrf.mxu0
        %v891 = vadd.f32 0.0, %v890
        %v892 = vpop.f32.mrf.mxu0
        %v893 = vpop.f32.mrf.mxu0
        %v894 = vadd.f32 0.0, %v893
        %v895 = vpop.f32.mrf.mxu0
        %896 = vdwg.mxu0
        %s897 = sld [smem:[#allocation2]]
        %v898 = vstv %s897
        %v899 = vmul.f32 %v898, %v891
        %v900 = vmul.f32 %v898, %v894
        %v901 = vadd.f32 %v899, %v446
        %v902 = vadd.f32 %v900, %v447
        %v903 = vld [vmem:[%s10] sm:$0x1]
        %v905 = vlaneseq
        %v906 = vshrl.u32 %v905, 7
        %v907 = vsub.s32 0, %v906
        %v908 = vrot.slane %v903, %v907
        %v910 = vmul.f32 %v901, %v908
        %v911 = vmul.f32 %v902, %v908
        %912 = vadd.xlane.f32.xlu0 %v910
        %v913 = vpop.xlane.xlu0 %912
        %914 = vadd.xlane.f32.xlu0 %v911
        %v915 = vpop.xlane.xlu0 %914
        %s916 = sld [smem:[#allocation2 + $0x1]]
        %v917 = vstv %s916
        %v918 = vadd.f32 %v913, %v917
        %v919 = vadd.f32 %v915, %v917
        %v920 = vtanh.pop %v918
        %v921 = vtanh.pop %v919
        %v922 = vmax.f32 %v920, %v921
        %v923 = vrot.slane %v922, 4
        %v924 = vmax.f32 %v922, %v923
        %v925 = vrot.slane %v924, 2
        %v926 = vmax.f32 %v924, %v925
        %v927 = vrot.slane %v926, 1
        %v928 = vmax.f32 %v926, %v927
        %v929 = vsub.f32 %v920, %v928
        %v930 = vsub.f32 %v921, %v928
        %v931 = vmul.f32 %v929, 1.442695
        %v932 = vpow.pop %v931
        %v933 = vmul.f32 %v930, 1.442695
        %v934 = vpow.pop %v933
        %v935 = vadd.f32 %v932, %v934
        %v936 = vrot.slane %v935, 4
        %v937 = vadd.f32 %v935, %v936
        %v938 = vrot.slane %v937, 2
        %v939 = vadd.f32 %v937, %v938
        %v940 = vrot.slane %v939, 1
        %v941 = vadd.f32 %v939, %v940
        %v942 = vrcp.pop %v941
        %v943 = vmul.f32 %v932, %v942
        %v944 = vmul.f32 %v934, %v942
        %v945 = vmul.f32 %v446, %v943
        %v946 = vmul.f32 %v447, %v944
        %v947 = vadd.f32 %v945, %v946
        %v948 = vrot.slane %v947, 4
        %v949 = vadd.f32 %v947, %v948
        %v950 = vrot.slane %v949, 2
        %v951 = vadd.f32 %v949, %v950
        %v952 = vrot.slane %v951, 1
        %v953 = vadd.f32 %v951, %v952
        %954 = vst [vmem:[%s424] sm:$0x1] %v953
        %p955 = scmp.lt.s32.totalorder %s23, 1
        %s956 = scalar_select %p955, %s23, 1
        %s957 = scalar_lea.vmem %s11, %s956
        // Predicated region
        $region69: #{ftgan_encoder_atten.11} parent=63 // pred_check
          %p958 = pneg %p287
        $region70: #{ftgan_encoder_atten.11} parent=63 // pred_check_branch
          %960 = sbr.rel (%p958) target = $region72
        $region71: #{ftgan_encoder_atten.11} parent=63 // pred_region
          _
        $region72: #{ftgan_encoder_atten.11} parent=63 // pred_fallthru
          _
      $region64: #{ftgan_encoder_atten.11} parent=5 // pred_fallthru
        _
      %p961 = scmp.le.s32.totalorder 2, %s18
      // Predicated region
      $region73: #{ftgan_encoder_atten.11} parent=5 // pred_check
        %p962 = pneg %p961
      $region74: #{ftgan_encoder_atten.11} parent=5 // pred_check_branch
        %964 = sbr.rel (%p962) target = $region76
      $region75: #{ftgan_encoder_atten.11} parent=5 // pred_region
        %s965 = ssub.s32 %s18, 2
        // Predicated region
        $region77: #{ftgan_encoder_atten.11} parent=75 // pred_check
          %p966 = pneg %p293
        $region78: #{ftgan_encoder_atten.11} parent=75 // pred_check_branch
          %968 = sbr.rel (%p966) target = $region80
        $region79: #{ftgan_encoder_atten.11} parent=75 // pred_region
          %p969 = scmp.lt.s32.totalorder %s24, 1
          %s970 = scalar_select %p969, %s24, 1
          %s971 = scalar_lea.vmem %s11, %s970
        $region80: #{ftgan_encoder_atten.11} parent=75 // pred_fallthru
          _
      $region76: #{ftgan_encoder_atten.11} parent=5 // pred_fallthru
        _
    $region6: #{ftgan_encoder_atten.11} parent=1 // loop_footer
      %s22 = sadd.s32 1, %s18
    $region7: #{ftgan_encoder_atten.11} parent=1 // loop_footer_branch
      %17 = sbr.rel target = $region3
    $region8: #{ftgan_encoder_atten.11} parent=1 // loop_exit
      _
    %972 = vsyncpa [#allocation3], 1
    %s973 = scalar_lea.sflag [#allocation3], 1
    %974 = vsyncpa %s973, 1

</llo_original>
